<compile_context>
chip_gen: v7x
topology: tpu7x:2x2x1
jax: 0.10.0
libtpu: 0.0.40
codegen_flags: <defaults>
</compile_context>

<pallas_src>
import numpy as np
import jax
import jax.numpy as jnp
from jax.experimental import pallas as pl
from jax.experimental.pallas import tpu as pltpu


# ----------------------------------------------------------------------------
# Fused dense-block kernel (one batch element per grid step).
# Refs (block shapes):
#   x_ref     : (1, HW, C0)       block input activations
#   mask_ref  : (HW, 9)           0/1 boundary masks for the 9 conv taps
#   per layer l (6 refs each):
#     s1,b1   : (1, Cin_l)        folded BatchNorm #1 scale / bias (f32)
#     w1      : (Cin_l, 4g)       1x1 conv weight (bf16)
#     s2,b2   : (1, 4g)           folded BatchNorm #2 scale / bias (f32)
#     w3      : (4g, 9g)          3x3 conv weights, all 9 taps fused (bf16)
#   o_ref     : (1, HW, C_total)  concatenated block output
#   acc_ref   : (HW, C_total)     VMEM scratch, running concatenation (f32)
# ----------------------------------------------------------------------------
def _make_dense_block_kernel(H, W, C0, growth, num_layer):
    HW = H * W
    g = growth
    ninep = 9 * g
    PAD = ((W + 1 + 7) // 8) * 8       # zero-pad rows (multiple of 8, >= W+1)

    def kernel(*refs):
        x_ref = refs[0]
        mask_ref = refs[1]
        param_refs = refs[2:2 + 6 * num_layer]
        o_ref = refs[2 + 6 * num_layer]
        acc_ref = refs[3 + 6 * num_layer]

        # Seed the running concatenation with the block input channels.
        acc_ref[:, :C0] = x_ref[0]

        # Per-tap boundary masks (HW, 1); identical for every layer -> hoist.
        mask = mask_ref[...]                                  # (HW, 9) f32
        tap_masks = [mask[:, t:t + 1] for t in range(9)]

        zpad = jnp.zeros((PAD, ninep), jnp.float32)

        for l in range(num_layer):
            s1, b1, w1, s2, b2, w3 = param_refs[6 * l:6 * l + 6]
            cin = C0 + l * g

            # BN (eval, folded) + ReLU — keep elementwise math in f32.
            xin = acc_ref[:, :cin]                                    # (HW, cin)
            y = jnp.maximum(xin * s1[...] + b1[...], 0.0)

            # 1x1 conv == channel matmul (bf16 inputs, f32 accumulate).
            z = jnp.dot(y.astype(jnp.bfloat16), w1[...],
                        preferred_element_type=jnp.float32)           # (HW, 4g)

            # BN + ReLU.
            z = jnp.maximum(z * s2[...] + b2[...], 0.0)

            # 3x3 conv, padding=1: single fused matmul over all 9 taps ...
            p_all = jnp.dot(z.astype(jnp.bfloat16), w3[...],
                            preferred_element_type=jnp.float32)       # (HW, 9g)

            # ... then shift-and-accumulate via static slices of a padded copy
            # plus 0/1 boundary masks (out[i] = sum_t mask_t[i] * P_t[i + d_t]).
            p_pad = jnp.concatenate([zpad, p_all, zpad], axis=0)      # (HW+2*PAD, 9g)
            out = jnp.zeros((HW, g), jnp.float32)
            for t in range(9):
                dh, dw = t // 3 - 1, t % 3 - 1
                d = dh * W + dw
                sh = p_pad[PAD + d:PAD + d + HW, t * g:(t + 1) * g]   # (HW, g)
                out = out + sh * tap_masks[t]

            # Write this layer's growth channels into the concatenation.
            acc_ref[:, cin:cin + g] = out

        # Single wide store of the whole concatenated activation for this image.
        o_ref[0] = acc_ref[...].astype(o_ref.dtype)

    return kernel


def dense_block_pallas(x_nhwc, layer_params, tap_masks):
    """_DenseBlock.forward, fully fused: (N,H,W,C0) -> (N,H,W,C0+L*g)."""
    N, H, W, C0 = x_nhwc.shape
    HW = H * W
    num_layer = len(layer_params)
    g = layer_params[0]["w3f"].shape[1] // 9
    C_total = C0 + num_layer * g
    x_flat = x_nhwc.reshape(N, HW, C0)

    kernel = _make_dense_block_kernel(H, W, C0, g, num_layer)

    in_specs = [
        pl.BlockSpec((1, HW, C0), lambda n: (n, 0, 0)),
        pl.BlockSpec((HW, 9), lambda n: (0, 0)),
    ]
    args = [x_flat, tap_masks]
    for p in layer_params:
        cin, c4 = p["w1f"].shape
        in_specs += [
            pl.BlockSpec((1, cin), lambda n: (0, 0)),
            pl.BlockSpec((1, cin), lambda n: (0, 0)),
            pl.BlockSpec((cin, c4), lambda n: (0, 0)),
            pl.BlockSpec((1, c4), lambda n: (0, 0)),
            pl.BlockSpec((1, c4), lambda n: (0, 0)),
            pl.BlockSpec((c4, 9 * g), lambda n: (0, 0)),
        ]
        args += [p["s1"], p["b1"], p["w1f"], p["s2"], p["b2"], p["w3f"]]

    out = pl.pallas_call(
        kernel,
        out_shape=jax.ShapeDtypeStruct((N, HW, C_total), x_flat.dtype),
        grid_spec=pltpu.PrefetchScalarGridSpec(
            num_scalar_prefetch=0,
            grid=(N,),
            in_specs=in_specs,
            out_specs=pl.BlockSpec((1, HW, C_total), lambda n: (n, 0, 0)),
            scratch_shapes=[pltpu.VMEM((HW, C_total), jnp.float32)],
        ),
        compiler_params=pltpu.CompilerParams(
            dimension_semantics=("parallel",)),
    )(*args)
    return out.reshape(N, H, W, C_total)


# ----------------------------------------------------------------------------
# Helpers: tap boundary masks, deterministic parameters, plain-JAX reference.
# ----------------------------------------------------------------------------
def build_tap_masks(H, W):
    """(HW, 9) 0/1 masks: mask[i, t] = 1 iff tap t reads a valid pixel for i."""
    HW = H * W
    i = np.arange(HW)
    h, w = i // W, i % W
    m = np.zeros((HW, 9), np.float32)
    for t in range(9):
        dh, dw = t // 3 - 1, t % 3 - 1
        valid = (h + dh >= 0) & (h + dh < H) & (w + dw >= 0) & (w + dw < W)
        m[valid, t] = 1.0
    return jnp.asarray(m)


def make_layer_params(key, in_channels, growth_rate):
    """Deterministic synthetic parameters for one bottleneck _DenseLayer."""
    c4 = 4 * growth_rate
    eps = 1e-5
    ks = jax.random.split(key, 10)

    g1 = jax.random.uniform(ks[0], (in_channels,), minval=0.5, maxval=1.5)
    b1 = 0.1 * jax.random.normal(ks[1], (in_channels,))
    m1 = 0.1 * jax.random.normal(ks[2], (in_channels,))
    v1 = jax.random.uniform(ks[3], (in_channels,), minval=0.5, maxval=1.5)
    s1 = g1 / jnp.sqrt(v1 + eps)
    bias1 = b1 - m1 * s1

    w1 = 0.1 * jax.random.normal(ks[4], (in_channels, c4))        # (Cin, 4g)

    g2 = jax.random.uniform(ks[5], (c4,), minval=0.5, maxval=1.5)
    b2 = 0.1 * jax.random.normal(ks[6], (c4,))
    m2 = 0.1 * jax.random.normal(ks[7], (c4,))
    v2 = jax.random.uniform(ks[8], (c4,), minval=0.5, maxval=1.5)
    s2 = g2 / jnp.sqrt(v2 + eps)
    bias2 = b2 - m2 * s2

    w3 = 0.1 * jax.random.normal(ks[9], (9, c4, growth_rate))     # taps (kh*3+kw)

    f32 = jnp.float32
    # Fused tap layout for the kernel: (4g, 9g), columns [t*g:(t+1)*g] = W3_t.
    w3_fused = jnp.transpose(w3, (1, 0, 2)).reshape(c4, 9 * growth_rate)
    return {
        "s1": s1.reshape(1, -1).astype(f32), "b1": bias1.reshape(1, -1).astype(f32),
        "s2": s2.reshape(1, -1).astype(f32), "b2": bias2.reshape(1, -1).astype(f32),
        "w1": w1.astype(f32), "w3": w3.astype(f32),                 # f32 (reference)
        "w1f": w1.astype(jnp.bfloat16),                             # bf16 (kernel)
        "w3f": w3_fused.astype(jnp.bfloat16),
    }


def dense_block_reference(x_nhwc, layer_params):
    """Plain-JAX f32 reference of the same forward pass (eval-mode BN)."""
    x = x_nhwc
    for p in layer_params:
        y = jnp.maximum(x * p["s1"] + p["b1"], 0.0)
        z = jnp.einsum("nhwc,cd->nhwd", y, p["w1"])
        z = jnp.maximum(z * p["s2"] + p["b2"], 0.0)
        c4, g = p["w3"].shape[1], p["w3"].shape[2]
        w3 = p["w3"].reshape(3, 3, c4, g)                 # HWIO
        out = jax.lax.conv_general_dilated(
            z, w3, window_strides=(1, 1), padding=((1, 1), (1, 1)),
            dimension_numbers=("NHWC", "HWIO", "NHWC"))
        x = jnp.concatenate([x, out], axis=-1)
    return x


# ----------------------------------------------------------------------------
if __name__ == "__main__":
    # _DenseBlock(in_channels=8, growth_rate=8, drop_rate=0.0,
    #             bottleneck=True, num_layer=3)
    N, C0, H, W = 2, 8, 16, 16
    growth_rate, num_layer = 8, 3
    # TODO(synk): drop_rate > 0 (stochastic Dropout2d) and training-mode
    # (batch-statistics) BatchNorm are not reproduced; eval-mode BN is used.

    root = jax.random.PRNGKey(0)
    kx, kp = jax.random.split(root)

    # PyTorch-convention NCHW input, permuted to NHWC for the kernel.
    x_nchw = jax.random.normal(kx, (N, C0, H, W), jnp.float32)
    x_nhwc = jnp.transpose(x_nchw, (0, 2, 3, 1))

    layer_keys = jax.random.split(kp, num_layer)
    layer_params = [
        make_layer_params(layer_keys[i], C0 + growth_rate * i, growth_rate)
        for i in range(num_layer)
    ]
    tap_masks = build_tap_masks(H, W)

    out_pallas = jax.block_until_ready(
        dense_block_pallas(x_nhwc, layer_params, tap_masks))

    out_ref = dense_block_reference(x_nhwc, layer_params)

    assert out_pallas.shape == (N, H, W, C0 + growth_rate * num_layer)
    max_err = float(jnp.max(jnp.abs(out_pallas - out_ref)))
    # bf16 matmul inputs with f32 accumulation vs an f32 reference:
    # structural bugs would produce O(1) errors, so 1e-1 still discriminates.
    assert max_err < 1e-1, f"mismatch vs reference, max abs err = {max_err}"

    print("KERNEL_OK")
</pallas_src>

<mosaic_0001>
module attributes {stable_mosaic.version = 11 : i64} {
  func.func @kernel(%arg0: i32, %arg1: memref<1x256x8xf32, #tpu.memory_space<vmem>>, %arg2: memref<256x9xf32, #tpu.memory_space<vmem>>, %arg3: memref<1x8xf32, #tpu.memory_space<vmem>>, %arg4: memref<1x8xf32, #tpu.memory_space<vmem>>, %arg5: memref<8x32xbf16, #tpu.memory_space<vmem>>, %arg6: memref<1x32xf32, #tpu.memory_space<vmem>>, %arg7: memref<1x32xf32, #tpu.memory_space<vmem>>, %arg8: memref<32x72xbf16, #tpu.memory_space<vmem>>, %arg9: memref<1x16xf32, #tpu.memory_space<vmem>>, %arg10: memref<1x16xf32, #tpu.memory_space<vmem>>, %arg11: memref<16x32xbf16, #tpu.memory_space<vmem>>, %arg12: memref<1x32xf32, #tpu.memory_space<vmem>>, %arg13: memref<1x32xf32, #tpu.memory_space<vmem>>, %arg14: memref<32x72xbf16, #tpu.memory_space<vmem>>, %arg15: memref<1x24xf32, #tpu.memory_space<vmem>>, %arg16: memref<1x24xf32, #tpu.memory_space<vmem>>, %arg17: memref<24x32xbf16, #tpu.memory_space<vmem>>, %arg18: memref<1x32xf32, #tpu.memory_space<vmem>>, %arg19: memref<1x32xf32, #tpu.memory_space<vmem>>, %arg20: memref<32x72xbf16, #tpu.memory_space<vmem>>, %arg21: memref<1x256x32xf32, #tpu.memory_space<vmem>>, %arg22: memref<256x32xf32, #tpu.memory_space<vmem>>) attributes {dimension_semantics = [#tpu.dimension_semantics<parallel>], iteration_bounds = array<i64: 2>, scalar_prefetch = 0 : i64, scratch_operands = 1 : i64, tpu.core_type = #tpu.core_type<tc>, window_params = [{transform_indices = @transform_0, window_bounds = array<i64: 1, 256, 8>}, {pipeline_mode = #tpu.pipeline_mode<synchronous>, transform_indices = @transform_1, window_bounds = array<i64: 256, 9>}, {pipeline_mode = #tpu.pipeline_mode<synchronous>, transform_indices = @transform_2, window_bounds = array<i64: 1, 8>}, {pipeline_mode = #tpu.pipeline_mode<synchronous>, transform_indices = @transform_3, window_bounds = array<i64: 1, 8>}, {pipeline_mode = #tpu.pipeline_mode<synchronous>, transform_indices = @transform_4, window_bounds = array<i64: 8, 32>}, {pipeline_mode = #tpu.pipeline_mode<synchronous>, transform_indices = @transform_5, window_bounds = array<i64: 1, 32>}, {pipeline_mode = #tpu.pipeline_mode<synchronous>, transform_indices = @transform_6, window_bounds = array<i64: 1, 32>}, {pipeline_mode = #tpu.pipeline_mode<synchronous>, transform_indices = @transform_7, window_bounds = array<i64: 32, 72>}, {pipeline_mode = #tpu.pipeline_mode<synchronous>, transform_indices = @transform_8, window_bounds = array<i64: 1, 16>}, {pipeline_mode = #tpu.pipeline_mode<synchronous>, transform_indices = @transform_9, window_bounds = array<i64: 1, 16>}, {pipeline_mode = #tpu.pipeline_mode<synchronous>, transform_indices = @transform_10, window_bounds = array<i64: 16, 32>}, {pipeline_mode = #tpu.pipeline_mode<synchronous>, transform_indices = @transform_11, window_bounds = array<i64: 1, 32>}, {pipeline_mode = #tpu.pipeline_mode<synchronous>, transform_indices = @transform_12, window_bounds = array<i64: 1, 32>}, {pipeline_mode = #tpu.pipeline_mode<synchronous>, transform_indices = @transform_13, window_bounds = array<i64: 32, 72>}, {pipeline_mode = #tpu.pipeline_mode<synchronous>, transform_indices = @transform_14, window_bounds = array<i64: 1, 24>}, {pipeline_mode = #tpu.pipeline_mode<synchronous>, transform_indices = @transform_15, window_bounds = array<i64: 1, 24>}, {pipeline_mode = #tpu.pipeline_mode<synchronous>, transform_indices = @transform_16, window_bounds = array<i64: 24, 32>}, {pipeline_mode = #tpu.pipeline_mode<synchronous>, transform_indices = @transform_17, window_bounds = array<i64: 1, 32>}, {pipeline_mode = #tpu.pipeline_mode<synchronous>, transform_indices = @transform_18, window_bounds = array<i64: 1, 32>}, {pipeline_mode = #tpu.pipeline_mode<synchronous>, transform_indices = @transform_19, window_bounds = array<i64: 32, 72>}, {transform_indices = @transform_20, window_bounds = array<i64: 1, 256, 32>}]} {
    %c0 = arith.constant 0 : index
    %c0_0 = arith.constant 0 : index
    %c0_1 = arith.constant 0 : index
    %0 = vector.load %arg1[%c0, %c0_0, %c0_1] : memref<1x256x8xf32, #tpu.memory_space<vmem>>, vector<1x256x8xf32>
    %1 = vector.shape_cast %0 : vector<1x256x8xf32> to vector<256x8xf32>
    %c0_2 = arith.constant 0 : index
    %c0_3 = arith.constant 0 : index
    %2 = vector.load %arg22[%c0_2, %c0_3] : memref<256x32xf32, #tpu.memory_space<vmem>>, vector<256x8xf32>
    tpu.vector_store %arg22[%c0_2, %c0_3], %1 {strides = array<i32>} : memref<256x32xf32, #tpu.memory_space<vmem>>, vector<256x8xf32>,
    %c0_4 = arith.constant 0 : index
    %c0_5 = arith.constant 0 : index
    %3 = vector.load %arg2[%c0_4, %c0_5] : memref<256x9xf32, #tpu.memory_space<vmem>>, vector<256x9xf32>
    %4 = vector.extract_strided_slice %3 {offsets = [0, 0], sizes = [256, 1], strides = [1, 1]} : vector<256x9xf32> to vector<256x1xf32>
    %5 = vector.extract_strided_slice %3 {offsets = [0, 1], sizes = [256, 1], strides = [1, 1]} : vector<256x9xf32> to vector<256x1xf32>
    %6 = vector.extract_strided_slice %3 {offsets = [0, 2], sizes = [256, 1], strides = [1, 1]} : vector<256x9xf32> to vector<256x1xf32>
    %7 = vector.extract_strided_slice %3 {offsets = [0, 3], sizes = [256, 1], strides = [1, 1]} : vector<256x9xf32> to vector<256x1xf32>
    %8 = vector.extract_strided_slice %3 {offsets = [0, 4], sizes = [256, 1], strides = [1, 1]} : vector<256x9xf32> to vector<256x1xf32>
    %9 = vector.extract_strided_slice %3 {offsets = [0, 5], sizes = [256, 1], strides = [1, 1]} : vector<256x9xf32> to vector<256x1xf32>
    %10 = vector.extract_strided_slice %3 {offsets = [0, 6], sizes = [256, 1], strides = [1, 1]} : vector<256x9xf32> to vector<256x1xf32>
    %11 = vector.extract_strided_slice %3 {offsets = [0, 7], sizes = [256, 1], strides = [1, 1]} : vector<256x9xf32> to vector<256x1xf32>
    %12 = vector.extract_strided_slice %3 {offsets = [0, 8], sizes = [256, 1], strides = [1, 1]} : vector<256x9xf32> to vector<256x1xf32>
    %cst = arith.constant 0.000000e+00 : f32
    %13 = vector.broadcast %cst : f32 to vector<24x72xf32>
    %c0_6 = arith.constant 0 : index
    %c0_7 = arith.constant 0 : index
    %14 = vector.load %arg22[%c0_6, %c0_7] : memref<256x32xf32, #tpu.memory_space<vmem>>, vector<256x8xf32>
    %c0_8 = arith.constant 0 : index
    %c0_9 = arith.constant 0 : index
    %15 = vector.load %arg3[%c0_8, %c0_9] : memref<1x8xf32, #tpu.memory_space<vmem>>, vector<1x8xf32>
    %16 = vector.broadcast %15 : vector<1x8xf32> to vector<256x8xf32>
    %17 = arith.mulf %14, %16 : vector<256x8xf32>
    %c0_10 = arith.constant 0 : index
    %c0_11 = arith.constant 0 : index
    %18 = vector.load %arg4[%c0_10, %c0_11] : memref<1x8xf32, #tpu.memory_space<vmem>>, vector<1x8xf32>
    %19 = vector.broadcast %18 : vector<1x8xf32> to vector<256x8xf32>
    %20 = arith.addf %17, %19 : vector<256x8xf32>
    %cst_12 = arith.constant 0.000000e+00 : f32
    %21 = vector.broadcast %cst_12 : f32 to vector<256x8xf32>
    %22 = arith.maximumf %20, %21 : vector<256x8xf32>
    %23 = arith.truncf %22 : vector<256x8xf32> to vector<256x8xbf16>
    %c0_13 = arith.constant 0 : index
    %c0_14 = arith.constant 0 : index
    %24 = vector.load %arg5[%c0_13, %c0_14] : memref<8x32xbf16, #tpu.memory_space<vmem>>, vector<8x32xbf16>
    %cst_15 = arith.constant dense<0.000000e+00> : vector<256x32xf32>
    %25 = tpu.matmul %23, %24, %cst_15 {dimension_numbers = #tpu.dot_dimension_numbers<[1], [0], [0], [1], [0, 0, 1, 1], [], []>} : vector<256x8xbf16>, vector<8x32xbf16>, vector<256x32xf32> -> vector<256x32xf32>
    %c0_16 = arith.constant 0 : index
    %c0_17 = arith.constant 0 : index
    %26 = vector.load %arg6[%c0_16, %c0_17] : memref<1x32xf32, #tpu.memory_space<vmem>>, vector<1x32xf32>
    %27 = vector.broadcast %26 : vector<1x32xf32> to vector<256x32xf32>
    %28 = arith.mulf %25, %27 : vector<256x32xf32>
    %c0_18 = arith.constant 0 : index
    %c0_19 = arith.constant 0 : index
    %29 = vector.load %arg7[%c0_18, %c0_19] : memref<1x32xf32, #tpu.memory_space<vmem>>, vector<1x32xf32>
    %30 = vector.broadcast %29 : vector<1x32xf32> to vector<256x32xf32>
    %31 = arith.addf %28, %30 : vector<256x32xf32>
    %cst_20 = arith.constant 0.000000e+00 : f32
    %32 = vector.broadcast %cst_20 : f32 to vector<256x32xf32>
    %33 = arith.maximumf %31, %32 : vector<256x32xf32>
    %34 = arith.truncf %33 : vector<256x32xf32> to vector<256x32xbf16>
    %c0_21 = arith.constant 0 : index
    %c0_22 = arith.constant 0 : index
    %35 = vector.load %arg8[%c0_21, %c0_22] : memref<32x72xbf16, #tpu.memory_space<vmem>>, vector<32x72xbf16>
    %cst_23 = arith.constant dense<0.000000e+00> : vector<256x72xf32>
    %36 = tpu.matmul %34, %35, %cst_23 {dimension_numbers = #tpu.dot_dimension_numbers<[1], [0], [0], [1], [0, 0, 1, 1], [], []>} : vector<256x32xbf16>, vector<32x72xbf16>, vector<256x72xf32> -> vector<256x72xf32>
    %37 = tpu.concatenate %13, %36, %13 in 0 : vector<24x72xf32>, vector<256x72xf32>, vector<24x72xf32> -> vector<304x72xf32>
    %cst_24 = arith.constant 0.000000e+00 : f32
    %38 = vector.broadcast %cst_24 : f32 to vector<256x8xf32>
    %39 = vector.extract_strided_slice %37 {offsets = [7, 0], sizes = [256, 8], strides = [1, 1]} : vector<304x72xf32> to vector<256x8xf32>
    %40 = vector.broadcast %4 : vector<256x1xf32> to vector<256x8xf32>
    %41 = arith.mulf %39, %40 : vector<256x8xf32>
    %42 = arith.addf %38, %41 : vector<256x8xf32>
    %43 = vector.extract_strided_slice %37 {offsets = [8, 8], sizes = [256, 8], strides = [1, 1]} : vector<304x72xf32> to vector<256x8xf32>
    %44 = vector.broadcast %5 : vector<256x1xf32> to vector<256x8xf32>
    %45 = arith.mulf %43, %44 : vector<256x8xf32>
    %46 = arith.addf %42, %45 : vector<256x8xf32>
    %47 = vector.extract_strided_slice %37 {offsets = [9, 16], sizes = [256, 8], strides = [1, 1]} : vector<304x72xf32> to vector<256x8xf32>
    %48 = vector.broadcast %6 : vector<256x1xf32> to vector<256x8xf32>
    %49 = arith.mulf %47, %48 : vector<256x8xf32>
    %50 = arith.addf %46, %49 : vector<256x8xf32>
    %51 = vector.extract_strided_slice %37 {offsets = [23, 24], sizes = [256, 8], strides = [1, 1]} : vector<304x72xf32> to vector<256x8xf32>
    %52 = vector.broadcast %7 : vector<256x1xf32> to vector<256x8xf32>
    %53 = arith.mulf %51, %52 : vector<256x8xf32>
    %54 = arith.addf %50, %53 : vector<256x8xf32>
    %55 = vector.extract_strided_slice %37 {offsets = [24, 32], sizes = [256, 8], strides = [1, 1]} : vector<304x72xf32> to vector<256x8xf32>
    %56 = vector.broadcast %8 : vector<256x1xf32> to vector<256x8xf32>
    %57 = arith.mulf %55, %56 : vector<256x8xf32>
    %58 = arith.addf %54, %57 : vector<256x8xf32>
    %59 = vector.extract_strided_slice %37 {offsets = [25, 40], sizes = [256, 8], strides = [1, 1]} : vector<304x72xf32> to vector<256x8xf32>
    %60 = vector.broadcast %9 : vector<256x1xf32> to vector<256x8xf32>
    %61 = arith.mulf %59, %60 : vector<256x8xf32>
    %62 = arith.addf %58, %61 : vector<256x8xf32>
    %63 = vector.extract_strided_slice %37 {offsets = [39, 48], sizes = [256, 8], strides = [1, 1]} : vector<304x72xf32> to vector<256x8xf32>
    %64 = vector.broadcast %10 : vector<256x1xf32> to vector<256x8xf32>
    %65 = arith.mulf %63, %64 : vector<256x8xf32>
    %66 = arith.addf %62, %65 : vector<256x8xf32>
    %67 = vector.extract_strided_slice %37 {offsets = [40, 56], sizes = [256, 8], strides = [1, 1]} : vector<304x72xf32> to vector<256x8xf32>
    %68 = vector.broadcast %11 : vector<256x1xf32> to vector<256x8xf32>
    %69 = arith.mulf %67, %68 : vector<256x8xf32>
    %70 = arith.addf %66, %69 : vector<256x8xf32>
    %71 = vector.extract_strided_slice %37 {offsets = [41, 64], sizes = [256, 8], strides = [1, 1]} : vector<304x72xf32> to vector<256x8xf32>
    %72 = vector.broadcast %12 : vector<256x1xf32> to vector<256x8xf32>
    %73 = arith.mulf %71, %72 : vector<256x8xf32>
    %74 = arith.addf %70, %73 : vector<256x8xf32>
    %c0_25 = arith.constant 0 : index
    %c8 = arith.constant 8 : index
    %75 = vector.load %arg22[%c0_25, %c8] : memref<256x32xf32, #tpu.memory_space<vmem>>, vector<256x8xf32>
    tpu.vector_store %arg22[%c0_25, %c8], %74 {strides = array<i32>} : memref<256x32xf32, #tpu.memory_space<vmem>>, vector<256x8xf32>,
    %c0_26 = arith.constant 0 : index
    %c0_27 = arith.constant 0 : index
    %76 = vector.load %arg22[%c0_26, %c0_27] : memref<256x32xf32, #tpu.memory_space<vmem>>, vector<256x16xf32>
    %c0_28 = arith.constant 0 : index
    %c0_29 = arith.constant 0 : index
    %77 = vector.load %arg9[%c0_28, %c0_29] : memref<1x16xf32, #tpu.memory_space<vmem>>, vector<1x16xf32>
    %78 = vector.broadcast %77 : vector<1x16xf32> to vector<256x16xf32>
    %79 = arith.mulf %76, %78 : vector<256x16xf32>
    %c0_30 = arith.constant 0 : index
    %c0_31 = arith.constant 0 : index
    %80 = vector.load %arg10[%c0_30, %c0_31] : memref<1x16xf32, #tpu.memory_space<vmem>>, vector<1x16xf32>
    %81 = vector.broadcast %80 : vector<1x16xf32> to vector<256x16xf32>
    %82 = arith.addf %79, %81 : vector<256x16xf32>
    %cst_32 = arith.constant 0.000000e+00 : f32
    %83 = vector.broadcast %cst_32 : f32 to vector<256x16xf32>
    %84 = arith.maximumf %82, %83 : vector<256x16xf32>
    %85 = arith.truncf %84 : vector<256x16xf32> to vector<256x16xbf16>
    %c0_33 = arith.constant 0 : index
    %c0_34 = arith.constant 0 : index
    %86 = vector.load %arg11[%c0_33, %c0_34] : memref<16x32xbf16, #tpu.memory_space<vmem>>, vector<16x32xbf16>
    %cst_35 = arith.constant dense<0.000000e+00> : vector<256x32xf32>
    %87 = tpu.matmul %85, %86, %cst_35 {dimension_numbers = #tpu.dot_dimension_numbers<[1], [0], [0], [1], [0, 0, 1, 1], [], []>} : vector<256x16xbf16>, vector<16x32xbf16>, vector<256x32xf32> -> vector<256x32xf32>
    %c0_36 = arith.constant 0 : index
    %c0_37 = arith.constant 0 : index
    %88 = vector.load %arg12[%c0_36, %c0_37] : memref<1x32xf32, #tpu.memory_space<vmem>>, vector<1x32xf32>
    %89 = vector.broadcast %88 : vector<1x32xf32> to vector<256x32xf32>
    %90 = arith.mulf %87, %89 : vector<256x32xf32>
    %c0_38 = arith.constant 0 : index
    %c0_39 = arith.constant 0 : index
    %91 = vector.load %arg13[%c0_38, %c0_39] : memref<1x32xf32, #tpu.memory_space<vmem>>, vector<1x32xf32>
    %92 = vector.broadcast %91 : vector<1x32xf32> to vector<256x32xf32>
    %93 = arith.addf %90, %92 : vector<256x32xf32>
    %cst_40 = arith.constant 0.000000e+00 : f32
    %94 = vector.broadcast %cst_40 : f32 to vector<256x32xf32>
    %95 = arith.maximumf %93, %94 : vector<256x32xf32>
    %96 = arith.truncf %95 : vector<256x32xf32> to vector<256x32xbf16>
    %c0_41 = arith.constant 0 : index
    %c0_42 = arith.constant 0 : index
    %97 = vector.load %arg14[%c0_41, %c0_42] : memref<32x72xbf16, #tpu.memory_space<vmem>>, vector<32x72xbf16>
    %cst_43 = arith.constant dense<0.000000e+00> : vector<256x72xf32>
    %98 = tpu.matmul %96, %97, %cst_43 {dimension_numbers = #tpu.dot_dimension_numbers<[1], [0], [0], [1], [0, 0, 1, 1], [], []>} : vector<256x32xbf16>, vector<32x72xbf16>, vector<256x72xf32> -> vector<256x72xf32>
    %99 = tpu.concatenate %13, %98, %13 in 0 : vector<24x72xf32>, vector<256x72xf32>, vector<24x72xf32> -> vector<304x72xf32>
    %cst_44 = arith.constant 0.000000e+00 : f32
    %100 = vector.broadcast %cst_44 : f32 to vector<256x8xf32>
    %101 = vector.extract_strided_slice %99 {offsets = [7, 0], sizes = [256, 8], strides = [1, 1]} : vector<304x72xf32> to vector<256x8xf32>
    %102 = vector.broadcast %4 : vector<256x1xf32> to vector<256x8xf32>
    %103 = arith.mulf %101, %102 : vector<256x8xf32>
    %104 = arith.addf %100, %103 : vector<256x8xf32>
    %105 = vector.extract_strided_slice %99 {offsets = [8, 8], sizes = [256, 8], strides = [1, 1]} : vector<304x72xf32> to vector<256x8xf32>
    %106 = vector.broadcast %5 : vector<256x1xf32> to vector<256x8xf32>
    %107 = arith.mulf %105, %106 : vector<256x8xf32>
    %108 = arith.addf %104, %107 : vector<256x8xf32>
    %109 = vector.extract_strided_slice %99 {offsets = [9, 16], sizes = [256, 8], strides = [1, 1]} : vector<304x72xf32> to vector<256x8xf32>
    %110 = vector.broadcast %6 : vector<256x1xf32> to vector<256x8xf32>
    %111 = arith.mulf %109, %110 : vector<256x8xf32>
    %112 = arith.addf %108, %111 : vector<256x8xf32>
    %113 = vector.extract_strided_slice %99 {offsets = [23, 24], sizes = [256, 8], strides = [1, 1]} : vector<304x72xf32> to vector<256x8xf32>
    %114 = vector.broadcast %7 : vector<256x1xf32> to vector<256x8xf32>
    %115 = arith.mulf %113, %114 : vector<256x8xf32>
    %116 = arith.addf %112, %115 : vector<256x8xf32>
    %117 = vector.extract_strided_slice %99 {offsets = [24, 32], sizes = [256, 8], strides = [1, 1]} : vector<304x72xf32> to vector<256x8xf32>
    %118 = vector.broadcast %8 : vector<256x1xf32> to vector<256x8xf32>
    %119 = arith.mulf %117, %118 : vector<256x8xf32>
    %120 = arith.addf %116, %119 : vector<256x8xf32>
    %121 = vector.extract_strided_slice %99 {offsets = [25, 40], sizes = [256, 8], strides = [1, 1]} : vector<304x72xf32> to vector<256x8xf32>
    %122 = vector.broadcast %9 : vector<256x1xf32> to vector<256x8xf32>
    %123 = arith.mulf %121, %122 : vector<256x8xf32>
    %124 = arith.addf %120, %123 : vector<256x8xf32>
    %125 = vector.extract_strided_slice %99 {offsets = [39, 48], sizes = [256, 8], strides = [1, 1]} : vector<304x72xf32> to vector<256x8xf32>
    %126 = vector.broadcast %10 : vector<256x1xf32> to vector<256x8xf32>
    %127 = arith.mulf %125, %126 : vector<256x8xf32>
    %128 = arith.addf %124, %127 : vector<256x8xf32>
    %129 = vector.extract_strided_slice %99 {offsets = [40, 56], sizes = [256, 8], strides = [1, 1]} : vector<304x72xf32> to vector<256x8xf32>
    %130 = vector.broadcast %11 : vector<256x1xf32> to vector<256x8xf32>
    %131 = arith.mulf %129, %130 : vector<256x8xf32>
    %132 = arith.addf %128, %131 : vector<256x8xf32>
    %133 = vector.extract_strided_slice %99 {offsets = [41, 64], sizes = [256, 8], strides = [1, 1]} : vector<304x72xf32> to vector<256x8xf32>
    %134 = vector.broadcast %12 : vector<256x1xf32> to vector<256x8xf32>
    %135 = arith.mulf %133, %134 : vector<256x8xf32>
    %136 = arith.addf %132, %135 : vector<256x8xf32>
    %c0_45 = arith.constant 0 : index
    %c16 = arith.constant 16 : index
    %137 = vector.load %arg22[%c0_45, %c16] : memref<256x32xf32, #tpu.memory_space<vmem>>, vector<256x8xf32>
    tpu.vector_store %arg22[%c0_45, %c16], %136 {strides = array<i32>} : memref<256x32xf32, #tpu.memory_space<vmem>>, vector<256x8xf32>,
    %c0_46 = arith.constant 0 : index
    %c0_47 = arith.constant 0 : index
    %138 = vector.load %arg22[%c0_46, %c0_47] : memref<256x32xf32, #tpu.memory_space<vmem>>, vector<256x24xf32>
    %c0_48 = arith.constant 0 : index
    %c0_49 = arith.constant 0 : index
    %139 = vector.load %arg15[%c0_48, %c0_49] : memref<1x24xf32, #tpu.memory_space<vmem>>, vector<1x24xf32>
    %140 = vector.broadcast %139 : vector<1x24xf32> to vector<256x24xf32>
    %141 = arith.mulf %138, %140 : vector<256x24xf32>
    %c0_50 = arith.constant 0 : index
    %c0_51 = arith.constant 0 : index
    %142 = vector.load %arg16[%c0_50, %c0_51] : memref<1x24xf32, #tpu.memory_space<vmem>>, vector<1x24xf32>
    %143 = vector.broadcast %142 : vector<1x24xf32> to vector<256x24xf32>
    %144 = arith.addf %141, %143 : vector<256x24xf32>
    %cst_52 = arith.constant 0.000000e+00 : f32
    %145 = vector.broadcast %cst_52 : f32 to vector<256x24xf32>
    %146 = arith.maximumf %144, %145 : vector<256x24xf32>
    %147 = arith.truncf %146 : vector<256x24xf32> to vector<256x24xbf16>
    %c0_53 = arith.constant 0 : index
    %c0_54 = arith.constant 0 : index
    %148 = vector.load %arg17[%c0_53, %c0_54] : memref<24x32xbf16, #tpu.memory_space<vmem>>, vector<24x32xbf16>
    %cst_55 = arith.constant dense<0.000000e+00> : vector<256x32xf32>
    %149 = tpu.matmul %147, %148, %cst_55 {dimension_numbers = #tpu.dot_dimension_numbers<[1], [0], [0], [1], [0, 0, 1, 1], [], []>} : vector<256x24xbf16>, vector<24x32xbf16>, vector<256x32xf32> -> vector<256x32xf32>
    %c0_56 = arith.constant 0 : index
    %c0_57 = arith.constant 0 : index
    %150 = vector.load %arg18[%c0_56, %c0_57] : memref<1x32xf32, #tpu.memory_space<vmem>>, vector<1x32xf32>
    %151 = vector.broadcast %150 : vector<1x32xf32> to vector<256x32xf32>
    %152 = arith.mulf %149, %151 : vector<256x32xf32>
    %c0_58 = arith.constant 0 : index
    %c0_59 = arith.constant 0 : index
    %153 = vector.load %arg19[%c0_58, %c0_59] : memref<1x32xf32, #tpu.memory_space<vmem>>, vector<1x32xf32>
    %154 = vector.broadcast %153 : vector<1x32xf32> to vector<256x32xf32>
    %155 = arith.addf %152, %154 : vector<256x32xf32>
    %cst_60 = arith.constant 0.000000e+00 : f32
    %156 = vector.broadcast %cst_60 : f32 to vector<256x32xf32>
    %157 = arith.maximumf %155, %156 : vector<256x32xf32>
    %158 = arith.truncf %157 : vector<256x32xf32> to vector<256x32xbf16>
    %c0_61 = arith.constant 0 : index
    %c0_62 = arith.constant 0 : index
    %159 = vector.load %arg20[%c0_61, %c0_62] : memref<32x72xbf16, #tpu.memory_space<vmem>>, vector<32x72xbf16>
    %cst_63 = arith.constant dense<0.000000e+00> : vector<256x72xf32>
    %160 = tpu.matmul %158, %159, %cst_63 {dimension_numbers = #tpu.dot_dimension_numbers<[1], [0], [0], [1], [0, 0, 1, 1], [], []>} : vector<256x32xbf16>, vector<32x72xbf16>, vector<256x72xf32> -> vector<256x72xf32>
    %161 = tpu.concatenate %13, %160, %13 in 0 : vector<24x72xf32>, vector<256x72xf32>, vector<24x72xf32> -> vector<304x72xf32>
    %cst_64 = arith.constant 0.000000e+00 : f32
    %162 = vector.broadcast %cst_64 : f32 to vector<256x8xf32>
    %163 = vector.extract_strided_slice %161 {offsets = [7, 0], sizes = [256, 8], strides = [1, 1]} : vector<304x72xf32> to vector<256x8xf32>
    %164 = vector.broadcast %4 : vector<256x1xf32> to vector<256x8xf32>
    %165 = arith.mulf %163, %164 : vector<256x8xf32>
    %166 = arith.addf %162, %165 : vector<256x8xf32>
    %167 = vector.extract_strided_slice %161 {offsets = [8, 8], sizes = [256, 8], strides = [1, 1]} : vector<304x72xf32> to vector<256x8xf32>
    %168 = vector.broadcast %5 : vector<256x1xf32> to vector<256x8xf32>
    %169 = arith.mulf %167, %168 : vector<256x8xf32>
    %170 = arith.addf %166, %169 : vector<256x8xf32>
    %171 = vector.extract_strided_slice %161 {offsets = [9, 16], sizes = [256, 8], strides = [1, 1]} : vector<304x72xf32> to vector<256x8xf32>
    %172 = vector.broadcast %6 : vector<256x1xf32> to vector<256x8xf32>
    %173 = arith.mulf %171, %172 : vector<256x8xf32>
    %174 = arith.addf %170, %173 : vector<256x8xf32>
    %175 = vector.extract_strided_slice %161 {offsets = [23, 24], sizes = [256, 8], strides = [1, 1]} : vector<304x72xf32> to vector<256x8xf32>
    %176 = vector.broadcast %7 : vector<256x1xf32> to vector<256x8xf32>
    %177 = arith.mulf %175, %176 : vector<256x8xf32>
    %178 = arith.addf %174, %177 : vector<256x8xf32>
    %179 = vector.extract_strided_slice %161 {offsets = [24, 32], sizes = [256, 8], strides = [1, 1]} : vector<304x72xf32> to vector<256x8xf32>
    %180 = vector.broadcast %8 : vector<256x1xf32> to vector<256x8xf32>
    %181 = arith.mulf %179, %180 : vector<256x8xf32>
    %182 = arith.addf %178, %181 : vector<256x8xf32>
    %183 = vector.extract_strided_slice %161 {offsets = [25, 40], sizes = [256, 8], strides = [1, 1]} : vector<304x72xf32> to vector<256x8xf32>
    %184 = vector.broadcast %9 : vector<256x1xf32> to vector<256x8xf32>
    %185 = arith.mulf %183, %184 : vector<256x8xf32>
    %186 = arith.addf %182, %185 : vector<256x8xf32>
    %187 = vector.extract_strided_slice %161 {offsets = [39, 48], sizes = [256, 8], strides = [1, 1]} : vector<304x72xf32> to vector<256x8xf32>
    %188 = vector.broadcast %10 : vector<256x1xf32> to vector<256x8xf32>
    %189 = arith.mulf %187, %188 : vector<256x8xf32>
    %190 = arith.addf %186, %189 : vector<256x8xf32>
    %191 = vector.extract_strided_slice %161 {offsets = [40, 56], sizes = [256, 8], strides = [1, 1]} : vector<304x72xf32> to vector<256x8xf32>
    %192 = vector.broadcast %11 : vector<256x1xf32> to vector<256x8xf32>
    %193 = arith.mulf %191, %192 : vector<256x8xf32>
    %194 = arith.addf %190, %193 : vector<256x8xf32>
    %195 = vector.extract_strided_slice %161 {offsets = [41, 64], sizes = [256, 8], strides = [1, 1]} : vector<304x72xf32> to vector<256x8xf32>
    %196 = vector.broadcast %12 : vector<256x1xf32> to vector<256x8xf32>
    %197 = arith.mulf %195, %196 : vector<256x8xf32>
    %198 = arith.addf %194, %197 : vector<256x8xf32>
    %c0_65 = arith.constant 0 : index
    %c24 = arith.constant 24 : index
    %199 = vector.load %arg22[%c0_65, %c24] : memref<256x32xf32, #tpu.memory_space<vmem>>, vector<256x8xf32>
    tpu.vector_store %arg22[%c0_65, %c24], %198 {strides = array<i32>} : memref<256x32xf32, #tpu.memory_space<vmem>>, vector<256x8xf32>,
    %c0_66 = arith.constant 0 : index
    %c0_67 = arith.constant 0 : index
    %200 = vector.load %arg22[%c0_66, %c0_67] : memref<256x32xf32, #tpu.memory_space<vmem>>, vector<256x32xf32>
    %c0_68 = arith.constant 0 : index
    %c0_69 = arith.constant 0 : index
    %c0_70 = arith.constant 0 : index
    %201 = vector.load %arg21[%c0_68, %c0_69, %c0_70] : memref<1x256x32xf32, #tpu.memory_space<vmem>>, vector<1x256x32xf32>
    %202 = vector.shape_cast %201 : vector<1x256x32xf32> to vector<256x32xf32>
    %203 = vector.shape_cast %200 : vector<256x32xf32> to vector<1x256x32xf32>
    tpu.vector_store %arg21[%c0_68, %c0_69, %c0_70], %203 {strides = array<i32>} : memref<1x256x32xf32, #tpu.memory_space<vmem>>, vector<1x256x32xf32>,
    return
  }
  func.func @transform_0(%arg0: i32) -> (i32, i32, i32) {
    %c0_i32 = arith.constant 0 : i32
    %c0_i32_0 = arith.constant 0 : i32
    %c0_i32_1 = arith.constant 0 : i32
    return %arg0, %c0_i32, %c0_i32_0 : i32, i32, i32
  }
  func.func @transform_1(%arg0: i32) -> (i32, i32) {
    %c0_i32 = arith.constant 0 : i32
    %c0_i32_0 = arith.constant 0 : i32
    %c0_i32_1 = arith.constant 0 : i32
    return %c0_i32, %c0_i32_0 : i32, i32
  }
  func.func @transform_2(%arg0: i32) -> (i32, i32) {
    %c0_i32 = arith.constant 0 : i32
    %c0_i32_0 = arith.constant 0 : i32
    %c0_i32_1 = arith.constant 0 : i32
    return %c0_i32, %c0_i32_0 : i32, i32
  }
  func.func @transform_3(%arg0: i32) -> (i32, i32) {
    %c0_i32 = arith.constant 0 : i32
    %c0_i32_0 = arith.constant 0 : i32
    %c0_i32_1 = arith.constant 0 : i32
    return %c0_i32, %c0_i32_0 : i32, i32
  }
  func.func @transform_4(%arg0: i32) -> (i32, i32) {
    %c0_i32 = arith.constant 0 : i32
    %c0_i32_0 = arith.constant 0 : i32
    %c0_i32_1 = arith.constant 0 : i32
    return %c0_i32, %c0_i32_0 : i32, i32
  }
  func.func @transform_5(%arg0: i32) -> (i32, i32) {
    %c0_i32 = arith.constant 0 : i32
    %c0_i32_0 = arith.constant 0 : i32
    %c0_i32_1 = arith.constant 0 : i32
    return %c0_i32, %c0_i32_0 : i32, i32
  }
  func.func @transform_6(%arg0: i32) -> (i32, i32) {
    %c0_i32 = arith.constant 0 : i32
    %c0_i32_0 = arith.constant 0 : i32
    %c0_i32_1 = arith.constant 0 : i32
    return %c0_i32, %c0_i32_0 : i32, i32
  }
  func.func @transform_7(%arg0: i32) -> (i32, i32) {
    %c0_i32 = arith.constant 0 : i32
    %c0_i32_0 = arith.constant 0 : i32
    %c0_i32_1 = arith.constant 0 : i32
    return %c0_i32, %c0_i32_0 : i32, i32
  }
  func.func @transform_8(%arg0: i32) -> (i32, i32) {
    %c0_i32 = arith.constant 0 : i32
    %c0_i32_0 = arith.constant 0 : i32
    %c0_i32_1 = arith.constant 0 : i32
    return %c0_i32, %c0_i32_0 : i32, i32
  }
  func.func @transform_9(%arg0: i32) -> (i32, i32) {
    %c0_i32 = arith.constant 0 : i32
    %c0_i32_0 = arith.constant 0 : i32
    %c0_i32_1 = arith.constant 0 : i32
    return %c0_i32, %c0_i32_0 : i32, i32
  }
  func.func @transform_10(%arg0: i32) -> (i32, i32) {
    %c0_i32 = arith.constant 0 : i32
    %c0_i32_0 = arith.constant 0 : i32
    %c0_i32_1 = arith.constant 0 : i32
    return %c0_i32, %c0_i32_0 : i32, i32
  }
  func.func @transform_11(%arg0: i32) -> (i32, i32) {
    %c0_i32 = arith.constant 0 : i32
    %c0_i32_0 = arith.constant 0 : i32
    %c0_i32_1 = arith.constant 0 : i32
    return %c0_i32, %c0_i32_0 : i32, i32
  }
  func.func @transform_12(%arg0: i32) -> (i32, i32) {
    %c0_i32 = arith.constant 0 : i32
    %c0_i32_0 = arith.constant 0 : i32
    %c0_i32_1 = arith.constant 0 : i32
    return %c0_i32, %c0_i32_0 : i32, i32
  }
  func.func @transform_13(%arg0: i32) -> (i32, i32) {
    %c0_i32 = arith.constant 0 : i32
    %c0_i32_0 = arith.constant 0 : i32
    %c0_i32_1 = arith.constant 0 : i32
    return %c0_i32, %c0_i32_0 : i32, i32
  }
  func.func @transform_14(%arg0: i32) -> (i32, i32) {
    %c0_i32 = arith.constant 0 : i32
    %c0_i32_0 = arith.constant 0 : i32
    %c0_i32_1 = arith.constant 0 : i32
    return %c0_i32, %c0_i32_0 : i32, i32
  }
  func.func @transform_15(%arg0: i32) -> (i32, i32) {
    %c0_i32 = arith.constant 0 : i32
    %c0_i32_0 = arith.constant 0 : i32
    %c0_i32_1 = arith.constant 0 : i32
    return %c0_i32, %c0_i32_0 : i32, i32
  }
  func.func @transform_16(%arg0: i32) -> (i32, i32) {
    %c0_i32 = arith.constant 0 : i32
    %c0_i32_0 = arith.constant 0 : i32
    %c0_i32_1 = arith.constant 0 : i32
    return %c0_i32, %c0_i32_0 : i32, i32
  }
  func.func @transform_17(%arg0: i32) -> (i32, i32) {
    %c0_i32 = arith.constant 0 : i32
    %c0_i32_0 = arith.constant 0 : i32
    %c0_i32_1 = arith.constant 0 : i32
    return %c0_i32, %c0_i32_0 : i32, i32
  }
  func.func @transform_18(%arg0: i32) -> (i32, i32) {
    %c0_i32 = arith.constant 0 : i32
    %c0_i32_0 = arith.constant 0 : i32
    %c0_i32_1 = arith.constant 0 : i32
    return %c0_i32, %c0_i32_0 : i32, i32
  }
  func.func @transform_19(%arg0: i32) -> (i32, i32) {
    %c0_i32 = arith.constant 0 : i32
    %c0_i32_0 = arith.constant 0 : i32
    %c0_i32_1 = arith.constant 0 : i32
    return %c0_i32, %c0_i32_0 : i32, i32
  }
  func.func @transform_20(%arg0: i32) -> (i32, i32, i32) {
    %c0_i32 = arith.constant 0 : i32
    %c0_i32_0 = arith.constant 0 : i32
    %c0_i32_1 = arith.constant 0 : i32
    return %arg0, %c0_i32, %c0_i32_0 : i32, i32, i32
  }
}

</mosaic_0001>

<llo_original>
// kernel: tpu_custom_call.1
$region0: #{tpu_custom_call.1}
  #allocation0 [shape = 'u32[]', space=smem, size = 0x4, offset = 0x4, fixed_abs, tag = 'smem constant byte address 0x4 - core index']
  #allocation1 [shape = 'u32[144,128]{1,0:T(1,128)}', space=vmem, size = 0x12000, scoped, tag = 'internal scratch']
  #allocation2 [shape = 'f32[256,32]{1,0:T(8,128)}', space=vmem, size = 0x20000, scoped, tag = 'scratch operand']
  %s0 = inlined_call_operand.vmem [shape: f32[2,256,8], index: 0, kind: input, shape index: {}]
  %s1 = inlined_call_operand.vmem [shape: f32[256,9], index: 1, kind: input, shape index: {}]
  %s2 = inlined_call_operand.vmem [shape: f32[1,8], index: 2, kind: input, shape index: {}]
  %s3 = inlined_call_operand.vmem [shape: f32[1,8], index: 3, kind: input, shape index: {}]
  %s4 = inlined_call_operand.vmem [shape: bf16[8,32], index: 4, kind: input, shape index: {}]
  %s5 = inlined_call_operand.vmem [shape: f32[1,32], index: 5, kind: input, shape index: {}]
  %s6 = inlined_call_operand.vmem [shape: f32[1,32], index: 6, kind: input, shape index: {}]
  %s7 = inlined_call_operand.vmem [shape: bf16[32,72], index: 7, kind: input, shape index: {}]
  %s8 = inlined_call_operand.vmem [shape: f32[1,16], index: 8, kind: input, shape index: {}]
  %s9 = inlined_call_operand.vmem [shape: f32[1,16], index: 9, kind: input, shape index: {}]
  %s10 = inlined_call_operand.vmem [shape: bf16[16,32], index: 10, kind: input, shape index: {}]
  %s11 = inlined_call_operand.vmem [shape: f32[1,32], index: 11, kind: input, shape index: {}]
  %s12 = inlined_call_operand.vmem [shape: f32[1,32], index: 12, kind: input, shape index: {}]
  %s13 = inlined_call_operand.vmem [shape: bf16[32,72], index: 13, kind: input, shape index: {}]
  %s14 = inlined_call_operand.vmem [shape: f32[1,24], index: 14, kind: input, shape index: {}]
  %s15 = inlined_call_operand.vmem [shape: f32[1,24], index: 15, kind: input, shape index: {}]
  %s16 = inlined_call_operand.vmem [shape: bf16[24,32], index: 16, kind: input, shape index: {}]
  %s17 = inlined_call_operand.vmem [shape: f32[1,32], index: 17, kind: input, shape index: {}]
  %s18 = inlined_call_operand.vmem [shape: f32[1,32], index: 18, kind: input, shape index: {}]
  %s19 = inlined_call_operand.vmem [shape: bf16[32,72], index: 19, kind: input, shape index: {}]
  %s20 = inlined_call_operand.vmem [shape: f32[2,256,32], index: 20, kind: output, shape index: {}]
  %s21 = sld [smem:[#allocation0]]
  $region113: #{tpu_custom_call.1} parent=0
    _
  %s23 = ssub.s32 1, %s21
  %s24 = scalar_select 0, %s23, %s21
  loop: start=0, step=1, limit=4
  $region2: #{tpu_custom_call.1} parent=0 // loop_pre_header
    _
  $region3: #{tpu_custom_call.1} parent=0 // loop_header
    %s26 = sphi 0, %s30
    %p27 = scmp.ge.s32.totalorder %s26, 4
    %s36 = sphi 0, %s38
    %s39 = sphi 0, %s36
    %s40 = sphi 0, %s39
    %s56 = sphi 0, %s40
    %s60 = sphi 0, %s60
    %s62 = sphi 0, %s60
    %s63 = sphi 0, %s62
    %s77 = sphi 0, %s63
    %s81 = sphi 0, %s81
    %s83 = sphi 0, %s81
    %s84 = sphi 0, %s83
    %s98 = sphi 0, %s84
    %s102 = sphi 0, %s102
    %s104 = sphi 0, %s102
    %s105 = sphi 0, %s104
    %s119 = sphi 0, %s105
    %s123 = sphi 0, %s123
    %s125 = sphi 0, %s123
    %s126 = sphi 0, %s125
    %s140 = sphi 0, %s126
    %s144 = sphi 0, %s144
    %s146 = sphi 0, %s144
    %s147 = sphi 0, %s146
    %s161 = sphi 0, %s147
    %s165 = sphi 0, %s165
    %s167 = sphi 0, %s165
    %s168 = sphi 0, %s167
    %s182 = sphi 0, %s168
    %s186 = sphi 0, %s186
    %s188 = sphi 0, %s186
    %s189 = sphi 0, %s188
    %s203 = sphi 0, %s189
    %s207 = sphi 0, %s207
    %s209 = sphi 0, %s207
    %s210 = sphi 0, %s209
    %s224 = sphi 0, %s210
    %s228 = sphi 0, %s228
    %s230 = sphi 0, %s228
    %s231 = sphi 0, %s230
    %s245 = sphi 0, %s231
    %s249 = sphi 0, %s249
    %s251 = sphi 0, %s249
    %s252 = sphi 0, %s251
    %s266 = sphi 0, %s252
    %s270 = sphi 0, %s270
    %s272 = sphi 0, %s270
    %s273 = sphi 0, %s272
    %s287 = sphi 0, %s273
    %s291 = sphi 0, %s291
    %s293 = sphi 0, %s291
    %s294 = sphi 0, %s293
    %s308 = sphi 0, %s294
    %s312 = sphi 0, %s312
    %s314 = sphi 0, %s312
    %s315 = sphi 0, %s314
    %s329 = sphi 0, %s315
    %s333 = sphi 0, %s333
    %s335 = sphi 0, %s333
    %s336 = sphi 0, %s335
    %s350 = sphi 0, %s336
    %s354 = sphi 0, %s354
    %s356 = sphi 0, %s354
    %s357 = sphi 0, %s356
    %s371 = sphi 0, %s357
    %s375 = sphi 0, %s375
    %s377 = sphi 0, %s375
    %s378 = sphi 0, %s377
    %s392 = sphi 0, %s378
    %s396 = sphi 0, %s396
    %s398 = sphi 0, %s396
    %s399 = sphi 0, %s398
    %s413 = sphi 0, %s399
    %s417 = sphi 0, %s417
    %s419 = sphi 0, %s417
    %s420 = sphi 0, %s419
    %s434 = sphi 0, %s420
    %s438 = sphi 0, %s438
    %s440 = sphi 0, %s438
    %s441 = sphi 0, %s440
    %s455 = sphi 0, %s441
    %s461 = sphi 0, %s463
    %s464 = sphi 0, %s461
    %s465 = sphi 0, %s464
    %s481 = sphi 0, %s465
  $region4: #{tpu_custom_call.1} parent=0 // loop_header_branch
    %29 = sbr.rel (%p27) target = $region8
  $region5: #{tpu_custom_call.1} parent=0 // loop_body
    %s31 = ssub.s32 %s26, 1
    %s32 = ssub.s32 %s26, 2
    %s33 = sadd.s32 %s26, 1
    %s34 = ssub.s32 %s26, %s33
    %p35 = scmp.eq.s32.totalorder %s34, 0
    %s37 = sadd.s32 %s36, 1
    %s38 = scalar_select %p35, %s36, %s37
    %p41 = pneg %p35
    %p42 = scmp.eq.s32.totalorder %s26, 1
    %p43 = por %p41, %p42
    %p44 = scmp.ne.s32.totalorder %s36, %s39
    %p45 = scmp.eq.s32.totalorder %s26, 0
    %p46 = por %p44, %p45
    %p47 = scmp.ne.s32.totalorder %s36, %s39
    %p48 = scmp.eq.s32.totalorder %s31, 1
    %p49 = por %p47, %p48
    %p50 = scmp.ne.s32.totalorder %s39, %s40
    %p51 = scmp.eq.s32.totalorder %s31, 0
    %p52 = por %p50, %p51
    %p53 = scmp.ne.s32.totalorder %s39, %s40
    %p54 = scmp.eq.s32.totalorder %s32, 1
    %p55 = por %p53, %p54
    %p57 = scmp.ne.s32.totalorder %s40, %s56
    %p58 = scmp.eq.s32.totalorder %s32, 0
    %p59 = por %p57, %p58
    %s61 = sadd.s32 %s60, 1
    %p64 = scmp.eq.s32.totalorder %s26, 1
    %p65 = scmp.ne.s32.totalorder %s60, %s62
    %p66 = scmp.eq.s32.totalorder %s26, 0
    %p67 = por %p65, %p66
    %p68 = scmp.ne.s32.totalorder %s60, %s62
    %p69 = scmp.eq.s32.totalorder %s31, 1
    %p70 = por %p68, %p69
    %p71 = scmp.ne.s32.totalorder %s62, %s63
    %p72 = scmp.eq.s32.totalorder %s31, 0
    %p73 = por %p71, %p72
    %p74 = scmp.ne.s32.totalorder %s62, %s63
    %p75 = scmp.eq.s32.totalorder %s32, 1
    %p76 = por %p74, %p75
    %p78 = scmp.ne.s32.totalorder %s63, %s77
    %p79 = scmp.eq.s32.totalorder %s32, 0
    %p80 = por %p78, %p79
    %s82 = sadd.s32 %s81, 1
    %p85 = scmp.eq.s32.totalorder %s26, 1
    %p86 = scmp.ne.s32.totalorder %s81, %s83
    %p87 = scmp.eq.s32.totalorder %s26, 0
    %p88 = por %p86, %p87
    %p89 = scmp.ne.s32.totalorder %s81, %s83
    %p90 = scmp.eq.s32.totalorder %s31, 1
    %p91 = por %p89, %p90
    %p92 = scmp.ne.s32.totalorder %s83, %s84
    %p93 = scmp.eq.s32.totalorder %s31, 0
    %p94 = por %p92, %p93
    %p95 = scmp.ne.s32.totalorder %s83, %s84
    %p96 = scmp.eq.s32.totalorder %s32, 1
    %p97 = por %p95, %p96
    %p99 = scmp.ne.s32.totalorder %s84, %s98
    %p100 = scmp.eq.s32.totalorder %s32, 0
    %p101 = por %p99, %p100
    %s103 = sadd.s32 %s102, 1
    %p106 = scmp.eq.s32.totalorder %s26, 1
    %p107 = scmp.ne.s32.totalorder %s102, %s104
    %p108 = scmp.eq.s32.totalorder %s26, 0
    %p109 = por %p107, %p108
    %p110 = scmp.ne.s32.totalorder %s102, %s104
    %p111 = scmp.eq.s32.totalorder %s31, 1
    %p112 = por %p110, %p111
    %p113 = scmp.ne.s32.totalorder %s104, %s105
    %p114 = scmp.eq.s32.totalorder %s31, 0
    %p115 = por %p113, %p114
    %p116 = scmp.ne.s32.totalorder %s104, %s105
    %p117 = scmp.eq.s32.totalorder %s32, 1
    %p118 = por %p116, %p117
    %p120 = scmp.ne.s32.totalorder %s105, %s119
    %p121 = scmp.eq.s32.totalorder %s32, 0
    %p122 = por %p120, %p121
    %s124 = sadd.s32 %s123, 1
    %p127 = scmp.eq.s32.totalorder %s26, 1
    %p128 = scmp.ne.s32.totalorder %s123, %s125
    %p129 = scmp.eq.s32.totalorder %s26, 0
    %p130 = por %p128, %p129
    %p131 = scmp.ne.s32.totalorder %s123, %s125
    %p132 = scmp.eq.s32.totalorder %s31, 1
    %p133 = por %p131, %p132
    %p134 = scmp.ne.s32.totalorder %s125, %s126
    %p135 = scmp.eq.s32.totalorder %s31, 0
    %p136 = por %p134, %p135
    %p137 = scmp.ne.s32.totalorder %s125, %s126
    %p138 = scmp.eq.s32.totalorder %s32, 1
    %p139 = por %p137, %p138
    %p141 = scmp.ne.s32.totalorder %s126, %s140
    %p142 = scmp.eq.s32.totalorder %s32, 0
    %p143 = por %p141, %p142
    %s145 = sadd.s32 %s144, 1
    %p148 = scmp.eq.s32.totalorder %s26, 1
    %p149 = scmp.ne.s32.totalorder %s144, %s146
    %p150 = scmp.eq.s32.totalorder %s26, 0
    %p151 = por %p149, %p150
    %p152 = scmp.ne.s32.totalorder %s144, %s146
    %p153 = scmp.eq.s32.totalorder %s31, 1
    %p154 = por %p152, %p153
    %p155 = scmp.ne.s32.totalorder %s146, %s147
    %p156 = scmp.eq.s32.totalorder %s31, 0
    %p157 = por %p155, %p156
    %p158 = scmp.ne.s32.totalorder %s146, %s147
    %p159 = scmp.eq.s32.totalorder %s32, 1
    %p160 = por %p158, %p159
    %p162 = scmp.ne.s32.totalorder %s147, %s161
    %p163 = scmp.eq.s32.totalorder %s32, 0
    %p164 = por %p162, %p163
    %s166 = sadd.s32 %s165, 1
    %p169 = scmp.eq.s32.totalorder %s26, 1
    %p170 = scmp.ne.s32.totalorder %s165, %s167
    %p171 = scmp.eq.s32.totalorder %s26, 0
    %p172 = por %p170, %p171
    %p173 = scmp.ne.s32.totalorder %s165, %s167
    %p174 = scmp.eq.s32.totalorder %s31, 1
    %p175 = por %p173, %p174
    %p176 = scmp.ne.s32.totalorder %s167, %s168
    %p177 = scmp.eq.s32.totalorder %s31, 0
    %p178 = por %p176, %p177
    %p179 = scmp.ne.s32.totalorder %s167, %s168
    %p180 = scmp.eq.s32.totalorder %s32, 1
    %p181 = por %p179, %p180
    %p183 = scmp.ne.s32.totalorder %s168, %s182
    %p184 = scmp.eq.s32.totalorder %s32, 0
    %p185 = por %p183, %p184
    %s187 = sadd.s32 %s186, 1
    %p190 = scmp.eq.s32.totalorder %s26, 1
    %p191 = scmp.ne.s32.totalorder %s186, %s188
    %p192 = scmp.eq.s32.totalorder %s26, 0
    %p193 = por %p191, %p192
    %p194 = scmp.ne.s32.totalorder %s186, %s188
    %p195 = scmp.eq.s32.totalorder %s31, 1
    %p196 = por %p194, %p195
    %p197 = scmp.ne.s32.totalorder %s188, %s189
    %p198 = scmp.eq.s32.totalorder %s31, 0
    %p199 = por %p197, %p198
    %p200 = scmp.ne.s32.totalorder %s188, %s189
    %p201 = scmp.eq.s32.totalorder %s32, 1
    %p202 = por %p200, %p201
    %p204 = scmp.ne.s32.totalorder %s189, %s203
    %p205 = scmp.eq.s32.totalorder %s32, 0
    %p206 = por %p204, %p205
    %s208 = sadd.s32 %s207, 1
    %p211 = scmp.eq.s32.totalorder %s26, 1
    %p212 = scmp.ne.s32.totalorder %s207, %s209
    %p213 = scmp.eq.s32.totalorder %s26, 0
    %p214 = por %p212, %p213
    %p215 = scmp.ne.s32.totalorder %s207, %s209
    %p216 = scmp.eq.s32.totalorder %s31, 1
    %p217 = por %p215, %p216
    %p218 = scmp.ne.s32.totalorder %s209, %s210
    %p219 = scmp.eq.s32.totalorder %s31, 0
    %p220 = por %p218, %p219
    %p221 = scmp.ne.s32.totalorder %s209, %s210
    %p222 = scmp.eq.s32.totalorder %s32, 1
    %p223 = por %p221, %p222
    %p225 = scmp.ne.s32.totalorder %s210, %s224
    %p226 = scmp.eq.s32.totalorder %s32, 0
    %p227 = por %p225, %p226
    %s229 = sadd.s32 %s228, 1
    %p232 = scmp.eq.s32.totalorder %s26, 1
    %p233 = scmp.ne.s32.totalorder %s228, %s230
    %p234 = scmp.eq.s32.totalorder %s26, 0
    %p235 = por %p233, %p234
    %p236 = scmp.ne.s32.totalorder %s228, %s230
    %p237 = scmp.eq.s32.totalorder %s31, 1
    %p238 = por %p236, %p237
    %p239 = scmp.ne.s32.totalorder %s230, %s231
    %p240 = scmp.eq.s32.totalorder %s31, 0
    %p241 = por %p239, %p240
    %p242 = scmp.ne.s32.totalorder %s230, %s231
    %p243 = scmp.eq.s32.totalorder %s32, 1
    %p244 = por %p242, %p243
    %p246 = scmp.ne.s32.totalorder %s231, %s245
    %p247 = scmp.eq.s32.totalorder %s32, 0
    %p248 = por %p246, %p247
    %s250 = sadd.s32 %s249, 1
    %p253 = scmp.eq.s32.totalorder %s26, 1
    %p254 = scmp.ne.s32.totalorder %s249, %s251
    %p255 = scmp.eq.s32.totalorder %s26, 0
    %p256 = por %p254, %p255
    %p257 = scmp.ne.s32.totalorder %s249, %s251
    %p258 = scmp.eq.s32.totalorder %s31, 1
    %p259 = por %p257, %p258
    %p260 = scmp.ne.s32.totalorder %s251, %s252
    %p261 = scmp.eq.s32.totalorder %s31, 0
    %p262 = por %p260, %p261
    %p263 = scmp.ne.s32.totalorder %s251, %s252
    %p264 = scmp.eq.s32.totalorder %s32, 1
    %p265 = por %p263, %p264
    %p267 = scmp.ne.s32.totalorder %s252, %s266
    %p268 = scmp.eq.s32.totalorder %s32, 0
    %p269 = por %p267, %p268
    %s271 = sadd.s32 %s270, 1
    %p274 = scmp.eq.s32.totalorder %s26, 1
    %p275 = scmp.ne.s32.totalorder %s270, %s272
    %p276 = scmp.eq.s32.totalorder %s26, 0
    %p277 = por %p275, %p276
    %p278 = scmp.ne.s32.totalorder %s270, %s272
    %p279 = scmp.eq.s32.totalorder %s31, 1
    %p280 = por %p278, %p279
    %p281 = scmp.ne.s32.totalorder %s272, %s273
    %p282 = scmp.eq.s32.totalorder %s31, 0
    %p283 = por %p281, %p282
    %p284 = scmp.ne.s32.totalorder %s272, %s273
    %p285 = scmp.eq.s32.totalorder %s32, 1
    %p286 = por %p284, %p285
    %p288 = scmp.ne.s32.totalorder %s273, %s287
    %p289 = scmp.eq.s32.totalorder %s32, 0
    %p290 = por %p288, %p289
    %s292 = sadd.s32 %s291, 1
    %p295 = scmp.eq.s32.totalorder %s26, 1
    %p296 = scmp.ne.s32.totalorder %s291, %s293
    %p297 = scmp.eq.s32.totalorder %s26, 0
    %p298 = por %p296, %p297
    %p299 = scmp.ne.s32.totalorder %s291, %s293
    %p300 = scmp.eq.s32.totalorder %s31, 1
    %p301 = por %p299, %p300
    %p302 = scmp.ne.s32.totalorder %s293, %s294
    %p303 = scmp.eq.s32.totalorder %s31, 0
    %p304 = por %p302, %p303
    %p305 = scmp.ne.s32.totalorder %s293, %s294
    %p306 = scmp.eq.s32.totalorder %s32, 1
    %p307 = por %p305, %p306
    %p309 = scmp.ne.s32.totalorder %s294, %s308
    %p310 = scmp.eq.s32.totalorder %s32, 0
    %p311 = por %p309, %p310
    %s313 = sadd.s32 %s312, 1
    %p316 = scmp.eq.s32.totalorder %s26, 1
    %p317 = scmp.ne.s32.totalorder %s312, %s314
    %p318 = scmp.eq.s32.totalorder %s26, 0
    %p319 = por %p317, %p318
    %p320 = scmp.ne.s32.totalorder %s312, %s314
    %p321 = scmp.eq.s32.totalorder %s31, 1
    %p322 = por %p320, %p321
    %p323 = scmp.ne.s32.totalorder %s314, %s315
    %p324 = scmp.eq.s32.totalorder %s31, 0
    %p325 = por %p323, %p324
    %p326 = scmp.ne.s32.totalorder %s314, %s315
    %p327 = scmp.eq.s32.totalorder %s32, 1
    %p328 = por %p326, %p327
    %p330 = scmp.ne.s32.totalorder %s315, %s329
    %p331 = scmp.eq.s32.totalorder %s32, 0
    %p332 = por %p330, %p331
    %s334 = sadd.s32 %s333, 1
    %p337 = scmp.eq.s32.totalorder %s26, 1
    %p338 = scmp.ne.s32.totalorder %s333, %s335
    %p339 = scmp.eq.s32.totalorder %s26, 0
    %p340 = por %p338, %p339
    %p341 = scmp.ne.s32.totalorder %s333, %s335
    %p342 = scmp.eq.s32.totalorder %s31, 1
    %p343 = por %p341, %p342
    %p344 = scmp.ne.s32.totalorder %s335, %s336
    %p345 = scmp.eq.s32.totalorder %s31, 0
    %p346 = por %p344, %p345
    %p347 = scmp.ne.s32.totalorder %s335, %s336
    %p348 = scmp.eq.s32.totalorder %s32, 1
    %p349 = por %p347, %p348
    %p351 = scmp.ne.s32.totalorder %s336, %s350
    %p352 = scmp.eq.s32.totalorder %s32, 0
    %p353 = por %p351, %p352
    %s355 = sadd.s32 %s354, 1
    %p358 = scmp.eq.s32.totalorder %s26, 1
    %p359 = scmp.ne.s32.totalorder %s354, %s356
    %p360 = scmp.eq.s32.totalorder %s26, 0
    %p361 = por %p359, %p360
    %p362 = scmp.ne.s32.totalorder %s354, %s356
    %p363 = scmp.eq.s32.totalorder %s31, 1
    %p364 = por %p362, %p363
    %p365 = scmp.ne.s32.totalorder %s356, %s357
    %p366 = scmp.eq.s32.totalorder %s31, 0
    %p367 = por %p365, %p366
    %p368 = scmp.ne.s32.totalorder %s356, %s357
    %p369 = scmp.eq.s32.totalorder %s32, 1
    %p370 = por %p368, %p369
    %p372 = scmp.ne.s32.totalorder %s357, %s371
    %p373 = scmp.eq.s32.totalorder %s32, 0
    %p374 = por %p372, %p373
    %s376 = sadd.s32 %s375, 1
    %p379 = scmp.eq.s32.totalorder %s26, 1
    %p380 = scmp.ne.s32.totalorder %s375, %s377
    %p381 = scmp.eq.s32.totalorder %s26, 0
    %p382 = por %p380, %p381
    %p383 = scmp.ne.s32.totalorder %s375, %s377
    %p384 = scmp.eq.s32.totalorder %s31, 1
    %p385 = por %p383, %p384
    %p386 = scmp.ne.s32.totalorder %s377, %s378
    %p387 = scmp.eq.s32.totalorder %s31, 0
    %p388 = por %p386, %p387
    %p389 = scmp.ne.s32.totalorder %s377, %s378
    %p390 = scmp.eq.s32.totalorder %s32, 1
    %p391 = por %p389, %p390
    %p393 = scmp.ne.s32.totalorder %s378, %s392
    %p394 = scmp.eq.s32.totalorder %s32, 0
    %p395 = por %p393, %p394
    %s397 = sadd.s32 %s396, 1
    %p400 = scmp.eq.s32.totalorder %s26, 1
    %p401 = scmp.ne.s32.totalorder %s396, %s398
    %p402 = scmp.eq.s32.totalorder %s26, 0
    %p403 = por %p401, %p402
    %p404 = scmp.ne.s32.totalorder %s396, %s398
    %p405 = scmp.eq.s32.totalorder %s31, 1
    %p406 = por %p404, %p405
    %p407 = scmp.ne.s32.totalorder %s398, %s399
    %p408 = scmp.eq.s32.totalorder %s31, 0
    %p409 = por %p407, %p408
    %p410 = scmp.ne.s32.totalorder %s398, %s399
    %p411 = scmp.eq.s32.totalorder %s32, 1
    %p412 = por %p410, %p411
    %p414 = scmp.ne.s32.totalorder %s399, %s413
    %p415 = scmp.eq.s32.totalorder %s32, 0
    %p416 = por %p414, %p415
    %s418 = sadd.s32 %s417, 1
    %p421 = scmp.eq.s32.totalorder %s26, 1
    %p422 = scmp.ne.s32.totalorder %s417, %s419
    %p423 = scmp.eq.s32.totalorder %s26, 0
    %p424 = por %p422, %p423
    %p425 = scmp.ne.s32.totalorder %s417, %s419
    %p426 = scmp.eq.s32.totalorder %s31, 1
    %p427 = por %p425, %p426
    %p428 = scmp.ne.s32.totalorder %s419, %s420
    %p429 = scmp.eq.s32.totalorder %s31, 0
    %p430 = por %p428, %p429
    %p431 = scmp.ne.s32.totalorder %s419, %s420
    %p432 = scmp.eq.s32.totalorder %s32, 1
    %p433 = por %p431, %p432
    %p435 = scmp.ne.s32.totalorder %s420, %s434
    %p436 = scmp.eq.s32.totalorder %s32, 0
    %p437 = por %p435, %p436
    %s439 = sadd.s32 %s438, 1
    %p442 = scmp.eq.s32.totalorder %s26, 1
    %p443 = scmp.ne.s32.totalorder %s438, %s440
    %p444 = scmp.eq.s32.totalorder %s26, 0
    %p445 = por %p443, %p444
    %p446 = scmp.ne.s32.totalorder %s438, %s440
    %p447 = scmp.eq.s32.totalorder %s31, 1
    %p448 = por %p446, %p447
    %p449 = scmp.ne.s32.totalorder %s440, %s441
    %p450 = scmp.eq.s32.totalorder %s31, 0
    %p451 = por %p449, %p450
    %p452 = scmp.ne.s32.totalorder %s440, %s441
    %p453 = scmp.eq.s32.totalorder %s32, 1
    %p454 = por %p452, %p453
    %p456 = scmp.ne.s32.totalorder %s441, %s455
    %p457 = scmp.eq.s32.totalorder %s32, 0
    %p458 = por %p456, %p457
    %s459 = ssub.s32 %s26, %s33
    %p460 = scmp.eq.s32.totalorder %s459, 0
    %s462 = sadd.s32 %s461, 1
    %s463 = scalar_select %p460, %s461, %s462
    %p466 = pneg %p460
    %p467 = scmp.eq.s32.totalorder %s26, 1
    %p468 = por %p466, %p467
    %p469 = scmp.ne.s32.totalorder %s461, %s464
    %p470 = scmp.eq.s32.totalorder %s26, 0
    %p471 = por %p469, %p470
    %p472 = scmp.ne.s32.totalorder %s461, %s464
    %p473 = scmp.eq.s32.totalorder %s31, 1
    %p474 = por %p472, %p473
    %p475 = scmp.ne.s32.totalorder %s464, %s465
    %p476 = scmp.eq.s32.totalorder %s31, 0
    %p477 = por %p475, %p476
    %p478 = scmp.ne.s32.totalorder %s464, %s465
    %p479 = scmp.eq.s32.totalorder %s32, 1
    %p480 = por %p478, %p479
    %p482 = scmp.ne.s32.totalorder %s465, %s481
    %p483 = scmp.eq.s32.totalorder %s32, 0
    %p484 = por %p482, %p483
    %p485 = scmp.le.s32.totalorder 1, %s26
    %p486 = scmp.lt.s32.totalorder %s26, 3
    %p487 = pnand %p485, %p486
    %p488 = pneg %p487
    // Predicated region
    $region9: #{tpu_custom_call.1} parent=5 // pred_check
      _
    $region10: #{tpu_custom_call.1} parent=5 // pred_check_branch
      %490 = sbr.rel (%p487) target = $region12
    $region11: #{tpu_custom_call.1} parent=5 // pred_region
      %s491 = ssub.s32 %s26, 1
      // Predicated region
      $region13: #{tpu_custom_call.1} parent=11 // pred_check
        %p492 = pneg %p73
      $region14: #{tpu_custom_call.1} parent=11 // pred_check_branch
        %494 = sbr.rel (%p492) target = $region16
      $region15: #{tpu_custom_call.1} parent=11 // pred_region
        _
      $region16: #{tpu_custom_call.1} parent=11 // pred_fallthru
        _
      // Predicated region
      $region17: #{tpu_custom_call.1} parent=11 // pred_check
        %p495 = pneg %p94
      $region18: #{tpu_custom_call.1} parent=11 // pred_check_branch
        %497 = sbr.rel (%p495) target = $region20
      $region19: #{tpu_custom_call.1} parent=11 // pred_region
        _
      $region20: #{tpu_custom_call.1} parent=11 // pred_fallthru
        _
      // Predicated region
      $region21: #{tpu_custom_call.1} parent=11 // pred_check
        %p498 = pneg %p115
      $region22: #{tpu_custom_call.1} parent=11 // pred_check_branch
        %500 = sbr.rel (%p498) target = $region24
      $region23: #{tpu_custom_call.1} parent=11 // pred_region
        _
      $region24: #{tpu_custom_call.1} parent=11 // pred_fallthru
        _
      // Predicated region
      $region25: #{tpu_custom_call.1} parent=11 // pred_check
        %p501 = pneg %p136
      $region26: #{tpu_custom_call.1} parent=11 // pred_check_branch
        %503 = sbr.rel (%p501) target = $region28
      $region27: #{tpu_custom_call.1} parent=11 // pred_region
        _
      $region28: #{tpu_custom_call.1} parent=11 // pred_fallthru
        _
      // Predicated region
      $region29: #{tpu_custom_call.1} parent=11 // pred_check
        %p504 = pneg %p157
      $region30: #{tpu_custom_call.1} parent=11 // pred_check_branch
        %506 = sbr.rel (%p504) target = $region32
      $region31: #{tpu_custom_call.1} parent=11 // pred_region
        _
      $region32: #{tpu_custom_call.1} parent=11 // pred_fallthru
        _
      // Predicated region
      $region33: #{tpu_custom_call.1} parent=11 // pred_check
        %p507 = pneg %p178
      $region34: #{tpu_custom_call.1} parent=11 // pred_check_branch
        %509 = sbr.rel (%p507) target = $region36
      $region35: #{tpu_custom_call.1} parent=11 // pred_region
        _
      $region36: #{tpu_custom_call.1} parent=11 // pred_fallthru
        _
      // Predicated region
      $region37: #{tpu_custom_call.1} parent=11 // pred_check
        %p510 = pneg %p199
      $region38: #{tpu_custom_call.1} parent=11 // pred_check_branch
        %512 = sbr.rel (%p510) target = $region40
      $region39: #{tpu_custom_call.1} parent=11 // pred_region
        _
      $region40: #{tpu_custom_call.1} parent=11 // pred_fallthru
        _
      // Predicated region
      $region41: #{tpu_custom_call.1} parent=11 // pred_check
        %p513 = pneg %p220
      $region42: #{tpu_custom_call.1} parent=11 // pred_check_branch
        %515 = sbr.rel (%p513) target = $region44
      $region43: #{tpu_custom_call.1} parent=11 // pred_region
        _
      $region44: #{tpu_custom_call.1} parent=11 // pred_fallthru
        _
      // Predicated region
      $region45: #{tpu_custom_call.1} parent=11 // pred_check
        %p516 = pneg %p241
      $region46: #{tpu_custom_call.1} parent=11 // pred_check_branch
        %518 = sbr.rel (%p516) target = $region48
      $region47: #{tpu_custom_call.1} parent=11 // pred_region
        _
      $region48: #{tpu_custom_call.1} parent=11 // pred_fallthru
        _
      // Predicated region
      $region49: #{tpu_custom_call.1} parent=11 // pred_check
        %p519 = pneg %p262
      $region50: #{tpu_custom_call.1} parent=11 // pred_check_branch
        %521 = sbr.rel (%p519) target = $region52
      $region51: #{tpu_custom_call.1} parent=11 // pred_region
        _
      $region52: #{tpu_custom_call.1} parent=11 // pred_fallthru
        _
      // Predicated region
      $region53: #{tpu_custom_call.1} parent=11 // pred_check
        %p522 = pneg %p283
      $region54: #{tpu_custom_call.1} parent=11 // pred_check_branch
        %524 = sbr.rel (%p522) target = $region56
      $region55: #{tpu_custom_call.1} parent=11 // pred_region
        _
      $region56: #{tpu_custom_call.1} parent=11 // pred_fallthru
        _
      // Predicated region
      $region57: #{tpu_custom_call.1} parent=11 // pred_check
        %p525 = pneg %p304
      $region58: #{tpu_custom_call.1} parent=11 // pred_check_branch
        %527 = sbr.rel (%p525) target = $region60
      $region59: #{tpu_custom_call.1} parent=11 // pred_region
        _
      $region60: #{tpu_custom_call.1} parent=11 // pred_fallthru
        _
      // Predicated region
      $region61: #{tpu_custom_call.1} parent=11 // pred_check
        %p528 = pneg %p325
      $region62: #{tpu_custom_call.1} parent=11 // pred_check_branch
        %530 = sbr.rel (%p528) target = $region64
      $region63: #{tpu_custom_call.1} parent=11 // pred_region
        _
      $region64: #{tpu_custom_call.1} parent=11 // pred_fallthru
        _
      // Predicated region
      $region65: #{tpu_custom_call.1} parent=11 // pred_check
        %p531 = pneg %p346
      $region66: #{tpu_custom_call.1} parent=11 // pred_check_branch
        %533 = sbr.rel (%p531) target = $region68
      $region67: #{tpu_custom_call.1} parent=11 // pred_region
        _
      $region68: #{tpu_custom_call.1} parent=11 // pred_fallthru
        _
      // Predicated region
      $region69: #{tpu_custom_call.1} parent=11 // pred_check
        %p534 = pneg %p367
      $region70: #{tpu_custom_call.1} parent=11 // pred_check_branch
        %536 = sbr.rel (%p534) target = $region72
      $region71: #{tpu_custom_call.1} parent=11 // pred_region
        _
      $region72: #{tpu_custom_call.1} parent=11 // pred_fallthru
        _
      // Predicated region
      $region73: #{tpu_custom_call.1} parent=11 // pred_check
        %p537 = pneg %p388
      $region74: #{tpu_custom_call.1} parent=11 // pred_check_branch
        %539 = sbr.rel (%p537) target = $region76
      $region75: #{tpu_custom_call.1} parent=11 // pred_region
        _
      $region76: #{tpu_custom_call.1} parent=11 // pred_fallthru
        _
      // Predicated region
      $region77: #{tpu_custom_call.1} parent=11 // pred_check
        %p540 = pneg %p409
      $region78: #{tpu_custom_call.1} parent=11 // pred_check_branch
        %542 = sbr.rel (%p540) target = $region80
      $region79: #{tpu_custom_call.1} parent=11 // pred_region
        _
      $region80: #{tpu_custom_call.1} parent=11 // pred_fallthru
        _
      // Predicated region
      $region81: #{tpu_custom_call.1} parent=11 // pred_check
        %p543 = pneg %p430
      $region82: #{tpu_custom_call.1} parent=11 // pred_check_branch
        %545 = sbr.rel (%p543) target = $region84
      $region83: #{tpu_custom_call.1} parent=11 // pred_region
        _
      $region84: #{tpu_custom_call.1} parent=11 // pred_fallthru
        _
      // Predicated region
      $region85: #{tpu_custom_call.1} parent=11 // pred_check
        %p546 = pneg %p451
      $region86: #{tpu_custom_call.1} parent=11 // pred_check_branch
        %548 = sbr.rel (%p546) target = $region88
      $region87: #{tpu_custom_call.1} parent=11 // pred_region
        _
      $region88: #{tpu_custom_call.1} parent=11 // pred_fallthru
        _
    $region12: #{tpu_custom_call.1} parent=5 // pred_fallthru
      _
    %p549 = scmp.lt.s32.totalorder %s26, 2
    // Predicated region
    $region89: #{tpu_custom_call.1} parent=5 // pred_check
      %p550 = pneg %p549
    $region90: #{tpu_custom_call.1} parent=5 // pred_check_branch
      %552 = sbr.rel (%p550) target = $region92
    $region91: #{tpu_custom_call.1} parent=5 // pred_region
      // Predicated region
      $region93: #{tpu_custom_call.1} parent=91 // pred_check
        %p553 = pneg %p46
      $region94: #{tpu_custom_call.1} parent=91 // pred_check_branch
        %555 = sbr.rel (%p553) target = $region96
      $region95: #{tpu_custom_call.1} parent=91 // pred_region
        %p556 = scmp.lt.s32.totalorder %s26, 1
        %s557 = scalar_select %p556, %s26, 1
        %s558 = smul.addr %s557, 32
        %s559 = smul.addr %s558, 8
        %s560 = scalar_lea.vmem %s0, %s559
      $region96: #{tpu_custom_call.1} parent=91 // pred_fallthru
        _
    $region92: #{tpu_custom_call.1} parent=5 // pred_fallthru
      _
    %p561 = scmp.le.s32.totalorder 1, %s26
    %p562 = scmp.lt.s32.totalorder %s26, 3
    %p563 = pnand %p561, %p562
    %p564 = pneg %p563
    // Predicated region
    $region97: #{tpu_custom_call.1} parent=5 // pred_check
      _
    $region98: #{tpu_custom_call.1} parent=5 // pred_check_branch
      %566 = sbr.rel (%p563) target = $region100
    $region99: #{tpu_custom_call.1} parent=5 // pred_region
      %s567 = ssub.s32 %s26, 1
      %p568 = scmp.lt.s32.totalorder %s31, 1
      %s569 = scalar_select %p568, %s31, 1
      %s570 = smul.addr %s569, 32
      %s571 = smul.addr %s570, 8
      %s572 = scalar_lea.vmem %s0, %s571
      %p573 = pneg %p52
      %p574 = pneg %p49
      %p575 = pneg %p73
      %p576 = pneg %p70
      %p577 = pneg %p94
      %p578 = pneg %p91
      %p579 = pneg %p115
      %p580 = pneg %p112
      %p581 = pneg %p136
      %p582 = pneg %p133
      %p583 = pneg %p157
      %p584 = pneg %p154
      %p585 = pneg %p178
      %p586 = pneg %p175
      %p587 = pneg %p199
      %p588 = pneg %p196
      %p589 = pneg %p220
      %p590 = pneg %p217
      %p591 = pneg %p241
      %p592 = pneg %p238
      %p593 = pneg %p262
      %p594 = pneg %p259
      %p595 = pneg %p283
      %p596 = pneg %p280
      %p597 = pneg %p304
      %p598 = pneg %p301
      %p599 = pneg %p325
      %p600 = pneg %p322
      %p601 = pneg %p346
      %p602 = pneg %p343
      %p603 = pneg %p367
      %p604 = pneg %p364
      %p605 = pneg %p388
      %p606 = pneg %p385
      %p607 = pneg %p409
      %p608 = pneg %p406
      %p609 = pneg %p430
      %p610 = pneg %p427
      %p611 = pneg %p451
      %p612 = pneg %p448
      %p613 = pneg %p477
      %p614 = pneg %p474
      %p615 = scmp.lt.s32.totalorder %s31, 1
      %s616 = scalar_select %p615, %s31, 1
      %s617 = smul.addr %s616, 32
      %s618 = smul.addr %s617, 8
      %s619 = scalar_lea.vmem %s20, %s618
      %p620 = scmp.lt.s32.totalorder %s31, 1
      %s621 = scalar_select %p620, %s31, 1
      %s622 = smul.addr %s621, 32
      %s623 = smul.addr %s622, 8
      %s624 = scalar_lea.vmem %s0, %s623
      %p625 = scmp.lt.s32.totalorder %s31, 1
      %s626 = scalar_select %p625, %s31, 1
      %s627 = smul.addr %s626, 32
      %s628 = smul.addr %s627, 8
      %s629 = scalar_lea.vmem %s20, %s628
      %v631 = vld [vmem:[%s624] sm:$0xff]
      %v632 = vld [vmem:[%s624 + $0x8] sm:$0xff]
      %v633 = vld [vmem:[%s624 + $0x10] sm:$0xff]
      %v634 = vld [vmem:[%s624 + $0x18] sm:$0xff]
      %v635 = vld [vmem:[%s624 + $0x20] sm:$0xff]
      %v636 = vld [vmem:[%s624 + $0x28] sm:$0xff]
      %v637 = vld [vmem:[%s624 + $0x30] sm:$0xff]
      %v638 = vld [vmem:[%s624 + $0x38] sm:$0xff]
      %v639 = vld [vmem:[%s624 + $0x40] sm:$0xff]
      %v640 = vld [vmem:[%s624 + $0x48] sm:$0xff]
      %v641 = vld [vmem:[%s624 + $0x50] sm:$0xff]
      %v642 = vld [vmem:[%s624 + $0x58] sm:$0xff]
      %v643 = vld [vmem:[%s624 + $0x60] sm:$0xff]
      %v644 = vld [vmem:[%s624 + $0x68] sm:$0xff]
      %v645 = vld [vmem:[%s624 + $0x70] sm:$0xff]
      %v646 = vld [vmem:[%s624 + $0x78] sm:$0xff]
      %v647 = vld [vmem:[%s624 + $0x80] sm:$0xff]
      %v648 = vld [vmem:[%s624 + $0x88] sm:$0xff]
      %v649 = vld [vmem:[%s624 + $0x90] sm:$0xff]
      %v650 = vld [vmem:[%s624 + $0x98] sm:$0xff]
      %v651 = vld [vmem:[%s624 + $0xa0] sm:$0xff]
      %v652 = vld [vmem:[%s624 + $0xa8] sm:$0xff]
      %v653 = vld [vmem:[%s624 + $0xb0] sm:$0xff]
      %v654 = vld [vmem:[%s624 + $0xb8] sm:$0xff]
      %v655 = vld [vmem:[%s624 + $0xc0] sm:$0xff]
      %v656 = vld [vmem:[%s624 + $0xc8] sm:$0xff]
      %v657 = vld [vmem:[%s624 + $0xd0] sm:$0xff]
      %v658 = vld [vmem:[%s624 + $0xd8] sm:$0xff]
      %v659 = vld [vmem:[%s624 + $0xe0] sm:$0xff]
      %v660 = vld [vmem:[%s624 + $0xe8] sm:$0xff]
      %v661 = vld [vmem:[%s624 + $0xf0] sm:$0xff]
      %v662 = vld [vmem:[%s624 + $0xf8] sm:$0xff]
      %vm663 = vcmask 64512
      %664 = vst.msk [vmem:[#allocation2] sm:$0xff] %vm663, %v631
      %665 = vst.msk [vmem:[#allocation2 + $0x8] sm:$0xff] %vm663, %v632
      %666 = vst.msk [vmem:[#allocation2 + $0x10] sm:$0xff] %vm663, %v633
      %667 = vst.msk [vmem:[#allocation2 + $0x18] sm:$0xff] %vm663, %v634
      %668 = vst.msk [vmem:[#allocation2 + $0x20] sm:$0xff] %vm663, %v635
      %669 = vst.msk [vmem:[#allocation2 + $0x28] sm:$0xff] %vm663, %v636
      %670 = vst.msk [vmem:[#allocation2 + $0x30] sm:$0xff] %vm663, %v637
      %671 = vst.msk [vmem:[#allocation2 + $0x38] sm:$0xff] %vm663, %v638
      %672 = vst.msk [vmem:[#allocation2 + $0x40] sm:$0xff] %vm663, %v639
      %673 = vst.msk [vmem:[#allocation2 + $0x48] sm:$0xff] %vm663, %v640
      %674 = vst.msk [vmem:[#allocation2 + $0x50] sm:$0xff] %vm663, %v641
      %675 = vst.msk [vmem:[#allocation2 + $0x58] sm:$0xff] %vm663, %v642
      %676 = vst.msk [vmem:[#allocation2 + $0x60] sm:$0xff] %vm663, %v643
      %677 = vst.msk [vmem:[#allocation2 + $0x68] sm:$0xff] %vm663, %v644
      %678 = vst.msk [vmem:[#allocation2 + $0x70] sm:$0xff] %vm663, %v645
      %679 = vst.msk [vmem:[#allocation2 + $0x78] sm:$0xff] %vm663, %v646
      %680 = vst.msk [vmem:[#allocation2 + $0x80] sm:$0xff] %vm663, %v647
      %681 = vst.msk [vmem:[#allocation2 + $0x88] sm:$0xff] %vm663, %v648
      %682 = vst.msk [vmem:[#allocation2 + $0x90] sm:$0xff] %vm663, %v649
      %683 = vst.msk [vmem:[#allocation2 + $0x98] sm:$0xff] %vm663, %v650
      %684 = vst.msk [vmem:[#allocation2 + $0xa0] sm:$0xff] %vm663, %v651
      %685 = vst.msk [vmem:[#allocation2 + $0xa8] sm:$0xff] %vm663, %v652
      %686 = vst.msk [vmem:[#allocation2 + $0xb0] sm:$0xff] %vm663, %v653
      %687 = vst.msk [vmem:[#allocation2 + $0xb8] sm:$0xff] %vm663, %v654
      %688 = vst.msk [vmem:[#allocation2 + $0xc0] sm:$0xff] %vm663, %v655
      %689 = vst.msk [vmem:[#allocation2 + $0xc8] sm:$0xff] %vm663, %v656
      %690 = vst.msk [vmem:[#allocation2 + $0xd0] sm:$0xff] %vm663, %v657
      %691 = vst.msk [vmem:[#allocation2 + $0xd8] sm:$0xff] %vm663, %v658
      %692 = vst.msk [vmem:[#allocation2 + $0xe0] sm:$0xff] %vm663, %v659
      %693 = vst.msk [vmem:[#allocation2 + $0xe8] sm:$0xff] %vm663, %v660
      %694 = vst.msk [vmem:[#allocation2 + $0xf0] sm:$0xff] %vm663, %v661
      %695 = vst.msk [vmem:[#allocation2 + $0xf8] sm:$0xff] %vm663, %v662
      %v696 = vld [vmem:[%s1] sm:$0xff]
      %v697 = vld [vmem:[%s1 + $0x8] sm:$0xff]
      %v698 = vld [vmem:[%s1 + $0x10] sm:$0xff]
      %v699 = vld [vmem:[%s1 + $0x18] sm:$0xff]
      %v700 = vld [vmem:[%s1 + $0x20] sm:$0xff]
      %v701 = vld [vmem:[%s1 + $0x28] sm:$0xff]
      %v702 = vld [vmem:[%s1 + $0x30] sm:$0xff]
      %v703 = vld [vmem:[%s1 + $0x38] sm:$0xff]
      %v704 = vld [vmem:[%s1 + $0x40] sm:$0xff]
      %v705 = vld [vmem:[%s1 + $0x48] sm:$0xff]
      %v706 = vld [vmem:[%s1 + $0x50] sm:$0xff]
      %v707 = vld [vmem:[%s1 + $0x58] sm:$0xff]
      %v708 = vld [vmem:[%s1 + $0x60] sm:$0xff]
      %v709 = vld [vmem:[%s1 + $0x68] sm:$0xff]
      %v710 = vld [vmem:[%s1 + $0x70] sm:$0xff]
      %v711 = vld [vmem:[%s1 + $0x78] sm:$0xff]
      %v712 = vld [vmem:[%s1 + $0x80] sm:$0xff]
      %v713 = vld [vmem:[%s1 + $0x88] sm:$0xff]
      %v714 = vld [vmem:[%s1 + $0x90] sm:$0xff]
      %v715 = vld [vmem:[%s1 + $0x98] sm:$0xff]
      %v716 = vld [vmem:[%s1 + $0xa0] sm:$0xff]
      %v717 = vld [vmem:[%s1 + $0xa8] sm:$0xff]
      %v718 = vld [vmem:[%s1 + $0xb0] sm:$0xff]
      %v719 = vld [vmem:[%s1 + $0xb8] sm:$0xff]
      %v720 = vld [vmem:[%s1 + $0xc0] sm:$0xff]
      %v721 = vld [vmem:[%s1 + $0xc8] sm:$0xff]
      %v722 = vld [vmem:[%s1 + $0xd0] sm:$0xff]
      %v723 = vld [vmem:[%s1 + $0xd8] sm:$0xff]
      %v724 = vld [vmem:[%s1 + $0xe0] sm:$0xff]
      %v725 = vld [vmem:[%s1 + $0xe8] sm:$0xff]
      %v726 = vld [vmem:[%s1 + $0xf0] sm:$0xff]
      %v727 = vld [vmem:[%s1 + $0xf8] sm:$0xff]
      %v728 = vld [vmem:[#allocation2] sm:$0xff]
      %v729 = vld [vmem:[#allocation2 + $0x8] sm:$0xff]
      %v730 = vld [vmem:[#allocation2 + $0x10] sm:$0xff]
      %v731 = vld [vmem:[#allocation2 + $0x18] sm:$0xff]
      %v732 = vld [vmem:[#allocation2 + $0x20] sm:$0xff]
      %v733 = vld [vmem:[#allocation2 + $0x28] sm:$0xff]
      %v734 = vld [vmem:[#allocation2 + $0x30] sm:$0xff]
      %v735 = vld [vmem:[#allocation2 + $0x38] sm:$0xff]
      %v736 = vld [vmem:[#allocation2 + $0x40] sm:$0xff]
      %v737 = vld [vmem:[#allocation2 + $0x48] sm:$0xff]
      %v738 = vld [vmem:[#allocation2 + $0x50] sm:$0xff]
      %v739 = vld [vmem:[#allocation2 + $0x58] sm:$0xff]
      %v740 = vld [vmem:[#allocation2 + $0x60] sm:$0xff]
      %v741 = vld [vmem:[#allocation2 + $0x68] sm:$0xff]
      %v742 = vld [vmem:[#allocation2 + $0x70] sm:$0xff]
      %v743 = vld [vmem:[#allocation2 + $0x78] sm:$0xff]
      %v744 = vld [vmem:[#allocation2 + $0x80] sm:$0xff]
      %v745 = vld [vmem:[#allocation2 + $0x88] sm:$0xff]
      %v746 = vld [vmem:[#allocation2 + $0x90] sm:$0xff]
      %v747 = vld [vmem:[#allocation2 + $0x98] sm:$0xff]
      %v748 = vld [vmem:[#allocation2 + $0xa0] sm:$0xff]
      %v749 = vld [vmem:[#allocation2 + $0xa8] sm:$0xff]
      %v750 = vld [vmem:[#allocation2 + $0xb0] sm:$0xff]
      %v751 = vld [vmem:[#allocation2 + $0xb8] sm:$0xff]
      %v752 = vld [vmem:[#allocation2 + $0xc0] sm:$0xff]
      %v753 = vld [vmem:[#allocation2 + $0xc8] sm:$0xff]
      %v754 = vld [vmem:[#allocation2 + $0xd0] sm:$0xff]
      %v755 = vld [vmem:[#allocation2 + $0xd8] sm:$0xff]
      %v756 = vld [vmem:[#allocation2 + $0xe0] sm:$0xff]
      %v757 = vld [vmem:[#allocation2 + $0xe8] sm:$0xff]
      %v758 = vld [vmem:[#allocation2 + $0xf0] sm:$0xff]
      %v759 = vld [vmem:[#allocation2 + $0xf8] sm:$0xff]
      %v760 = vld [vmem:[%s2] sm:$0x1]
      %v762 = vlaneseq
      %v763 = vshrl.u32 %v762, 7
      %v764 = vsub.s32 0, %v763
      %v765 = vrot.slane %v760, %v764
      %v767 = vmul.f32 %v728, %v765
      %v768 = vmul.f32 %v729, %v765
      %v769 = vmul.f32 %v730, %v765
      %v770 = vmul.f32 %v731, %v765
      %v771 = vmul.f32 %v732, %v765
      %v772 = vmul.f32 %v733, %v765
      %v773 = vmul.f32 %v734, %v765
      %v774 = vmul.f32 %v735, %v765
      %v775 = vmul.f32 %v736, %v765
      %v776 = vmul.f32 %v737, %v765
      %v777 = vmul.f32 %v738, %v765
      %v778 = vmul.f32 %v739, %v765
      %v779 = vmul.f32 %v740, %v765
      %v780 = vmul.f32 %v741, %v765
      %v781 = vmul.f32 %v742, %v765
      %v782 = vmul.f32 %v743, %v765
      %v783 = vmul.f32 %v744, %v765
      %v784 = vmul.f32 %v745, %v765
      %v785 = vmul.f32 %v746, %v765
      %v786 = vmul.f32 %v747, %v765
      %v787 = vmul.f32 %v748, %v765
      %v788 = vmul.f32 %v749, %v765
      %v789 = vmul.f32 %v750, %v765
      %v790 = vmul.f32 %v751, %v765
      %v791 = vmul.f32 %v752, %v765
      %v792 = vmul.f32 %v753, %v765
      %v793 = vmul.f32 %v754, %v765
      %v794 = vmul.f32 %v755, %v765
      %v795 = vmul.f32 %v756, %v765
      %v796 = vmul.f32 %v757, %v765
      %v797 = vmul.f32 %v758, %v765
      %v798 = vmul.f32 %v759, %v765
      %v799 = vld [vmem:[%s3] sm:$0x1]
      %v801 = vlaneseq
      %v802 = vshrl.u32 %v801, 7
      %v803 = vsub.s32 0, %v802
      %v804 = vrot.slane %v799, %v803
      %v806 = vadd.f32 %v767, %v804
      %v807 = vadd.f32 %v768, %v804
      %v808 = vadd.f32 %v769, %v804
      %v809 = vadd.f32 %v770, %v804
      %v810 = vadd.f32 %v771, %v804
      %v811 = vadd.f32 %v772, %v804
      %v812 = vadd.f32 %v773, %v804
      %v813 = vadd.f32 %v774, %v804
      %v814 = vadd.f32 %v775, %v804
      %v815 = vadd.f32 %v776, %v804
      %v816 = vadd.f32 %v777, %v804
      %v817 = vadd.f32 %v778, %v804
      %v818 = vadd.f32 %v779, %v804
      %v819 = vadd.f32 %v780, %v804
      %v820 = vadd.f32 %v781, %v804
      %v821 = vadd.f32 %v782, %v804
      %v822 = vadd.f32 %v783, %v804
      %v823 = vadd.f32 %v784, %v804
      %v824 = vadd.f32 %v785, %v804
      %v825 = vadd.f32 %v786, %v804
      %v826 = vadd.f32 %v787, %v804
      %v827 = vadd.f32 %v788, %v804
      %v828 = vadd.f32 %v789, %v804
      %v829 = vadd.f32 %v790, %v804
      %v830 = vadd.f32 %v791, %v804
      %v831 = vadd.f32 %v792, %v804
      %v832 = vadd.f32 %v793, %v804
      %v833 = vadd.f32 %v794, %v804
      %v834 = vadd.f32 %v795, %v804
      %v835 = vadd.f32 %v796, %v804
      %v836 = vadd.f32 %v797, %v804
      %v837 = vadd.f32 %v798, %v804
      %v838 = vmax.f32 %v806, 0.0
      %v839 = vmax.f32 %v807, 0.0
      %v840 = vmax.f32 %v808, 0.0
      %v841 = vmax.f32 %v809, 0.0
      %v842 = vmax.f32 %v810, 0.0
      %v843 = vmax.f32 %v811, 0.0
      %v844 = vmax.f32 %v812, 0.0
      %v845 = vmax.f32 %v813, 0.0
      %v846 = vmax.f32 %v814, 0.0
      %v847 = vmax.f32 %v815, 0.0
      %v848 = vmax.f32 %v816, 0.0
      %v849 = vmax.f32 %v817, 0.0
      %v850 = vmax.f32 %v818, 0.0
      %v851 = vmax.f32 %v819, 0.0
      %v852 = vmax.f32 %v820, 0.0
      %v853 = vmax.f32 %v821, 0.0
      %v854 = vmax.f32 %v822, 0.0
      %v855 = vmax.f32 %v823, 0.0
      %v856 = vmax.f32 %v824, 0.0
      %v857 = vmax.f32 %v825, 0.0
      %v858 = vmax.f32 %v826, 0.0
      %v859 = vmax.f32 %v827, 0.0
      %v860 = vmax.f32 %v828, 0.0
      %v861 = vmax.f32 %v829, 0.0
      %v862 = vmax.f32 %v830, 0.0
      %v863 = vmax.f32 %v831, 0.0
      %v864 = vmax.f32 %v832, 0.0
      %v865 = vmax.f32 %v833, 0.0
      %v866 = vmax.f32 %v834, 0.0
      %v867 = vmax.f32 %v835, 0.0
      %v868 = vmax.f32 %v836, 0.0
      %v869 = vmax.f32 %v837, 0.0
      %v870 = vpack.c.bf16 %v839, %v838
      %v871 = vpack.c.bf16 %v841, %v840
      %v872 = vpack.c.bf16 %v843, %v842
      %v873 = vpack.c.bf16 %v845, %v844
      %v874 = vpack.c.bf16 %v847, %v846
      %v875 = vpack.c.bf16 %v849, %v848
      %v876 = vpack.c.bf16 %v851, %v850
      %v877 = vpack.c.bf16 %v853, %v852
      %v878 = vpack.c.bf16 %v855, %v854
      %v879 = vpack.c.bf16 %v857, %v856
      %v880 = vpack.c.bf16 %v859, %v858
      %v881 = vpack.c.bf16 %v861, %v860
      %v882 = vpack.c.bf16 %v863, %v862
      %v883 = vpack.c.bf16 %v865, %v864
      %v884 = vpack.c.bf16 %v867, %v866
      %v885 = vpack.c.bf16 %v869, %v868
      %v886 = vld [vmem:[%s4] sm:$0xf]
      %v888 = vsel %vm663, %v870, 0
      %v891 = vsel %vm663, %v871, 0
      %v894 = vsel %vm663, %v872, 0
      %v897 = vsel %vm663, %v873, 0
      %v900 = vsel %vm663, %v874, 0
      %v903 = vsel %vm663, %v875, 0
      %v906 = vsel %vm663, %v876, 0
      %v909 = vsel %vm663, %v877, 0
      %v912 = vsel %vm663, %v878, 0
      %v915 = vsel %vm663, %v879, 0
      %v918 = vsel %vm663, %v880, 0
      %v921 = vsel %vm663, %v881, 0
      %v924 = vsel %vm663, %v882, 0
      %v927 = vsel %vm663, %v883, 0
      %v930 = vsel %vm663, %v884, 0
      %v933 = vsel %vm663, %v885, 0
      %vm935 = vcmask 1043456
      %v937 = vsel %vm935, %v886, 0
      %939 = vmatprep.subr.bf16.mxu0 0
      %940 = vmatpush1.bf16.msra.mxu0 %v937
      %941 = vmatprep.subr.bf16.mxu0 0
      %942 = vmatpush1.bf16.msra.mxu0 0
      %943 = vmatprep.subr.bf16.mxu0 0
      %944 = vmatpush1.bf16.msra.mxu0 0
      %945 = vmatprep.subr.bf16.mxu0 0
      %946 = vmatpush1.bf16.msra.mxu0 0
      %947 = vmatprep.subr.bf16.mxu0 0
      %948 = vmatpush1.bf16.msra.mxu0 0
      %949 = vmatprep.subr.bf16.mxu0 0
      %950 = vmatpush1.bf16.msra.mxu0 0
      %951 = vmatprep.subr.bf16.mxu0 0
      %952 = vmatpush1.bf16.msra.mxu0 0
      %953 = vmatprep.subr.bf16.mxu0 0
      %954 = vmatpush1.bf16.msra.mxu0 0
      %955 = vmatprep.subr.bf16.mxu0 0
      %956 = vmatpush1.bf16.msra.mxu0 0
      %957 = vmatprep.subr.bf16.mxu0 0
      %958 = vmatpush1.bf16.msra.mxu0 0
      %959 = vmatprep.subr.bf16.mxu0 0
      %960 = vmatpush1.bf16.msra.mxu0 0
      %961 = vmatprep.subr.bf16.mxu0 0
      %962 = vmatpush1.bf16.msra.mxu0 0
      %963 = vmatprep.subr.bf16.mxu0 0
      %964 = vmatpush1.bf16.msra.mxu0 0
      %965 = vmatprep.subr.bf16.mxu0 0
      %966 = vmatpush1.bf16.msra.mxu0 0
      %967 = vmatprep.subr.bf16.mxu0 0
      %968 = vmatpush1.bf16.msra.mxu0 0
      %969 = vmatprep.subr.bf16.mxu0 0
      %970 = vmatpush1.bf16.msra.mxu0 0
      %971 = vmatprep.mubr.bf16.mxu0 0
      %972 = vmatmul.mubr.bf16.gmra.mrb[0].mxu0 %v888
      %v973 = vpop.f32.mrb[0].mxu0
      %v974 = vadd.f32 0.0, %v973
      %v975 = vpop.f32.mrb[0].mxu0
      %v976 = vpop.f32.mrb[0].mxu0
      %v977 = vadd.f32 0.0, %v976
      %v978 = vpop.f32.mrb[0].mxu0
      %979 = vmatprep.mubr.bf16.mxu0 0
      %980 = vmatmul.mubr.bf16.gmra.mrb[0].mxu0 %v891
      %v981 = vpop.f32.mrb[0].mxu0
      %v982 = vadd.f32 0.0, %v981
      %v983 = vpop.f32.mrb[0].mxu0
      %v984 = vpop.f32.mrb[0].mxu0
      %v985 = vadd.f32 0.0, %v984
      %v986 = vpop.f32.mrb[0].mxu0
      %987 = vmatprep.mubr.bf16.mxu0 0
      %988 = vmatmul.mubr.bf16.gmra.mrb[0].mxu0 %v894
      %v989 = vpop.f32.mrb[0].mxu0
      %v990 = vadd.f32 0.0, %v989
      %v991 = vpop.f32.mrb[0].mxu0
      %v992 = vpop.f32.mrb[0].mxu0
      %v993 = vadd.f32 0.0, %v992
      %v994 = vpop.f32.mrb[0].mxu0
      %995 = vmatprep.mubr.bf16.mxu0 0
      %996 = vmatmul.mubr.bf16.gmra.mrb[0].mxu0 %v897
      %v997 = vpop.f32.mrb[0].mxu0
      %v998 = vadd.f32 0.0, %v997
      %v999 = vpop.f32.mrb[0].mxu0
      %v1000 = vpop.f32.mrb[0].mxu0
      %v1001 = vadd.f32 0.0, %v1000
      %v1002 = vpop.f32.mrb[0].mxu0
      %1003 = vmatprep.mubr.bf16.mxu0 0
      %1004 = vmatmul.mubr.bf16.gmra.mrb[0].mxu0 %v900
      %v1005 = vpop.f32.mrb[0].mxu0
      %v1006 = vadd.f32 0.0, %v1005
      %v1007 = vpop.f32.mrb[0].mxu0
      %v1008 = vpop.f32.mrb[0].mxu0
      %v1009 = vadd.f32 0.0, %v1008
      %v1010 = vpop.f32.mrb[0].mxu0
      %1011 = vmatprep.mubr.bf16.mxu0 0
      %1012 = vmatmul.mubr.bf16.gmra.mrb[0].mxu0 %v903
      %v1013 = vpop.f32.mrb[0].mxu0
      %v1014 = vadd.f32 0.0, %v1013
      %v1015 = vpop.f32.mrb[0].mxu0
      %v1016 = vpop.f32.mrb[0].mxu0
      %v1017 = vadd.f32 0.0, %v1016
      %v1018 = vpop.f32.mrb[0].mxu0
      %1019 = vmatprep.mubr.bf16.mxu0 0
      %1020 = vmatmul.mubr.bf16.gmra.mrb[0].mxu0 %v906
      %v1021 = vpop.f32.mrb[0].mxu0
      %v1022 = vadd.f32 0.0, %v1021
      %v1023 = vpop.f32.mrb[0].mxu0
      %v1024 = vpop.f32.mrb[0].mxu0
      %v1025 = vadd.f32 0.0, %v1024
      %v1026 = vpop.f32.mrb[0].mxu0
      %1027 = vmatprep.mubr.bf16.mxu0 0
      %1028 = vmatmul.mubr.bf16.gmra.mrb[0].mxu0 %v909
      %v1029 = vpop.f32.mrb[0].mxu0
      %v1030 = vadd.f32 0.0, %v1029
      %v1031 = vpop.f32.mrb[0].mxu0
      %v1032 = vpop.f32.mrb[0].mxu0
      %v1033 = vadd.f32 0.0, %v1032
      %v1034 = vpop.f32.mrb[0].mxu0
      %1035 = vmatprep.mubr.bf16.mxu0 0
      %1036 = vmatmul.mubr.bf16.gmra.mrb[0].mxu0 %v912
      %v1037 = vpop.f32.mrb[0].mxu0
      %v1038 = vadd.f32 0.0, %v1037
      %v1039 = vpop.f32.mrb[0].mxu0
      %v1040 = vpop.f32.mrb[0].mxu0
      %v1041 = vadd.f32 0.0, %v1040
      %v1042 = vpop.f32.mrb[0].mxu0
      %1043 = vmatprep.mubr.bf16.mxu0 0
      %1044 = vmatmul.mubr.bf16.gmra.mrb[0].mxu0 %v915
      %v1045 = vpop.f32.mrb[0].mxu0
      %v1046 = vadd.f32 0.0, %v1045
      %v1047 = vpop.f32.mrb[0].mxu0
      %v1048 = vpop.f32.mrb[0].mxu0
      %v1049 = vadd.f32 0.0, %v1048
      %v1050 = vpop.f32.mrb[0].mxu0
      %1051 = vmatprep.mubr.bf16.mxu0 0
      %1052 = vmatmul.mubr.bf16.gmra.mrb[0].mxu0 %v918
      %v1053 = vpop.f32.mrb[0].mxu0
      %v1054 = vadd.f32 0.0, %v1053
      %v1055 = vpop.f32.mrb[0].mxu0
      %v1056 = vpop.f32.mrb[0].mxu0
      %v1057 = vadd.f32 0.0, %v1056
      %v1058 = vpop.f32.mrb[0].mxu0
      %1059 = vmatprep.mubr.bf16.mxu0 0
      %1060 = vmatmul.mubr.bf16.gmra.mrb[0].mxu0 %v921
      %v1061 = vpop.f32.mrb[0].mxu0
      %v1062 = vadd.f32 0.0, %v1061
      %v1063 = vpop.f32.mrb[0].mxu0
      %v1064 = vpop.f32.mrb[0].mxu0
      %v1065 = vadd.f32 0.0, %v1064
      %v1066 = vpop.f32.mrb[0].mxu0
      %1067 = vmatprep.mubr.bf16.mxu0 0
      %1068 = vmatmul.mubr.bf16.gmra.mrb[0].mxu0 %v924
      %v1069 = vpop.f32.mrb[0].mxu0
      %v1070 = vadd.f32 0.0, %v1069
      %v1071 = vpop.f32.mrb[0].mxu0
      %v1072 = vpop.f32.mrb[0].mxu0
      %v1073 = vadd.f32 0.0, %v1072
      %v1074 = vpop.f32.mrb[0].mxu0
      %1075 = vmatprep.mubr.bf16.mxu0 0
      %1076 = vmatmul.mubr.bf16.gmra.mrb[0].mxu0 %v927
      %v1077 = vpop.f32.mrb[0].mxu0
      %v1078 = vadd.f32 0.0, %v1077
      %v1079 = vpop.f32.mrb[0].mxu0
      %v1080 = vpop.f32.mrb[0].mxu0
      %v1081 = vadd.f32 0.0, %v1080
      %v1082 = vpop.f32.mrb[0].mxu0
      %1083 = vmatprep.mubr.bf16.mxu0 0
      %1084 = vmatmul.mubr.bf16.gmra.mrb[0].mxu0 %v930
      %v1085 = vpop.f32.mrb[0].mxu0
      %v1086 = vadd.f32 0.0, %v1085
      %v1087 = vpop.f32.mrb[0].mxu0
      %v1088 = vpop.f32.mrb[0].mxu0
      %v1089 = vadd.f32 0.0, %v1088
      %v1090 = vpop.f32.mrb[0].mxu0
      %1091 = vmatprep.mubr.bf16.mxu0 0
      %1092 = vmatmul.mubr.bf16.gmra.mrb[0].mxu0 %v933
      %v1093 = vpop.f32.mrb[0].mxu0
      %v1094 = vadd.f32 0.0, %v1093
      %v1095 = vpop.f32.mrb[0].mxu0
      %v1096 = vpop.f32.mrb[0].mxu0
      %v1097 = vadd.f32 0.0, %v1096
      %v1098 = vpop.f32.mrb[0].mxu0
      %1099 = vdwg.mxu0
      %v1100 = vld [vmem:[%s5] sm:$0x1]
      %v1102 = vlaneseq
      %v1103 = vshrl.u32 %v1102, 7
      %v1104 = vsub.s32 0, %v1103
      %v1105 = vrot.slane %v1100, %v1104
      %v1107 = vmul.f32 %v974, %v1105
      %v1108 = vmul.f32 %v977, %v1105
      %v1109 = vmul.f32 %v982, %v1105
      %v1110 = vmul.f32 %v985, %v1105
      %v1111 = vmul.f32 %v990, %v1105
      %v1112 = vmul.f32 %v993, %v1105
      %v1113 = vmul.f32 %v998, %v1105
      %v1114 = vmul.f32 %v1001, %v1105
      %v1115 = vmul.f32 %v1006, %v1105
      %v1116 = vmul.f32 %v1009, %v1105
      %v1117 = vmul.f32 %v1014, %v1105
      %v1118 = vmul.f32 %v1017, %v1105
      %v1119 = vmul.f32 %v1022, %v1105
      %v1120 = vmul.f32 %v1025, %v1105
      %v1121 = vmul.f32 %v1030, %v1105
      %v1122 = vmul.f32 %v1033, %v1105
      %v1123 = vmul.f32 %v1038, %v1105
      %v1124 = vmul.f32 %v1041, %v1105
      %v1125 = vmul.f32 %v1046, %v1105
      %v1126 = vmul.f32 %v1049, %v1105
      %v1127 = vmul.f32 %v1054, %v1105
      %v1128 = vmul.f32 %v1057, %v1105
      %v1129 = vmul.f32 %v1062, %v1105
      %v1130 = vmul.f32 %v1065, %v1105
      %v1131 = vmul.f32 %v1070, %v1105
      %v1132 = vmul.f32 %v1073, %v1105
      %v1133 = vmul.f32 %v1078, %v1105
      %v1134 = vmul.f32 %v1081, %v1105
      %v1135 = vmul.f32 %v1086, %v1105
      %v1136 = vmul.f32 %v1089, %v1105
      %v1137 = vmul.f32 %v1094, %v1105
      %v1138 = vmul.f32 %v1097, %v1105
      %v1139 = vld [vmem:[%s6] sm:$0x1]
      %v1141 = vlaneseq
      %v1142 = vshrl.u32 %v1141, 7
      %v1143 = vsub.s32 0, %v1142
      %v1144 = vrot.slane %v1139, %v1143
      %v1146 = vadd.f32 %v1107, %v1144
      %v1147 = vadd.f32 %v1108, %v1144
      %v1148 = vadd.f32 %v1109, %v1144
      %v1149 = vadd.f32 %v1110, %v1144
      %v1150 = vadd.f32 %v1111, %v1144
      %v1151 = vadd.f32 %v1112, %v1144
      %v1152 = vadd.f32 %v1113, %v1144
      %v1153 = vadd.f32 %v1114, %v1144
      %v1154 = vadd.f32 %v1115, %v1144
      %v1155 = vadd.f32 %v1116, %v1144
      %v1156 = vadd.f32 %v1117, %v1144
      %v1157 = vadd.f32 %v1118, %v1144
      %v1158 = vadd.f32 %v1119, %v1144
      %v1159 = vadd.f32 %v1120, %v1144
      %v1160 = vadd.f32 %v1121, %v1144
      %v1161 = vadd.f32 %v1122, %v1144
      %v1162 = vadd.f32 %v1123, %v1144
      %v1163 = vadd.f32 %v1124, %v1144
      %v1164 = vadd.f32 %v1125, %v1144
      %v1165 = vadd.f32 %v1126, %v1144
      %v1166 = vadd.f32 %v1127, %v1144
      %v1167 = vadd.f32 %v1128, %v1144
      %v1168 = vadd.f32 %v1129, %v1144
      %v1169 = vadd.f32 %v1130, %v1144
      %v1170 = vadd.f32 %v1131, %v1144
      %v1171 = vadd.f32 %v1132, %v1144
      %v1172 = vadd.f32 %v1133, %v1144
      %v1173 = vadd.f32 %v1134, %v1144
      %v1174 = vadd.f32 %v1135, %v1144
      %v1175 = vadd.f32 %v1136, %v1144
      %v1176 = vadd.f32 %v1137, %v1144
      %v1177 = vadd.f32 %v1138, %v1144
      %v1178 = vmax.f32 %v1146, 0.0
      %v1179 = vmax.f32 %v1147, 0.0
      %v1180 = vmax.f32 %v1148, 0.0
      %v1181 = vmax.f32 %v1149, 0.0
      %v1182 = vmax.f32 %v1150, 0.0
      %v1183 = vmax.f32 %v1151, 0.0
      %v1184 = vmax.f32 %v1152, 0.0
      %v1185 = vmax.f32 %v1153, 0.0
      %v1186 = vmax.f32 %v1154, 0.0
      %v1187 = vmax.f32 %v1155, 0.0
      %v1188 = vmax.f32 %v1156, 0.0
      %v1189 = vmax.f32 %v1157, 0.0
      %v1190 = vmax.f32 %v1158, 0.0
      %v1191 = vmax.f32 %v1159, 0.0
      %v1192 = vmax.f32 %v1160, 0.0
      %v1193 = vmax.f32 %v1161, 0.0
      %v1194 = vmax.f32 %v1162, 0.0
      %v1195 = vmax.f32 %v1163, 0.0
      %v1196 = vmax.f32 %v1164, 0.0
      %v1197 = vmax.f32 %v1165, 0.0
      %v1198 = vmax.f32 %v1166, 0.0
      %v1199 = vmax.f32 %v1167, 0.0
      %v1200 = vmax.f32 %v1168, 0.0
      %v1201 = vmax.f32 %v1169, 0.0
      %v1202 = vmax.f32 %v1170, 0.0
      %v1203 = vmax.f32 %v1171, 0.0
      %v1204 = vmax.f32 %v1172, 0.0
      %v1205 = vmax.f32 %v1173, 0.0
      %v1206 = vmax.f32 %v1174, 0.0
      %v1207 = vmax.f32 %v1175, 0.0
      %v1208 = vmax.f32 %v1176, 0.0
      %v1209 = vmax.f32 %v1177, 0.0
      %v1210 = vpack.c.bf16 %v1179, %v1178
      %v1211 = vpack.c.bf16 %v1181, %v1180
      %v1212 = vpack.c.bf16 %v1183, %v1182
      %v1213 = vpack.c.bf16 %v1185, %v1184
      %v1214 = vpack.c.bf16 %v1187, %v1186
      %v1215 = vpack.c.bf16 %v1189, %v1188
      %v1216 = vpack.c.bf16 %v1191, %v1190
      %v1217 = vpack.c.bf16 %v1193, %v1192
      %v1218 = vpack.c.bf16 %v1195, %v1194
      %v1219 = vpack.c.bf16 %v1197, %v1196
      %v1220 = vpack.c.bf16 %v1199, %v1198
      %v1221 = vpack.c.bf16 %v1201, %v1200
      %v1222 = vpack.c.bf16 %v1203, %v1202
      %v1223 = vpack.c.bf16 %v1205, %v1204
      %v1224 = vpack.c.bf16 %v1207, %v1206
      %v1225 = vpack.c.bf16 %v1209, %v1208
      %v1226 = vld [vmem:[%s7] sm:$0xf]
      %v1227 = vld [vmem:[%s7 + $0x4] sm:$0xf]
      %v1228 = vld [vmem:[%s7 + $0x8] sm:$0xf]
      %v1229 = vld [vmem:[%s7 + $0xc] sm:$0xf]
      %v1234 = vunpack.c.l.b16 %v1226
      %v1235 = vunpack.c.l.b16 %v1227
      %v1236 = vunpack.c.l.b16 %v1228
      %v1237 = vunpack.c.l.b16 %v1229
      %v1238 = vpack.c.b16 %v1235, %v1234
      %v1239 = vpack.c.b16 %v1237, %v1236
      %vm1242 = vcmask 261120
      %v1244 = vsel %vm1242, %v1210, 0
      %v1247 = vsel %vm1242, %v1211, 0
      %v1250 = vsel %vm1242, %v1212, 0
      %v1253 = vsel %vm1242, %v1213, 0
      %v1256 = vsel %vm1242, %v1214, 0
      %v1259 = vsel %vm1242, %v1215, 0
      %v1262 = vsel %vm1242, %v1216, 0
      %v1265 = vsel %vm1242, %v1217, 0
      %v1268 = vsel %vm1242, %v1218, 0
      %v1271 = vsel %vm1242, %v1219, 0
      %v1274 = vsel %vm1242, %v1220, 0
      %v1277 = vsel %vm1242, %v1221, 0
      %v1280 = vsel %vm1242, %v1222, 0
      %v1283 = vsel %vm1242, %v1223, 0
      %v1286 = vsel %vm1242, %v1224, 0
      %v1289 = vsel %vm1242, %v1225, 0
      %1291 = vmatprep.subr.bf16.mxu0 0
      %1292 = vmatpush1.bf16.msra.mxu0 %v1238
      %1293 = vmatprep.subr.bf16.mxu0 0
      %1294 = vmatpush1.bf16.msra.mxu0 %v1239
      %1295 = vmatprep.subr.bf16.mxu0 0
      %1296 = vmatpush1.bf16.msra.mxu0 0
      %1297 = vmatprep.subr.bf16.mxu0 0
      %1298 = vmatpush1.bf16.msra.mxu0 0
      %1299 = vmatprep.subr.bf16.mxu0 0
      %1300 = vmatpush1.bf16.msra.mxu0 0
      %1301 = vmatprep.subr.bf16.mxu0 0
      %1302 = vmatpush1.bf16.msra.mxu0 0
      %1303 = vmatprep.subr.bf16.mxu0 0
      %1304 = vmatpush1.bf16.msra.mxu0 0
      %1305 = vmatprep.subr.bf16.mxu0 0
      %1306 = vmatpush1.bf16.msra.mxu0 0
      %1307 = vmatprep.subr.bf16.mxu0 0
      %1308 = vmatpush1.bf16.msra.mxu0 0
      %1309 = vmatprep.subr.bf16.mxu0 0
      %1310 = vmatpush1.bf16.msra.mxu0 0
      %1311 = vmatprep.subr.bf16.mxu0 0
      %1312 = vmatpush1.bf16.msra.mxu0 0
      %1313 = vmatprep.subr.bf16.mxu0 0
      %1314 = vmatpush1.bf16.msra.mxu0 0
      %1315 = vmatprep.subr.bf16.mxu0 0
      %1316 = vmatpush1.bf16.msra.mxu0 0
      %1317 = vmatprep.subr.bf16.mxu0 0
      %1318 = vmatpush1.bf16.msra.mxu0 0
      %1319 = vmatprep.subr.bf16.mxu0 0
      %1320 = vmatpush1.bf16.msra.mxu0 0
      %1321 = vmatprep.subr.bf16.mxu0 0
      %1322 = vmatpush1.bf16.msra.mxu0 0
      %1323 = vmatprep.mubr.bf16.mxu0 0
      %1324 = vmatmul.mubr.bf16.gmra.mrb[0].mxu0 %v1244
      %v1325 = vpop.f32.mrb[0].mxu0
      %v1326 = vadd.f32 0.0, %v1325
      %v1327 = vpop.f32.mrb[0].mxu0
      %v1328 = vpop.f32.mrb[0].mxu0
      %v1329 = vadd.f32 0.0, %v1328
      %v1330 = vpop.f32.mrb[0].mxu0
      %1331 = vmatprep.mubr.bf16.mxu0 0
      %1332 = vmatmul.mubr.bf16.gmra.mrb[0].mxu0 %v1247
      %v1333 = vpop.f32.mrb[0].mxu0
      %v1334 = vadd.f32 0.0, %v1333
      %v1335 = vpop.f32.mrb[0].mxu0
      %v1336 = vpop.f32.mrb[0].mxu0
      %v1337 = vadd.f32 0.0, %v1336
      %v1338 = vpop.f32.mrb[0].mxu0
      %1339 = vmatprep.mubr.bf16.mxu0 0
      %1340 = vmatmul.mubr.bf16.gmra.mrb[0].mxu0 %v1250
      %v1341 = vpop.f32.mrb[0].mxu0
      %v1342 = vadd.f32 0.0, %v1341
      %v1343 = vpop.f32.mrb[0].mxu0
      %v1344 = vpop.f32.mrb[0].mxu0
      %v1345 = vadd.f32 0.0, %v1344
      %v1346 = vpop.f32.mrb[0].mxu0
      %1347 = vmatprep.mubr.bf16.mxu0 0
      %1348 = vmatmul.mubr.bf16.gmra.mrb[0].mxu0 %v1253
      %v1349 = vpop.f32.mrb[0].mxu0
      %v1350 = vadd.f32 0.0, %v1349
      %v1351 = vpop.f32.mrb[0].mxu0
      %v1352 = vpop.f32.mrb[0].mxu0
      %v1353 = vadd.f32 0.0, %v1352
      %v1354 = vpop.f32.mrb[0].mxu0
      %1355 = vmatprep.mubr.bf16.mxu0 0
      %1356 = vmatmul.mubr.bf16.gmra.mrb[0].mxu0 %v1256
      %v1357 = vpop.f32.mrb[0].mxu0
      %v1358 = vadd.f32 0.0, %v1357
      %v1359 = vpop.f32.mrb[0].mxu0
      %v1360 = vpop.f32.mrb[0].mxu0
      %v1361 = vadd.f32 0.0, %v1360
      %v1362 = vpop.f32.mrb[0].mxu0
      %1363 = vmatprep.mubr.bf16.mxu0 0
      %1364 = vmatmul.mubr.bf16.gmra.mrb[0].mxu0 %v1259
      %v1365 = vpop.f32.mrb[0].mxu0
      %v1366 = vadd.f32 0.0, %v1365
      %v1367 = vpop.f32.mrb[0].mxu0
      %v1368 = vpop.f32.mrb[0].mxu0
      %v1369 = vadd.f32 0.0, %v1368
      %v1370 = vpop.f32.mrb[0].mxu0
      %1371 = vmatprep.mubr.bf16.mxu0 0
      %1372 = vmatmul.mubr.bf16.gmra.mrb[0].mxu0 %v1262
      %v1373 = vpop.f32.mrb[0].mxu0
      %v1374 = vadd.f32 0.0, %v1373
      %v1375 = vpop.f32.mrb[0].mxu0
      %v1376 = vpop.f32.mrb[0].mxu0
      %v1377 = vadd.f32 0.0, %v1376
      %v1378 = vpop.f32.mrb[0].mxu0
      %1379 = vmatprep.mubr.bf16.mxu0 0
      %1380 = vmatmul.mubr.bf16.gmra.mrb[0].mxu0 %v1265
      %v1381 = vpop.f32.mrb[0].mxu0
      %v1382 = vadd.f32 0.0, %v1381
      %v1383 = vpop.f32.mrb[0].mxu0
      %v1384 = vpop.f32.mrb[0].mxu0
      %v1385 = vadd.f32 0.0, %v1384
      %v1386 = vpop.f32.mrb[0].mxu0
      %1387 = vmatprep.mubr.bf16.mxu0 0
      %1388 = vmatmul.mubr.bf16.gmra.mrb[0].mxu0 %v1268
      %v1389 = vpop.f32.mrb[0].mxu0
      %v1390 = vadd.f32 0.0, %v1389
      %v1391 = vpop.f32.mrb[0].mxu0
      %v1392 = vpop.f32.mrb[0].mxu0
      %v1393 = vadd.f32 0.0, %v1392
      %v1394 = vpop.f32.mrb[0].mxu0
      %1395 = vmatprep.mubr.bf16.mxu0 0
      %1396 = vmatmul.mubr.bf16.gmra.mrb[0].mxu0 %v1271
      %v1397 = vpop.f32.mrb[0].mxu0
      %v1398 = vadd.f32 0.0, %v1397
      %v1399 = vpop.f32.mrb[0].mxu0
      %v1400 = vpop.f32.mrb[0].mxu0
      %v1401 = vadd.f32 0.0, %v1400
      %v1402 = vpop.f32.mrb[0].mxu0
      %1403 = vmatprep.mubr.bf16.mxu0 0
      %1404 = vmatmul.mubr.bf16.gmra.mrb[0].mxu0 %v1274
      %v1405 = vpop.f32.mrb[0].mxu0
      %v1406 = vadd.f32 0.0, %v1405
      %v1407 = vpop.f32.mrb[0].mxu0
      %v1408 = vpop.f32.mrb[0].mxu0
      %v1409 = vadd.f32 0.0, %v1408
      %v1410 = vpop.f32.mrb[0].mxu0
      %1411 = vmatprep.mubr.bf16.mxu0 0
      %1412 = vmatmul.mubr.bf16.gmra.mrb[0].mxu0 %v1277
      %v1413 = vpop.f32.mrb[0].mxu0
      %v1414 = vadd.f32 0.0, %v1413
      %v1415 = vpop.f32.mrb[0].mxu0
      %v1416 = vpop.f32.mrb[0].mxu0
      %v1417 = vadd.f32 0.0, %v1416
      %v1418 = vpop.f32.mrb[0].mxu0
      %1419 = vmatprep.mubr.bf16.mxu0 0
      %1420 = vmatmul.mubr.bf16.gmra.mrb[0].mxu0 %v1280
      %v1421 = vpop.f32.mrb[0].mxu0
      %v1422 = vadd.f32 0.0, %v1421
      %v1423 = vpop.f32.mrb[0].mxu0
      %v1424 = vpop.f32.mrb[0].mxu0
      %v1425 = vadd.f32 0.0, %v1424
      %v1426 = vpop.f32.mrb[0].mxu0
      %1427 = vmatprep.mubr.bf16.mxu0 0
      %1428 = vmatmul.mubr.bf16.gmra.mrb[0].mxu0 %v1283
      %v1429 = vpop.f32.mrb[0].mxu0
      %v1430 = vadd.f32 0.0, %v1429
      %v1431 = vpop.f32.mrb[0].mxu0
      %v1432 = vpop.f32.mrb[0].mxu0
      %v1433 = vadd.f32 0.0, %v1432
      %v1434 = vpop.f32.mrb[0].mxu0
      %1435 = vmatprep.mubr.bf16.mxu0 0
      %1436 = vmatmul.mubr.bf16.gmra.mrb[0].mxu0 %v1286
      %v1437 = vpop.f32.mrb[0].mxu0
      %v1438 = vadd.f32 0.0, %v1437
      %v1439 = vpop.f32.mrb[0].mxu0
      %v1440 = vpop.f32.mrb[0].mxu0
      %v1441 = vadd.f32 0.0, %v1440
      %v1442 = vpop.f32.mrb[0].mxu0
      %1443 = vmatprep.mubr.bf16.mxu0 0
      %1444 = vmatmul.mubr.bf16.gmra.mrb[0].mxu0 %v1289
      %v1445 = vpop.f32.mrb[0].mxu0
      %v1446 = vadd.f32 0.0, %v1445
      %v1447 = vpop.f32.mrb[0].mxu0
      %v1448 = vpop.f32.mrb[0].mxu0
      %v1449 = vadd.f32 0.0, %v1448
      %v1450 = vpop.f32.mrb[0].mxu0
      %1451 = vdwg.mxu0
      %1453 = vset.pattern.permute.xlu0 0
      %1454 = vperm.xlu0 %1453, %v696
      %v1455 = vpop.permute.xlu0 %1454
      %1457 = vset.pattern.permute.xlu0 0
      %1458 = vperm.xlu0 %1457, %v697
      %v1459 = vpop.permute.xlu0 %1458
      %1461 = vset.pattern.permute.xlu0 0
      %1462 = vperm.xlu0 %1461, %v698
      %v1463 = vpop.permute.xlu0 %1462
      %1465 = vset.pattern.permute.xlu0 0
      %1466 = vperm.xlu0 %1465, %v699
      %v1467 = vpop.permute.xlu0 %1466
      %1469 = vset.pattern.permute.xlu0 0
      %1470 = vperm.xlu0 %1469, %v700
      %v1471 = vpop.permute.xlu0 %1470
      %1473 = vset.pattern.permute.xlu0 0
      %1474 = vperm.xlu0 %1473, %v701
      %v1475 = vpop.permute.xlu0 %1474
      %1477 = vset.pattern.permute.xlu0 0
      %1478 = vperm.xlu0 %1477, %v702
      %v1479 = vpop.permute.xlu0 %1478
      %1481 = vset.pattern.permute.xlu0 0
      %1482 = vperm.xlu0 %1481, %v703
      %v1483 = vpop.permute.xlu0 %1482
      %1485 = vset.pattern.permute.xlu0 0
      %1486 = vperm.xlu0 %1485, %v704
      %v1487 = vpop.permute.xlu0 %1486
      %1489 = vset.pattern.permute.xlu0 0
      %1490 = vperm.xlu0 %1489, %v705
      %v1491 = vpop.permute.xlu0 %1490
      %1493 = vset.pattern.permute.xlu0 0
      %1494 = vperm.xlu0 %1493, %v706
      %v1495 = vpop.permute.xlu0 %1494
      %1497 = vset.pattern.permute.xlu0 0
      %1498 = vperm.xlu0 %1497, %v707
      %v1499 = vpop.permute.xlu0 %1498
      %1501 = vset.pattern.permute.xlu0 0
      %1502 = vperm.xlu0 %1501, %v708
      %v1503 = vpop.permute.xlu0 %1502
      %1505 = vset.pattern.permute.xlu0 0
      %1506 = vperm.xlu0 %1505, %v709
      %v1507 = vpop.permute.xlu0 %1506
      %1509 = vset.pattern.permute.xlu0 0
      %1510 = vperm.xlu0 %1509, %v710
      %v1511 = vpop.permute.xlu0 %1510
      %1513 = vset.pattern.permute.xlu0 0
      %1514 = vperm.xlu0 %1513, %v711
      %v1515 = vpop.permute.xlu0 %1514
      %1517 = vset.pattern.permute.xlu0 0
      %1518 = vperm.xlu0 %1517, %v712
      %v1519 = vpop.permute.xlu0 %1518
      %1521 = vset.pattern.permute.xlu0 0
      %1522 = vperm.xlu0 %1521, %v713
      %v1523 = vpop.permute.xlu0 %1522
      %1525 = vset.pattern.permute.xlu0 0
      %1526 = vperm.xlu0 %1525, %v714
      %v1527 = vpop.permute.xlu0 %1526
      %1529 = vset.pattern.permute.xlu0 0
      %1530 = vperm.xlu0 %1529, %v715
      %v1531 = vpop.permute.xlu0 %1530
      %1533 = vset.pattern.permute.xlu0 0
      %1534 = vperm.xlu0 %1533, %v716
      %v1535 = vpop.permute.xlu0 %1534
      %1537 = vset.pattern.permute.xlu0 0
      %1538 = vperm.xlu0 %1537, %v717
      %v1539 = vpop.permute.xlu0 %1538
      %1541 = vset.pattern.permute.xlu0 0
      %1542 = vperm.xlu0 %1541, %v718
      %v1543 = vpop.permute.xlu0 %1542
      %1545 = vset.pattern.permute.xlu0 0
      %1546 = vperm.xlu0 %1545, %v719
      %v1547 = vpop.permute.xlu0 %1546
      %1549 = vset.pattern.permute.xlu0 0
      %1550 = vperm.xlu0 %1549, %v720
      %v1551 = vpop.permute.xlu0 %1550
      %1553 = vset.pattern.permute.xlu0 0
      %1554 = vperm.xlu0 %1553, %v721
      %v1555 = vpop.permute.xlu0 %1554
      %1557 = vset.pattern.permute.xlu0 0
      %1558 = vperm.xlu0 %1557, %v722
      %v1559 = vpop.permute.xlu0 %1558
      %1561 = vset.pattern.permute.xlu0 0
      %1562 = vperm.xlu0 %1561, %v723
      %v1563 = vpop.permute.xlu0 %1562
      %1565 = vset.pattern.permute.xlu0 0
      %1566 = vperm.xlu0 %1565, %v724
      %v1567 = vpop.permute.xlu0 %1566
      %1569 = vset.pattern.permute.xlu0 0
      %1570 = vperm.xlu0 %1569, %v725
      %v1571 = vpop.permute.xlu0 %1570
      %1573 = vset.pattern.permute.xlu0 0
      %1574 = vperm.xlu0 %1573, %v726
      %v1575 = vpop.permute.xlu0 %1574
      %1577 = vset.pattern.permute.xlu0 0
      %1578 = vperm.xlu0 %1577, %v727
      %v1579 = vpop.permute.xlu0 %1578
      %vm1580 = vcmask 1046528
      %v1581 = vrot.slane %v1455, 1
      %v1582 = vrot.slane %v1459, 1
      %v1583 = vsel %vm1580, %v1581, %v1582
      %v1584 = vrot.slane %v1463, 1
      %v1585 = vsel %vm1580, %v1582, %v1584
      %v1586 = vrot.slane %v1467, 1
      %v1587 = vsel %vm1580, %v1584, %v1586
      %v1588 = vrot.slane %v1471, 1
      %v1589 = vsel %vm1580, %v1586, %v1588
      %v1590 = vrot.slane %v1475, 1
      %v1591 = vsel %vm1580, %v1588, %v1590
      %v1592 = vrot.slane %v1479, 1
      %v1593 = vsel %vm1580, %v1590, %v1592
      %v1594 = vrot.slane %v1483, 1
      %v1595 = vsel %vm1580, %v1592, %v1594
      %v1596 = vrot.slane %v1487, 1
      %v1597 = vsel %vm1580, %v1594, %v1596
      %v1598 = vrot.slane %v1491, 1
      %v1599 = vsel %vm1580, %v1596, %v1598
      %v1600 = vrot.slane %v1495, 1
      %v1601 = vsel %vm1580, %v1598, %v1600
      %v1602 = vrot.slane %v1499, 1
      %v1603 = vsel %vm1580, %v1600, %v1602
      %v1604 = vrot.slane %v1503, 1
      %v1605 = vsel %vm1580, %v1602, %v1604
      %v1606 = vrot.slane %v1507, 1
      %v1607 = vsel %vm1580, %v1604, %v1606
      %v1608 = vrot.slane %v1511, 1
      %v1609 = vsel %vm1580, %v1606, %v1608
      %v1610 = vrot.slane %v1515, 1
      %v1611 = vsel %vm1580, %v1608, %v1610
      %v1612 = vrot.slane %v1519, 1
      %v1613 = vsel %vm1580, %v1610, %v1612
      %v1614 = vrot.slane %v1523, 1
      %v1615 = vsel %vm1580, %v1612, %v1614
      %v1616 = vrot.slane %v1527, 1
      %v1617 = vsel %vm1580, %v1614, %v1616
      %v1618 = vrot.slane %v1531, 1
      %v1619 = vsel %vm1580, %v1616, %v1618
      %v1620 = vrot.slane %v1535, 1
      %v1621 = vsel %vm1580, %v1618, %v1620
      %v1622 = vrot.slane %v1539, 1
      %v1623 = vsel %vm1580, %v1620, %v1622
      %v1624 = vrot.slane %v1543, 1
      %v1625 = vsel %vm1580, %v1622, %v1624
      %v1626 = vrot.slane %v1547, 1
      %v1627 = vsel %vm1580, %v1624, %v1626
      %v1628 = vrot.slane %v1551, 1
      %v1629 = vsel %vm1580, %v1626, %v1628
      %v1630 = vrot.slane %v1555, 1
      %v1631 = vsel %vm1580, %v1628, %v1630
      %v1632 = vrot.slane %v1559, 1
      %v1633 = vsel %vm1580, %v1630, %v1632
      %v1634 = vrot.slane %v1563, 1
      %v1635 = vsel %vm1580, %v1632, %v1634
      %v1636 = vrot.slane %v1567, 1
      %v1637 = vsel %vm1580, %v1634, %v1636
      %v1638 = vrot.slane %v1571, 1
      %v1639 = vsel %vm1580, %v1636, %v1638
      %v1640 = vrot.slane %v1575, 1
      %v1641 = vsel %vm1580, %v1638, %v1640
      %v1642 = vrot.slane %v1579, 1
      %v1643 = vsel %vm1580, %v1640, %v1642
      %v1677 = vmul.f32 %v1581, 0.0
      %v1678 = vmul.f32 %v1583, 0.0
      %v1679 = vmul.f32 %v1585, 0.0
      %v1680 = vmul.f32 %v1326, %v1587
      %v1681 = vmul.f32 %v1329, %v1589
      %v1682 = vmul.f32 %v1334, %v1591
      %v1683 = vmul.f32 %v1337, %v1593
      %v1684 = vmul.f32 %v1342, %v1595
      %v1685 = vmul.f32 %v1345, %v1597
      %v1686 = vmul.f32 %v1350, %v1599
      %v1687 = vmul.f32 %v1353, %v1601
      %v1688 = vmul.f32 %v1358, %v1603
      %v1689 = vmul.f32 %v1361, %v1605
      %v1690 = vmul.f32 %v1366, %v1607
      %v1691 = vmul.f32 %v1369, %v1609
      %v1692 = vmul.f32 %v1374, %v1611
      %v1693 = vmul.f32 %v1377, %v1613
      %v1694 = vmul.f32 %v1382, %v1615
      %v1695 = vmul.f32 %v1385, %v1617
      %v1696 = vmul.f32 %v1390, %v1619
      %v1697 = vmul.f32 %v1393, %v1621
      %v1698 = vmul.f32 %v1398, %v1623
      %v1699 = vmul.f32 %v1401, %v1625
      %v1700 = vmul.f32 %v1406, %v1627
      %v1701 = vmul.f32 %v1409, %v1629
      %v1702 = vmul.f32 %v1414, %v1631
      %v1703 = vmul.f32 %v1417, %v1633
      %v1704 = vmul.f32 %v1422, %v1635
      %v1705 = vmul.f32 %v1425, %v1637
      %v1706 = vmul.f32 %v1430, %v1639
      %v1707 = vmul.f32 %v1433, %v1641
      %v1708 = vmul.f32 %v1438, %v1643
      %v1709 = vmul.f32 %v1441, %v1642
      %v1710 = vadd.f32 %v1677, 0.0
      %v1711 = vadd.f32 %v1678, 0.0
      %v1712 = vadd.f32 %v1679, 0.0
      %v1713 = vadd.f32 %v1680, 0.0
      %v1714 = vadd.f32 %v1681, 0.0
      %v1715 = vadd.f32 %v1682, 0.0
      %v1716 = vadd.f32 %v1683, 0.0
      %v1717 = vadd.f32 %v1684, 0.0
      %v1718 = vadd.f32 %v1685, 0.0
      %v1719 = vadd.f32 %v1686, 0.0
      %v1720 = vadd.f32 %v1687, 0.0
      %v1721 = vadd.f32 %v1688, 0.0
      %v1722 = vadd.f32 %v1689, 0.0
      %v1723 = vadd.f32 %v1690, 0.0
      %v1724 = vadd.f32 %v1691, 0.0
      %v1725 = vadd.f32 %v1692, 0.0
      %v1726 = vadd.f32 %v1693, 0.0
      %v1727 = vadd.f32 %v1694, 0.0
      %v1728 = vadd.f32 %v1695, 0.0
      %v1729 = vadd.f32 %v1696, 0.0
      %v1730 = vadd.f32 %v1697, 0.0
      %v1731 = vadd.f32 %v1698, 0.0
      %v1732 = vadd.f32 %v1699, 0.0
      %v1733 = vadd.f32 %v1700, 0.0
      %v1734 = vadd.f32 %v1701, 0.0
      %v1735 = vadd.f32 %v1702, 0.0
      %v1736 = vadd.f32 %v1703, 0.0
      %v1737 = vadd.f32 %v1704, 0.0
      %v1738 = vadd.f32 %v1705, 0.0
      %v1739 = vadd.f32 %v1706, 0.0
      %v1740 = vadd.f32 %v1707, 0.0
      %v1741 = vadd.f32 %v1708, 0.0
      %v1742 = vadd.f32 %v1709, 0.0
      %1743 = vset.pattern.permute.xlu0 1
      %1744 = vperm.xlu0 %1743, %v696
      %v1745 = vpop.permute.xlu0 %1744
      %1747 = vset.pattern.permute.xlu0 1
      %1748 = vperm.xlu0 %1747, %v697
      %v1749 = vpop.permute.xlu0 %1748
      %1751 = vset.pattern.permute.xlu0 1
      %1752 = vperm.xlu0 %1751, %v698
      %v1753 = vpop.permute.xlu0 %1752
      %1755 = vset.pattern.permute.xlu0 1
      %1756 = vperm.xlu0 %1755, %v699
      %v1757 = vpop.permute.xlu0 %1756
      %1759 = vset.pattern.permute.xlu0 1
      %1760 = vperm.xlu0 %1759, %v700
      %v1761 = vpop.permute.xlu0 %1760
      %1763 = vset.pattern.permute.xlu0 1
      %1764 = vperm.xlu0 %1763, %v701
      %v1765 = vpop.permute.xlu0 %1764
      %1767 = vset.pattern.permute.xlu0 1
      %1768 = vperm.xlu0 %1767, %v702
      %v1769 = vpop.permute.xlu0 %1768
      %1771 = vset.pattern.permute.xlu0 1
      %1772 = vperm.xlu0 %1771, %v703
      %v1773 = vpop.permute.xlu0 %1772
      %1775 = vset.pattern.permute.xlu0 1
      %1776 = vperm.xlu0 %1775, %v704
      %v1777 = vpop.permute.xlu0 %1776
      %1779 = vset.pattern.permute.xlu0 1
      %1780 = vperm.xlu0 %1779, %v705
      %v1781 = vpop.permute.xlu0 %1780
      %1783 = vset.pattern.permute.xlu0 1
      %1784 = vperm.xlu0 %1783, %v706
      %v1785 = vpop.permute.xlu0 %1784
      %1787 = vset.pattern.permute.xlu0 1
      %1788 = vperm.xlu0 %1787, %v707
      %v1789 = vpop.permute.xlu0 %1788
      %1791 = vset.pattern.permute.xlu0 1
      %1792 = vperm.xlu0 %1791, %v708
      %v1793 = vpop.permute.xlu0 %1792
      %1795 = vset.pattern.permute.xlu0 1
      %1796 = vperm.xlu0 %1795, %v709
      %v1797 = vpop.permute.xlu0 %1796
      %1799 = vset.pattern.permute.xlu0 1
      %1800 = vperm.xlu0 %1799, %v710
      %v1801 = vpop.permute.xlu0 %1800
      %1803 = vset.pattern.permute.xlu0 1
      %1804 = vperm.xlu0 %1803, %v711
      %v1805 = vpop.permute.xlu0 %1804
      %1807 = vset.pattern.permute.xlu0 1
      %1808 = vperm.xlu0 %1807, %v712
      %v1809 = vpop.permute.xlu0 %1808
      %1811 = vset.pattern.permute.xlu0 1
      %1812 = vperm.xlu0 %1811, %v713
      %v1813 = vpop.permute.xlu0 %1812
      %1815 = vset.pattern.permute.xlu0 1
      %1816 = vperm.xlu0 %1815, %v714
      %v1817 = vpop.permute.xlu0 %1816
      %1819 = vset.pattern.permute.xlu0 1
      %1820 = vperm.xlu0 %1819, %v715
      %v1821 = vpop.permute.xlu0 %1820
      %1823 = vset.pattern.permute.xlu0 1
      %1824 = vperm.xlu0 %1823, %v716
      %v1825 = vpop.permute.xlu0 %1824
      %1827 = vset.pattern.permute.xlu0 1
      %1828 = vperm.xlu0 %1827, %v717
      %v1829 = vpop.permute.xlu0 %1828
      %1831 = vset.pattern.permute.xlu0 1
      %1832 = vperm.xlu0 %1831, %v718
      %v1833 = vpop.permute.xlu0 %1832
      %1835 = vset.pattern.permute.xlu0 1
      %1836 = vperm.xlu0 %1835, %v719
      %v1837 = vpop.permute.xlu0 %1836
      %1839 = vset.pattern.permute.xlu0 1
      %1840 = vperm.xlu0 %1839, %v720
      %v1841 = vpop.permute.xlu0 %1840
      %1843 = vset.pattern.permute.xlu0 1
      %1844 = vperm.xlu0 %1843, %v721
      %v1845 = vpop.permute.xlu0 %1844
      %1847 = vset.pattern.permute.xlu0 1
      %1848 = vperm.xlu0 %1847, %v722
      %v1849 = vpop.permute.xlu0 %1848
      %1851 = vset.pattern.permute.xlu0 1
      %1852 = vperm.xlu0 %1851, %v723
      %v1853 = vpop.permute.xlu0 %1852
      %1855 = vset.pattern.permute.xlu0 1
      %1856 = vperm.xlu0 %1855, %v724
      %v1857 = vpop.permute.xlu0 %1856
      %1859 = vset.pattern.permute.xlu0 1
      %1860 = vperm.xlu0 %1859, %v725
      %v1861 = vpop.permute.xlu0 %1860
      %1863 = vset.pattern.permute.xlu0 1
      %1864 = vperm.xlu0 %1863, %v726
      %v1865 = vpop.permute.xlu0 %1864
      %1867 = vset.pattern.permute.xlu0 1
      %1868 = vperm.xlu0 %1867, %v727
      %v1869 = vpop.permute.xlu0 %1868
      %v1871 = vmul.f32 %v1745, 0.0
      %v1872 = vmul.f32 %v1749, 0.0
      %v1873 = vmul.f32 %v1326, %v1753
      %v1874 = vmul.f32 %v1329, %v1757
      %v1875 = vmul.f32 %v1334, %v1761
      %v1876 = vmul.f32 %v1337, %v1765
      %v1877 = vmul.f32 %v1342, %v1769
      %v1878 = vmul.f32 %v1345, %v1773
      %v1879 = vmul.f32 %v1350, %v1777
      %v1880 = vmul.f32 %v1353, %v1781
      %v1881 = vmul.f32 %v1358, %v1785
      %v1882 = vmul.f32 %v1361, %v1789
      %v1883 = vmul.f32 %v1366, %v1793
      %v1884 = vmul.f32 %v1369, %v1797
      %v1885 = vmul.f32 %v1374, %v1801
      %v1886 = vmul.f32 %v1377, %v1805
      %v1887 = vmul.f32 %v1382, %v1809
      %v1888 = vmul.f32 %v1385, %v1813
      %v1889 = vmul.f32 %v1390, %v1817
      %v1890 = vmul.f32 %v1393, %v1821
      %v1891 = vmul.f32 %v1398, %v1825
      %v1892 = vmul.f32 %v1401, %v1829
      %v1893 = vmul.f32 %v1406, %v1833
      %v1894 = vmul.f32 %v1409, %v1837
      %v1895 = vmul.f32 %v1414, %v1841
      %v1896 = vmul.f32 %v1417, %v1845
      %v1897 = vmul.f32 %v1422, %v1849
      %v1898 = vmul.f32 %v1425, %v1853
      %v1899 = vmul.f32 %v1430, %v1857
      %v1900 = vmul.f32 %v1433, %v1861
      %v1901 = vmul.f32 %v1438, %v1865
      %v1902 = vmul.f32 %v1441, %v1869
      %v1935 = vrot.slane %v1871, 1
      %v1936 = vrot.slane %v1872, 1
      %v1937 = vsel %vm1580, %v1935, %v1936
      %v1938 = vrot.slane %v1873, 1
      %v1939 = vsel %vm1580, %v1936, %v1938
      %v1940 = vrot.slane %v1874, 1
      %v1941 = vsel %vm1580, %v1938, %v1940
      %v1942 = vrot.slane %v1875, 1
      %v1943 = vsel %vm1580, %v1940, %v1942
      %v1944 = vrot.slane %v1876, 1
      %v1945 = vsel %vm1580, %v1942, %v1944
      %v1946 = vrot.slane %v1877, 1
      %v1947 = vsel %vm1580, %v1944, %v1946
      %v1948 = vrot.slane %v1878, 1
      %v1949 = vsel %vm1580, %v1946, %v1948
      %v1950 = vrot.slane %v1879, 1
      %v1951 = vsel %vm1580, %v1948, %v1950
      %v1952 = vrot.slane %v1880, 1
      %v1953 = vsel %vm1580, %v1950, %v1952
      %v1954 = vrot.slane %v1881, 1
      %v1955 = vsel %vm1580, %v1952, %v1954
      %v1956 = vrot.slane %v1882, 1
      %v1957 = vsel %vm1580, %v1954, %v1956
      %v1958 = vrot.slane %v1883, 1
      %v1959 = vsel %vm1580, %v1956, %v1958
      %v1960 = vrot.slane %v1884, 1
      %v1961 = vsel %vm1580, %v1958, %v1960
      %v1962 = vrot.slane %v1885, 1
      %v1963 = vsel %vm1580, %v1960, %v1962
      %v1964 = vrot.slane %v1886, 1
      %v1965 = vsel %vm1580, %v1962, %v1964
      %v1966 = vrot.slane %v1887, 1
      %v1967 = vsel %vm1580, %v1964, %v1966
      %v1968 = vrot.slane %v1888, 1
      %v1969 = vsel %vm1580, %v1966, %v1968
      %v1970 = vrot.slane %v1889, 1
      %v1971 = vsel %vm1580, %v1968, %v1970
      %v1972 = vrot.slane %v1890, 1
      %v1973 = vsel %vm1580, %v1970, %v1972
      %v1974 = vrot.slane %v1891, 1
      %v1975 = vsel %vm1580, %v1972, %v1974
      %v1976 = vrot.slane %v1892, 1
      %v1977 = vsel %vm1580, %v1974, %v1976
      %v1978 = vrot.slane %v1893, 1
      %v1979 = vsel %vm1580, %v1976, %v1978
      %v1980 = vrot.slane %v1894, 1
      %v1981 = vsel %vm1580, %v1978, %v1980
      %v1982 = vrot.slane %v1895, 1
      %v1983 = vsel %vm1580, %v1980, %v1982
      %v1984 = vrot.slane %v1896, 1
      %v1985 = vsel %vm1580, %v1982, %v1984
      %v1986 = vrot.slane %v1897, 1
      %v1987 = vsel %vm1580, %v1984, %v1986
      %v1988 = vrot.slane %v1898, 1
      %v1989 = vsel %vm1580, %v1986, %v1988
      %v1990 = vrot.slane %v1899, 1
      %v1991 = vsel %vm1580, %v1988, %v1990
      %v1992 = vrot.slane %v1900, 1
      %v1993 = vsel %vm1580, %v1990, %v1992
      %v1994 = vrot.slane %v1901, 1
      %v1995 = vsel %vm1580, %v1992, %v1994
      %v1996 = vrot.slane %v1902, 1
      %v1997 = vsel %vm1580, %v1994, %v1996
      %1998 = vrot.lane.b32.xlu0 %v1935, 120
      %v1999 = vpop.permute.xlu0 %1998
      %2000 = vrot.lane.b32.xlu0 %v1937, 120
      %v2001 = vpop.permute.xlu0 %2000
      %2002 = vrot.lane.b32.xlu0 %v1939, 120
      %v2003 = vpop.permute.xlu0 %2002
      %2004 = vrot.lane.b32.xlu0 %v1941, 120
      %v2005 = vpop.permute.xlu0 %2004
      %2006 = vrot.lane.b32.xlu0 %v1943, 120
      %v2007 = vpop.permute.xlu0 %2006
      %2008 = vrot.lane.b32.xlu0 %v1945, 120
      %v2009 = vpop.permute.xlu0 %2008
      %2010 = vrot.lane.b32.xlu0 %v1947, 120
      %v2011 = vpop.permute.xlu0 %2010
      %2012 = vrot.lane.b32.xlu0 %v1949, 120
      %v2013 = vpop.permute.xlu0 %2012
      %2014 = vrot.lane.b32.xlu0 %v1951, 120
      %v2015 = vpop.permute.xlu0 %2014
      %2016 = vrot.lane.b32.xlu0 %v1953, 120
      %v2017 = vpop.permute.xlu0 %2016
      %2018 = vrot.lane.b32.xlu0 %v1955, 120
      %v2019 = vpop.permute.xlu0 %2018
      %2020 = vrot.lane.b32.xlu0 %v1957, 120
      %v2021 = vpop.permute.xlu0 %2020
      %2022 = vrot.lane.b32.xlu0 %v1959, 120
      %v2023 = vpop.permute.xlu0 %2022
      %2024 = vrot.lane.b32.xlu0 %v1961, 120
      %v2025 = vpop.permute.xlu0 %2024
      %2026 = vrot.lane.b32.xlu0 %v1963, 120
      %v2027 = vpop.permute.xlu0 %2026
      %2028 = vrot.lane.b32.xlu0 %v1965, 120
      %v2029 = vpop.permute.xlu0 %2028
      %2030 = vrot.lane.b32.xlu0 %v1967, 120
      %v2031 = vpop.permute.xlu0 %2030
      %2032 = vrot.lane.b32.xlu0 %v1969, 120
      %v2033 = vpop.permute.xlu0 %2032
      %2034 = vrot.lane.b32.xlu0 %v1971, 120
      %v2035 = vpop.permute.xlu0 %2034
      %2036 = vrot.lane.b32.xlu0 %v1973, 120
      %v2037 = vpop.permute.xlu0 %2036
      %2038 = vrot.lane.b32.xlu0 %v1975, 120
      %v2039 = vpop.permute.xlu0 %2038
      %2040 = vrot.lane.b32.xlu0 %v1977, 120
      %v2041 = vpop.permute.xlu0 %2040
      %2042 = vrot.lane.b32.xlu0 %v1979, 120
      %v2043 = vpop.permute.xlu0 %2042
      %2044 = vrot.lane.b32.xlu0 %v1981, 120
      %v2045 = vpop.permute.xlu0 %2044
      %2046 = vrot.lane.b32.xlu0 %v1983, 120
      %v2047 = vpop.permute.xlu0 %2046
      %2048 = vrot.lane.b32.xlu0 %v1985, 120
      %v2049 = vpop.permute.xlu0 %2048
      %2050 = vrot.lane.b32.xlu0 %v1987, 120
      %v2051 = vpop.permute.xlu0 %2050
      %2052 = vrot.lane.b32.xlu0 %v1989, 120
      %v2053 = vpop.permute.xlu0 %2052
      %2054 = vrot.lane.b32.xlu0 %v1991, 120
      %v2055 = vpop.permute.xlu0 %2054
      %2056 = vrot.lane.b32.xlu0 %v1993, 120
      %v2057 = vpop.permute.xlu0 %2056
      %2058 = vrot.lane.b32.xlu0 %v1995, 120
      %v2059 = vpop.permute.xlu0 %2058
      %2060 = vrot.lane.b32.xlu0 %v1997, 120
      %v2061 = vpop.permute.xlu0 %2060
      %2062 = vrot.lane.b32.xlu0 %v1996, 120
      %v2063 = vpop.permute.xlu0 %2062
      %v2097 = vadd.f32 %v1710, %v1999
      %v2098 = vadd.f32 %v1711, %v2001
      %v2099 = vadd.f32 %v1712, %v2003
      %v2100 = vadd.f32 %v1713, %v2005
      %v2101 = vadd.f32 %v1714, %v2007
      %v2102 = vadd.f32 %v1715, %v2009
      %v2103 = vadd.f32 %v1716, %v2011
      %v2104 = vadd.f32 %v1717, %v2013
      %v2105 = vadd.f32 %v1718, %v2015
      %v2106 = vadd.f32 %v1719, %v2017
      %v2107 = vadd.f32 %v1720, %v2019
      %v2108 = vadd.f32 %v1721, %v2021
      %v2109 = vadd.f32 %v1722, %v2023
      %v2110 = vadd.f32 %v1723, %v2025
      %v2111 = vadd.f32 %v1724, %v2027
      %v2112 = vadd.f32 %v1725, %v2029
      %v2113 = vadd.f32 %v1726, %v2031
      %v2114 = vadd.f32 %v1727, %v2033
      %v2115 = vadd.f32 %v1728, %v2035
      %v2116 = vadd.f32 %v1729, %v2037
      %v2117 = vadd.f32 %v1730, %v2039
      %v2118 = vadd.f32 %v1731, %v2041
      %v2119 = vadd.f32 %v1732, %v2043
      %v2120 = vadd.f32 %v1733, %v2045
      %v2121 = vadd.f32 %v1734, %v2047
      %v2122 = vadd.f32 %v1735, %v2049
      %v2123 = vadd.f32 %v1736, %v2051
      %v2124 = vadd.f32 %v1737, %v2053
      %v2125 = vadd.f32 %v1738, %v2055
      %v2126 = vadd.f32 %v1739, %v2057
      %v2127 = vadd.f32 %v1740, %v2059
      %v2128 = vadd.f32 %v1741, %v2061
      %v2129 = vadd.f32 %v1742, %v2063
      %2130 = vset.pattern.permute.xlu0 2
      %2131 = vperm.xlu0 %2130, %v696
      %v2132 = vpop.permute.xlu0 %2131
      %2133 = vset.pattern.permute.xlu0 2
      %2134 = vperm.xlu0 %2133, %v697
      %v2135 = vpop.permute.xlu0 %2134
      %2136 = vset.pattern.permute.xlu0 2
      %2137 = vperm.xlu0 %2136, %v698
      %v2138 = vpop.permute.xlu0 %2137
      %2139 = vset.pattern.permute.xlu0 2
      %2140 = vperm.xlu0 %2139, %v699
      %v2141 = vpop.permute.xlu0 %2140
      %2142 = vset.pattern.permute.xlu0 2
      %2143 = vperm.xlu0 %2142, %v700
      %v2144 = vpop.permute.xlu0 %2143
      %2145 = vset.pattern.permute.xlu0 2
      %2146 = vperm.xlu0 %2145, %v701
      %v2147 = vpop.permute.xlu0 %2146
      %2148 = vset.pattern.permute.xlu0 2
      %2149 = vperm.xlu0 %2148, %v702
      %v2150 = vpop.permute.xlu0 %2149
      %2151 = vset.pattern.permute.xlu0 2
      %2152 = vperm.xlu0 %2151, %v703
      %v2153 = vpop.permute.xlu0 %2152
      %2154 = vset.pattern.permute.xlu0 2
      %2155 = vperm.xlu0 %2154, %v704
      %v2156 = vpop.permute.xlu0 %2155
      %2157 = vset.pattern.permute.xlu0 2
      %2158 = vperm.xlu0 %2157, %v705
      %v2159 = vpop.permute.xlu0 %2158
      %2160 = vset.pattern.permute.xlu0 2
      %2161 = vperm.xlu0 %2160, %v706
      %v2162 = vpop.permute.xlu0 %2161
      %2163 = vset.pattern.permute.xlu0 2
      %2164 = vperm.xlu0 %2163, %v707
      %v2165 = vpop.permute.xlu0 %2164
      %2166 = vset.pattern.permute.xlu0 2
      %2167 = vperm.xlu0 %2166, %v708
      %v2168 = vpop.permute.xlu0 %2167
      %2169 = vset.pattern.permute.xlu0 2
      %2170 = vperm.xlu0 %2169, %v709
      %v2171 = vpop.permute.xlu0 %2170
      %2172 = vset.pattern.permute.xlu0 2
      %2173 = vperm.xlu0 %2172, %v710
      %v2174 = vpop.permute.xlu0 %2173
      %2175 = vset.pattern.permute.xlu0 2
      %2176 = vperm.xlu0 %2175, %v711
      %v2177 = vpop.permute.xlu0 %2176
      %2178 = vset.pattern.permute.xlu0 2
      %2179 = vperm.xlu0 %2178, %v712
      %v2180 = vpop.permute.xlu0 %2179
      %2181 = vset.pattern.permute.xlu0 2
      %2182 = vperm.xlu0 %2181, %v713
      %v2183 = vpop.permute.xlu0 %2182
      %2184 = vset.pattern.permute.xlu0 2
      %2185 = vperm.xlu0 %2184, %v714
      %v2186 = vpop.permute.xlu0 %2185
      %2187 = vset.pattern.permute.xlu0 2
      %2188 = vperm.xlu0 %2187, %v715
      %v2189 = vpop.permute.xlu0 %2188
      %2190 = vset.pattern.permute.xlu0 2
      %2191 = vperm.xlu0 %2190, %v716
      %v2192 = vpop.permute.xlu0 %2191
      %2193 = vset.pattern.permute.xlu0 2
      %2194 = vperm.xlu0 %2193, %v717
      %v2195 = vpop.permute.xlu0 %2194
      %2196 = vset.pattern.permute.xlu0 2
      %2197 = vperm.xlu0 %2196, %v718
      %v2198 = vpop.permute.xlu0 %2197
      %2199 = vset.pattern.permute.xlu0 2
      %2200 = vperm.xlu0 %2199, %v719
      %v2201 = vpop.permute.xlu0 %2200
      %2202 = vset.pattern.permute.xlu0 2
      %2203 = vperm.xlu0 %2202, %v720
      %v2204 = vpop.permute.xlu0 %2203
      %2205 = vset.pattern.permute.xlu0 2
      %2206 = vperm.xlu0 %2205, %v721
      %v2207 = vpop.permute.xlu0 %2206
      %2208 = vset.pattern.permute.xlu0 2
      %2209 = vperm.xlu0 %2208, %v722
      %v2210 = vpop.permute.xlu0 %2209
      %2211 = vset.pattern.permute.xlu0 2
      %2212 = vperm.xlu0 %2211, %v723
      %v2213 = vpop.permute.xlu0 %2212
      %2214 = vset.pattern.permute.xlu0 2
      %2215 = vperm.xlu0 %2214, %v724
      %v2216 = vpop.permute.xlu0 %2215
      %2217 = vset.pattern.permute.xlu0 2
      %2218 = vperm.xlu0 %2217, %v725
      %v2219 = vpop.permute.xlu0 %2218
      %2220 = vset.pattern.permute.xlu0 2
      %2221 = vperm.xlu0 %2220, %v726
      %v2222 = vpop.permute.xlu0 %2221
      %2223 = vset.pattern.permute.xlu0 2
      %2224 = vperm.xlu0 %2223, %v727
      %v2225 = vpop.permute.xlu0 %2224
      %vm2226 = vcmask 1040384
      %v2227 = vrot.slane %v2132, 7
      %v2228 = vrot.slane %v2135, 7
      %v2229 = vsel %vm2226, %v2227, %v2228
      %v2230 = vrot.slane %v2138, 7
      %v2231 = vsel %vm2226, %v2228, %v2230
      %v2232 = vrot.slane %v2141, 7
      %v2233 = vsel %vm2226, %v2230, %v2232
      %v2234 = vrot.slane %v2144, 7
      %v2235 = vsel %vm2226, %v2232, %v2234
      %v2236 = vrot.slane %v2147, 7
      %v2237 = vsel %vm2226, %v2234, %v2236
      %v2238 = vrot.slane %v2150, 7
      %v2239 = vsel %vm2226, %v2236, %v2238
      %v2240 = vrot.slane %v2153, 7
      %v2241 = vsel %vm2226, %v2238, %v2240
      %v2242 = vrot.slane %v2156, 7
      %v2243 = vsel %vm2226, %v2240, %v2242
      %v2244 = vrot.slane %v2159, 7
      %v2245 = vsel %vm2226, %v2242, %v2244
      %v2246 = vrot.slane %v2162, 7
      %v2247 = vsel %vm2226, %v2244, %v2246
      %v2248 = vrot.slane %v2165, 7
      %v2249 = vsel %vm2226, %v2246, %v2248
      %v2250 = vrot.slane %v2168, 7
      %v2251 = vsel %vm2226, %v2248, %v2250
      %v2252 = vrot.slane %v2171, 7
      %v2253 = vsel %vm2226, %v2250, %v2252
      %v2254 = vrot.slane %v2174, 7
      %v2255 = vsel %vm2226, %v2252, %v2254
      %v2256 = vrot.slane %v2177, 7
      %v2257 = vsel %vm2226, %v2254, %v2256
      %v2258 = vrot.slane %v2180, 7
      %v2259 = vsel %vm2226, %v2256, %v2258
      %v2260 = vrot.slane %v2183, 7
      %v2261 = vsel %vm2226, %v2258, %v2260
      %v2262 = vrot.slane %v2186, 7
      %v2263 = vsel %vm2226, %v2260, %v2262
      %v2264 = vrot.slane %v2189, 7
      %v2265 = vsel %vm2226, %v2262, %v2264
      %v2266 = vrot.slane %v2192, 7
      %v2267 = vsel %vm2226, %v2264, %v2266
      %v2268 = vrot.slane %v2195, 7
      %v2269 = vsel %vm2226, %v2266, %v2268
      %v2270 = vrot.slane %v2198, 7
      %v2271 = vsel %vm2226, %v2268, %v2270
      %v2272 = vrot.slane %v2201, 7
      %v2273 = vsel %vm2226, %v2270, %v2272
      %v2274 = vrot.slane %v2204, 7
      %v2275 = vsel %vm2226, %v2272, %v2274
      %v2276 = vrot.slane %v2207, 7
      %v2277 = vsel %vm2226, %v2274, %v2276
      %v2278 = vrot.slane %v2210, 7
      %v2279 = vsel %vm2226, %v2276, %v2278
      %v2280 = vrot.slane %v2213, 7
      %v2281 = vsel %vm2226, %v2278, %v2280
      %v2282 = vrot.slane %v2216, 7
      %v2283 = vsel %vm2226, %v2280, %v2282
      %v2284 = vrot.slane %v2219, 7
      %v2285 = vsel %vm2226, %v2282, %v2284
      %v2286 = vrot.slane %v2222, 7
      %v2287 = vsel %vm2226, %v2284, %v2286
      %v2288 = vrot.slane %v2225, 7
      %v2289 = vsel %vm2226, %v2286, %v2288
      %v2323 = vmul.f32 %v2227, 0.0
      %v2324 = vmul.f32 %v2229, 0.0
      %v2325 = vmul.f32 %v1326, %v2231
      %v2326 = vmul.f32 %v1329, %v2233
      %v2327 = vmul.f32 %v1334, %v2235
      %v2328 = vmul.f32 %v1337, %v2237
      %v2329 = vmul.f32 %v1342, %v2239
      %v2330 = vmul.f32 %v1345, %v2241
      %v2331 = vmul.f32 %v1350, %v2243
      %v2332 = vmul.f32 %v1353, %v2245
      %v2333 = vmul.f32 %v1358, %v2247
      %v2334 = vmul.f32 %v1361, %v2249
      %v2335 = vmul.f32 %v1366, %v2251
      %v2336 = vmul.f32 %v1369, %v2253
      %v2337 = vmul.f32 %v1374, %v2255
      %v2338 = vmul.f32 %v1377, %v2257
      %v2339 = vmul.f32 %v1382, %v2259
      %v2340 = vmul.f32 %v1385, %v2261
      %v2341 = vmul.f32 %v1390, %v2263
      %v2342 = vmul.f32 %v1393, %v2265
      %v2343 = vmul.f32 %v1398, %v2267
      %v2344 = vmul.f32 %v1401, %v2269
      %v2345 = vmul.f32 %v1406, %v2271
      %v2346 = vmul.f32 %v1409, %v2273
      %v2347 = vmul.f32 %v1414, %v2275
      %v2348 = vmul.f32 %v1417, %v2277
      %v2349 = vmul.f32 %v1422, %v2279
      %v2350 = vmul.f32 %v1425, %v2281
      %v2351 = vmul.f32 %v1430, %v2283
      %v2352 = vmul.f32 %v1433, %v2285
      %v2353 = vmul.f32 %v1438, %v2287
      %v2354 = vmul.f32 %v1441, %v2289
      %v2355 = vmul.f32 %v1446, %v2288
      %vm2389 = vcmask 1045504
      %v2390 = vrot.slane %v2323, 2
      %v2391 = vrot.slane %v2324, 2
      %v2392 = vsel %vm2389, %v2390, %v2391
      %v2393 = vrot.slane %v2325, 2
      %v2394 = vsel %vm2389, %v2391, %v2393
      %v2395 = vrot.slane %v2326, 2
      %v2396 = vsel %vm2389, %v2393, %v2395
      %v2397 = vrot.slane %v2327, 2
      %v2398 = vsel %vm2389, %v2395, %v2397
      %v2399 = vrot.slane %v2328, 2
      %v2400 = vsel %vm2389, %v2397, %v2399
      %v2401 = vrot.slane %v2329, 2
      %v2402 = vsel %vm2389, %v2399, %v2401
      %v2403 = vrot.slane %v2330, 2
      %v2404 = vsel %vm2389, %v2401, %v2403
      %v2405 = vrot.slane %v2331, 2
      %v2406 = vsel %vm2389, %v2403, %v2405
      %v2407 = vrot.slane %v2332, 2
      %v2408 = vsel %vm2389, %v2405, %v2407
      %v2409 = vrot.slane %v2333, 2
      %v2410 = vsel %vm2389, %v2407, %v2409
      %v2411 = vrot.slane %v2334, 2
      %v2412 = vsel %vm2389, %v2409, %v2411
      %v2413 = vrot.slane %v2335, 2
      %v2414 = vsel %vm2389, %v2411, %v2413
      %v2415 = vrot.slane %v2336, 2
      %v2416 = vsel %vm2389, %v2413, %v2415
      %v2417 = vrot.slane %v2337, 2
      %v2418 = vsel %vm2389, %v2415, %v2417
      %v2419 = vrot.slane %v2338, 2
      %v2420 = vsel %vm2389, %v2417, %v2419
      %v2421 = vrot.slane %v2339, 2
      %v2422 = vsel %vm2389, %v2419, %v2421
      %v2423 = vrot.slane %v2340, 2
      %v2424 = vsel %vm2389, %v2421, %v2423
      %v2425 = vrot.slane %v2341, 2
      %v2426 = vsel %vm2389, %v2423, %v2425
      %v2427 = vrot.slane %v2342, 2
      %v2428 = vsel %vm2389, %v2425, %v2427
      %v2429 = vrot.slane %v2343, 2
      %v2430 = vsel %vm2389, %v2427, %v2429
      %v2431 = vrot.slane %v2344, 2
      %v2432 = vsel %vm2389, %v2429, %v2431
      %v2433 = vrot.slane %v2345, 2
      %v2434 = vsel %vm2389, %v2431, %v2433
      %v2435 = vrot.slane %v2346, 2
      %v2436 = vsel %vm2389, %v2433, %v2435
      %v2437 = vrot.slane %v2347, 2
      %v2438 = vsel %vm2389, %v2435, %v2437
      %v2439 = vrot.slane %v2348, 2
      %v2440 = vsel %vm2389, %v2437, %v2439
      %v2441 = vrot.slane %v2349, 2
      %v2442 = vsel %vm2389, %v2439, %v2441
      %v2443 = vrot.slane %v2350, 2
      %v2444 = vsel %vm2389, %v2441, %v2443
      %v2445 = vrot.slane %v2351, 2
      %v2446 = vsel %vm2389, %v2443, %v2445
      %v2447 = vrot.slane %v2352, 2
      %v2448 = vsel %vm2389, %v2445, %v2447
      %v2449 = vrot.slane %v2353, 2
      %v2450 = vsel %vm2389, %v2447, %v2449
      %v2451 = vrot.slane %v2354, 2
      %v2452 = vsel %vm2389, %v2449, %v2451
      %v2453 = vrot.slane %v2355, 2
      %v2454 = vsel %vm2389, %v2451, %v2453
      %2455 = vrot.lane.b32.xlu0 %v2390, 112
      %v2456 = vpop.permute.xlu0 %2455
      %2457 = vrot.lane.b32.xlu0 %v2392, 112
      %v2458 = vpop.permute.xlu0 %2457
      %2459 = vrot.lane.b32.xlu0 %v2394, 112
      %v2460 = vpop.permute.xlu0 %2459
      %2461 = vrot.lane.b32.xlu0 %v2396, 112
      %v2462 = vpop.permute.xlu0 %2461
      %2463 = vrot.lane.b32.xlu0 %v2398, 112
      %v2464 = vpop.permute.xlu0 %2463
      %2465 = vrot.lane.b32.xlu0 %v2400, 112
      %v2466 = vpop.permute.xlu0 %2465
      %2467 = vrot.lane.b32.xlu0 %v2402, 112
      %v2468 = vpop.permute.xlu0 %2467
      %2469 = vrot.lane.b32.xlu0 %v2404, 112
      %v2470 = vpop.permute.xlu0 %2469
      %2471 = vrot.lane.b32.xlu0 %v2406, 112
      %v2472 = vpop.permute.xlu0 %2471
      %2473 = vrot.lane.b32.xlu0 %v2408, 112
      %v2474 = vpop.permute.xlu0 %2473
      %2475 = vrot.lane.b32.xlu0 %v2410, 112
      %v2476 = vpop.permute.xlu0 %2475
      %2477 = vrot.lane.b32.xlu0 %v2412, 112
      %v2478 = vpop.permute.xlu0 %2477
      %2479 = vrot.lane.b32.xlu0 %v2414, 112
      %v2480 = vpop.permute.xlu0 %2479
      %2481 = vrot.lane.b32.xlu0 %v2416, 112
      %v2482 = vpop.permute.xlu0 %2481
      %2483 = vrot.lane.b32.xlu0 %v2418, 112
      %v2484 = vpop.permute.xlu0 %2483
      %2485 = vrot.lane.b32.xlu0 %v2420, 112
      %v2486 = vpop.permute.xlu0 %2485
      %2487 = vrot.lane.b32.xlu0 %v2422, 112
      %v2488 = vpop.permute.xlu0 %2487
      %2489 = vrot.lane.b32.xlu0 %v2424, 112
      %v2490 = vpop.permute.xlu0 %2489
      %2491 = vrot.lane.b32.xlu0 %v2426, 112
      %v2492 = vpop.permute.xlu0 %2491
      %2493 = vrot.lane.b32.xlu0 %v2428, 112
      %v2494 = vpop.permute.xlu0 %2493
      %2495 = vrot.lane.b32.xlu0 %v2430, 112
      %v2496 = vpop.permute.xlu0 %2495
      %2497 = vrot.lane.b32.xlu0 %v2432, 112
      %v2498 = vpop.permute.xlu0 %2497
      %2499 = vrot.lane.b32.xlu0 %v2434, 112
      %v2500 = vpop.permute.xlu0 %2499
      %2501 = vrot.lane.b32.xlu0 %v2436, 112
      %v2502 = vpop.permute.xlu0 %2501
      %2503 = vrot.lane.b32.xlu0 %v2438, 112
      %v2504 = vpop.permute.xlu0 %2503
      %2505 = vrot.lane.b32.xlu0 %v2440, 112
      %v2506 = vpop.permute.xlu0 %2505
      %2507 = vrot.lane.b32.xlu0 %v2442, 112
      %v2508 = vpop.permute.xlu0 %2507
      %2509 = vrot.lane.b32.xlu0 %v2444, 112
      %v2510 = vpop.permute.xlu0 %2509
      %2511 = vrot.lane.b32.xlu0 %v2446, 112
      %v2512 = vpop.permute.xlu0 %2511
      %2513 = vrot.lane.b32.xlu0 %v2448, 112
      %v2514 = vpop.permute.xlu0 %2513
      %2515 = vrot.lane.b32.xlu0 %v2450, 112
      %v2516 = vpop.permute.xlu0 %2515
      %2517 = vrot.lane.b32.xlu0 %v2452, 112
      %v2518 = vpop.permute.xlu0 %2517
      %2519 = vrot.lane.b32.xlu0 %v2454, 112
      %v2520 = vpop.permute.xlu0 %2519
      %v2554 = vadd.f32 %v2097, %v2456
      %v2555 = vadd.f32 %v2098, %v2458
      %v2556 = vadd.f32 %v2099, %v2460
      %v2557 = vadd.f32 %v2100, %v2462
      %v2558 = vadd.f32 %v2101, %v2464
      %v2559 = vadd.f32 %v2102, %v2466
      %v2560 = vadd.f32 %v2103, %v2468
      %v2561 = vadd.f32 %v2104, %v2470
      %v2562 = vadd.f32 %v2105, %v2472
      %v2563 = vadd.f32 %v2106, %v2474
      %v2564 = vadd.f32 %v2107, %v2476
      %v2565 = vadd.f32 %v2108, %v2478
      %v2566 = vadd.f32 %v2109, %v2480
      %v2567 = vadd.f32 %v2110, %v2482
      %v2568 = vadd.f32 %v2111, %v2484
      %v2569 = vadd.f32 %v2112, %v2486
      %v2570 = vadd.f32 %v2113, %v2488
      %v2571 = vadd.f32 %v2114, %v2490
      %v2572 = vadd.f32 %v2115, %v2492
      %v2573 = vadd.f32 %v2116, %v2494
      %v2574 = vadd.f32 %v2117, %v2496
      %v2575 = vadd.f32 %v2118, %v2498
      %v2576 = vadd.f32 %v2119, %v2500
      %v2577 = vadd.f32 %v2120, %v2502
      %v2578 = vadd.f32 %v2121, %v2504
      %v2579 = vadd.f32 %v2122, %v2506
      %v2580 = vadd.f32 %v2123, %v2508
      %v2581 = vadd.f32 %v2124, %v2510
      %v2582 = vadd.f32 %v2125, %v2512
      %v2583 = vadd.f32 %v2126, %v2514
      %v2584 = vadd.f32 %v2127, %v2516
      %v2585 = vadd.f32 %v2128, %v2518
      %v2586 = vadd.f32 %v2129, %v2520
      %2587 = vset.pattern.permute.xlu0 3
      %2588 = vperm.xlu0 %2587, %v696
      %v2589 = vpop.permute.xlu0 %2588
      %2590 = vset.pattern.permute.xlu0 3
      %2591 = vperm.xlu0 %2590, %v697
      %v2592 = vpop.permute.xlu0 %2591
      %2593 = vset.pattern.permute.xlu0 3
      %2594 = vperm.xlu0 %2593, %v698
      %v2595 = vpop.permute.xlu0 %2594
      %2596 = vset.pattern.permute.xlu0 3
      %2597 = vperm.xlu0 %2596, %v699
      %v2598 = vpop.permute.xlu0 %2597
      %2599 = vset.pattern.permute.xlu0 3
      %2600 = vperm.xlu0 %2599, %v700
      %v2601 = vpop.permute.xlu0 %2600
      %2602 = vset.pattern.permute.xlu0 3
      %2603 = vperm.xlu0 %2602, %v701
      %v2604 = vpop.permute.xlu0 %2603
      %2605 = vset.pattern.permute.xlu0 3
      %2606 = vperm.xlu0 %2605, %v702
      %v2607 = vpop.permute.xlu0 %2606
      %2608 = vset.pattern.permute.xlu0 3
      %2609 = vperm.xlu0 %2608, %v703
      %v2610 = vpop.permute.xlu0 %2609
      %2611 = vset.pattern.permute.xlu0 3
      %2612 = vperm.xlu0 %2611, %v704
      %v2613 = vpop.permute.xlu0 %2612
      %2614 = vset.pattern.permute.xlu0 3
      %2615 = vperm.xlu0 %2614, %v705
      %v2616 = vpop.permute.xlu0 %2615
      %2617 = vset.pattern.permute.xlu0 3
      %2618 = vperm.xlu0 %2617, %v706
      %v2619 = vpop.permute.xlu0 %2618
      %2620 = vset.pattern.permute.xlu0 3
      %2621 = vperm.xlu0 %2620, %v707
      %v2622 = vpop.permute.xlu0 %2621
      %2623 = vset.pattern.permute.xlu0 3
      %2624 = vperm.xlu0 %2623, %v708
      %v2625 = vpop.permute.xlu0 %2624
      %2626 = vset.pattern.permute.xlu0 3
      %2627 = vperm.xlu0 %2626, %v709
      %v2628 = vpop.permute.xlu0 %2627
      %2629 = vset.pattern.permute.xlu0 3
      %2630 = vperm.xlu0 %2629, %v710
      %v2631 = vpop.permute.xlu0 %2630
      %2632 = vset.pattern.permute.xlu0 3
      %2633 = vperm.xlu0 %2632, %v711
      %v2634 = vpop.permute.xlu0 %2633
      %2635 = vset.pattern.permute.xlu0 3
      %2636 = vperm.xlu0 %2635, %v712
      %v2637 = vpop.permute.xlu0 %2636
      %2638 = vset.pattern.permute.xlu0 3
      %2639 = vperm.xlu0 %2638, %v713
      %v2640 = vpop.permute.xlu0 %2639
      %2641 = vset.pattern.permute.xlu0 3
      %2642 = vperm.xlu0 %2641, %v714
      %v2643 = vpop.permute.xlu0 %2642
      %2644 = vset.pattern.permute.xlu0 3
      %2645 = vperm.xlu0 %2644, %v715
      %v2646 = vpop.permute.xlu0 %2645
      %2647 = vset.pattern.permute.xlu0 3
      %2648 = vperm.xlu0 %2647, %v716
      %v2649 = vpop.permute.xlu0 %2648
      %2650 = vset.pattern.permute.xlu0 3
      %2651 = vperm.xlu0 %2650, %v717
      %v2652 = vpop.permute.xlu0 %2651
      %2653 = vset.pattern.permute.xlu0 3
      %2654 = vperm.xlu0 %2653, %v718
      %v2655 = vpop.permute.xlu0 %2654
      %2656 = vset.pattern.permute.xlu0 3
      %2657 = vperm.xlu0 %2656, %v719
      %v2658 = vpop.permute.xlu0 %2657
      %2659 = vset.pattern.permute.xlu0 3
      %2660 = vperm.xlu0 %2659, %v720
      %v2661 = vpop.permute.xlu0 %2660
      %2662 = vset.pattern.permute.xlu0 3
      %2663 = vperm.xlu0 %2662, %v721
      %v2664 = vpop.permute.xlu0 %2663
      %2665 = vset.pattern.permute.xlu0 3
      %2666 = vperm.xlu0 %2665, %v722
      %v2667 = vpop.permute.xlu0 %2666
      %2668 = vset.pattern.permute.xlu0 3
      %2669 = vperm.xlu0 %2668, %v723
      %v2670 = vpop.permute.xlu0 %2669
      %2671 = vset.pattern.permute.xlu0 3
      %2672 = vperm.xlu0 %2671, %v724
      %v2673 = vpop.permute.xlu0 %2672
      %2674 = vset.pattern.permute.xlu0 3
      %2675 = vperm.xlu0 %2674, %v725
      %v2676 = vpop.permute.xlu0 %2675
      %2677 = vset.pattern.permute.xlu0 3
      %2678 = vperm.xlu0 %2677, %v726
      %v2679 = vpop.permute.xlu0 %2678
      %2680 = vset.pattern.permute.xlu0 3
      %2681 = vperm.xlu0 %2680, %v727
      %v2682 = vpop.permute.xlu0 %2681
      %v2683 = vrot.slane %v2589, 1
      %v2684 = vrot.slane %v2592, 1
      %v2685 = vsel %vm1580, %v2683, %v2684
      %v2686 = vrot.slane %v2595, 1
      %v2687 = vsel %vm1580, %v2684, %v2686
      %v2688 = vrot.slane %v2598, 1
      %v2689 = vsel %vm1580, %v2686, %v2688
      %v2690 = vrot.slane %v2601, 1
      %v2691 = vsel %vm1580, %v2688, %v2690
      %v2692 = vrot.slane %v2604, 1
      %v2693 = vsel %vm1580, %v2690, %v2692
      %v2694 = vrot.slane %v2607, 1
      %v2695 = vsel %vm1580, %v2692, %v2694
      %v2696 = vrot.slane %v2610, 1
      %v2697 = vsel %vm1580, %v2694, %v2696
      %v2698 = vrot.slane %v2613, 1
      %v2699 = vsel %vm1580, %v2696, %v2698
      %v2700 = vrot.slane %v2616, 1
      %v2701 = vsel %vm1580, %v2698, %v2700
      %v2702 = vrot.slane %v2619, 1
      %v2703 = vsel %vm1580, %v2700, %v2702
      %v2704 = vrot.slane %v2622, 1
      %v2705 = vsel %vm1580, %v2702, %v2704
      %v2706 = vrot.slane %v2625, 1
      %v2707 = vsel %vm1580, %v2704, %v2706
      %v2708 = vrot.slane %v2628, 1
      %v2709 = vsel %vm1580, %v2706, %v2708
      %v2710 = vrot.slane %v2631, 1
      %v2711 = vsel %vm1580, %v2708, %v2710
      %v2712 = vrot.slane %v2634, 1
      %v2713 = vsel %vm1580, %v2710, %v2712
      %v2714 = vrot.slane %v2637, 1
      %v2715 = vsel %vm1580, %v2712, %v2714
      %v2716 = vrot.slane %v2640, 1
      %v2717 = vsel %vm1580, %v2714, %v2716
      %v2718 = vrot.slane %v2643, 1
      %v2719 = vsel %vm1580, %v2716, %v2718
      %v2720 = vrot.slane %v2646, 1
      %v2721 = vsel %vm1580, %v2718, %v2720
      %v2722 = vrot.slane %v2649, 1
      %v2723 = vsel %vm1580, %v2720, %v2722
      %v2724 = vrot.slane %v2652, 1
      %v2725 = vsel %vm1580, %v2722, %v2724
      %v2726 = vrot.slane %v2655, 1
      %v2727 = vsel %vm1580, %v2724, %v2726
      %v2728 = vrot.slane %v2658, 1
      %v2729 = vsel %vm1580, %v2726, %v2728
      %v2730 = vrot.slane %v2661, 1
      %v2731 = vsel %vm1580, %v2728, %v2730
      %v2732 = vrot.slane %v2664, 1
      %v2733 = vsel %vm1580, %v2730, %v2732
      %v2734 = vrot.slane %v2667, 1
      %v2735 = vsel %vm1580, %v2732, %v2734
      %v2736 = vrot.slane %v2670, 1
      %v2737 = vsel %vm1580, %v2734, %v2736
      %v2738 = vrot.slane %v2673, 1
      %v2739 = vsel %vm1580, %v2736, %v2738
      %v2740 = vrot.slane %v2676, 1
      %v2741 = vsel %vm1580, %v2738, %v2740
      %v2742 = vrot.slane %v2679, 1
      %v2743 = vsel %vm1580, %v2740, %v2742
      %v2744 = vrot.slane %v2682, 1
      %v2745 = vsel %vm1580, %v2742, %v2744
      %v2779 = vmul.f32 %v2683, 0.0
      %v2780 = vmul.f32 %v1326, %v2685
      %v2781 = vmul.f32 %v1329, %v2687
      %v2782 = vmul.f32 %v1334, %v2689
      %v2783 = vmul.f32 %v1337, %v2691
      %v2784 = vmul.f32 %v1342, %v2693
      %v2785 = vmul.f32 %v1345, %v2695
      %v2786 = vmul.f32 %v1350, %v2697
      %v2787 = vmul.f32 %v1353, %v2699
      %v2788 = vmul.f32 %v1358, %v2701
      %v2789 = vmul.f32 %v1361, %v2703
      %v2790 = vmul.f32 %v1366, %v2705
      %v2791 = vmul.f32 %v1369, %v2707
      %v2792 = vmul.f32 %v1374, %v2709
      %v2793 = vmul.f32 %v1377, %v2711
      %v2794 = vmul.f32 %v1382, %v2713
      %v2795 = vmul.f32 %v1385, %v2715
      %v2796 = vmul.f32 %v1390, %v2717
      %v2797 = vmul.f32 %v1393, %v2719
      %v2798 = vmul.f32 %v1398, %v2721
      %v2799 = vmul.f32 %v1401, %v2723
      %v2800 = vmul.f32 %v1406, %v2725
      %v2801 = vmul.f32 %v1409, %v2727
      %v2802 = vmul.f32 %v1414, %v2729
      %v2803 = vmul.f32 %v1417, %v2731
      %v2804 = vmul.f32 %v1422, %v2733
      %v2805 = vmul.f32 %v1425, %v2735
      %v2806 = vmul.f32 %v1430, %v2737
      %v2807 = vmul.f32 %v1433, %v2739
      %v2808 = vmul.f32 %v1438, %v2741
      %v2809 = vmul.f32 %v1441, %v2743
      %v2810 = vmul.f32 %v1446, %v2745
      %v2811 = vmul.f32 %v1449, %v2744
      %2845 = vrot.lane.b32.xlu0 %v2779, 104
      %v2846 = vpop.permute.xlu0 %2845
      %2847 = vrot.lane.b32.xlu0 %v2780, 104
      %v2848 = vpop.permute.xlu0 %2847
      %2849 = vrot.lane.b32.xlu0 %v2781, 104
      %v2850 = vpop.permute.xlu0 %2849
      %2851 = vrot.lane.b32.xlu0 %v2782, 104
      %v2852 = vpop.permute.xlu0 %2851
      %2853 = vrot.lane.b32.xlu0 %v2783, 104
      %v2854 = vpop.permute.xlu0 %2853
      %2855 = vrot.lane.b32.xlu0 %v2784, 104
      %v2856 = vpop.permute.xlu0 %2855
      %2857 = vrot.lane.b32.xlu0 %v2785, 104
      %v2858 = vpop.permute.xlu0 %2857
      %2859 = vrot.lane.b32.xlu0 %v2786, 104
      %v2860 = vpop.permute.xlu0 %2859
      %2861 = vrot.lane.b32.xlu0 %v2787, 104
      %v2862 = vpop.permute.xlu0 %2861
      %2863 = vrot.lane.b32.xlu0 %v2788, 104
      %v2864 = vpop.permute.xlu0 %2863
      %2865 = vrot.lane.b32.xlu0 %v2789, 104
      %v2866 = vpop.permute.xlu0 %2865
      %2867 = vrot.lane.b32.xlu0 %v2790, 104
      %v2868 = vpop.permute.xlu0 %2867
      %2869 = vrot.lane.b32.xlu0 %v2791, 104
      %v2870 = vpop.permute.xlu0 %2869
      %2871 = vrot.lane.b32.xlu0 %v2792, 104
      %v2872 = vpop.permute.xlu0 %2871
      %2873 = vrot.lane.b32.xlu0 %v2793, 104
      %v2874 = vpop.permute.xlu0 %2873
      %2875 = vrot.lane.b32.xlu0 %v2794, 104
      %v2876 = vpop.permute.xlu0 %2875
      %2877 = vrot.lane.b32.xlu0 %v2795, 104
      %v2878 = vpop.permute.xlu0 %2877
      %2879 = vrot.lane.b32.xlu0 %v2796, 104
      %v2880 = vpop.permute.xlu0 %2879
      %2881 = vrot.lane.b32.xlu0 %v2797, 104
      %v2882 = vpop.permute.xlu0 %2881
      %2883 = vrot.lane.b32.xlu0 %v2798, 104
      %v2884 = vpop.permute.xlu0 %2883
      %2885 = vrot.lane.b32.xlu0 %v2799, 104
      %v2886 = vpop.permute.xlu0 %2885
      %2887 = vrot.lane.b32.xlu0 %v2800, 104
      %v2888 = vpop.permute.xlu0 %2887
      %2889 = vrot.lane.b32.xlu0 %v2801, 104
      %v2890 = vpop.permute.xlu0 %2889
      %2891 = vrot.lane.b32.xlu0 %v2802, 104
      %v2892 = vpop.permute.xlu0 %2891
      %2893 = vrot.lane.b32.xlu0 %v2803, 104
      %v2894 = vpop.permute.xlu0 %2893
      %2895 = vrot.lane.b32.xlu0 %v2804, 104
      %v2896 = vpop.permute.xlu0 %2895
      %2897 = vrot.lane.b32.xlu0 %v2805, 104
      %v2898 = vpop.permute.xlu0 %2897
      %2899 = vrot.lane.b32.xlu0 %v2806, 104
      %v2900 = vpop.permute.xlu0 %2899
      %2901 = vrot.lane.b32.xlu0 %v2807, 104
      %v2902 = vpop.permute.xlu0 %2901
      %2903 = vrot.lane.b32.xlu0 %v2808, 104
      %v2904 = vpop.permute.xlu0 %2903
      %2905 = vrot.lane.b32.xlu0 %v2809, 104
      %v2906 = vpop.permute.xlu0 %2905
      %2907 = vrot.lane.b32.xlu0 %v2810, 104
      %v2908 = vpop.permute.xlu0 %2907
      %2909 = vrot.lane.b32.xlu0 %v2811, 104
      %v2910 = vpop.permute.xlu0 %2909
      %v2944 = vadd.f32 %v2554, %v2846
      %v2945 = vadd.f32 %v2555, %v2848
      %v2946 = vadd.f32 %v2556, %v2850
      %v2947 = vadd.f32 %v2557, %v2852
      %v2948 = vadd.f32 %v2558, %v2854
      %v2949 = vadd.f32 %v2559, %v2856
      %v2950 = vadd.f32 %v2560, %v2858
      %v2951 = vadd.f32 %v2561, %v2860
      %v2952 = vadd.f32 %v2562, %v2862
      %v2953 = vadd.f32 %v2563, %v2864
      %v2954 = vadd.f32 %v2564, %v2866
      %v2955 = vadd.f32 %v2565, %v2868
      %v2956 = vadd.f32 %v2566, %v2870
      %v2957 = vadd.f32 %v2567, %v2872
      %v2958 = vadd.f32 %v2568, %v2874
      %v2959 = vadd.f32 %v2569, %v2876
      %v2960 = vadd.f32 %v2570, %v2878
      %v2961 = vadd.f32 %v2571, %v2880
      %v2962 = vadd.f32 %v2572, %v2882
      %v2963 = vadd.f32 %v2573, %v2884
      %v2964 = vadd.f32 %v2574, %v2886
      %v2965 = vadd.f32 %v2575, %v2888
      %v2966 = vadd.f32 %v2576, %v2890
      %v2967 = vadd.f32 %v2577, %v2892
      %v2968 = vadd.f32 %v2578, %v2894
      %v2969 = vadd.f32 %v2579, %v2896
      %v2970 = vadd.f32 %v2580, %v2898
      %v2971 = vadd.f32 %v2581, %v2900
      %v2972 = vadd.f32 %v2582, %v2902
      %v2973 = vadd.f32 %v2583, %v2904
      %v2974 = vadd.f32 %v2584, %v2906
      %v2975 = vadd.f32 %v2585, %v2908
      %v2976 = vadd.f32 %v2586, %v2910
      %2977 = vset.pattern.permute.xlu0 4
      %2978 = vperm.xlu0 %2977, %v696
      %v2979 = vpop.permute.xlu0 %2978
      %2981 = vset.pattern.permute.xlu0 4
      %2982 = vperm.xlu0 %2981, %v697
      %v2983 = vpop.permute.xlu0 %2982
      %2985 = vset.pattern.permute.xlu0 4
      %2986 = vperm.xlu0 %2985, %v698
      %v2987 = vpop.permute.xlu0 %2986
      %2989 = vset.pattern.permute.xlu0 4
      %2990 = vperm.xlu0 %2989, %v699
      %v2991 = vpop.permute.xlu0 %2990
      %2993 = vset.pattern.permute.xlu0 4
      %2994 = vperm.xlu0 %2993, %v700
      %v2995 = vpop.permute.xlu0 %2994
      %2997 = vset.pattern.permute.xlu0 4
      %2998 = vperm.xlu0 %2997, %v701
      %v2999 = vpop.permute.xlu0 %2998
      %3001 = vset.pattern.permute.xlu0 4
      %3002 = vperm.xlu0 %3001, %v702
      %v3003 = vpop.permute.xlu0 %3002
      %3005 = vset.pattern.permute.xlu0 4
      %3006 = vperm.xlu0 %3005, %v703
      %v3007 = vpop.permute.xlu0 %3006
      %3009 = vset.pattern.permute.xlu0 4
      %3010 = vperm.xlu0 %3009, %v704
      %v3011 = vpop.permute.xlu0 %3010
      %3013 = vset.pattern.permute.xlu0 4
      %3014 = vperm.xlu0 %3013, %v705
      %v3015 = vpop.permute.xlu0 %3014
      %3017 = vset.pattern.permute.xlu0 4
      %3018 = vperm.xlu0 %3017, %v706
      %v3019 = vpop.permute.xlu0 %3018
      %3021 = vset.pattern.permute.xlu0 4
      %3022 = vperm.xlu0 %3021, %v707
      %v3023 = vpop.permute.xlu0 %3022
      %3025 = vset.pattern.permute.xlu0 4
      %3026 = vperm.xlu0 %3025, %v708
      %v3027 = vpop.permute.xlu0 %3026
      %3029 = vset.pattern.permute.xlu0 4
      %3030 = vperm.xlu0 %3029, %v709
      %v3031 = vpop.permute.xlu0 %3030
      %3033 = vset.pattern.permute.xlu0 4
      %3034 = vperm.xlu0 %3033, %v710
      %v3035 = vpop.permute.xlu0 %3034
      %3037 = vset.pattern.permute.xlu0 4
      %3038 = vperm.xlu0 %3037, %v711
      %v3039 = vpop.permute.xlu0 %3038
      %3041 = vset.pattern.permute.xlu0 4
      %3042 = vperm.xlu0 %3041, %v712
      %v3043 = vpop.permute.xlu0 %3042
      %3045 = vset.pattern.permute.xlu0 4
      %3046 = vperm.xlu0 %3045, %v713
      %v3047 = vpop.permute.xlu0 %3046
      %3049 = vset.pattern.permute.xlu0 4
      %3050 = vperm.xlu0 %3049, %v714
      %v3051 = vpop.permute.xlu0 %3050
      %3053 = vset.pattern.permute.xlu0 4
      %3054 = vperm.xlu0 %3053, %v715
      %v3055 = vpop.permute.xlu0 %3054
      %3057 = vset.pattern.permute.xlu0 4
      %3058 = vperm.xlu0 %3057, %v716
      %v3059 = vpop.permute.xlu0 %3058
      %3061 = vset.pattern.permute.xlu0 4
      %3062 = vperm.xlu0 %3061, %v717
      %v3063 = vpop.permute.xlu0 %3062
      %3065 = vset.pattern.permute.xlu0 4
      %3066 = vperm.xlu0 %3065, %v718
      %v3067 = vpop.permute.xlu0 %3066
      %3069 = vset.pattern.permute.xlu0 4
      %3070 = vperm.xlu0 %3069, %v719
      %v3071 = vpop.permute.xlu0 %3070
      %3073 = vset.pattern.permute.xlu0 4
      %3074 = vperm.xlu0 %3073, %v720
      %v3075 = vpop.permute.xlu0 %3074
      %3077 = vset.pattern.permute.xlu0 4
      %3078 = vperm.xlu0 %3077, %v721
      %v3079 = vpop.permute.xlu0 %3078
      %3081 = vset.pattern.permute.xlu0 4
      %3082 = vperm.xlu0 %3081, %v722
      %v3083 = vpop.permute.xlu0 %3082
      %3085 = vset.pattern.permute.xlu0 4
      %3086 = vperm.xlu0 %3085, %v723
      %v3087 = vpop.permute.xlu0 %3086
      %3089 = vset.pattern.permute.xlu0 4
      %3090 = vperm.xlu0 %3089, %v724
      %v3091 = vpop.permute.xlu0 %3090
      %3093 = vset.pattern.permute.xlu0 4
      %3094 = vperm.xlu0 %3093, %v725
      %v3095 = vpop.permute.xlu0 %3094
      %3097 = vset.pattern.permute.xlu0 4
      %3098 = vperm.xlu0 %3097, %v726
      %v3099 = vpop.permute.xlu0 %3098
      %3101 = vset.pattern.permute.xlu0 4
      %3102 = vperm.xlu0 %3101, %v727
      %v3103 = vpop.permute.xlu0 %3102
      %v3105 = vmul.f32 %v1326, %v2979
      %v3106 = vmul.f32 %v1329, %v2983
      %v3107 = vmul.f32 %v1334, %v2987
      %v3108 = vmul.f32 %v1337, %v2991
      %v3109 = vmul.f32 %v1342, %v2995
      %v3110 = vmul.f32 %v1345, %v2999
      %v3111 = vmul.f32 %v1350, %v3003
      %v3112 = vmul.f32 %v1353, %v3007
      %v3113 = vmul.f32 %v1358, %v3011
      %v3114 = vmul.f32 %v1361, %v3015
      %v3115 = vmul.f32 %v1366, %v3019
      %v3116 = vmul.f32 %v1369, %v3023
      %v3117 = vmul.f32 %v1374, %v3027
      %v3118 = vmul.f32 %v1377, %v3031
      %v3119 = vmul.f32 %v1382, %v3035
      %v3120 = vmul.f32 %v1385, %v3039
      %v3121 = vmul.f32 %v1390, %v3043
      %v3122 = vmul.f32 %v1393, %v3047
      %v3123 = vmul.f32 %v1398, %v3051
      %v3124 = vmul.f32 %v1401, %v3055
      %v3125 = vmul.f32 %v1406, %v3059
      %v3126 = vmul.f32 %v1409, %v3063
      %v3127 = vmul.f32 %v1414, %v3067
      %v3128 = vmul.f32 %v1417, %v3071
      %v3129 = vmul.f32 %v1422, %v3075
      %v3130 = vmul.f32 %v1425, %v3079
      %v3131 = vmul.f32 %v1430, %v3083
      %v3132 = vmul.f32 %v1433, %v3087
      %v3133 = vmul.f32 %v1438, %v3091
      %v3134 = vmul.f32 %v1441, %v3095
      %v3135 = vmul.f32 %v1446, %v3099
      %v3136 = vmul.f32 %v1449, %v3103
      %v3169 = vrot.slane %v3105, 1
      %v3170 = vrot.slane %v3106, 1
      %v3171 = vsel %vm1580, %v3169, %v3170
      %v3172 = vrot.slane %v3107, 1
      %v3173 = vsel %vm1580, %v3170, %v3172
      %v3174 = vrot.slane %v3108, 1
      %v3175 = vsel %vm1580, %v3172, %v3174
      %v3176 = vrot.slane %v3109, 1
      %v3177 = vsel %vm1580, %v3174, %v3176
      %v3178 = vrot.slane %v3110, 1
      %v3179 = vsel %vm1580, %v3176, %v3178
      %v3180 = vrot.slane %v3111, 1
      %v3181 = vsel %vm1580, %v3178, %v3180
      %v3182 = vrot.slane %v3112, 1
      %v3183 = vsel %vm1580, %v3180, %v3182
      %v3184 = vrot.slane %v3113, 1
      %v3185 = vsel %vm1580, %v3182, %v3184
      %v3186 = vrot.slane %v3114, 1
      %v3187 = vsel %vm1580, %v3184, %v3186
      %v3188 = vrot.slane %v3115, 1
      %v3189 = vsel %vm1580, %v3186, %v3188
      %v3190 = vrot.slane %v3116, 1
      %v3191 = vsel %vm1580, %v3188, %v3190
      %v3192 = vrot.slane %v3117, 1
      %v3193 = vsel %vm1580, %v3190, %v3192
      %v3194 = vrot.slane %v3118, 1
      %v3195 = vsel %vm1580, %v3192, %v3194
      %v3196 = vrot.slane %v3119, 1
      %v3197 = vsel %vm1580, %v3194, %v3196
      %v3198 = vrot.slane %v3120, 1
      %v3199 = vsel %vm1580, %v3196, %v3198
      %v3200 = vrot.slane %v3121, 1
      %v3201 = vsel %vm1580, %v3198, %v3200
      %v3202 = vrot.slane %v3122, 1
      %v3203 = vsel %vm1580, %v3200, %v3202
      %v3204 = vrot.slane %v3123, 1
      %v3205 = vsel %vm1580, %v3202, %v3204
      %v3206 = vrot.slane %v3124, 1
      %v3207 = vsel %vm1580, %v3204, %v3206
      %v3208 = vrot.slane %v3125, 1
      %v3209 = vsel %vm1580, %v3206, %v3208
      %v3210 = vrot.slane %v3126, 1
      %v3211 = vsel %vm1580, %v3208, %v3210
      %v3212 = vrot.slane %v3127, 1
      %v3213 = vsel %vm1580, %v3210, %v3212
      %v3214 = vrot.slane %v3128, 1
      %v3215 = vsel %vm1580, %v3212, %v3214
      %v3216 = vrot.slane %v3129, 1
      %v3217 = vsel %vm1580, %v3214, %v3216
      %v3218 = vrot.slane %v3130, 1
      %v3219 = vsel %vm1580, %v3216, %v3218
      %v3220 = vrot.slane %v3131, 1
      %v3221 = vsel %vm1580, %v3218, %v3220
      %v3222 = vrot.slane %v3132, 1
      %v3223 = vsel %vm1580, %v3220, %v3222
      %v3224 = vrot.slane %v3133, 1
      %v3225 = vsel %vm1580, %v3222, %v3224
      %v3226 = vrot.slane %v3134, 1
      %v3227 = vsel %vm1580, %v3224, %v3226
      %v3228 = vrot.slane %v3135, 1
      %v3229 = vsel %vm1580, %v3226, %v3228
      %v3230 = vrot.slane %v3136, 1
      %v3231 = vsel %vm1580, %v3228, %v3230
      %3232 = vrot.lane.b32.xlu0 %v3169, 96
      %v3233 = vpop.permute.xlu0 %3232
      %3234 = vrot.lane.b32.xlu0 %v3171, 96
      %v3235 = vpop.permute.xlu0 %3234
      %3236 = vrot.lane.b32.xlu0 %v3173, 96
      %v3237 = vpop.permute.xlu0 %3236
      %3238 = vrot.lane.b32.xlu0 %v3175, 96
      %v3239 = vpop.permute.xlu0 %3238
      %3240 = vrot.lane.b32.xlu0 %v3177, 96
      %v3241 = vpop.permute.xlu0 %3240
      %3242 = vrot.lane.b32.xlu0 %v3179, 96
      %v3243 = vpop.permute.xlu0 %3242
      %3244 = vrot.lane.b32.xlu0 %v3181, 96
      %v3245 = vpop.permute.xlu0 %3244
      %3246 = vrot.lane.b32.xlu0 %v3183, 96
      %v3247 = vpop.permute.xlu0 %3246
      %3248 = vrot.lane.b32.xlu0 %v3185, 96
      %v3249 = vpop.permute.xlu0 %3248
      %3250 = vrot.lane.b32.xlu0 %v3187, 96
      %v3251 = vpop.permute.xlu0 %3250
      %3252 = vrot.lane.b32.xlu0 %v3189, 96
      %v3253 = vpop.permute.xlu0 %3252
      %3254 = vrot.lane.b32.xlu0 %v3191, 96
      %v3255 = vpop.permute.xlu0 %3254
      %3256 = vrot.lane.b32.xlu0 %v3193, 96
      %v3257 = vpop.permute.xlu0 %3256
      %3258 = vrot.lane.b32.xlu0 %v3195, 96
      %v3259 = vpop.permute.xlu0 %3258
      %3260 = vrot.lane.b32.xlu0 %v3197, 96
      %v3261 = vpop.permute.xlu0 %3260
      %3262 = vrot.lane.b32.xlu0 %v3199, 96
      %v3263 = vpop.permute.xlu0 %3262
      %3264 = vrot.lane.b32.xlu0 %v3201, 96
      %v3265 = vpop.permute.xlu0 %3264
      %3266 = vrot.lane.b32.xlu0 %v3203, 96
      %v3267 = vpop.permute.xlu0 %3266
      %3268 = vrot.lane.b32.xlu0 %v3205, 96
      %v3269 = vpop.permute.xlu0 %3268
      %3270 = vrot.lane.b32.xlu0 %v3207, 96
      %v3271 = vpop.permute.xlu0 %3270
      %3272 = vrot.lane.b32.xlu0 %v3209, 96
      %v3273 = vpop.permute.xlu0 %3272
      %3274 = vrot.lane.b32.xlu0 %v3211, 96
      %v3275 = vpop.permute.xlu0 %3274
      %3276 = vrot.lane.b32.xlu0 %v3213, 96
      %v3277 = vpop.permute.xlu0 %3276
      %3278 = vrot.lane.b32.xlu0 %v3215, 96
      %v3279 = vpop.permute.xlu0 %3278
      %3280 = vrot.lane.b32.xlu0 %v3217, 96
      %v3281 = vpop.permute.xlu0 %3280
      %3282 = vrot.lane.b32.xlu0 %v3219, 96
      %v3283 = vpop.permute.xlu0 %3282
      %3284 = vrot.lane.b32.xlu0 %v3221, 96
      %v3285 = vpop.permute.xlu0 %3284
      %3286 = vrot.lane.b32.xlu0 %v3223, 96
      %v3287 = vpop.permute.xlu0 %3286
      %3288 = vrot.lane.b32.xlu0 %v3225, 96
      %v3289 = vpop.permute.xlu0 %3288
      %3290 = vrot.lane.b32.xlu0 %v3227, 96
      %v3291 = vpop.permute.xlu0 %3290
      %3292 = vrot.lane.b32.xlu0 %v3229, 96
      %v3293 = vpop.permute.xlu0 %3292
      %3294 = vrot.lane.b32.xlu0 %v3231, 96
      %v3295 = vpop.permute.xlu0 %3294
      %3296 = vrot.lane.b32.xlu0 %v3230, 96
      %v3297 = vpop.permute.xlu0 %3296
      %v3331 = vadd.f32 %v2944, %v3233
      %v3332 = vadd.f32 %v2945, %v3235
      %v3333 = vadd.f32 %v2946, %v3237
      %v3334 = vadd.f32 %v2947, %v3239
      %v3335 = vadd.f32 %v2948, %v3241
      %v3336 = vadd.f32 %v2949, %v3243
      %v3337 = vadd.f32 %v2950, %v3245
      %v3338 = vadd.f32 %v2951, %v3247
      %v3339 = vadd.f32 %v2952, %v3249
      %v3340 = vadd.f32 %v2953, %v3251
      %v3341 = vadd.f32 %v2954, %v3253
      %v3342 = vadd.f32 %v2955, %v3255
      %v3343 = vadd.f32 %v2956, %v3257
      %v3344 = vadd.f32 %v2957, %v3259
      %v3345 = vadd.f32 %v2958, %v3261
      %v3346 = vadd.f32 %v2959, %v3263
      %v3347 = vadd.f32 %v2960, %v3265
      %v3348 = vadd.f32 %v2961, %v3267
      %v3349 = vadd.f32 %v2962, %v3269
      %v3350 = vadd.f32 %v2963, %v3271
      %v3351 = vadd.f32 %v2964, %v3273
      %v3352 = vadd.f32 %v2965, %v3275
      %v3353 = vadd.f32 %v2966, %v3277
      %v3354 = vadd.f32 %v2967, %v3279
      %v3355 = vadd.f32 %v2968, %v3281
      %v3356 = vadd.f32 %v2969, %v3283
      %v3357 = vadd.f32 %v2970, %v3285
      %v3358 = vadd.f32 %v2971, %v3287
      %v3359 = vadd.f32 %v2972, %v3289
      %v3360 = vadd.f32 %v2973, %v3291
      %v3361 = vadd.f32 %v2974, %v3293
      %v3362 = vadd.f32 %v2975, %v3295
      %v3363 = vadd.f32 %v2976, %v3297
      %3364 = vset.pattern.permute.xlu0 5
      %3365 = vperm.xlu0 %3364, %v696
      %v3366 = vpop.permute.xlu0 %3365
      %3367 = vset.pattern.permute.xlu0 5
      %3368 = vperm.xlu0 %3367, %v697
      %v3369 = vpop.permute.xlu0 %3368
      %3370 = vset.pattern.permute.xlu0 5
      %3371 = vperm.xlu0 %3370, %v698
      %v3372 = vpop.permute.xlu0 %3371
      %3373 = vset.pattern.permute.xlu0 5
      %3374 = vperm.xlu0 %3373, %v699
      %v3375 = vpop.permute.xlu0 %3374
      %3376 = vset.pattern.permute.xlu0 5
      %3377 = vperm.xlu0 %3376, %v700
      %v3378 = vpop.permute.xlu0 %3377
      %3379 = vset.pattern.permute.xlu0 5
      %3380 = vperm.xlu0 %3379, %v701
      %v3381 = vpop.permute.xlu0 %3380
      %3382 = vset.pattern.permute.xlu0 5
      %3383 = vperm.xlu0 %3382, %v702
      %v3384 = vpop.permute.xlu0 %3383
      %3385 = vset.pattern.permute.xlu0 5
      %3386 = vperm.xlu0 %3385, %v703
      %v3387 = vpop.permute.xlu0 %3386
      %3388 = vset.pattern.permute.xlu0 5
      %3389 = vperm.xlu0 %3388, %v704
      %v3390 = vpop.permute.xlu0 %3389
      %3391 = vset.pattern.permute.xlu0 5
      %3392 = vperm.xlu0 %3391, %v705
      %v3393 = vpop.permute.xlu0 %3392
      %3394 = vset.pattern.permute.xlu0 5
      %3395 = vperm.xlu0 %3394, %v706
      %v3396 = vpop.permute.xlu0 %3395
      %3397 = vset.pattern.permute.xlu0 5
      %3398 = vperm.xlu0 %3397, %v707
      %v3399 = vpop.permute.xlu0 %3398
      %3400 = vset.pattern.permute.xlu0 5
      %3401 = vperm.xlu0 %3400, %v708
      %v3402 = vpop.permute.xlu0 %3401
      %3403 = vset.pattern.permute.xlu0 5
      %3404 = vperm.xlu0 %3403, %v709
      %v3405 = vpop.permute.xlu0 %3404
      %3406 = vset.pattern.permute.xlu0 5
      %3407 = vperm.xlu0 %3406, %v710
      %v3408 = vpop.permute.xlu0 %3407
      %3409 = vset.pattern.permute.xlu0 5
      %3410 = vperm.xlu0 %3409, %v711
      %v3411 = vpop.permute.xlu0 %3410
      %3412 = vset.pattern.permute.xlu0 5
      %3413 = vperm.xlu0 %3412, %v712
      %v3414 = vpop.permute.xlu0 %3413
      %3415 = vset.pattern.permute.xlu0 5
      %3416 = vperm.xlu0 %3415, %v713
      %v3417 = vpop.permute.xlu0 %3416
      %3418 = vset.pattern.permute.xlu0 5
      %3419 = vperm.xlu0 %3418, %v714
      %v3420 = vpop.permute.xlu0 %3419
      %3421 = vset.pattern.permute.xlu0 5
      %3422 = vperm.xlu0 %3421, %v715
      %v3423 = vpop.permute.xlu0 %3422
      %3424 = vset.pattern.permute.xlu0 5
      %3425 = vperm.xlu0 %3424, %v716
      %v3426 = vpop.permute.xlu0 %3425
      %3427 = vset.pattern.permute.xlu0 5
      %3428 = vperm.xlu0 %3427, %v717
      %v3429 = vpop.permute.xlu0 %3428
      %3430 = vset.pattern.permute.xlu0 5
      %3431 = vperm.xlu0 %3430, %v718
      %v3432 = vpop.permute.xlu0 %3431
      %3433 = vset.pattern.permute.xlu0 5
      %3434 = vperm.xlu0 %3433, %v719
      %v3435 = vpop.permute.xlu0 %3434
      %3436 = vset.pattern.permute.xlu0 5
      %3437 = vperm.xlu0 %3436, %v720
      %v3438 = vpop.permute.xlu0 %3437
      %3439 = vset.pattern.permute.xlu0 5
      %3440 = vperm.xlu0 %3439, %v721
      %v3441 = vpop.permute.xlu0 %3440
      %3442 = vset.pattern.permute.xlu0 5
      %3443 = vperm.xlu0 %3442, %v722
      %v3444 = vpop.permute.xlu0 %3443
      %3445 = vset.pattern.permute.xlu0 5
      %3446 = vperm.xlu0 %3445, %v723
      %v3447 = vpop.permute.xlu0 %3446
      %3448 = vset.pattern.permute.xlu0 5
      %3449 = vperm.xlu0 %3448, %v724
      %v3450 = vpop.permute.xlu0 %3449
      %3451 = vset.pattern.permute.xlu0 5
      %3452 = vperm.xlu0 %3451, %v725
      %v3453 = vpop.permute.xlu0 %3452
      %3454 = vset.pattern.permute.xlu0 5
      %3455 = vperm.xlu0 %3454, %v726
      %v3456 = vpop.permute.xlu0 %3455
      %3457 = vset.pattern.permute.xlu0 5
      %3458 = vperm.xlu0 %3457, %v727
      %v3459 = vpop.permute.xlu0 %3458
      %v3460 = vrot.slane %v3366, 7
      %v3461 = vrot.slane %v3369, 7
      %v3462 = vsel %vm2226, %v3460, %v3461
      %v3463 = vrot.slane %v3372, 7
      %v3464 = vsel %vm2226, %v3461, %v3463
      %v3465 = vrot.slane %v3375, 7
      %v3466 = vsel %vm2226, %v3463, %v3465
      %v3467 = vrot.slane %v3378, 7
      %v3468 = vsel %vm2226, %v3465, %v3467
      %v3469 = vrot.slane %v3381, 7
      %v3470 = vsel %vm2226, %v3467, %v3469
      %v3471 = vrot.slane %v3384, 7
      %v3472 = vsel %vm2226, %v3469, %v3471
      %v3473 = vrot.slane %v3387, 7
      %v3474 = vsel %vm2226, %v3471, %v3473
      %v3475 = vrot.slane %v3390, 7
      %v3476 = vsel %vm2226, %v3473, %v3475
      %v3477 = vrot.slane %v3393, 7
      %v3478 = vsel %vm2226, %v3475, %v3477
      %v3479 = vrot.slane %v3396, 7
      %v3480 = vsel %vm2226, %v3477, %v3479
      %v3481 = vrot.slane %v3399, 7
      %v3482 = vsel %vm2226, %v3479, %v3481
      %v3483 = vrot.slane %v3402, 7
      %v3484 = vsel %vm2226, %v3481, %v3483
      %v3485 = vrot.slane %v3405, 7
      %v3486 = vsel %vm2226, %v3483, %v3485
      %v3487 = vrot.slane %v3408, 7
      %v3488 = vsel %vm2226, %v3485, %v3487
      %v3489 = vrot.slane %v3411, 7
      %v3490 = vsel %vm2226, %v3487, %v3489
      %v3491 = vrot.slane %v3414, 7
      %v3492 = vsel %vm2226, %v3489, %v3491
      %v3493 = vrot.slane %v3417, 7
      %v3494 = vsel %vm2226, %v3491, %v3493
      %v3495 = vrot.slane %v3420, 7
      %v3496 = vsel %vm2226, %v3493, %v3495
      %v3497 = vrot.slane %v3423, 7
      %v3498 = vsel %vm2226, %v3495, %v3497
      %v3499 = vrot.slane %v3426, 7
      %v3500 = vsel %vm2226, %v3497, %v3499
      %v3501 = vrot.slane %v3429, 7
      %v3502 = vsel %vm2226, %v3499, %v3501
      %v3503 = vrot.slane %v3432, 7
      %v3504 = vsel %vm2226, %v3501, %v3503
      %v3505 = vrot.slane %v3435, 7
      %v3506 = vsel %vm2226, %v3503, %v3505
      %v3507 = vrot.slane %v3438, 7
      %v3508 = vsel %vm2226, %v3505, %v3507
      %v3509 = vrot.slane %v3441, 7
      %v3510 = vsel %vm2226, %v3507, %v3509
      %v3511 = vrot.slane %v3444, 7
      %v3512 = vsel %vm2226, %v3509, %v3511
      %v3513 = vrot.slane %v3447, 7
      %v3514 = vsel %vm2226, %v3511, %v3513
      %v3515 = vrot.slane %v3450, 7
      %v3516 = vsel %vm2226, %v3513, %v3515
      %v3517 = vrot.slane %v3453, 7
      %v3518 = vsel %vm2226, %v3515, %v3517
      %v3519 = vrot.slane %v3456, 7
      %v3520 = vsel %vm2226, %v3517, %v3519
      %v3521 = vrot.slane %v3459, 7
      %v3522 = vsel %vm2226, %v3519, %v3521
      %v3556 = vmul.f32 %v1326, %v3460
      %v3557 = vmul.f32 %v1329, %v3462
      %v3558 = vmul.f32 %v1334, %v3464
      %v3559 = vmul.f32 %v1337, %v3466
      %v3560 = vmul.f32 %v1342, %v3468
      %v3561 = vmul.f32 %v1345, %v3470
      %v3562 = vmul.f32 %v1350, %v3472
      %v3563 = vmul.f32 %v1353, %v3474
      %v3564 = vmul.f32 %v1358, %v3476
      %v3565 = vmul.f32 %v1361, %v3478
      %v3566 = vmul.f32 %v1366, %v3480
      %v3567 = vmul.f32 %v1369, %v3482
      %v3568 = vmul.f32 %v1374, %v3484
      %v3569 = vmul.f32 %v1377, %v3486
      %v3570 = vmul.f32 %v1382, %v3488
      %v3571 = vmul.f32 %v1385, %v3490
      %v3572 = vmul.f32 %v1390, %v3492
      %v3573 = vmul.f32 %v1393, %v3494
      %v3574 = vmul.f32 %v1398, %v3496
      %v3575 = vmul.f32 %v1401, %v3498
      %v3576 = vmul.f32 %v1406, %v3500
      %v3577 = vmul.f32 %v1409, %v3502
      %v3578 = vmul.f32 %v1414, %v3504
      %v3579 = vmul.f32 %v1417, %v3506
      %v3580 = vmul.f32 %v1422, %v3508
      %v3581 = vmul.f32 %v1425, %v3510
      %v3582 = vmul.f32 %v1430, %v3512
      %v3583 = vmul.f32 %v1433, %v3514
      %v3584 = vmul.f32 %v1438, %v3516
      %v3585 = vmul.f32 %v1441, %v3518
      %v3586 = vmul.f32 %v1446, %v3520
      %v3587 = vmul.f32 %v1449, %v3522
      %v3588 = vmul.f32 %v3521, 0.0
      %v3622 = vrot.slane %v3556, 2
      %v3623 = vrot.slane %v3557, 2
      %v3624 = vsel %vm2389, %v3622, %v3623
      %v3625 = vrot.slane %v3558, 2
      %v3626 = vsel %vm2389, %v3623, %v3625
      %v3627 = vrot.slane %v3559, 2
      %v3628 = vsel %vm2389, %v3625, %v3627
      %v3629 = vrot.slane %v3560, 2
      %v3630 = vsel %vm2389, %v3627, %v3629
      %v3631 = vrot.slane %v3561, 2
      %v3632 = vsel %vm2389, %v3629, %v3631
      %v3633 = vrot.slane %v3562, 2
      %v3634 = vsel %vm2389, %v3631, %v3633
      %v3635 = vrot.slane %v3563, 2
      %v3636 = vsel %vm2389, %v3633, %v3635
      %v3637 = vrot.slane %v3564, 2
      %v3638 = vsel %vm2389, %v3635, %v3637
      %v3639 = vrot.slane %v3565, 2
      %v3640 = vsel %vm2389, %v3637, %v3639
      %v3641 = vrot.slane %v3566, 2
      %v3642 = vsel %vm2389, %v3639, %v3641
      %v3643 = vrot.slane %v3567, 2
      %v3644 = vsel %vm2389, %v3641, %v3643
      %v3645 = vrot.slane %v3568, 2
      %v3646 = vsel %vm2389, %v3643, %v3645
      %v3647 = vrot.slane %v3569, 2
      %v3648 = vsel %vm2389, %v3645, %v3647
      %v3649 = vrot.slane %v3570, 2
      %v3650 = vsel %vm2389, %v3647, %v3649
      %v3651 = vrot.slane %v3571, 2
      %v3652 = vsel %vm2389, %v3649, %v3651
      %v3653 = vrot.slane %v3572, 2
      %v3654 = vsel %vm2389, %v3651, %v3653
      %v3655 = vrot.slane %v3573, 2
      %v3656 = vsel %vm2389, %v3653, %v3655
      %v3657 = vrot.slane %v3574, 2
      %v3658 = vsel %vm2389, %v3655, %v3657
      %v3659 = vrot.slane %v3575, 2
      %v3660 = vsel %vm2389, %v3657, %v3659
      %v3661 = vrot.slane %v3576, 2
      %v3662 = vsel %vm2389, %v3659, %v3661
      %v3663 = vrot.slane %v3577, 2
      %v3664 = vsel %vm2389, %v3661, %v3663
      %v3665 = vrot.slane %v3578, 2
      %v3666 = vsel %vm2389, %v3663, %v3665
      %v3667 = vrot.slane %v3579, 2
      %v3668 = vsel %vm2389, %v3665, %v3667
      %v3669 = vrot.slane %v3580, 2
      %v3670 = vsel %vm2389, %v3667, %v3669
      %v3671 = vrot.slane %v3581, 2
      %v3672 = vsel %vm2389, %v3669, %v3671
      %v3673 = vrot.slane %v3582, 2
      %v3674 = vsel %vm2389, %v3671, %v3673
      %v3675 = vrot.slane %v3583, 2
      %v3676 = vsel %vm2389, %v3673, %v3675
      %v3677 = vrot.slane %v3584, 2
      %v3678 = vsel %vm2389, %v3675, %v3677
      %v3679 = vrot.slane %v3585, 2
      %v3680 = vsel %vm2389, %v3677, %v3679
      %v3681 = vrot.slane %v3586, 2
      %v3682 = vsel %vm2389, %v3679, %v3681
      %v3683 = vrot.slane %v3587, 2
      %v3684 = vsel %vm2389, %v3681, %v3683
      %v3685 = vrot.slane %v3588, 2
      %v3686 = vsel %vm2389, %v3683, %v3685
      %3687 = vrot.lane.b32.xlu0 %v3622, 88
      %v3688 = vpop.permute.xlu0 %3687
      %3689 = vrot.lane.b32.xlu0 %v3624, 88
      %v3690 = vpop.permute.xlu0 %3689
      %3691 = vrot.lane.b32.xlu0 %v3626, 88
      %v3692 = vpop.permute.xlu0 %3691
      %3693 = vrot.lane.b32.xlu0 %v3628, 88
      %v3694 = vpop.permute.xlu0 %3693
      %3695 = vrot.lane.b32.xlu0 %v3630, 88
      %v3696 = vpop.permute.xlu0 %3695
      %3697 = vrot.lane.b32.xlu0 %v3632, 88
      %v3698 = vpop.permute.xlu0 %3697
      %3699 = vrot.lane.b32.xlu0 %v3634, 88
      %v3700 = vpop.permute.xlu0 %3699
      %3701 = vrot.lane.b32.xlu0 %v3636, 88
      %v3702 = vpop.permute.xlu0 %3701
      %3703 = vrot.lane.b32.xlu0 %v3638, 88
      %v3704 = vpop.permute.xlu0 %3703
      %3705 = vrot.lane.b32.xlu0 %v3640, 88
      %v3706 = vpop.permute.xlu0 %3705
      %3707 = vrot.lane.b32.xlu0 %v3642, 88
      %v3708 = vpop.permute.xlu0 %3707
      %3709 = vrot.lane.b32.xlu0 %v3644, 88
      %v3710 = vpop.permute.xlu0 %3709
      %3711 = vrot.lane.b32.xlu0 %v3646, 88
      %v3712 = vpop.permute.xlu0 %3711
      %3713 = vrot.lane.b32.xlu0 %v3648, 88
      %v3714 = vpop.permute.xlu0 %3713
      %3715 = vrot.lane.b32.xlu0 %v3650, 88
      %v3716 = vpop.permute.xlu0 %3715
      %3717 = vrot.lane.b32.xlu0 %v3652, 88
      %v3718 = vpop.permute.xlu0 %3717
      %3719 = vrot.lane.b32.xlu0 %v3654, 88
      %v3720 = vpop.permute.xlu0 %3719
      %3721 = vrot.lane.b32.xlu0 %v3656, 88
      %v3722 = vpop.permute.xlu0 %3721
      %3723 = vrot.lane.b32.xlu0 %v3658, 88
      %v3724 = vpop.permute.xlu0 %3723
      %3725 = vrot.lane.b32.xlu0 %v3660, 88
      %v3726 = vpop.permute.xlu0 %3725
      %3727 = vrot.lane.b32.xlu0 %v3662, 88
      %v3728 = vpop.permute.xlu0 %3727
      %3729 = vrot.lane.b32.xlu0 %v3664, 88
      %v3730 = vpop.permute.xlu0 %3729
      %3731 = vrot.lane.b32.xlu0 %v3666, 88
      %v3732 = vpop.permute.xlu0 %3731
      %3733 = vrot.lane.b32.xlu0 %v3668, 88
      %v3734 = vpop.permute.xlu0 %3733
      %3735 = vrot.lane.b32.xlu0 %v3670, 88
      %v3736 = vpop.permute.xlu0 %3735
      %3737 = vrot.lane.b32.xlu0 %v3672, 88
      %v3738 = vpop.permute.xlu0 %3737
      %3739 = vrot.lane.b32.xlu0 %v3674, 88
      %v3740 = vpop.permute.xlu0 %3739
      %3741 = vrot.lane.b32.xlu0 %v3676, 88
      %v3742 = vpop.permute.xlu0 %3741
      %3743 = vrot.lane.b32.xlu0 %v3678, 88
      %v3744 = vpop.permute.xlu0 %3743
      %3745 = vrot.lane.b32.xlu0 %v3680, 88
      %v3746 = vpop.permute.xlu0 %3745
      %3747 = vrot.lane.b32.xlu0 %v3682, 88
      %v3748 = vpop.permute.xlu0 %3747
      %3749 = vrot.lane.b32.xlu0 %v3684, 88
      %v3750 = vpop.permute.xlu0 %3749
      %3751 = vrot.lane.b32.xlu0 %v3686, 88
      %v3752 = vpop.permute.xlu0 %3751
      %v3786 = vadd.f32 %v3331, %v3688
      %v3787 = vadd.f32 %v3332, %v3690
      %v3788 = vadd.f32 %v3333, %v3692
      %v3789 = vadd.f32 %v3334, %v3694
      %v3790 = vadd.f32 %v3335, %v3696
      %v3791 = vadd.f32 %v3336, %v3698
      %v3792 = vadd.f32 %v3337, %v3700
      %v3793 = vadd.f32 %v3338, %v3702
      %v3794 = vadd.f32 %v3339, %v3704
      %v3795 = vadd.f32 %v3340, %v3706
      %v3796 = vadd.f32 %v3341, %v3708
      %v3797 = vadd.f32 %v3342, %v3710
      %v3798 = vadd.f32 %v3343, %v3712
      %v3799 = vadd.f32 %v3344, %v3714
      %v3800 = vadd.f32 %v3345, %v3716
      %v3801 = vadd.f32 %v3346, %v3718
      %v3802 = vadd.f32 %v3347, %v3720
      %v3803 = vadd.f32 %v3348, %v3722
      %v3804 = vadd.f32 %v3349, %v3724
      %v3805 = vadd.f32 %v3350, %v3726
      %v3806 = vadd.f32 %v3351, %v3728
      %v3807 = vadd.f32 %v3352, %v3730
      %v3808 = vadd.f32 %v3353, %v3732
      %v3809 = vadd.f32 %v3354, %v3734
      %v3810 = vadd.f32 %v3355, %v3736
      %v3811 = vadd.f32 %v3356, %v3738
      %v3812 = vadd.f32 %v3357, %v3740
      %v3813 = vadd.f32 %v3358, %v3742
      %v3814 = vadd.f32 %v3359, %v3744
      %v3815 = vadd.f32 %v3360, %v3746
      %v3816 = vadd.f32 %v3361, %v3748
      %v3817 = vadd.f32 %v3362, %v3750
      %v3818 = vadd.f32 %v3363, %v3752
      %3819 = vset.pattern.permute.xlu0 6
      %3820 = vperm.xlu0 %3819, %v696
      %v3821 = vpop.permute.xlu0 %3820
      %3822 = vset.pattern.permute.xlu0 6
      %3823 = vperm.xlu0 %3822, %v697
      %v3824 = vpop.permute.xlu0 %3823
      %3825 = vset.pattern.permute.xlu0 6
      %3826 = vperm.xlu0 %3825, %v698
      %v3827 = vpop.permute.xlu0 %3826
      %3828 = vset.pattern.permute.xlu0 6
      %3829 = vperm.xlu0 %3828, %v699
      %v3830 = vpop.permute.xlu0 %3829
      %3831 = vset.pattern.permute.xlu0 6
      %3832 = vperm.xlu0 %3831, %v700
      %v3833 = vpop.permute.xlu0 %3832
      %3834 = vset.pattern.permute.xlu0 6
      %3835 = vperm.xlu0 %3834, %v701
      %v3836 = vpop.permute.xlu0 %3835
      %3837 = vset.pattern.permute.xlu0 6
      %3838 = vperm.xlu0 %3837, %v702
      %v3839 = vpop.permute.xlu0 %3838
      %3840 = vset.pattern.permute.xlu0 6
      %3841 = vperm.xlu0 %3840, %v703
      %v3842 = vpop.permute.xlu0 %3841
      %3843 = vset.pattern.permute.xlu0 6
      %3844 = vperm.xlu0 %3843, %v704
      %v3845 = vpop.permute.xlu0 %3844
      %3846 = vset.pattern.permute.xlu0 6
      %3847 = vperm.xlu0 %3846, %v705
      %v3848 = vpop.permute.xlu0 %3847
      %3849 = vset.pattern.permute.xlu0 6
      %3850 = vperm.xlu0 %3849, %v706
      %v3851 = vpop.permute.xlu0 %3850
      %3852 = vset.pattern.permute.xlu0 6
      %3853 = vperm.xlu0 %3852, %v707
      %v3854 = vpop.permute.xlu0 %3853
      %3855 = vset.pattern.permute.xlu0 6
      %3856 = vperm.xlu0 %3855, %v708
      %v3857 = vpop.permute.xlu0 %3856
      %3858 = vset.pattern.permute.xlu0 6
      %3859 = vperm.xlu0 %3858, %v709
      %v3860 = vpop.permute.xlu0 %3859
      %3861 = vset.pattern.permute.xlu0 6
      %3862 = vperm.xlu0 %3861, %v710
      %v3863 = vpop.permute.xlu0 %3862
      %3864 = vset.pattern.permute.xlu0 6
      %3865 = vperm.xlu0 %3864, %v711
      %v3866 = vpop.permute.xlu0 %3865
      %3867 = vset.pattern.permute.xlu0 6
      %3868 = vperm.xlu0 %3867, %v712
      %v3869 = vpop.permute.xlu0 %3868
      %3870 = vset.pattern.permute.xlu0 6
      %3871 = vperm.xlu0 %3870, %v713
      %v3872 = vpop.permute.xlu0 %3871
      %3873 = vset.pattern.permute.xlu0 6
      %3874 = vperm.xlu0 %3873, %v714
      %v3875 = vpop.permute.xlu0 %3874
      %3876 = vset.pattern.permute.xlu0 6
      %3877 = vperm.xlu0 %3876, %v715
      %v3878 = vpop.permute.xlu0 %3877
      %3879 = vset.pattern.permute.xlu0 6
      %3880 = vperm.xlu0 %3879, %v716
      %v3881 = vpop.permute.xlu0 %3880
      %3882 = vset.pattern.permute.xlu0 6
      %3883 = vperm.xlu0 %3882, %v717
      %v3884 = vpop.permute.xlu0 %3883
      %3885 = vset.pattern.permute.xlu0 6
      %3886 = vperm.xlu0 %3885, %v718
      %v3887 = vpop.permute.xlu0 %3886
      %3888 = vset.pattern.permute.xlu0 6
      %3889 = vperm.xlu0 %3888, %v719
      %v3890 = vpop.permute.xlu0 %3889
      %3891 = vset.pattern.permute.xlu0 6
      %3892 = vperm.xlu0 %3891, %v720
      %v3893 = vpop.permute.xlu0 %3892
      %3894 = vset.pattern.permute.xlu0 6
      %3895 = vperm.xlu0 %3894, %v721
      %v3896 = vpop.permute.xlu0 %3895
      %3897 = vset.pattern.permute.xlu0 6
      %3898 = vperm.xlu0 %3897, %v722
      %v3899 = vpop.permute.xlu0 %3898
      %3900 = vset.pattern.permute.xlu0 6
      %3901 = vperm.xlu0 %3900, %v723
      %v3902 = vpop.permute.xlu0 %3901
      %3903 = vset.pattern.permute.xlu0 6
      %3904 = vperm.xlu0 %3903, %v724
      %v3905 = vpop.permute.xlu0 %3904
      %3906 = vset.pattern.permute.xlu0 6
      %3907 = vperm.xlu0 %3906, %v725
      %v3908 = vpop.permute.xlu0 %3907
      %3909 = vset.pattern.permute.xlu0 6
      %3910 = vperm.xlu0 %3909, %v726
      %v3911 = vpop.permute.xlu0 %3910
      %3912 = vset.pattern.permute.xlu0 6
      %3913 = vperm.xlu0 %3912, %v727
      %v3914 = vpop.permute.xlu0 %3913
      %v3915 = vrot.slane %v3821, 1
      %v3916 = vrot.slane %v3824, 1
      %v3917 = vsel %vm1580, %v3915, %v3916
      %v3918 = vrot.slane %v3827, 1
      %v3919 = vsel %vm1580, %v3916, %v3918
      %v3920 = vrot.slane %v3830, 1
      %v3921 = vsel %vm1580, %v3918, %v3920
      %v3922 = vrot.slane %v3833, 1
      %v3923 = vsel %vm1580, %v3920, %v3922
      %v3924 = vrot.slane %v3836, 1
      %v3925 = vsel %vm1580, %v3922, %v3924
      %v3926 = vrot.slane %v3839, 1
      %v3927 = vsel %vm1580, %v3924, %v3926
      %v3928 = vrot.slane %v3842, 1
      %v3929 = vsel %vm1580, %v3926, %v3928
      %v3930 = vrot.slane %v3845, 1
      %v3931 = vsel %vm1580, %v3928, %v3930
      %v3932 = vrot.slane %v3848, 1
      %v3933 = vsel %vm1580, %v3930, %v3932
      %v3934 = vrot.slane %v3851, 1
      %v3935 = vsel %vm1580, %v3932, %v3934
      %v3936 = vrot.slane %v3854, 1
      %v3937 = vsel %vm1580, %v3934, %v3936
      %v3938 = vrot.slane %v3857, 1
      %v3939 = vsel %vm1580, %v3936, %v3938
      %v3940 = vrot.slane %v3860, 1
      %v3941 = vsel %vm1580, %v3938, %v3940
      %v3942 = vrot.slane %v3863, 1
      %v3943 = vsel %vm1580, %v3940, %v3942
      %v3944 = vrot.slane %v3866, 1
      %v3945 = vsel %vm1580, %v3942, %v3944
      %v3946 = vrot.slane %v3869, 1
      %v3947 = vsel %vm1580, %v3944, %v3946
      %v3948 = vrot.slane %v3872, 1
      %v3949 = vsel %vm1580, %v3946, %v3948
      %v3950 = vrot.slane %v3875, 1
      %v3951 = vsel %vm1580, %v3948, %v3950
      %v3952 = vrot.slane %v3878, 1
      %v3953 = vsel %vm1580, %v3950, %v3952
      %v3954 = vrot.slane %v3881, 1
      %v3955 = vsel %vm1580, %v3952, %v3954
      %v3956 = vrot.slane %v3884, 1
      %v3957 = vsel %vm1580, %v3954, %v3956
      %v3958 = vrot.slane %v3887, 1
      %v3959 = vsel %vm1580, %v3956, %v3958
      %v3960 = vrot.slane %v3890, 1
      %v3961 = vsel %vm1580, %v3958, %v3960
      %v3962 = vrot.slane %v3893, 1
      %v3963 = vsel %vm1580, %v3960, %v3962
      %v3964 = vrot.slane %v3896, 1
      %v3965 = vsel %vm1580, %v3962, %v3964
      %v3966 = vrot.slane %v3899, 1
      %v3967 = vsel %vm1580, %v3964, %v3966
      %v3968 = vrot.slane %v3902, 1
      %v3969 = vsel %vm1580, %v3966, %v3968
      %v3970 = vrot.slane %v3905, 1
      %v3971 = vsel %vm1580, %v3968, %v3970
      %v3972 = vrot.slane %v3908, 1
      %v3973 = vsel %vm1580, %v3970, %v3972
      %v3974 = vrot.slane %v3911, 1
      %v3975 = vsel %vm1580, %v3972, %v3974
      %v3976 = vrot.slane %v3914, 1
      %v3977 = vsel %vm1580, %v3974, %v3976
      %v4011 = vmul.f32 %v1329, %v3915
      %v4012 = vmul.f32 %v1334, %v3917
      %v4013 = vmul.f32 %v1337, %v3919
      %v4014 = vmul.f32 %v1342, %v3921
      %v4015 = vmul.f32 %v1345, %v3923
      %v4016 = vmul.f32 %v1350, %v3925
      %v4017 = vmul.f32 %v1353, %v3927
      %v4018 = vmul.f32 %v1358, %v3929
      %v4019 = vmul.f32 %v1361, %v3931
      %v4020 = vmul.f32 %v1366, %v3933
      %v4021 = vmul.f32 %v1369, %v3935
      %v4022 = vmul.f32 %v1374, %v3937
      %v4023 = vmul.f32 %v1377, %v3939
      %v4024 = vmul.f32 %v1382, %v3941
      %v4025 = vmul.f32 %v1385, %v3943
      %v4026 = vmul.f32 %v1390, %v3945
      %v4027 = vmul.f32 %v1393, %v3947
      %v4028 = vmul.f32 %v1398, %v3949
      %v4029 = vmul.f32 %v1401, %v3951
      %v4030 = vmul.f32 %v1406, %v3953
      %v4031 = vmul.f32 %v1409, %v3955
      %v4032 = vmul.f32 %v1414, %v3957
      %v4033 = vmul.f32 %v1417, %v3959
      %v4034 = vmul.f32 %v1422, %v3961
      %v4035 = vmul.f32 %v1425, %v3963
      %v4036 = vmul.f32 %v1430, %v3965
      %v4037 = vmul.f32 %v1433, %v3967
      %v4038 = vmul.f32 %v1438, %v3969
      %v4039 = vmul.f32 %v1441, %v3971
      %v4040 = vmul.f32 %v1446, %v3973
      %v4041 = vmul.f32 %v1449, %v3975
      %v4042 = vmul.f32 %v3977, 0.0
      %v4043 = vmul.f32 %v3976, 0.0
      %4077 = vrot.lane.b32.xlu0 %v4011, 80
      %v4078 = vpop.permute.xlu0 %4077
      %4079 = vrot.lane.b32.xlu0 %v4012, 80
      %v4080 = vpop.permute.xlu0 %4079
      %4081 = vrot.lane.b32.xlu0 %v4013, 80
      %v4082 = vpop.permute.xlu0 %4081
      %4083 = vrot.lane.b32.xlu0 %v4014, 80
      %v4084 = vpop.permute.xlu0 %4083
      %4085 = vrot.lane.b32.xlu0 %v4015, 80
      %v4086 = vpop.permute.xlu0 %4085
      %4087 = vrot.lane.b32.xlu0 %v4016, 80
      %v4088 = vpop.permute.xlu0 %4087
      %4089 = vrot.lane.b32.xlu0 %v4017, 80
      %v4090 = vpop.permute.xlu0 %4089
      %4091 = vrot.lane.b32.xlu0 %v4018, 80
      %v4092 = vpop.permute.xlu0 %4091
      %4093 = vrot.lane.b32.xlu0 %v4019, 80
      %v4094 = vpop.permute.xlu0 %4093
      %4095 = vrot.lane.b32.xlu0 %v4020, 80
      %v4096 = vpop.permute.xlu0 %4095
      %4097 = vrot.lane.b32.xlu0 %v4021, 80
      %v4098 = vpop.permute.xlu0 %4097
      %4099 = vrot.lane.b32.xlu0 %v4022, 80
      %v4100 = vpop.permute.xlu0 %4099
      %4101 = vrot.lane.b32.xlu0 %v4023, 80
      %v4102 = vpop.permute.xlu0 %4101
      %4103 = vrot.lane.b32.xlu0 %v4024, 80
      %v4104 = vpop.permute.xlu0 %4103
      %4105 = vrot.lane.b32.xlu0 %v4025, 80
      %v4106 = vpop.permute.xlu0 %4105
      %4107 = vrot.lane.b32.xlu0 %v4026, 80
      %v4108 = vpop.permute.xlu0 %4107
      %4109 = vrot.lane.b32.xlu0 %v4027, 80
      %v4110 = vpop.permute.xlu0 %4109
      %4111 = vrot.lane.b32.xlu0 %v4028, 80
      %v4112 = vpop.permute.xlu0 %4111
      %4113 = vrot.lane.b32.xlu0 %v4029, 80
      %v4114 = vpop.permute.xlu0 %4113
      %4115 = vrot.lane.b32.xlu0 %v4030, 80
      %v4116 = vpop.permute.xlu0 %4115
      %4117 = vrot.lane.b32.xlu0 %v4031, 80
      %v4118 = vpop.permute.xlu0 %4117
      %4119 = vrot.lane.b32.xlu0 %v4032, 80
      %v4120 = vpop.permute.xlu0 %4119
      %4121 = vrot.lane.b32.xlu0 %v4033, 80
      %v4122 = vpop.permute.xlu0 %4121
      %4123 = vrot.lane.b32.xlu0 %v4034, 80
      %v4124 = vpop.permute.xlu0 %4123
      %4125 = vrot.lane.b32.xlu0 %v4035, 80
      %v4126 = vpop.permute.xlu0 %4125
      %4127 = vrot.lane.b32.xlu0 %v4036, 80
      %v4128 = vpop.permute.xlu0 %4127
      %4129 = vrot.lane.b32.xlu0 %v4037, 80
      %v4130 = vpop.permute.xlu0 %4129
      %4131 = vrot.lane.b32.xlu0 %v4038, 80
      %v4132 = vpop.permute.xlu0 %4131
      %4133 = vrot.lane.b32.xlu0 %v4039, 80
      %v4134 = vpop.permute.xlu0 %4133
      %4135 = vrot.lane.b32.xlu0 %v4040, 80
      %v4136 = vpop.permute.xlu0 %4135
      %4137 = vrot.lane.b32.xlu0 %v4041, 80
      %v4138 = vpop.permute.xlu0 %4137
      %4139 = vrot.lane.b32.xlu0 %v4042, 80
      %v4140 = vpop.permute.xlu0 %4139
      %4141 = vrot.lane.b32.xlu0 %v4043, 80
      %v4142 = vpop.permute.xlu0 %4141
      %v4176 = vadd.f32 %v3786, %v4078
      %v4177 = vadd.f32 %v3787, %v4080
      %v4178 = vadd.f32 %v3788, %v4082
      %v4179 = vadd.f32 %v3789, %v4084
      %v4180 = vadd.f32 %v3790, %v4086
      %v4181 = vadd.f32 %v3791, %v4088
      %v4182 = vadd.f32 %v3792, %v4090
      %v4183 = vadd.f32 %v3793, %v4092
      %v4184 = vadd.f32 %v3794, %v4094
      %v4185 = vadd.f32 %v3795, %v4096
      %v4186 = vadd.f32 %v3796, %v4098
      %v4187 = vadd.f32 %v3797, %v4100
      %v4188 = vadd.f32 %v3798, %v4102
      %v4189 = vadd.f32 %v3799, %v4104
      %v4190 = vadd.f32 %v3800, %v4106
      %v4191 = vadd.f32 %v3801, %v4108
      %v4192 = vadd.f32 %v3802, %v4110
      %v4193 = vadd.f32 %v3803, %v4112
      %v4194 = vadd.f32 %v3804, %v4114
      %v4195 = vadd.f32 %v3805, %v4116
      %v4196 = vadd.f32 %v3806, %v4118
      %v4197 = vadd.f32 %v3807, %v4120
      %v4198 = vadd.f32 %v3808, %v4122
      %v4199 = vadd.f32 %v3809, %v4124
      %v4200 = vadd.f32 %v3810, %v4126
      %v4201 = vadd.f32 %v3811, %v4128
      %v4202 = vadd.f32 %v3812, %v4130
      %v4203 = vadd.f32 %v3813, %v4132
      %v4204 = vadd.f32 %v3814, %v4134
      %v4205 = vadd.f32 %v3815, %v4136
      %v4206 = vadd.f32 %v3816, %v4138
      %v4207 = vadd.f32 %v3817, %v4140
      %v4208 = vadd.f32 %v3818, %v4142
      %4209 = vset.pattern.permute.xlu0 7
      %4210 = vperm.xlu0 %4209, %v696
      %v4211 = vpop.permute.xlu0 %4210
      %4213 = vset.pattern.permute.xlu0 7
      %4214 = vperm.xlu0 %4213, %v697
      %v4215 = vpop.permute.xlu0 %4214
      %4217 = vset.pattern.permute.xlu0 7
      %4218 = vperm.xlu0 %4217, %v698
      %v4219 = vpop.permute.xlu0 %4218
      %4221 = vset.pattern.permute.xlu0 7
      %4222 = vperm.xlu0 %4221, %v699
      %v4223 = vpop.permute.xlu0 %4222
      %4225 = vset.pattern.permute.xlu0 7
      %4226 = vperm.xlu0 %4225, %v700
      %v4227 = vpop.permute.xlu0 %4226
      %4229 = vset.pattern.permute.xlu0 7
      %4230 = vperm.xlu0 %4229, %v701
      %v4231 = vpop.permute.xlu0 %4230
      %4233 = vset.pattern.permute.xlu0 7
      %4234 = vperm.xlu0 %4233, %v702
      %v4235 = vpop.permute.xlu0 %4234
      %4237 = vset.pattern.permute.xlu0 7
      %4238 = vperm.xlu0 %4237, %v703
      %v4239 = vpop.permute.xlu0 %4238
      %4241 = vset.pattern.permute.xlu0 7
      %4242 = vperm.xlu0 %4241, %v704
      %v4243 = vpop.permute.xlu0 %4242
      %4245 = vset.pattern.permute.xlu0 7
      %4246 = vperm.xlu0 %4245, %v705
      %v4247 = vpop.permute.xlu0 %4246
      %4249 = vset.pattern.permute.xlu0 7
      %4250 = vperm.xlu0 %4249, %v706
      %v4251 = vpop.permute.xlu0 %4250
      %4253 = vset.pattern.permute.xlu0 7
      %4254 = vperm.xlu0 %4253, %v707
      %v4255 = vpop.permute.xlu0 %4254
      %4257 = vset.pattern.permute.xlu0 7
      %4258 = vperm.xlu0 %4257, %v708
      %v4259 = vpop.permute.xlu0 %4258
      %4261 = vset.pattern.permute.xlu0 7
      %4262 = vperm.xlu0 %4261, %v709
      %v4263 = vpop.permute.xlu0 %4262
      %4265 = vset.pattern.permute.xlu0 7
      %4266 = vperm.xlu0 %4265, %v710
      %v4267 = vpop.permute.xlu0 %4266
      %4269 = vset.pattern.permute.xlu0 7
      %4270 = vperm.xlu0 %4269, %v711
      %v4271 = vpop.permute.xlu0 %4270
      %4273 = vset.pattern.permute.xlu0 7
      %4274 = vperm.xlu0 %4273, %v712
      %v4275 = vpop.permute.xlu0 %4274
      %4277 = vset.pattern.permute.xlu0 7
      %4278 = vperm.xlu0 %4277, %v713
      %v4279 = vpop.permute.xlu0 %4278
      %4281 = vset.pattern.permute.xlu0 7
      %4282 = vperm.xlu0 %4281, %v714
      %v4283 = vpop.permute.xlu0 %4282
      %4285 = vset.pattern.permute.xlu0 7
      %4286 = vperm.xlu0 %4285, %v715
      %v4287 = vpop.permute.xlu0 %4286
      %4289 = vset.pattern.permute.xlu0 7
      %4290 = vperm.xlu0 %4289, %v716
      %v4291 = vpop.permute.xlu0 %4290
      %4293 = vset.pattern.permute.xlu0 7
      %4294 = vperm.xlu0 %4293, %v717
      %v4295 = vpop.permute.xlu0 %4294
      %4297 = vset.pattern.permute.xlu0 7
      %4298 = vperm.xlu0 %4297, %v718
      %v4299 = vpop.permute.xlu0 %4298
      %4301 = vset.pattern.permute.xlu0 7
      %4302 = vperm.xlu0 %4301, %v719
      %v4303 = vpop.permute.xlu0 %4302
      %4305 = vset.pattern.permute.xlu0 7
      %4306 = vperm.xlu0 %4305, %v720
      %v4307 = vpop.permute.xlu0 %4306
      %4309 = vset.pattern.permute.xlu0 7
      %4310 = vperm.xlu0 %4309, %v721
      %v4311 = vpop.permute.xlu0 %4310
      %4313 = vset.pattern.permute.xlu0 7
      %4314 = vperm.xlu0 %4313, %v722
      %v4315 = vpop.permute.xlu0 %4314
      %4317 = vset.pattern.permute.xlu0 7
      %4318 = vperm.xlu0 %4317, %v723
      %v4319 = vpop.permute.xlu0 %4318
      %4321 = vset.pattern.permute.xlu0 7
      %4322 = vperm.xlu0 %4321, %v724
      %v4323 = vpop.permute.xlu0 %4322
      %4325 = vset.pattern.permute.xlu0 7
      %4326 = vperm.xlu0 %4325, %v725
      %v4327 = vpop.permute.xlu0 %4326
      %4329 = vset.pattern.permute.xlu0 7
      %4330 = vperm.xlu0 %4329, %v726
      %v4331 = vpop.permute.xlu0 %4330
      %4333 = vset.pattern.permute.xlu0 7
      %4334 = vperm.xlu0 %4333, %v727
      %v4335 = vpop.permute.xlu0 %4334
      %v4337 = vmul.f32 %v1334, %v4211
      %v4338 = vmul.f32 %v1337, %v4215
      %v4339 = vmul.f32 %v1342, %v4219
      %v4340 = vmul.f32 %v1345, %v4223
      %v4341 = vmul.f32 %v1350, %v4227
      %v4342 = vmul.f32 %v1353, %v4231
      %v4343 = vmul.f32 %v1358, %v4235
      %v4344 = vmul.f32 %v1361, %v4239
      %v4345 = vmul.f32 %v1366, %v4243
      %v4346 = vmul.f32 %v1369, %v4247
      %v4347 = vmul.f32 %v1374, %v4251
      %v4348 = vmul.f32 %v1377, %v4255
      %v4349 = vmul.f32 %v1382, %v4259
      %v4350 = vmul.f32 %v1385, %v4263
      %v4351 = vmul.f32 %v1390, %v4267
      %v4352 = vmul.f32 %v1393, %v4271
      %v4353 = vmul.f32 %v1398, %v4275
      %v4354 = vmul.f32 %v1401, %v4279
      %v4355 = vmul.f32 %v1406, %v4283
      %v4356 = vmul.f32 %v1409, %v4287
      %v4357 = vmul.f32 %v1414, %v4291
      %v4358 = vmul.f32 %v1417, %v4295
      %v4359 = vmul.f32 %v1422, %v4299
      %v4360 = vmul.f32 %v1425, %v4303
      %v4361 = vmul.f32 %v1430, %v4307
      %v4362 = vmul.f32 %v1433, %v4311
      %v4363 = vmul.f32 %v1438, %v4315
      %v4364 = vmul.f32 %v1441, %v4319
      %v4365 = vmul.f32 %v1446, %v4323
      %v4366 = vmul.f32 %v1449, %v4327
      %v4367 = vmul.f32 %v4331, 0.0
      %v4368 = vmul.f32 %v4335, 0.0
      %v4401 = vrot.slane %v4337, 1
      %v4402 = vrot.slane %v4338, 1
      %v4403 = vsel %vm1580, %v4401, %v4402
      %v4404 = vrot.slane %v4339, 1
      %v4405 = vsel %vm1580, %v4402, %v4404
      %v4406 = vrot.slane %v4340, 1
      %v4407 = vsel %vm1580, %v4404, %v4406
      %v4408 = vrot.slane %v4341, 1
      %v4409 = vsel %vm1580, %v4406, %v4408
      %v4410 = vrot.slane %v4342, 1
      %v4411 = vsel %vm1580, %v4408, %v4410
      %v4412 = vrot.slane %v4343, 1
      %v4413 = vsel %vm1580, %v4410, %v4412
      %v4414 = vrot.slane %v4344, 1
      %v4415 = vsel %vm1580, %v4412, %v4414
      %v4416 = vrot.slane %v4345, 1
      %v4417 = vsel %vm1580, %v4414, %v4416
      %v4418 = vrot.slane %v4346, 1
      %v4419 = vsel %vm1580, %v4416, %v4418
      %v4420 = vrot.slane %v4347, 1
      %v4421 = vsel %vm1580, %v4418, %v4420
      %v4422 = vrot.slane %v4348, 1
      %v4423 = vsel %vm1580, %v4420, %v4422
      %v4424 = vrot.slane %v4349, 1
      %v4425 = vsel %vm1580, %v4422, %v4424
      %v4426 = vrot.slane %v4350, 1
      %v4427 = vsel %vm1580, %v4424, %v4426
      %v4428 = vrot.slane %v4351, 1
      %v4429 = vsel %vm1580, %v4426, %v4428
      %v4430 = vrot.slane %v4352, 1
      %v4431 = vsel %vm1580, %v4428, %v4430
      %v4432 = vrot.slane %v4353, 1
      %v4433 = vsel %vm1580, %v4430, %v4432
      %v4434 = vrot.slane %v4354, 1
      %v4435 = vsel %vm1580, %v4432, %v4434
      %v4436 = vrot.slane %v4355, 1
      %v4437 = vsel %vm1580, %v4434, %v4436
      %v4438 = vrot.slane %v4356, 1
      %v4439 = vsel %vm1580, %v4436, %v4438
      %v4440 = vrot.slane %v4357, 1
      %v4441 = vsel %vm1580, %v4438, %v4440
      %v4442 = vrot.slane %v4358, 1
      %v4443 = vsel %vm1580, %v4440, %v4442
      %v4444 = vrot.slane %v4359, 1
      %v4445 = vsel %vm1580, %v4442, %v4444
      %v4446 = vrot.slane %v4360, 1
      %v4447 = vsel %vm1580, %v4444, %v4446
      %v4448 = vrot.slane %v4361, 1
      %v4449 = vsel %vm1580, %v4446, %v4448
      %v4450 = vrot.slane %v4362, 1
      %v4451 = vsel %vm1580, %v4448, %v4450
      %v4452 = vrot.slane %v4363, 1
      %v4453 = vsel %vm1580, %v4450, %v4452
      %v4454 = vrot.slane %v4364, 1
      %v4455 = vsel %vm1580, %v4452, %v4454
      %v4456 = vrot.slane %v4365, 1
      %v4457 = vsel %vm1580, %v4454, %v4456
      %v4458 = vrot.slane %v4366, 1
      %v4459 = vsel %vm1580, %v4456, %v4458
      %v4460 = vrot.slane %v4367, 1
      %v4461 = vsel %vm1580, %v4458, %v4460
      %v4462 = vrot.slane %v4368, 1
      %v4463 = vsel %vm1580, %v4460, %v4462
      %4464 = vrot.lane.b32.xlu0 %v4401, 72
      %v4465 = vpop.permute.xlu0 %4464
      %4466 = vrot.lane.b32.xlu0 %v4403, 72
      %v4467 = vpop.permute.xlu0 %4466
      %4468 = vrot.lane.b32.xlu0 %v4405, 72
      %v4469 = vpop.permute.xlu0 %4468
      %4470 = vrot.lane.b32.xlu0 %v4407, 72
      %v4471 = vpop.permute.xlu0 %4470
      %4472 = vrot.lane.b32.xlu0 %v4409, 72
      %v4473 = vpop.permute.xlu0 %4472
      %4474 = vrot.lane.b32.xlu0 %v4411, 72
      %v4475 = vpop.permute.xlu0 %4474
      %4476 = vrot.lane.b32.xlu0 %v4413, 72
      %v4477 = vpop.permute.xlu0 %4476
      %4478 = vrot.lane.b32.xlu0 %v4415, 72
      %v4479 = vpop.permute.xlu0 %4478
      %4480 = vrot.lane.b32.xlu0 %v4417, 72
      %v4481 = vpop.permute.xlu0 %4480
      %4482 = vrot.lane.b32.xlu0 %v4419, 72
      %v4483 = vpop.permute.xlu0 %4482
      %4484 = vrot.lane.b32.xlu0 %v4421, 72
      %v4485 = vpop.permute.xlu0 %4484
      %4486 = vrot.lane.b32.xlu0 %v4423, 72
      %v4487 = vpop.permute.xlu0 %4486
      %4488 = vrot.lane.b32.xlu0 %v4425, 72
      %v4489 = vpop.permute.xlu0 %4488
      %4490 = vrot.lane.b32.xlu0 %v4427, 72
      %v4491 = vpop.permute.xlu0 %4490
      %4492 = vrot.lane.b32.xlu0 %v4429, 72
      %v4493 = vpop.permute.xlu0 %4492
      %4494 = vrot.lane.b32.xlu0 %v4431, 72
      %v4495 = vpop.permute.xlu0 %4494
      %4496 = vrot.lane.b32.xlu0 %v4433, 72
      %v4497 = vpop.permute.xlu0 %4496
      %4498 = vrot.lane.b32.xlu0 %v4435, 72
      %v4499 = vpop.permute.xlu0 %4498
      %4500 = vrot.lane.b32.xlu0 %v4437, 72
      %v4501 = vpop.permute.xlu0 %4500
      %4502 = vrot.lane.b32.xlu0 %v4439, 72
      %v4503 = vpop.permute.xlu0 %4502
      %4504 = vrot.lane.b32.xlu0 %v4441, 72
      %v4505 = vpop.permute.xlu0 %4504
      %4506 = vrot.lane.b32.xlu0 %v4443, 72
      %v4507 = vpop.permute.xlu0 %4506
      %4508 = vrot.lane.b32.xlu0 %v4445, 72
      %v4509 = vpop.permute.xlu0 %4508
      %4510 = vrot.lane.b32.xlu0 %v4447, 72
      %v4511 = vpop.permute.xlu0 %4510
      %4512 = vrot.lane.b32.xlu0 %v4449, 72
      %v4513 = vpop.permute.xlu0 %4512
      %4514 = vrot.lane.b32.xlu0 %v4451, 72
      %v4515 = vpop.permute.xlu0 %4514
      %4516 = vrot.lane.b32.xlu0 %v4453, 72
      %v4517 = vpop.permute.xlu0 %4516
      %4518 = vrot.lane.b32.xlu0 %v4455, 72
      %v4519 = vpop.permute.xlu0 %4518
      %4520 = vrot.lane.b32.xlu0 %v4457, 72
      %v4521 = vpop.permute.xlu0 %4520
      %4522 = vrot.lane.b32.xlu0 %v4459, 72
      %v4523 = vpop.permute.xlu0 %4522
      %4524 = vrot.lane.b32.xlu0 %v4461, 72
      %v4525 = vpop.permute.xlu0 %4524
      %4526 = vrot.lane.b32.xlu0 %v4463, 72
      %v4527 = vpop.permute.xlu0 %4526
      %4528 = vrot.lane.b32.xlu0 %v4462, 72
      %v4529 = vpop.permute.xlu0 %4528
      %v4563 = vadd.f32 %v4176, %v4465
      %v4564 = vadd.f32 %v4177, %v4467
      %v4565 = vadd.f32 %v4178, %v4469
      %v4566 = vadd.f32 %v4179, %v4471
      %v4567 = vadd.f32 %v4180, %v4473
      %v4568 = vadd.f32 %v4181, %v4475
      %v4569 = vadd.f32 %v4182, %v4477
      %v4570 = vadd.f32 %v4183, %v4479
      %v4571 = vadd.f32 %v4184, %v4481
      %v4572 = vadd.f32 %v4185, %v4483
      %v4573 = vadd.f32 %v4186, %v4485
      %v4574 = vadd.f32 %v4187, %v4487
      %v4575 = vadd.f32 %v4188, %v4489
      %v4576 = vadd.f32 %v4189, %v4491
      %v4577 = vadd.f32 %v4190, %v4493
      %v4578 = vadd.f32 %v4191, %v4495
      %v4579 = vadd.f32 %v4192, %v4497
      %v4580 = vadd.f32 %v4193, %v4499
      %v4581 = vadd.f32 %v4194, %v4501
      %v4582 = vadd.f32 %v4195, %v4503
      %v4583 = vadd.f32 %v4196, %v4505
      %v4584 = vadd.f32 %v4197, %v4507
      %v4585 = vadd.f32 %v4198, %v4509
      %v4586 = vadd.f32 %v4199, %v4511
      %v4587 = vadd.f32 %v4200, %v4513
      %v4588 = vadd.f32 %v4201, %v4515
      %v4589 = vadd.f32 %v4202, %v4517
      %v4590 = vadd.f32 %v4203, %v4519
      %v4591 = vadd.f32 %v4204, %v4521
      %v4592 = vadd.f32 %v4205, %v4523
      %v4593 = vadd.f32 %v4206, %v4525
      %v4594 = vadd.f32 %v4207, %v4527
      %v4595 = vadd.f32 %v4208, %v4529
      %4596 = vset.pattern.permute.xlu0 8
      %4597 = vperm.xlu0 %4596, %v696
      %v4598 = vpop.permute.xlu0 %4597
      %4599 = vset.pattern.permute.xlu0 8
      %4600 = vperm.xlu0 %4599, %v697
      %v4601 = vpop.permute.xlu0 %4600
      %4602 = vset.pattern.permute.xlu0 8
      %4603 = vperm.xlu0 %4602, %v698
      %v4604 = vpop.permute.xlu0 %4603
      %4605 = vset.pattern.permute.xlu0 8
      %4606 = vperm.xlu0 %4605, %v699
      %v4607 = vpop.permute.xlu0 %4606
      %4608 = vset.pattern.permute.xlu0 8
      %4609 = vperm.xlu0 %4608, %v700
      %v4610 = vpop.permute.xlu0 %4609
      %4611 = vset.pattern.permute.xlu0 8
      %4612 = vperm.xlu0 %4611, %v701
      %v4613 = vpop.permute.xlu0 %4612
      %4614 = vset.pattern.permute.xlu0 8
      %4615 = vperm.xlu0 %4614, %v702
      %v4616 = vpop.permute.xlu0 %4615
      %4617 = vset.pattern.permute.xlu0 8
      %4618 = vperm.xlu0 %4617, %v703
      %v4619 = vpop.permute.xlu0 %4618
      %4620 = vset.pattern.permute.xlu0 8
      %4621 = vperm.xlu0 %4620, %v704
      %v4622 = vpop.permute.xlu0 %4621
      %4623 = vset.pattern.permute.xlu0 8
      %4624 = vperm.xlu0 %4623, %v705
      %v4625 = vpop.permute.xlu0 %4624
      %4626 = vset.pattern.permute.xlu0 8
      %4627 = vperm.xlu0 %4626, %v706
      %v4628 = vpop.permute.xlu0 %4627
      %4629 = vset.pattern.permute.xlu0 8
      %4630 = vperm.xlu0 %4629, %v707
      %v4631 = vpop.permute.xlu0 %4630
      %4632 = vset.pattern.permute.xlu0 8
      %4633 = vperm.xlu0 %4632, %v708
      %v4634 = vpop.permute.xlu0 %4633
      %4635 = vset.pattern.permute.xlu0 8
      %4636 = vperm.xlu0 %4635, %v709
      %v4637 = vpop.permute.xlu0 %4636
      %4638 = vset.pattern.permute.xlu0 8
      %4639 = vperm.xlu0 %4638, %v710
      %v4640 = vpop.permute.xlu0 %4639
      %4641 = vset.pattern.permute.xlu0 8
      %4642 = vperm.xlu0 %4641, %v711
      %v4643 = vpop.permute.xlu0 %4642
      %4644 = vset.pattern.permute.xlu0 8
      %4645 = vperm.xlu0 %4644, %v712
      %v4646 = vpop.permute.xlu0 %4645
      %4647 = vset.pattern.permute.xlu0 8
      %4648 = vperm.xlu0 %4647, %v713
      %v4649 = vpop.permute.xlu0 %4648
      %4650 = vset.pattern.permute.xlu0 8
      %4651 = vperm.xlu0 %4650, %v714
      %v4652 = vpop.permute.xlu0 %4651
      %4653 = vset.pattern.permute.xlu0 8
      %4654 = vperm.xlu0 %4653, %v715
      %v4655 = vpop.permute.xlu0 %4654
      %4656 = vset.pattern.permute.xlu0 8
      %4657 = vperm.xlu0 %4656, %v716
      %v4658 = vpop.permute.xlu0 %4657
      %4659 = vset.pattern.permute.xlu0 8
      %4660 = vperm.xlu0 %4659, %v717
      %v4661 = vpop.permute.xlu0 %4660
      %4662 = vset.pattern.permute.xlu0 8
      %4663 = vperm.xlu0 %4662, %v718
      %v4664 = vpop.permute.xlu0 %4663
      %4665 = vset.pattern.permute.xlu0 8
      %4666 = vperm.xlu0 %4665, %v719
      %v4667 = vpop.permute.xlu0 %4666
      %4668 = vset.pattern.permute.xlu0 8
      %4669 = vperm.xlu0 %4668, %v720
      %v4670 = vpop.permute.xlu0 %4669
      %4671 = vset.pattern.permute.xlu0 8
      %4672 = vperm.xlu0 %4671, %v721
      %v4673 = vpop.permute.xlu0 %4672
      %4674 = vset.pattern.permute.xlu0 8
      %4675 = vperm.xlu0 %4674, %v722
      %v4676 = vpop.permute.xlu0 %4675
      %4677 = vset.pattern.permute.xlu0 8
      %4678 = vperm.xlu0 %4677, %v723
      %v4679 = vpop.permute.xlu0 %4678
      %4680 = vset.pattern.permute.xlu0 8
      %4681 = vperm.xlu0 %4680, %v724
      %v4682 = vpop.permute.xlu0 %4681
      %4683 = vset.pattern.permute.xlu0 8
      %4684 = vperm.xlu0 %4683, %v725
      %v4685 = vpop.permute.xlu0 %4684
      %4686 = vset.pattern.permute.xlu0 8
      %4687 = vperm.xlu0 %4686, %v726
      %v4688 = vpop.permute.xlu0 %4687
      %4689 = vset.pattern.permute.xlu0 8
      %4690 = vperm.xlu0 %4689, %v727
      %v4691 = vpop.permute.xlu0 %4690
      %v4692 = vrot.slane %v4598, 7
      %v4693 = vrot.slane %v4601, 7
      %v4694 = vsel %vm2226, %v4692, %v4693
      %v4695 = vrot.slane %v4604, 7
      %v4696 = vsel %vm2226, %v4693, %v4695
      %v4697 = vrot.slane %v4607, 7
      %v4698 = vsel %vm2226, %v4695, %v4697
      %v4699 = vrot.slane %v4610, 7
      %v4700 = vsel %vm2226, %v4697, %v4699
      %v4701 = vrot.slane %v4613, 7
      %v4702 = vsel %vm2226, %v4699, %v4701
      %v4703 = vrot.slane %v4616, 7
      %v4704 = vsel %vm2226, %v4701, %v4703
      %v4705 = vrot.slane %v4619, 7
      %v4706 = vsel %vm2226, %v4703, %v4705
      %v4707 = vrot.slane %v4622, 7
      %v4708 = vsel %vm2226, %v4705, %v4707
      %v4709 = vrot.slane %v4625, 7
      %v4710 = vsel %vm2226, %v4707, %v4709
      %v4711 = vrot.slane %v4628, 7
      %v4712 = vsel %vm2226, %v4709, %v4711
      %v4713 = vrot.slane %v4631, 7
      %v4714 = vsel %vm2226, %v4711, %v4713
      %v4715 = vrot.slane %v4634, 7
      %v4716 = vsel %vm2226, %v4713, %v4715
      %v4717 = vrot.slane %v4637, 7
      %v4718 = vsel %vm2226, %v4715, %v4717
      %v4719 = vrot.slane %v4640, 7
      %v4720 = vsel %vm2226, %v4717, %v4719
      %v4721 = vrot.slane %v4643, 7
      %v4722 = vsel %vm2226, %v4719, %v4721
      %v4723 = vrot.slane %v4646, 7
      %v4724 = vsel %vm2226, %v4721, %v4723
      %v4725 = vrot.slane %v4649, 7
      %v4726 = vsel %vm2226, %v4723, %v4725
      %v4727 = vrot.slane %v4652, 7
      %v4728 = vsel %vm2226, %v4725, %v4727
      %v4729 = vrot.slane %v4655, 7
      %v4730 = vsel %vm2226, %v4727, %v4729
      %v4731 = vrot.slane %v4658, 7
      %v4732 = vsel %vm2226, %v4729, %v4731
      %v4733 = vrot.slane %v4661, 7
      %v4734 = vsel %vm2226, %v4731, %v4733
      %v4735 = vrot.slane %v4664, 7
      %v4736 = vsel %vm2226, %v4733, %v4735
      %v4737 = vrot.slane %v4667, 7
      %v4738 = vsel %vm2226, %v4735, %v4737
      %v4739 = vrot.slane %v4670, 7
      %v4740 = vsel %vm2226, %v4737, %v4739
      %v4741 = vrot.slane %v4673, 7
      %v4742 = vsel %vm2226, %v4739, %v4741
      %v4743 = vrot.slane %v4676, 7
      %v4744 = vsel %vm2226, %v4741, %v4743
      %v4745 = vrot.slane %v4679, 7
      %v4746 = vsel %vm2226, %v4743, %v4745
      %v4747 = vrot.slane %v4682, 7
      %v4748 = vsel %vm2226, %v4745, %v4747
      %v4749 = vrot.slane %v4685, 7
      %v4750 = vsel %vm2226, %v4747, %v4749
      %v4751 = vrot.slane %v4688, 7
      %v4752 = vsel %vm2226, %v4749, %v4751
      %v4753 = vrot.slane %v4691, 7
      %v4754 = vsel %vm2226, %v4751, %v4753
      %v4788 = vmul.f32 %v1334, %v4692
      %v4789 = vmul.f32 %v1337, %v4694
      %v4790 = vmul.f32 %v1342, %v4696
      %v4791 = vmul.f32 %v1345, %v4698
      %v4792 = vmul.f32 %v1350, %v4700
      %v4793 = vmul.f32 %v1353, %v4702
      %v4794 = vmul.f32 %v1358, %v4704
      %v4795 = vmul.f32 %v1361, %v4706
      %v4796 = vmul.f32 %v1366, %v4708
      %v4797 = vmul.f32 %v1369, %v4710
      %v4798 = vmul.f32 %v1374, %v4712
      %v4799 = vmul.f32 %v1377, %v4714
      %v4800 = vmul.f32 %v1382, %v4716
      %v4801 = vmul.f32 %v1385, %v4718
      %v4802 = vmul.f32 %v1390, %v4720
      %v4803 = vmul.f32 %v1393, %v4722
      %v4804 = vmul.f32 %v1398, %v4724
      %v4805 = vmul.f32 %v1401, %v4726
      %v4806 = vmul.f32 %v1406, %v4728
      %v4807 = vmul.f32 %v1409, %v4730
      %v4808 = vmul.f32 %v1414, %v4732
      %v4809 = vmul.f32 %v1417, %v4734
      %v4810 = vmul.f32 %v1422, %v4736
      %v4811 = vmul.f32 %v1425, %v4738
      %v4812 = vmul.f32 %v1430, %v4740
      %v4813 = vmul.f32 %v1433, %v4742
      %v4814 = vmul.f32 %v1438, %v4744
      %v4815 = vmul.f32 %v1441, %v4746
      %v4816 = vmul.f32 %v1446, %v4748
      %v4817 = vmul.f32 %v1449, %v4750
      %v4818 = vmul.f32 %v4752, 0.0
      %v4819 = vmul.f32 %v4754, 0.0
      %v4820 = vmul.f32 %v4753, 0.0
      %v4854 = vrot.slane %v4788, 2
      %v4855 = vrot.slane %v4789, 2
      %v4856 = vsel %vm2389, %v4854, %v4855
      %v4857 = vrot.slane %v4790, 2
      %v4858 = vsel %vm2389, %v4855, %v4857
      %v4859 = vrot.slane %v4791, 2
      %v4860 = vsel %vm2389, %v4857, %v4859
      %v4861 = vrot.slane %v4792, 2
      %v4862 = vsel %vm2389, %v4859, %v4861
      %v4863 = vrot.slane %v4793, 2
      %v4864 = vsel %vm2389, %v4861, %v4863
      %v4865 = vrot.slane %v4794, 2
      %v4866 = vsel %vm2389, %v4863, %v4865
      %v4867 = vrot.slane %v4795, 2
      %v4868 = vsel %vm2389, %v4865, %v4867
      %v4869 = vrot.slane %v4796, 2
      %v4870 = vsel %vm2389, %v4867, %v4869
      %v4871 = vrot.slane %v4797, 2
      %v4872 = vsel %vm2389, %v4869, %v4871
      %v4873 = vrot.slane %v4798, 2
      %v4874 = vsel %vm2389, %v4871, %v4873
      %v4875 = vrot.slane %v4799, 2
      %v4876 = vsel %vm2389, %v4873, %v4875
      %v4877 = vrot.slane %v4800, 2
      %v4878 = vsel %vm2389, %v4875, %v4877
      %v4879 = vrot.slane %v4801, 2
      %v4880 = vsel %vm2389, %v4877, %v4879
      %v4881 = vrot.slane %v4802, 2
      %v4882 = vsel %vm2389, %v4879, %v4881
      %v4883 = vrot.slane %v4803, 2
      %v4884 = vsel %vm2389, %v4881, %v4883
      %v4885 = vrot.slane %v4804, 2
      %v4886 = vsel %vm2389, %v4883, %v4885
      %v4887 = vrot.slane %v4805, 2
      %v4888 = vsel %vm2389, %v4885, %v4887
      %v4889 = vrot.slane %v4806, 2
      %v4890 = vsel %vm2389, %v4887, %v4889
      %v4891 = vrot.slane %v4807, 2
      %v4892 = vsel %vm2389, %v4889, %v4891
      %v4893 = vrot.slane %v4808, 2
      %v4894 = vsel %vm2389, %v4891, %v4893
      %v4895 = vrot.slane %v4809, 2
      %v4896 = vsel %vm2389, %v4893, %v4895
      %v4897 = vrot.slane %v4810, 2
      %v4898 = vsel %vm2389, %v4895, %v4897
      %v4899 = vrot.slane %v4811, 2
      %v4900 = vsel %vm2389, %v4897, %v4899
      %v4901 = vrot.slane %v4812, 2
      %v4902 = vsel %vm2389, %v4899, %v4901
      %v4903 = vrot.slane %v4813, 2
      %v4904 = vsel %vm2389, %v4901, %v4903
      %v4905 = vrot.slane %v4814, 2
      %v4906 = vsel %vm2389, %v4903, %v4905
      %v4907 = vrot.slane %v4815, 2
      %v4908 = vsel %vm2389, %v4905, %v4907
      %v4909 = vrot.slane %v4816, 2
      %v4910 = vsel %vm2389, %v4907, %v4909
      %v4911 = vrot.slane %v4817, 2
      %v4912 = vsel %vm2389, %v4909, %v4911
      %v4913 = vrot.slane %v4818, 2
      %v4914 = vsel %vm2389, %v4911, %v4913
      %v4915 = vrot.slane %v4819, 2
      %v4916 = vsel %vm2389, %v4913, %v4915
      %v4917 = vrot.slane %v4820, 2
      %v4918 = vsel %vm2389, %v4915, %v4917
      %4919 = vrot.lane.b32.xlu0 %v4854, 64
      %v4920 = vpop.permute.xlu0 %4919
      %4921 = vrot.lane.b32.xlu0 %v4856, 64
      %v4922 = vpop.permute.xlu0 %4921
      %4923 = vrot.lane.b32.xlu0 %v4858, 64
      %v4924 = vpop.permute.xlu0 %4923
      %4925 = vrot.lane.b32.xlu0 %v4860, 64
      %v4926 = vpop.permute.xlu0 %4925
      %4927 = vrot.lane.b32.xlu0 %v4862, 64
      %v4928 = vpop.permute.xlu0 %4927
      %4929 = vrot.lane.b32.xlu0 %v4864, 64
      %v4930 = vpop.permute.xlu0 %4929
      %4931 = vrot.lane.b32.xlu0 %v4866, 64
      %v4932 = vpop.permute.xlu0 %4931
      %4933 = vrot.lane.b32.xlu0 %v4868, 64
      %v4934 = vpop.permute.xlu0 %4933
      %4935 = vrot.lane.b32.xlu0 %v4870, 64
      %v4936 = vpop.permute.xlu0 %4935
      %4937 = vrot.lane.b32.xlu0 %v4872, 64
      %v4938 = vpop.permute.xlu0 %4937
      %4939 = vrot.lane.b32.xlu0 %v4874, 64
      %v4940 = vpop.permute.xlu0 %4939
      %4941 = vrot.lane.b32.xlu0 %v4876, 64
      %v4942 = vpop.permute.xlu0 %4941
      %4943 = vrot.lane.b32.xlu0 %v4878, 64
      %v4944 = vpop.permute.xlu0 %4943
      %4945 = vrot.lane.b32.xlu0 %v4880, 64
      %v4946 = vpop.permute.xlu0 %4945
      %4947 = vrot.lane.b32.xlu0 %v4882, 64
      %v4948 = vpop.permute.xlu0 %4947
      %4949 = vrot.lane.b32.xlu0 %v4884, 64
      %v4950 = vpop.permute.xlu0 %4949
      %4951 = vrot.lane.b32.xlu0 %v4886, 64
      %v4952 = vpop.permute.xlu0 %4951
      %4953 = vrot.lane.b32.xlu0 %v4888, 64
      %v4954 = vpop.permute.xlu0 %4953
      %4955 = vrot.lane.b32.xlu0 %v4890, 64
      %v4956 = vpop.permute.xlu0 %4955
      %4957 = vrot.lane.b32.xlu0 %v4892, 64
      %v4958 = vpop.permute.xlu0 %4957
      %4959 = vrot.lane.b32.xlu0 %v4894, 64
      %v4960 = vpop.permute.xlu0 %4959
      %4961 = vrot.lane.b32.xlu0 %v4896, 64
      %v4962 = vpop.permute.xlu0 %4961
      %4963 = vrot.lane.b32.xlu0 %v4898, 64
      %v4964 = vpop.permute.xlu0 %4963
      %4965 = vrot.lane.b32.xlu0 %v4900, 64
      %v4966 = vpop.permute.xlu0 %4965
      %4967 = vrot.lane.b32.xlu0 %v4902, 64
      %v4968 = vpop.permute.xlu0 %4967
      %4969 = vrot.lane.b32.xlu0 %v4904, 64
      %v4970 = vpop.permute.xlu0 %4969
      %4971 = vrot.lane.b32.xlu0 %v4906, 64
      %v4972 = vpop.permute.xlu0 %4971
      %4973 = vrot.lane.b32.xlu0 %v4908, 64
      %v4974 = vpop.permute.xlu0 %4973
      %4975 = vrot.lane.b32.xlu0 %v4910, 64
      %v4976 = vpop.permute.xlu0 %4975
      %4977 = vrot.lane.b32.xlu0 %v4912, 64
      %v4978 = vpop.permute.xlu0 %4977
      %4979 = vrot.lane.b32.xlu0 %v4914, 64
      %v4980 = vpop.permute.xlu0 %4979
      %4981 = vrot.lane.b32.xlu0 %v4916, 64
      %v4982 = vpop.permute.xlu0 %4981
      %4983 = vrot.lane.b32.xlu0 %v4918, 64
      %v4984 = vpop.permute.xlu0 %4983
      %v5018 = vadd.f32 %v4563, %v4920
      %v5019 = vadd.f32 %v4564, %v4922
      %v5020 = vadd.f32 %v4565, %v4924
      %v5021 = vadd.f32 %v4566, %v4926
      %v5022 = vadd.f32 %v4567, %v4928
      %v5023 = vadd.f32 %v4568, %v4930
      %v5024 = vadd.f32 %v4569, %v4932
      %v5025 = vadd.f32 %v4570, %v4934
      %v5026 = vadd.f32 %v4571, %v4936
      %v5027 = vadd.f32 %v4572, %v4938
      %v5028 = vadd.f32 %v4573, %v4940
      %v5029 = vadd.f32 %v4574, %v4942
      %v5030 = vadd.f32 %v4575, %v4944
      %v5031 = vadd.f32 %v4576, %v4946
      %v5032 = vadd.f32 %v4577, %v4948
      %v5033 = vadd.f32 %v4578, %v4950
      %v5034 = vadd.f32 %v4579, %v4952
      %v5035 = vadd.f32 %v4580, %v4954
      %v5036 = vadd.f32 %v4581, %v4956
      %v5037 = vadd.f32 %v4582, %v4958
      %v5038 = vadd.f32 %v4583, %v4960
      %v5039 = vadd.f32 %v4584, %v4962
      %v5040 = vadd.f32 %v4585, %v4964
      %v5041 = vadd.f32 %v4586, %v4966
      %v5042 = vadd.f32 %v4587, %v4968
      %v5043 = vadd.f32 %v4588, %v4970
      %v5044 = vadd.f32 %v4589, %v4972
      %v5045 = vadd.f32 %v4590, %v4974
      %v5046 = vadd.f32 %v4591, %v4976
      %v5047 = vadd.f32 %v4592, %v4978
      %v5048 = vadd.f32 %v4593, %v4980
      %v5049 = vadd.f32 %v4594, %v4982
      %v5050 = vadd.f32 %v4595, %v4984
      %5084 = vrot.lane.b32.xlu0 %v5018, 8
      %v5085 = vpop.permute.xlu0 %5084
      %5086 = vrot.lane.b32.xlu0 %v5019, 8
      %v5087 = vpop.permute.xlu0 %5086
      %5088 = vrot.lane.b32.xlu0 %v5020, 8
      %v5089 = vpop.permute.xlu0 %5088
      %5090 = vrot.lane.b32.xlu0 %v5021, 8
      %v5091 = vpop.permute.xlu0 %5090
      %5092 = vrot.lane.b32.xlu0 %v5022, 8
      %v5093 = vpop.permute.xlu0 %5092
      %5094 = vrot.lane.b32.xlu0 %v5023, 8
      %v5095 = vpop.permute.xlu0 %5094
      %5096 = vrot.lane.b32.xlu0 %v5024, 8
      %v5097 = vpop.permute.xlu0 %5096
      %5098 = vrot.lane.b32.xlu0 %v5025, 8
      %v5099 = vpop.permute.xlu0 %5098
      %5100 = vrot.lane.b32.xlu0 %v5026, 8
      %v5101 = vpop.permute.xlu0 %5100
      %5102 = vrot.lane.b32.xlu0 %v5027, 8
      %v5103 = vpop.permute.xlu0 %5102
      %5104 = vrot.lane.b32.xlu0 %v5028, 8
      %v5105 = vpop.permute.xlu0 %5104
      %5106 = vrot.lane.b32.xlu0 %v5029, 8
      %v5107 = vpop.permute.xlu0 %5106
      %5108 = vrot.lane.b32.xlu0 %v5030, 8
      %v5109 = vpop.permute.xlu0 %5108
      %5110 = vrot.lane.b32.xlu0 %v5031, 8
      %v5111 = vpop.permute.xlu0 %5110
      %5112 = vrot.lane.b32.xlu0 %v5032, 8
      %v5113 = vpop.permute.xlu0 %5112
      %5114 = vrot.lane.b32.xlu0 %v5033, 8
      %v5115 = vpop.permute.xlu0 %5114
      %5116 = vrot.lane.b32.xlu0 %v5034, 8
      %v5117 = vpop.permute.xlu0 %5116
      %5118 = vrot.lane.b32.xlu0 %v5035, 8
      %v5119 = vpop.permute.xlu0 %5118
      %5120 = vrot.lane.b32.xlu0 %v5036, 8
      %v5121 = vpop.permute.xlu0 %5120
      %5122 = vrot.lane.b32.xlu0 %v5037, 8
      %v5123 = vpop.permute.xlu0 %5122
      %5124 = vrot.lane.b32.xlu0 %v5038, 8
      %v5125 = vpop.permute.xlu0 %5124
      %5126 = vrot.lane.b32.xlu0 %v5039, 8
      %v5127 = vpop.permute.xlu0 %5126
      %5128 = vrot.lane.b32.xlu0 %v5040, 8
      %v5129 = vpop.permute.xlu0 %5128
      %5130 = vrot.lane.b32.xlu0 %v5041, 8
      %v5131 = vpop.permute.xlu0 %5130
      %5132 = vrot.lane.b32.xlu0 %v5042, 8
      %v5133 = vpop.permute.xlu0 %5132
      %5134 = vrot.lane.b32.xlu0 %v5043, 8
      %v5135 = vpop.permute.xlu0 %5134
      %5136 = vrot.lane.b32.xlu0 %v5044, 8
      %v5137 = vpop.permute.xlu0 %5136
      %5138 = vrot.lane.b32.xlu0 %v5045, 8
      %v5139 = vpop.permute.xlu0 %5138
      %5140 = vrot.lane.b32.xlu0 %v5046, 8
      %v5141 = vpop.permute.xlu0 %5140
      %5142 = vrot.lane.b32.xlu0 %v5047, 8
      %v5143 = vpop.permute.xlu0 %5142
      %5144 = vrot.lane.b32.xlu0 %v5048, 8
      %v5145 = vpop.permute.xlu0 %5144
      %5146 = vrot.lane.b32.xlu0 %v5049, 8
      %v5147 = vpop.permute.xlu0 %5146
      %5148 = vrot.lane.b32.xlu0 %v5050, 8
      %v5149 = vpop.permute.xlu0 %5148
      %vm5183 = vcmask 130119
      %5184 = vst.msk [vmem:[#allocation2 - $0x7] sm:$0x80] %vm5183, %v5085
      %vm5185 = vcmask 130112
      %5186 = vst.msk [vmem:[#allocation2 + $0x1] sm:$0xff] %vm5185, %v5087
      %5187 = vst.msk [vmem:[#allocation2 + $0x9] sm:$0xff] %vm5185, %v5089
      %5188 = vst.msk [vmem:[#allocation2 + $0x11] sm:$0xff] %vm5185, %v5091
      %5189 = vst.msk [vmem:[#allocation2 + $0x19] sm:$0xff] %vm5185, %v5093
      %5190 = vst.msk [vmem:[#allocation2 + $0x21] sm:$0xff] %vm5185, %v5095
      %5191 = vst.msk [vmem:[#allocation2 + $0x29] sm:$0xff] %vm5185, %v5097
      %5192 = vst.msk [vmem:[#allocation2 + $0x31] sm:$0xff] %vm5185, %v5099
      %5193 = vst.msk [vmem:[#allocation2 + $0x39] sm:$0xff] %vm5185, %v5101
      %5194 = vst.msk [vmem:[#allocation2 + $0x41] sm:$0xff] %vm5185, %v5103
      %5195 = vst.msk [vmem:[#allocation2 + $0x49] sm:$0xff] %vm5185, %v5105
      %5196 = vst.msk [vmem:[#allocation2 + $0x51] sm:$0xff] %vm5185, %v5107
      %5197 = vst.msk [vmem:[#allocation2 + $0x59] sm:$0xff] %vm5185, %v5109
      %5198 = vst.msk [vmem:[#allocation2 + $0x61] sm:$0xff] %vm5185, %v5111
      %5199 = vst.msk [vmem:[#allocation2 + $0x69] sm:$0xff] %vm5185, %v5113
      %5200 = vst.msk [vmem:[#allocation2 + $0x71] sm:$0xff] %vm5185, %v5115
      %5201 = vst.msk [vmem:[#allocation2 + $0x79] sm:$0xff] %vm5185, %v5117
      %5202 = vst.msk [vmem:[#allocation2 + $0x81] sm:$0xff] %vm5185, %v5119
      %5203 = vst.msk [vmem:[#allocation2 + $0x89] sm:$0xff] %vm5185, %v5121
      %5204 = vst.msk [vmem:[#allocation2 + $0x91] sm:$0xff] %vm5185, %v5123
      %5205 = vst.msk [vmem:[#allocation2 + $0x99] sm:$0xff] %vm5185, %v5125
      %5206 = vst.msk [vmem:[#allocation2 + $0xa1] sm:$0xff] %vm5185, %v5127
      %5207 = vst.msk [vmem:[#allocation2 + $0xa9] sm:$0xff] %vm5185, %v5129
      %5208 = vst.msk [vmem:[#allocation2 + $0xb1] sm:$0xff] %vm5185, %v5131
      %5209 = vst.msk [vmem:[#allocation2 + $0xb9] sm:$0xff] %vm5185, %v5133
      %5210 = vst.msk [vmem:[#allocation2 + $0xc1] sm:$0xff] %vm5185, %v5135
      %5211 = vst.msk [vmem:[#allocation2 + $0xc9] sm:$0xff] %vm5185, %v5137
      %5212 = vst.msk [vmem:[#allocation2 + $0xd1] sm:$0xff] %vm5185, %v5139
      %5213 = vst.msk [vmem:[#allocation2 + $0xd9] sm:$0xff] %vm5185, %v5141
      %5214 = vst.msk [vmem:[#allocation2 + $0xe1] sm:$0xff] %vm5185, %v5143
      %5215 = vst.msk [vmem:[#allocation2 + $0xe9] sm:$0xff] %vm5185, %v5145
      %5216 = vst.msk [vmem:[#allocation2 + $0xf1] sm:$0xff] %vm5185, %v5147
      %vm5217 = vcmask 129088
      %5218 = vst.msk [vmem:[#allocation2 + $0xf9] sm:$0x7f] %vm5217, %v5149
      %v5219 = vld [vmem:[#allocation2] sm:$0xff]
      %v5220 = vld [vmem:[#allocation2 + $0x8] sm:$0xff]
      %v5221 = vld [vmem:[#allocation2 + $0x10] sm:$0xff]
      %v5222 = vld [vmem:[#allocation2 + $0x18] sm:$0xff]
      %v5223 = vld [vmem:[#allocation2 + $0x20] sm:$0xff]
      %v5224 = vld [vmem:[#allocation2 + $0x28] sm:$0xff]
      %v5225 = vld [vmem:[#allocation2 + $0x30] sm:$0xff]
      %v5226 = vld [vmem:[#allocation2 + $0x38] sm:$0xff]
      %v5227 = vld [vmem:[#allocation2 + $0x40] sm:$0xff]
      %v5228 = vld [vmem:[#allocation2 + $0x48] sm:$0xff]
      %v5229 = vld [vmem:[#allocation2 + $0x50] sm:$0xff]
      %v5230 = vld [vmem:[#allocation2 + $0x58] sm:$0xff]
      %v5231 = vld [vmem:[#allocation2 + $0x60] sm:$0xff]
      %v5232 = vld [vmem:[#allocation2 + $0x68] sm:$0xff]
      %v5233 = vld [vmem:[#allocation2 + $0x70] sm:$0xff]
      %v5234 = vld [vmem:[#allocation2 + $0x78] sm:$0xff]
      %v5235 = vld [vmem:[#allocation2 + $0x80] sm:$0xff]
      %v5236 = vld [vmem:[#allocation2 + $0x88] sm:$0xff]
      %v5237 = vld [vmem:[#allocation2 + $0x90] sm:$0xff]
      %v5238 = vld [vmem:[#allocation2 + $0x98] sm:$0xff]
      %v5239 = vld [vmem:[#allocation2 + $0xa0] sm:$0xff]
      %v5240 = vld [vmem:[#allocation2 + $0xa8] sm:$0xff]
      %v5241 = vld [vmem:[#allocation2 + $0xb0] sm:$0xff]
      %v5242 = vld [vmem:[#allocation2 + $0xb8] sm:$0xff]
      %v5243 = vld [vmem:[#allocation2 + $0xc0] sm:$0xff]
      %v5244 = vld [vmem:[#allocation2 + $0xc8] sm:$0xff]
      %v5245 = vld [vmem:[#allocation2 + $0xd0] sm:$0xff]
      %v5246 = vld [vmem:[#allocation2 + $0xd8] sm:$0xff]
      %v5247 = vld [vmem:[#allocation2 + $0xe0] sm:$0xff]
      %v5248 = vld [vmem:[#allocation2 + $0xe8] sm:$0xff]
      %v5249 = vld [vmem:[#allocation2 + $0xf0] sm:$0xff]
      %v5250 = vld [vmem:[#allocation2 + $0xf8] sm:$0xff]
      %v5251 = vld [vmem:[%s8] sm:$0x1]
      %v5253 = vlaneseq
      %v5254 = vshrl.u32 %v5253, 7
      %v5255 = vsub.s32 0, %v5254
      %v5256 = vrot.slane %v5251, %v5255
      %v5258 = vmul.f32 %v5219, %v5256
      %v5259 = vmul.f32 %v5220, %v5256
      %v5260 = vmul.f32 %v5221, %v5256
      %v5261 = vmul.f32 %v5222, %v5256
      %v5262 = vmul.f32 %v5223, %v5256
      %v5263 = vmul.f32 %v5224, %v5256
      %v5264 = vmul.f32 %v5225, %v5256
      %v5265 = vmul.f32 %v5226, %v5256
      %v5266 = vmul.f32 %v5227, %v5256
      %v5267 = vmul.f32 %v5228, %v5256
      %v5268 = vmul.f32 %v5229, %v5256
      %v5269 = vmul.f32 %v5230, %v5256
      %v5270 = vmul.f32 %v5231, %v5256
      %v5271 = vmul.f32 %v5232, %v5256
      %v5272 = vmul.f32 %v5233, %v5256
      %v5273 = vmul.f32 %v5234, %v5256
      %v5274 = vmul.f32 %v5235, %v5256
      %v5275 = vmul.f32 %v5236, %v5256
      %v5276 = vmul.f32 %v5237, %v5256
      %v5277 = vmul.f32 %v5238, %v5256
      %v5278 = vmul.f32 %v5239, %v5256
      %v5279 = vmul.f32 %v5240, %v5256
      %v5280 = vmul.f32 %v5241, %v5256
      %v5281 = vmul.f32 %v5242, %v5256
      %v5282 = vmul.f32 %v5243, %v5256
      %v5283 = vmul.f32 %v5244, %v5256
      %v5284 = vmul.f32 %v5245, %v5256
      %v5285 = vmul.f32 %v5246, %v5256
      %v5286 = vmul.f32 %v5247, %v5256
      %v5287 = vmul.f32 %v5248, %v5256
      %v5288 = vmul.f32 %v5249, %v5256
      %v5289 = vmul.f32 %v5250, %v5256
      %v5290 = vld [vmem:[%s9] sm:$0x1]
      %v5292 = vlaneseq
      %v5293 = vshrl.u32 %v5292, 7
      %v5294 = vsub.s32 0, %v5293
      %v5295 = vrot.slane %v5290, %v5294
      %v5297 = vadd.f32 %v5258, %v5295
      %v5298 = vadd.f32 %v5259, %v5295
      %v5299 = vadd.f32 %v5260, %v5295
      %v5300 = vadd.f32 %v5261, %v5295
      %v5301 = vadd.f32 %v5262, %v5295
      %v5302 = vadd.f32 %v5263, %v5295
      %v5303 = vadd.f32 %v5264, %v5295
      %v5304 = vadd.f32 %v5265, %v5295
      %v5305 = vadd.f32 %v5266, %v5295
      %v5306 = vadd.f32 %v5267, %v5295
      %v5307 = vadd.f32 %v5268, %v5295
      %v5308 = vadd.f32 %v5269, %v5295
      %v5309 = vadd.f32 %v5270, %v5295
      %v5310 = vadd.f32 %v5271, %v5295
      %v5311 = vadd.f32 %v5272, %v5295
      %v5312 = vadd.f32 %v5273, %v5295
      %v5313 = vadd.f32 %v5274, %v5295
      %v5314 = vadd.f32 %v5275, %v5295
      %v5315 = vadd.f32 %v5276, %v5295
      %v5316 = vadd.f32 %v5277, %v5295
      %v5317 = vadd.f32 %v5278, %v5295
      %v5318 = vadd.f32 %v5279, %v5295
      %v5319 = vadd.f32 %v5280, %v5295
      %v5320 = vadd.f32 %v5281, %v5295
      %v5321 = vadd.f32 %v5282, %v5295
      %v5322 = vadd.f32 %v5283, %v5295
      %v5323 = vadd.f32 %v5284, %v5295
      %v5324 = vadd.f32 %v5285, %v5295
      %v5325 = vadd.f32 %v5286, %v5295
      %v5326 = vadd.f32 %v5287, %v5295
      %v5327 = vadd.f32 %v5288, %v5295
      %v5328 = vadd.f32 %v5289, %v5295
      %v5329 = vmax.f32 %v5297, 0.0
      %v5330 = vmax.f32 %v5298, 0.0
      %v5331 = vmax.f32 %v5299, 0.0
      %v5332 = vmax.f32 %v5300, 0.0
      %v5333 = vmax.f32 %v5301, 0.0
      %v5334 = vmax.f32 %v5302, 0.0
      %v5335 = vmax.f32 %v5303, 0.0
      %v5336 = vmax.f32 %v5304, 0.0
      %v5337 = vmax.f32 %v5305, 0.0
      %v5338 = vmax.f32 %v5306, 0.0
      %v5339 = vmax.f32 %v5307, 0.0
      %v5340 = vmax.f32 %v5308, 0.0
      %v5341 = vmax.f32 %v5309, 0.0
      %v5342 = vmax.f32 %v5310, 0.0
      %v5343 = vmax.f32 %v5311, 0.0
      %v5344 = vmax.f32 %v5312, 0.0
      %v5345 = vmax.f32 %v5313, 0.0
      %v5346 = vmax.f32 %v5314, 0.0
      %v5347 = vmax.f32 %v5315, 0.0
      %v5348 = vmax.f32 %v5316, 0.0
      %v5349 = vmax.f32 %v5317, 0.0
      %v5350 = vmax.f32 %v5318, 0.0
      %v5351 = vmax.f32 %v5319, 0.0
      %v5352 = vmax.f32 %v5320, 0.0
      %v5353 = vmax.f32 %v5321, 0.0
      %v5354 = vmax.f32 %v5322, 0.0
      %v5355 = vmax.f32 %v5323, 0.0
      %v5356 = vmax.f32 %v5324, 0.0
      %v5357 = vmax.f32 %v5325, 0.0
      %v5358 = vmax.f32 %v5326, 0.0
      %v5359 = vmax.f32 %v5327, 0.0
      %v5360 = vmax.f32 %v5328, 0.0
      %v5361 = vpack.c.bf16 %v5330, %v5329
      %v5362 = vpack.c.bf16 %v5332, %v5331
      %v5363 = vpack.c.bf16 %v5334, %v5333
      %v5364 = vpack.c.bf16 %v5336, %v5335
      %v5365 = vpack.c.bf16 %v5338, %v5337
      %v5366 = vpack.c.bf16 %v5340, %v5339
      %v5367 = vpack.c.bf16 %v5342, %v5341
      %v5368 = vpack.c.bf16 %v5344, %v5343
      %v5369 = vpack.c.bf16 %v5346, %v5345
      %v5370 = vpack.c.bf16 %v5348, %v5347
      %v5371 = vpack.c.bf16 %v5350, %v5349
      %v5372 = vpack.c.bf16 %v5352, %v5351
      %v5373 = vpack.c.bf16 %v5354, %v5353
      %v5374 = vpack.c.bf16 %v5356, %v5355
      %v5375 = vpack.c.bf16 %v5358, %v5357
      %v5376 = vpack.c.bf16 %v5360, %v5359
      %v5377 = vld [vmem:[%s10] sm:$0xf]
      %v5378 = vld [vmem:[%s10 + $0x4] sm:$0xf]
      %v5381 = vunpack.c.l.b16 %v5377
      %v5382 = vunpack.c.l.b16 %v5378
      %v5383 = vpack.c.b16 %v5382, %v5381
      %vm5385 = vcmask 130048
      %v5387 = vsel %vm5385, %v5361, 0
      %v5390 = vsel %vm5385, %v5362, 0
      %v5393 = vsel %vm5385, %v5363, 0
      %v5396 = vsel %vm5385, %v5364, 0
      %v5399 = vsel %vm5385, %v5365, 0
      %v5402 = vsel %vm5385, %v5366, 0
      %v5405 = vsel %vm5385, %v5367, 0
      %v5408 = vsel %vm5385, %v5368, 0
      %v5411 = vsel %vm5385, %v5369, 0
      %v5414 = vsel %vm5385, %v5370, 0
      %v5417 = vsel %vm5385, %v5371, 0
      %v5420 = vsel %vm5385, %v5372, 0
      %v5423 = vsel %vm5385, %v5373, 0
      %v5426 = vsel %vm5385, %v5374, 0
      %v5429 = vsel %vm5385, %v5375, 0
      %v5432 = vsel %vm5385, %v5376, 0
      %5434 = vmatprep.subr.bf16.mxu0 0
      %5435 = vmatpush1.bf16.msra.mxu0 %v5383
      %5436 = vmatprep.subr.bf16.mxu0 0
      %5437 = vmatpush1.bf16.msra.mxu0 0
      %5438 = vmatprep.subr.bf16.mxu0 0
      %5439 = vmatpush1.bf16.msra.mxu0 0
      %5440 = vmatprep.subr.bf16.mxu0 0
      %5441 = vmatpush1.bf16.msra.mxu0 0
      %5442 = vmatprep.subr.bf16.mxu0 0
      %5443 = vmatpush1.bf16.msra.mxu0 0
      %5444 = vmatprep.subr.bf16.mxu0 0
      %5445 = vmatpush1.bf16.msra.mxu0 0
      %5446 = vmatprep.subr.bf16.mxu0 0
      %5447 = vmatpush1.bf16.msra.mxu0 0
      %5448 = vmatprep.subr.bf16.mxu0 0
      %5449 = vmatpush1.bf16.msra.mxu0 0
      %5450 = vmatprep.subr.bf16.mxu0 0
      %5451 = vmatpush1.bf16.msra.mxu0 0
      %5452 = vmatprep.subr.bf16.mxu0 0
      %5453 = vmatpush1.bf16.msra.mxu0 0
      %5454 = vmatprep.subr.bf16.mxu0 0
      %5455 = vmatpush1.bf16.msra.mxu0 0
      %5456 = vmatprep.subr.bf16.mxu0 0
      %5457 = vmatpush1.bf16.msra.mxu0 0
      %5458 = vmatprep.subr.bf16.mxu0 0
      %5459 = vmatpush1.bf16.msra.mxu0 0
      %5460 = vmatprep.subr.bf16.mxu0 0
      %5461 = vmatpush1.bf16.msra.mxu0 0
      %5462 = vmatprep.subr.bf16.mxu0 0
      %5463 = vmatpush1.bf16.msra.mxu0 0
      %5464 = vmatprep.subr.bf16.mxu0 0
      %5465 = vmatpush1.bf16.msra.mxu0 0
      %5466 = vmatprep.mubr.bf16.mxu0 0
      %5467 = vmatmul.mubr.bf16.gmra.mrb[0].mxu0 %v5387
      %v5468 = vpop.f32.mrb[0].mxu0
      %v5469 = vadd.f32 0.0, %v5468
      %v5470 = vpop.f32.mrb[0].mxu0
      %v5471 = vpop.f32.mrb[0].mxu0
      %v5472 = vadd.f32 0.0, %v5471
      %v5473 = vpop.f32.mrb[0].mxu0
      %5474 = vmatprep.mubr.bf16.mxu0 0
      %5475 = vmatmul.mubr.bf16.gmra.mrb[0].mxu0 %v5390
      %v5476 = vpop.f32.mrb[0].mxu0
      %v5477 = vadd.f32 0.0, %v5476
      %v5478 = vpop.f32.mrb[0].mxu0
      %v5479 = vpop.f32.mrb[0].mxu0
      %v5480 = vadd.f32 0.0, %v5479
      %v5481 = vpop.f32.mrb[0].mxu0
      %5482 = vmatprep.mubr.bf16.mxu0 0
      %5483 = vmatmul.mubr.bf16.gmra.mrb[0].mxu0 %v5393
      %v5484 = vpop.f32.mrb[0].mxu0
      %v5485 = vadd.f32 0.0, %v5484
      %v5486 = vpop.f32.mrb[0].mxu0
      %v5487 = vpop.f32.mrb[0].mxu0
      %v5488 = vadd.f32 0.0, %v5487
      %v5489 = vpop.f32.mrb[0].mxu0
      %5490 = vmatprep.mubr.bf16.mxu0 0
      %5491 = vmatmul.mubr.bf16.gmra.mrb[0].mxu0 %v5396
      %v5492 = vpop.f32.mrb[0].mxu0
      %v5493 = vadd.f32 0.0, %v5492
      %v5494 = vpop.f32.mrb[0].mxu0
      %v5495 = vpop.f32.mrb[0].mxu0
      %v5496 = vadd.f32 0.0, %v5495
      %v5497 = vpop.f32.mrb[0].mxu0
      %5498 = vmatprep.mubr.bf16.mxu0 0
      %5499 = vmatmul.mubr.bf16.gmra.mrb[0].mxu0 %v5399
      %v5500 = vpop.f32.mrb[0].mxu0
      %v5501 = vadd.f32 0.0, %v5500
      %v5502 = vpop.f32.mrb[0].mxu0
      %v5503 = vpop.f32.mrb[0].mxu0
      %v5504 = vadd.f32 0.0, %v5503
      %v5505 = vpop.f32.mrb[0].mxu0
      %5506 = vmatprep.mubr.bf16.mxu0 0
      %5507 = vmatmul.mubr.bf16.gmra.mrb[0].mxu0 %v5402
      %v5508 = vpop.f32.mrb[0].mxu0
      %v5509 = vadd.f32 0.0, %v5508
      %v5510 = vpop.f32.mrb[0].mxu0
      %v5511 = vpop.f32.mrb[0].mxu0
      %v5512 = vadd.f32 0.0, %v5511
      %v5513 = vpop.f32.mrb[0].mxu0
      %5514 = vmatprep.mubr.bf16.mxu0 0
      %5515 = vmatmul.mubr.bf16.gmra.mrb[0].mxu0 %v5405
      %v5516 = vpop.f32.mrb[0].mxu0
      %v5517 = vadd.f32 0.0, %v5516
      %v5518 = vpop.f32.mrb[0].mxu0
      %v5519 = vpop.f32.mrb[0].mxu0
      %v5520 = vadd.f32 0.0, %v5519
      %v5521 = vpop.f32.mrb[0].mxu0
      %5522 = vmatprep.mubr.bf16.mxu0 0
      %5523 = vmatmul.mubr.bf16.gmra.mrb[0].mxu0 %v5408
      %v5524 = vpop.f32.mrb[0].mxu0
      %v5525 = vadd.f32 0.0, %v5524
      %v5526 = vpop.f32.mrb[0].mxu0
      %v5527 = vpop.f32.mrb[0].mxu0
      %v5528 = vadd.f32 0.0, %v5527
      %v5529 = vpop.f32.mrb[0].mxu0
      %5530 = vmatprep.mubr.bf16.mxu0 0
      %5531 = vmatmul.mubr.bf16.gmra.mrb[0].mxu0 %v5411
      %v5532 = vpop.f32.mrb[0].mxu0
      %v5533 = vadd.f32 0.0, %v5532
      %v5534 = vpop.f32.mrb[0].mxu0
      %v5535 = vpop.f32.mrb[0].mxu0
      %v5536 = vadd.f32 0.0, %v5535
      %v5537 = vpop.f32.mrb[0].mxu0
      %5538 = vmatprep.mubr.bf16.mxu0 0
      %5539 = vmatmul.mubr.bf16.gmra.mrb[0].mxu0 %v5414
      %v5540 = vpop.f32.mrb[0].mxu0
      %v5541 = vadd.f32 0.0, %v5540
      %v5542 = vpop.f32.mrb[0].mxu0
      %v5543 = vpop.f32.mrb[0].mxu0
      %v5544 = vadd.f32 0.0, %v5543
      %v5545 = vpop.f32.mrb[0].mxu0
      %5546 = vmatprep.mubr.bf16.mxu0 0
      %5547 = vmatmul.mubr.bf16.gmra.mrb[0].mxu0 %v5417
      %v5548 = vpop.f32.mrb[0].mxu0
      %v5549 = vadd.f32 0.0, %v5548
      %v5550 = vpop.f32.mrb[0].mxu0
      %v5551 = vpop.f32.mrb[0].mxu0
      %v5552 = vadd.f32 0.0, %v5551
      %v5553 = vpop.f32.mrb[0].mxu0
      %5554 = vmatprep.mubr.bf16.mxu0 0
      %5555 = vmatmul.mubr.bf16.gmra.mrb[0].mxu0 %v5420
      %v5556 = vpop.f32.mrb[0].mxu0
      %v5557 = vadd.f32 0.0, %v5556
      %v5558 = vpop.f32.mrb[0].mxu0
      %v5559 = vpop.f32.mrb[0].mxu0
      %v5560 = vadd.f32 0.0, %v5559
      %v5561 = vpop.f32.mrb[0].mxu0
      %5562 = vmatprep.mubr.bf16.mxu0 0
      %5563 = vmatmul.mubr.bf16.gmra.mrb[0].mxu0 %v5423
      %v5564 = vpop.f32.mrb[0].mxu0
      %v5565 = vadd.f32 0.0, %v5564
      %v5566 = vpop.f32.mrb[0].mxu0
      %v5567 = vpop.f32.mrb[0].mxu0
      %v5568 = vadd.f32 0.0, %v5567
      %v5569 = vpop.f32.mrb[0].mxu0
      %5570 = vmatprep.mubr.bf16.mxu0 0
      %5571 = vmatmul.mubr.bf16.gmra.mrb[0].mxu0 %v5426
      %v5572 = vpop.f32.mrb[0].mxu0
      %v5573 = vadd.f32 0.0, %v5572
      %v5574 = vpop.f32.mrb[0].mxu0
      %v5575 = vpop.f32.mrb[0].mxu0
      %v5576 = vadd.f32 0.0, %v5575
      %v5577 = vpop.f32.mrb[0].mxu0
      %5578 = vmatprep.mubr.bf16.mxu0 0
      %5579 = vmatmul.mubr.bf16.gmra.mrb[0].mxu0 %v5429
      %v5580 = vpop.f32.mrb[0].mxu0
      %v5581 = vadd.f32 0.0, %v5580
      %v5582 = vpop.f32.mrb[0].mxu0
      %v5583 = vpop.f32.mrb[0].mxu0
      %v5584 = vadd.f32 0.0, %v5583
      %v5585 = vpop.f32.mrb[0].mxu0
      %5586 = vmatprep.mubr.bf16.mxu0 0
      %5587 = vmatmul.mubr.bf16.gmra.mrb[0].mxu0 %v5432
      %v5588 = vpop.f32.mrb[0].mxu0
      %v5589 = vadd.f32 0.0, %v5588
      %v5590 = vpop.f32.mrb[0].mxu0
      %v5591 = vpop.f32.mrb[0].mxu0
      %v5592 = vadd.f32 0.0, %v5591
      %v5593 = vpop.f32.mrb[0].mxu0
      %5594 = vdwg.mxu0
      %v5595 = vld [vmem:[%s11] sm:$0x1]
      %v5597 = vlaneseq
      %v5598 = vshrl.u32 %v5597, 7
      %v5599 = vsub.s32 0, %v5598
      %v5600 = vrot.slane %v5595, %v5599
      %v5602 = vmul.f32 %v5469, %v5600
      %v5603 = vmul.f32 %v5472, %v5600
      %v5604 = vmul.f32 %v5477, %v5600
      %v5605 = vmul.f32 %v5480, %v5600
      %v5606 = vmul.f32 %v5485, %v5600
      %v5607 = vmul.f32 %v5488, %v5600
      %v5608 = vmul.f32 %v5493, %v5600
      %v5609 = vmul.f32 %v5496, %v5600
      %v5610 = vmul.f32 %v5501, %v5600
      %v5611 = vmul.f32 %v5504, %v5600
      %v5612 = vmul.f32 %v5509, %v5600
      %v5613 = vmul.f32 %v5512, %v5600
      %v5614 = vmul.f32 %v5517, %v5600
      %v5615 = vmul.f32 %v5520, %v5600
      %v5616 = vmul.f32 %v5525, %v5600
      %v5617 = vmul.f32 %v5528, %v5600
      %v5618 = vmul.f32 %v5533, %v5600
      %v5619 = vmul.f32 %v5536, %v5600
      %v5620 = vmul.f32 %v5541, %v5600
      %v5621 = vmul.f32 %v5544, %v5600
      %v5622 = vmul.f32 %v5549, %v5600
      %v5623 = vmul.f32 %v5552, %v5600
      %v5624 = vmul.f32 %v5557, %v5600
      %v5625 = vmul.f32 %v5560, %v5600
      %v5626 = vmul.f32 %v5565, %v5600
      %v5627 = vmul.f32 %v5568, %v5600
      %v5628 = vmul.f32 %v5573, %v5600
      %v5629 = vmul.f32 %v5576, %v5600
      %v5630 = vmul.f32 %v5581, %v5600
      %v5631 = vmul.f32 %v5584, %v5600
      %v5632 = vmul.f32 %v5589, %v5600
      %v5633 = vmul.f32 %v5592, %v5600
      %v5634 = vld [vmem:[%s12] sm:$0x1]
      %v5636 = vlaneseq
      %v5637 = vshrl.u32 %v5636, 7
      %v5638 = vsub.s32 0, %v5637
      %v5639 = vrot.slane %v5634, %v5638
      %v5641 = vadd.f32 %v5602, %v5639
      %v5642 = vadd.f32 %v5603, %v5639
      %v5643 = vadd.f32 %v5604, %v5639
      %v5644 = vadd.f32 %v5605, %v5639
      %v5645 = vadd.f32 %v5606, %v5639
      %v5646 = vadd.f32 %v5607, %v5639
      %v5647 = vadd.f32 %v5608, %v5639
      %v5648 = vadd.f32 %v5609, %v5639
      %v5649 = vadd.f32 %v5610, %v5639
      %v5650 = vadd.f32 %v5611, %v5639
      %v5651 = vadd.f32 %v5612, %v5639
      %v5652 = vadd.f32 %v5613, %v5639
      %v5653 = vadd.f32 %v5614, %v5639
      %v5654 = vadd.f32 %v5615, %v5639
      %v5655 = vadd.f32 %v5616, %v5639
      %v5656 = vadd.f32 %v5617, %v5639
      %v5657 = vadd.f32 %v5618, %v5639
      %v5658 = vadd.f32 %v5619, %v5639
      %v5659 = vadd.f32 %v5620, %v5639
      %v5660 = vadd.f32 %v5621, %v5639
      %v5661 = vadd.f32 %v5622, %v5639
      %v5662 = vadd.f32 %v5623, %v5639
      %v5663 = vadd.f32 %v5624, %v5639
      %v5664 = vadd.f32 %v5625, %v5639
      %v5665 = vadd.f32 %v5626, %v5639
      %v5666 = vadd.f32 %v5627, %v5639
      %v5667 = vadd.f32 %v5628, %v5639
      %v5668 = vadd.f32 %v5629, %v5639
      %v5669 = vadd.f32 %v5630, %v5639
      %v5670 = vadd.f32 %v5631, %v5639
      %v5671 = vadd.f32 %v5632, %v5639
      %v5672 = vadd.f32 %v5633, %v5639
      %v5673 = vmax.f32 %v5641, 0.0
      %v5674 = vmax.f32 %v5642, 0.0
      %v5675 = vmax.f32 %v5643, 0.0
      %v5676 = vmax.f32 %v5644, 0.0
      %v5677 = vmax.f32 %v5645, 0.0
      %v5678 = vmax.f32 %v5646, 0.0
      %v5679 = vmax.f32 %v5647, 0.0
      %v5680 = vmax.f32 %v5648, 0.0
      %v5681 = vmax.f32 %v5649, 0.0
      %v5682 = vmax.f32 %v5650, 0.0
      %v5683 = vmax.f32 %v5651, 0.0
      %v5684 = vmax.f32 %v5652, 0.0
      %v5685 = vmax.f32 %v5653, 0.0
      %v5686 = vmax.f32 %v5654, 0.0
      %v5687 = vmax.f32 %v5655, 0.0
      %v5688 = vmax.f32 %v5656, 0.0
      %v5689 = vmax.f32 %v5657, 0.0
      %v5690 = vmax.f32 %v5658, 0.0
      %v5691 = vmax.f32 %v5659, 0.0
      %v5692 = vmax.f32 %v5660, 0.0
      %v5693 = vmax.f32 %v5661, 0.0
      %v5694 = vmax.f32 %v5662, 0.0
      %v5695 = vmax.f32 %v5663, 0.0
      %v5696 = vmax.f32 %v5664, 0.0
      %v5697 = vmax.f32 %v5665, 0.0
      %v5698 = vmax.f32 %v5666, 0.0
      %v5699 = vmax.f32 %v5667, 0.0
      %v5700 = vmax.f32 %v5668, 0.0
      %v5701 = vmax.f32 %v5669, 0.0
      %v5702 = vmax.f32 %v5670, 0.0
      %v5703 = vmax.f32 %v5671, 0.0
      %v5704 = vmax.f32 %v5672, 0.0
      %v5705 = vpack.c.bf16 %v5674, %v5673
      %v5706 = vpack.c.bf16 %v5676, %v5675
      %v5707 = vpack.c.bf16 %v5678, %v5677
      %v5708 = vpack.c.bf16 %v5680, %v5679
      %v5709 = vpack.c.bf16 %v5682, %v5681
      %v5710 = vpack.c.bf16 %v5684, %v5683
      %v5711 = vpack.c.bf16 %v5686, %v5685
      %v5712 = vpack.c.bf16 %v5688, %v5687
      %v5713 = vpack.c.bf16 %v5690, %v5689
      %v5714 = vpack.c.bf16 %v5692, %v5691
      %v5715 = vpack.c.bf16 %v5694, %v5693
      %v5716 = vpack.c.bf16 %v5696, %v5695
      %v5717 = vpack.c.bf16 %v5698, %v5697
      %v5718 = vpack.c.bf16 %v5700, %v5699
      %v5719 = vpack.c.bf16 %v5702, %v5701
      %v5720 = vpack.c.bf16 %v5704, %v5703
      %v5721 = vld [vmem:[%s13] sm:$0xf]
      %v5722 = vld [vmem:[%s13 + $0x4] sm:$0xf]
      %v5723 = vld [vmem:[%s13 + $0x8] sm:$0xf]
      %v5724 = vld [vmem:[%s13 + $0xc] sm:$0xf]
      %v5729 = vunpack.c.l.b16 %v5721
      %v5730 = vunpack.c.l.b16 %v5722
      %v5731 = vunpack.c.l.b16 %v5723
      %v5732 = vunpack.c.l.b16 %v5724
      %v5733 = vpack.c.b16 %v5730, %v5729
      %v5734 = vpack.c.b16 %v5732, %v5731
      %v5738 = vsel %vm1242, %v5705, 0
      %v5741 = vsel %vm1242, %v5706, 0
      %v5744 = vsel %vm1242, %v5707, 0
      %v5747 = vsel %vm1242, %v5708, 0
      %v5750 = vsel %vm1242, %v5709, 0
      %v5753 = vsel %vm1242, %v5710, 0
      %v5756 = vsel %vm1242, %v5711, 0
      %v5759 = vsel %vm1242, %v5712, 0
      %v5762 = vsel %vm1242, %v5713, 0
      %v5765 = vsel %vm1242, %v5714, 0
      %v5768 = vsel %vm1242, %v5715, 0
      %v5771 = vsel %vm1242, %v5716, 0
      %v5774 = vsel %vm1242, %v5717, 0
      %v5777 = vsel %vm1242, %v5718, 0
      %v5780 = vsel %vm1242, %v5719, 0
      %v5783 = vsel %vm1242, %v5720, 0
      %5785 = vmatprep.subr.bf16.mxu0 0
      %5786 = vmatpush1.bf16.msra.mxu0 %v5733
      %5787 = vmatprep.subr.bf16.mxu0 0
      %5788 = vmatpush1.bf16.msra.mxu0 %v5734
      %5789 = vmatprep.subr.bf16.mxu0 0
      %5790 = vmatpush1.bf16.msra.mxu0 0
      %5791 = vmatprep.subr.bf16.mxu0 0
      %5792 = vmatpush1.bf16.msra.mxu0 0
      %5793 = vmatprep.subr.bf16.mxu0 0
      %5794 = vmatpush1.bf16.msra.mxu0 0
      %5795 = vmatprep.subr.bf16.mxu0 0
      %5796 = vmatpush1.bf16.msra.mxu0 0
      %5797 = vmatprep.subr.bf16.mxu0 0
      %5798 = vmatpush1.bf16.msra.mxu0 0
      %5799 = vmatprep.subr.bf16.mxu0 0
      %5800 = vmatpush1.bf16.msra.mxu0 0
      %5801 = vmatprep.subr.bf16.mxu0 0
      %5802 = vmatpush1.bf16.msra.mxu0 0
      %5803 = vmatprep.subr.bf16.mxu0 0
      %5804 = vmatpush1.bf16.msra.mxu0 0
      %5805 = vmatprep.subr.bf16.mxu0 0
      %5806 = vmatpush1.bf16.msra.mxu0 0
      %5807 = vmatprep.subr.bf16.mxu0 0
      %5808 = vmatpush1.bf16.msra.mxu0 0
      %5809 = vmatprep.subr.bf16.mxu0 0
      %5810 = vmatpush1.bf16.msra.mxu0 0
      %5811 = vmatprep.subr.bf16.mxu0 0
      %5812 = vmatpush1.bf16.msra.mxu0 0
      %5813 = vmatprep.subr.bf16.mxu0 0
      %5814 = vmatpush1.bf16.msra.mxu0 0
      %5815 = vmatprep.subr.bf16.mxu0 0
      %5816 = vmatpush1.bf16.msra.mxu0 0
      %5817 = vmatprep.mubr.bf16.mxu0 0
      %5818 = vmatmul.mubr.bf16.gmra.mrb[0].mxu0 %v5738
      %v5819 = vpop.f32.mrb[0].mxu0
      %v5820 = vadd.f32 0.0, %v5819
      %v5821 = vpop.f32.mrb[0].mxu0
      %v5822 = vpop.f32.mrb[0].mxu0
      %v5823 = vadd.f32 0.0, %v5822
      %v5824 = vpop.f32.mrb[0].mxu0
      %5825 = vmatprep.mubr.bf16.mxu0 0
      %5826 = vmatmul.mubr.bf16.gmra.mrb[0].mxu0 %v5741
      %v5827 = vpop.f32.mrb[0].mxu0
      %v5828 = vadd.f32 0.0, %v5827
      %v5829 = vpop.f32.mrb[0].mxu0
      %v5830 = vpop.f32.mrb[0].mxu0
      %v5831 = vadd.f32 0.0, %v5830
      %v5832 = vpop.f32.mrb[0].mxu0
      %5833 = vmatprep.mubr.bf16.mxu0 0
      %5834 = vmatmul.mubr.bf16.gmra.mrb[0].mxu0 %v5744
      %v5835 = vpop.f32.mrb[0].mxu0
      %v5836 = vadd.f32 0.0, %v5835
      %v5837 = vpop.f32.mrb[0].mxu0
      %v5838 = vpop.f32.mrb[0].mxu0
      %v5839 = vadd.f32 0.0, %v5838
      %v5840 = vpop.f32.mrb[0].mxu0
      %5841 = vmatprep.mubr.bf16.mxu0 0
      %5842 = vmatmul.mubr.bf16.gmra.mrb[0].mxu0 %v5747
      %v5843 = vpop.f32.mrb[0].mxu0
      %v5844 = vadd.f32 0.0, %v5843
      %v5845 = vpop.f32.mrb[0].mxu0
      %v5846 = vpop.f32.mrb[0].mxu0
      %v5847 = vadd.f32 0.0, %v5846
      %v5848 = vpop.f32.mrb[0].mxu0
      %5849 = vmatprep.mubr.bf16.mxu0 0
      %5850 = vmatmul.mubr.bf16.gmra.mrb[0].mxu0 %v5750
      %v5851 = vpop.f32.mrb[0].mxu0
      %v5852 = vadd.f32 0.0, %v5851
      %v5853 = vpop.f32.mrb[0].mxu0
      %v5854 = vpop.f32.mrb[0].mxu0
      %v5855 = vadd.f32 0.0, %v5854
      %v5856 = vpop.f32.mrb[0].mxu0
      %5857 = vmatprep.mubr.bf16.mxu0 0
      %5858 = vmatmul.mubr.bf16.gmra.mrb[0].mxu0 %v5753
      %v5859 = vpop.f32.mrb[0].mxu0
      %v5860 = vadd.f32 0.0, %v5859
      %v5861 = vpop.f32.mrb[0].mxu0
      %v5862 = vpop.f32.mrb[0].mxu0
      %v5863 = vadd.f32 0.0, %v5862
      %v5864 = vpop.f32.mrb[0].mxu0
      %5865 = vmatprep.mubr.bf16.mxu0 0
      %5866 = vmatmul.mubr.bf16.gmra.mrb[0].mxu0 %v5756
      %v5867 = vpop.f32.mrb[0].mxu0
      %v5868 = vadd.f32 0.0, %v5867
      %v5869 = vpop.f32.mrb[0].mxu0
      %v5870 = vpop.f32.mrb[0].mxu0
      %v5871 = vadd.f32 0.0, %v5870
      %v5872 = vpop.f32.mrb[0].mxu0
      %5873 = vmatprep.mubr.bf16.mxu0 0
      %5874 = vmatmul.mubr.bf16.gmra.mrb[0].mxu0 %v5759
      %v5875 = vpop.f32.mrb[0].mxu0
      %v5876 = vadd.f32 0.0, %v5875
      %v5877 = vpop.f32.mrb[0].mxu0
      %v5878 = vpop.f32.mrb[0].mxu0
      %v5879 = vadd.f32 0.0, %v5878
      %v5880 = vpop.f32.mrb[0].mxu0
      %5881 = vmatprep.mubr.bf16.mxu0 0
      %5882 = vmatmul.mubr.bf16.gmra.mrb[0].mxu0 %v5762
      %v5883 = vpop.f32.mrb[0].mxu0
      %v5884 = vadd.f32 0.0, %v5883
      %v5885 = vpop.f32.mrb[0].mxu0
      %v5886 = vpop.f32.mrb[0].mxu0
      %v5887 = vadd.f32 0.0, %v5886
      %v5888 = vpop.f32.mrb[0].mxu0
      %5889 = vmatprep.mubr.bf16.mxu0 0
      %5890 = vmatmul.mubr.bf16.gmra.mrb[0].mxu0 %v5765
      %v5891 = vpop.f32.mrb[0].mxu0
      %v5892 = vadd.f32 0.0, %v5891
      %v5893 = vpop.f32.mrb[0].mxu0
      %v5894 = vpop.f32.mrb[0].mxu0
      %v5895 = vadd.f32 0.0, %v5894
      %v5896 = vpop.f32.mrb[0].mxu0
      %5897 = vmatprep.mubr.bf16.mxu0 0
      %5898 = vmatmul.mubr.bf16.gmra.mrb[0].mxu0 %v5768
      %v5899 = vpop.f32.mrb[0].mxu0
      %v5900 = vadd.f32 0.0, %v5899
      %v5901 = vpop.f32.mrb[0].mxu0
      %v5902 = vpop.f32.mrb[0].mxu0
      %v5903 = vadd.f32 0.0, %v5902
      %v5904 = vpop.f32.mrb[0].mxu0
      %5905 = vmatprep.mubr.bf16.mxu0 0
      %5906 = vmatmul.mubr.bf16.gmra.mrb[0].mxu0 %v5771
      %v5907 = vpop.f32.mrb[0].mxu0
      %v5908 = vadd.f32 0.0, %v5907
      %v5909 = vpop.f32.mrb[0].mxu0
      %v5910 = vpop.f32.mrb[0].mxu0
      %v5911 = vadd.f32 0.0, %v5910
      %v5912 = vpop.f32.mrb[0].mxu0
      %5913 = vmatprep.mubr.bf16.mxu0 0
      %5914 = vmatmul.mubr.bf16.gmra.mrb[0].mxu0 %v5774
      %v5915 = vpop.f32.mrb[0].mxu0
      %v5916 = vadd.f32 0.0, %v5915
      %v5917 = vpop.f32.mrb[0].mxu0
      %v5918 = vpop.f32.mrb[0].mxu0
      %v5919 = vadd.f32 0.0, %v5918
      %v5920 = vpop.f32.mrb[0].mxu0
      %5921 = vmatprep.mubr.bf16.mxu0 0
      %5922 = vmatmul.mubr.bf16.gmra.mrb[0].mxu0 %v5777
      %v5923 = vpop.f32.mrb[0].mxu0
      %v5924 = vadd.f32 0.0, %v5923
      %v5925 = vpop.f32.mrb[0].mxu0
      %v5926 = vpop.f32.mrb[0].mxu0
      %v5927 = vadd.f32 0.0, %v5926
      %v5928 = vpop.f32.mrb[0].mxu0
      %5929 = vmatprep.mubr.bf16.mxu0 0
      %5930 = vmatmul.mubr.bf16.gmra.mrb[0].mxu0 %v5780
      %v5931 = vpop.f32.mrb[0].mxu0
      %v5932 = vadd.f32 0.0, %v5931
      %v5933 = vpop.f32.mrb[0].mxu0
      %v5934 = vpop.f32.mrb[0].mxu0
      %v5935 = vadd.f32 0.0, %v5934
      %v5936 = vpop.f32.mrb[0].mxu0
      %5937 = vmatprep.mubr.bf16.mxu0 0
      %5938 = vmatmul.mubr.bf16.gmra.mrb[0].mxu0 %v5783
      %v5939 = vpop.f32.mrb[0].mxu0
      %v5940 = vadd.f32 0.0, %v5939
      %v5941 = vpop.f32.mrb[0].mxu0
      %v5942 = vpop.f32.mrb[0].mxu0
      %v5943 = vadd.f32 0.0, %v5942
      %v5944 = vpop.f32.mrb[0].mxu0
      %5945 = vdwg.mxu0
      %v5946 = vmul.f32 %v5820, %v1587
      %v5947 = vmul.f32 %v5823, %v1589
      %v5948 = vmul.f32 %v5828, %v1591
      %v5949 = vmul.f32 %v5831, %v1593
      %v5950 = vmul.f32 %v5836, %v1595
      %v5951 = vmul.f32 %v5839, %v1597
      %v5952 = vmul.f32 %v5844, %v1599
      %v5953 = vmul.f32 %v5847, %v1601
      %v5954 = vmul.f32 %v5852, %v1603
      %v5955 = vmul.f32 %v5855, %v1605
      %v5956 = vmul.f32 %v5860, %v1607
      %v5957 = vmul.f32 %v5863, %v1609
      %v5958 = vmul.f32 %v5868, %v1611
      %v5959 = vmul.f32 %v5871, %v1613
      %v5960 = vmul.f32 %v5876, %v1615
      %v5961 = vmul.f32 %v5879, %v1617
      %v5962 = vmul.f32 %v5884, %v1619
      %v5963 = vmul.f32 %v5887, %v1621
      %v5964 = vmul.f32 %v5892, %v1623
      %v5965 = vmul.f32 %v5895, %v1625
      %v5966 = vmul.f32 %v5900, %v1627
      %v5967 = vmul.f32 %v5903, %v1629
      %v5968 = vmul.f32 %v5908, %v1631
      %v5969 = vmul.f32 %v5911, %v1633
      %v5970 = vmul.f32 %v5916, %v1635
      %v5971 = vmul.f32 %v5919, %v1637
      %v5972 = vmul.f32 %v5924, %v1639
      %v5973 = vmul.f32 %v5927, %v1641
      %v5974 = vmul.f32 %v5932, %v1643
      %v5975 = vmul.f32 %v5935, %v1642
      %v5976 = vadd.f32 %v5946, 0.0
      %v5977 = vadd.f32 %v5947, 0.0
      %v5978 = vadd.f32 %v5948, 0.0
      %v5979 = vadd.f32 %v5949, 0.0
      %v5980 = vadd.f32 %v5950, 0.0
      %v5981 = vadd.f32 %v5951, 0.0
      %v5982 = vadd.f32 %v5952, 0.0
      %v5983 = vadd.f32 %v5953, 0.0
      %v5984 = vadd.f32 %v5954, 0.0
      %v5985 = vadd.f32 %v5955, 0.0
      %v5986 = vadd.f32 %v5956, 0.0
      %v5987 = vadd.f32 %v5957, 0.0
      %v5988 = vadd.f32 %v5958, 0.0
      %v5989 = vadd.f32 %v5959, 0.0
      %v5990 = vadd.f32 %v5960, 0.0
      %v5991 = vadd.f32 %v5961, 0.0
      %v5992 = vadd.f32 %v5962, 0.0
      %v5993 = vadd.f32 %v5963, 0.0
      %v5994 = vadd.f32 %v5964, 0.0
      %v5995 = vadd.f32 %v5965, 0.0
      %v5996 = vadd.f32 %v5966, 0.0
      %v5997 = vadd.f32 %v5967, 0.0
      %v5998 = vadd.f32 %v5968, 0.0
      %v5999 = vadd.f32 %v5969, 0.0
      %v6000 = vadd.f32 %v5970, 0.0
      %v6001 = vadd.f32 %v5971, 0.0
      %v6002 = vadd.f32 %v5972, 0.0
      %v6003 = vadd.f32 %v5973, 0.0
      %v6004 = vadd.f32 %v5974, 0.0
      %v6005 = vadd.f32 %v5975, 0.0
      %v6006 = vmul.f32 %v5820, %v1753
      %v6007 = vmul.f32 %v5823, %v1757
      %v6008 = vmul.f32 %v5828, %v1761
      %v6009 = vmul.f32 %v5831, %v1765
      %v6010 = vmul.f32 %v5836, %v1769
      %v6011 = vmul.f32 %v5839, %v1773
      %v6012 = vmul.f32 %v5844, %v1777
      %v6013 = vmul.f32 %v5847, %v1781
      %v6014 = vmul.f32 %v5852, %v1785
      %v6015 = vmul.f32 %v5855, %v1789
      %v6016 = vmul.f32 %v5860, %v1793
      %v6017 = vmul.f32 %v5863, %v1797
      %v6018 = vmul.f32 %v5868, %v1801
      %v6019 = vmul.f32 %v5871, %v1805
      %v6020 = vmul.f32 %v5876, %v1809
      %v6021 = vmul.f32 %v5879, %v1813
      %v6022 = vmul.f32 %v5884, %v1817
      %v6023 = vmul.f32 %v5887, %v1821
      %v6024 = vmul.f32 %v5892, %v1825
      %v6025 = vmul.f32 %v5895, %v1829
      %v6026 = vmul.f32 %v5900, %v1833
      %v6027 = vmul.f32 %v5903, %v1837
      %v6028 = vmul.f32 %v5908, %v1841
      %v6029 = vmul.f32 %v5911, %v1845
      %v6030 = vmul.f32 %v5916, %v1849
      %v6031 = vmul.f32 %v5919, %v1853
      %v6032 = vmul.f32 %v5924, %v1857
      %v6033 = vmul.f32 %v5927, %v1861
      %v6034 = vmul.f32 %v5932, %v1865
      %v6035 = vmul.f32 %v5935, %v1869
      %v6066 = vrot.slane %v6006, 1
      %v6067 = vsel %vm1580, %v1936, %v6066
      %v6068 = vrot.slane %v6007, 1
      %v6069 = vsel %vm1580, %v6066, %v6068
      %v6070 = vrot.slane %v6008, 1
      %v6071 = vsel %vm1580, %v6068, %v6070
      %v6072 = vrot.slane %v6009, 1
      %v6073 = vsel %vm1580, %v6070, %v6072
      %v6074 = vrot.slane %v6010, 1
      %v6075 = vsel %vm1580, %v6072, %v6074
      %v6076 = vrot.slane %v6011, 1
      %v6077 = vsel %vm1580, %v6074, %v6076
      %v6078 = vrot.slane %v6012, 1
      %v6079 = vsel %vm1580, %v6076, %v6078
      %v6080 = vrot.slane %v6013, 1
      %v6081 = vsel %vm1580, %v6078, %v6080
      %v6082 = vrot.slane %v6014, 1
      %v6083 = vsel %vm1580, %v6080, %v6082
      %v6084 = vrot.slane %v6015, 1
      %v6085 = vsel %vm1580, %v6082, %v6084
      %v6086 = vrot.slane %v6016, 1
      %v6087 = vsel %vm1580, %v6084, %v6086
      %v6088 = vrot.slane %v6017, 1
      %v6089 = vsel %vm1580, %v6086, %v6088
      %v6090 = vrot.slane %v6018, 1
      %v6091 = vsel %vm1580, %v6088, %v6090
      %v6092 = vrot.slane %v6019, 1
      %v6093 = vsel %vm1580, %v6090, %v6092
      %v6094 = vrot.slane %v6020, 1
      %v6095 = vsel %vm1580, %v6092, %v6094
      %v6096 = vrot.slane %v6021, 1
      %v6097 = vsel %vm1580, %v6094, %v6096
      %v6098 = vrot.slane %v6022, 1
      %v6099 = vsel %vm1580, %v6096, %v6098
      %v6100 = vrot.slane %v6023, 1
      %v6101 = vsel %vm1580, %v6098, %v6100
      %v6102 = vrot.slane %v6024, 1
      %v6103 = vsel %vm1580, %v6100, %v6102
      %v6104 = vrot.slane %v6025, 1
      %v6105 = vsel %vm1580, %v6102, %v6104
      %v6106 = vrot.slane %v6026, 1
      %v6107 = vsel %vm1580, %v6104, %v6106
      %v6108 = vrot.slane %v6027, 1
      %v6109 = vsel %vm1580, %v6106, %v6108
      %v6110 = vrot.slane %v6028, 1
      %v6111 = vsel %vm1580, %v6108, %v6110
      %v6112 = vrot.slane %v6029, 1
      %v6113 = vsel %vm1580, %v6110, %v6112
      %v6114 = vrot.slane %v6030, 1
      %v6115 = vsel %vm1580, %v6112, %v6114
      %v6116 = vrot.slane %v6031, 1
      %v6117 = vsel %vm1580, %v6114, %v6116
      %v6118 = vrot.slane %v6032, 1
      %v6119 = vsel %vm1580, %v6116, %v6118
      %v6120 = vrot.slane %v6033, 1
      %v6121 = vsel %vm1580, %v6118, %v6120
      %v6122 = vrot.slane %v6034, 1
      %v6123 = vsel %vm1580, %v6120, %v6122
      %v6124 = vrot.slane %v6035, 1
      %v6125 = vsel %vm1580, %v6122, %v6124
      %6126 = vrot.lane.b32.xlu0 %v6067, 120
      %v6127 = vpop.permute.xlu0 %6126
      %6128 = vrot.lane.b32.xlu0 %v6069, 120
      %v6129 = vpop.permute.xlu0 %6128
      %6130 = vrot.lane.b32.xlu0 %v6071, 120
      %v6131 = vpop.permute.xlu0 %6130
      %6132 = vrot.lane.b32.xlu0 %v6073, 120
      %v6133 = vpop.permute.xlu0 %6132
      %6134 = vrot.lane.b32.xlu0 %v6075, 120
      %v6135 = vpop.permute.xlu0 %6134
      %6136 = vrot.lane.b32.xlu0 %v6077, 120
      %v6137 = vpop.permute.xlu0 %6136
      %6138 = vrot.lane.b32.xlu0 %v6079, 120
      %v6139 = vpop.permute.xlu0 %6138
      %6140 = vrot.lane.b32.xlu0 %v6081, 120
      %v6141 = vpop.permute.xlu0 %6140
      %6142 = vrot.lane.b32.xlu0 %v6083, 120
      %v6143 = vpop.permute.xlu0 %6142
      %6144 = vrot.lane.b32.xlu0 %v6085, 120
      %v6145 = vpop.permute.xlu0 %6144
      %6146 = vrot.lane.b32.xlu0 %v6087, 120
      %v6147 = vpop.permute.xlu0 %6146
      %6148 = vrot.lane.b32.xlu0 %v6089, 120
      %v6149 = vpop.permute.xlu0 %6148
      %6150 = vrot.lane.b32.xlu0 %v6091, 120
      %v6151 = vpop.permute.xlu0 %6150
      %6152 = vrot.lane.b32.xlu0 %v6093, 120
      %v6153 = vpop.permute.xlu0 %6152
      %6154 = vrot.lane.b32.xlu0 %v6095, 120
      %v6155 = vpop.permute.xlu0 %6154
      %6156 = vrot.lane.b32.xlu0 %v6097, 120
      %v6157 = vpop.permute.xlu0 %6156
      %6158 = vrot.lane.b32.xlu0 %v6099, 120
      %v6159 = vpop.permute.xlu0 %6158
      %6160 = vrot.lane.b32.xlu0 %v6101, 120
      %v6161 = vpop.permute.xlu0 %6160
      %6162 = vrot.lane.b32.xlu0 %v6103, 120
      %v6163 = vpop.permute.xlu0 %6162
      %6164 = vrot.lane.b32.xlu0 %v6105, 120
      %v6165 = vpop.permute.xlu0 %6164
      %6166 = vrot.lane.b32.xlu0 %v6107, 120
      %v6167 = vpop.permute.xlu0 %6166
      %6168 = vrot.lane.b32.xlu0 %v6109, 120
      %v6169 = vpop.permute.xlu0 %6168
      %6170 = vrot.lane.b32.xlu0 %v6111, 120
      %v6171 = vpop.permute.xlu0 %6170
      %6172 = vrot.lane.b32.xlu0 %v6113, 120
      %v6173 = vpop.permute.xlu0 %6172
      %6174 = vrot.lane.b32.xlu0 %v6115, 120
      %v6175 = vpop.permute.xlu0 %6174
      %6176 = vrot.lane.b32.xlu0 %v6117, 120
      %v6177 = vpop.permute.xlu0 %6176
      %6178 = vrot.lane.b32.xlu0 %v6119, 120
      %v6179 = vpop.permute.xlu0 %6178
      %6180 = vrot.lane.b32.xlu0 %v6121, 120
      %v6181 = vpop.permute.xlu0 %6180
      %6182 = vrot.lane.b32.xlu0 %v6123, 120
      %v6183 = vpop.permute.xlu0 %6182
      %6184 = vrot.lane.b32.xlu0 %v6125, 120
      %v6185 = vpop.permute.xlu0 %6184
      %6186 = vrot.lane.b32.xlu0 %v6124, 120
      %v6187 = vpop.permute.xlu0 %6186
      %v6219 = vadd.f32 %v1712, %v6127
      %v6220 = vadd.f32 %v5976, %v6129
      %v6221 = vadd.f32 %v5977, %v6131
      %v6222 = vadd.f32 %v5978, %v6133
      %v6223 = vadd.f32 %v5979, %v6135
      %v6224 = vadd.f32 %v5980, %v6137
      %v6225 = vadd.f32 %v5981, %v6139
      %v6226 = vadd.f32 %v5982, %v6141
      %v6227 = vadd.f32 %v5983, %v6143
      %v6228 = vadd.f32 %v5984, %v6145
      %v6229 = vadd.f32 %v5985, %v6147
      %v6230 = vadd.f32 %v5986, %v6149
      %v6231 = vadd.f32 %v5987, %v6151
      %v6232 = vadd.f32 %v5988, %v6153
      %v6233 = vadd.f32 %v5989, %v6155
      %v6234 = vadd.f32 %v5990, %v6157
      %v6235 = vadd.f32 %v5991, %v6159
      %v6236 = vadd.f32 %v5992, %v6161
      %v6237 = vadd.f32 %v5993, %v6163
      %v6238 = vadd.f32 %v5994, %v6165
      %v6239 = vadd.f32 %v5995, %v6167
      %v6240 = vadd.f32 %v5996, %v6169
      %v6241 = vadd.f32 %v5997, %v6171
      %v6242 = vadd.f32 %v5998, %v6173
      %v6243 = vadd.f32 %v5999, %v6175
      %v6244 = vadd.f32 %v6000, %v6177
      %v6245 = vadd.f32 %v6001, %v6179
      %v6246 = vadd.f32 %v6002, %v6181
      %v6247 = vadd.f32 %v6003, %v6183
      %v6248 = vadd.f32 %v6004, %v6185
      %v6249 = vadd.f32 %v6005, %v6187
      %v6250 = vmul.f32 %v5820, %v2231
      %v6251 = vmul.f32 %v5823, %v2233
      %v6252 = vmul.f32 %v5828, %v2235
      %v6253 = vmul.f32 %v5831, %v2237
      %v6254 = vmul.f32 %v5836, %v2239
      %v6255 = vmul.f32 %v5839, %v2241
      %v6256 = vmul.f32 %v5844, %v2243
      %v6257 = vmul.f32 %v5847, %v2245
      %v6258 = vmul.f32 %v5852, %v2247
      %v6259 = vmul.f32 %v5855, %v2249
      %v6260 = vmul.f32 %v5860, %v2251
      %v6261 = vmul.f32 %v5863, %v2253
      %v6262 = vmul.f32 %v5868, %v2255
      %v6263 = vmul.f32 %v5871, %v2257
      %v6264 = vmul.f32 %v5876, %v2259
      %v6265 = vmul.f32 %v5879, %v2261
      %v6266 = vmul.f32 %v5884, %v2263
      %v6267 = vmul.f32 %v5887, %v2265
      %v6268 = vmul.f32 %v5892, %v2267
      %v6269 = vmul.f32 %v5895, %v2269
      %v6270 = vmul.f32 %v5900, %v2271
      %v6271 = vmul.f32 %v5903, %v2273
      %v6272 = vmul.f32 %v5908, %v2275
      %v6273 = vmul.f32 %v5911, %v2277
      %v6274 = vmul.f32 %v5916, %v2279
      %v6275 = vmul.f32 %v5919, %v2281
      %v6276 = vmul.f32 %v5924, %v2283
      %v6277 = vmul.f32 %v5927, %v2285
      %v6278 = vmul.f32 %v5932, %v2287
      %v6279 = vmul.f32 %v5935, %v2289
      %v6280 = vmul.f32 %v5940, %v2288
      %v6312 = vrot.slane %v6250, 2
      %v6313 = vsel %vm2389, %v2391, %v6312
      %v6314 = vrot.slane %v6251, 2
      %v6315 = vsel %vm2389, %v6312, %v6314
      %v6316 = vrot.slane %v6252, 2
      %v6317 = vsel %vm2389, %v6314, %v6316
      %v6318 = vrot.slane %v6253, 2
      %v6319 = vsel %vm2389, %v6316, %v6318
      %v6320 = vrot.slane %v6254, 2
      %v6321 = vsel %vm2389, %v6318, %v6320
      %v6322 = vrot.slane %v6255, 2
      %v6323 = vsel %vm2389, %v6320, %v6322
      %v6324 = vrot.slane %v6256, 2
      %v6325 = vsel %vm2389, %v6322, %v6324
      %v6326 = vrot.slane %v6257, 2
      %v6327 = vsel %vm2389, %v6324, %v6326
      %v6328 = vrot.slane %v6258, 2
      %v6329 = vsel %vm2389, %v6326, %v6328
      %v6330 = vrot.slane %v6259, 2
      %v6331 = vsel %vm2389, %v6328, %v6330
      %v6332 = vrot.slane %v6260, 2
      %v6333 = vsel %vm2389, %v6330, %v6332
      %v6334 = vrot.slane %v6261, 2
      %v6335 = vsel %vm2389, %v6332, %v6334
      %v6336 = vrot.slane %v6262, 2
      %v6337 = vsel %vm2389, %v6334, %v6336
      %v6338 = vrot.slane %v6263, 2
      %v6339 = vsel %vm2389, %v6336, %v6338
      %v6340 = vrot.slane %v6264, 2
      %v6341 = vsel %vm2389, %v6338, %v6340
      %v6342 = vrot.slane %v6265, 2
      %v6343 = vsel %vm2389, %v6340, %v6342
      %v6344 = vrot.slane %v6266, 2
      %v6345 = vsel %vm2389, %v6342, %v6344
      %v6346 = vrot.slane %v6267, 2
      %v6347 = vsel %vm2389, %v6344, %v6346
      %v6348 = vrot.slane %v6268, 2
      %v6349 = vsel %vm2389, %v6346, %v6348
      %v6350 = vrot.slane %v6269, 2
      %v6351 = vsel %vm2389, %v6348, %v6350
      %v6352 = vrot.slane %v6270, 2
      %v6353 = vsel %vm2389, %v6350, %v6352
      %v6354 = vrot.slane %v6271, 2
      %v6355 = vsel %vm2389, %v6352, %v6354
      %v6356 = vrot.slane %v6272, 2
      %v6357 = vsel %vm2389, %v6354, %v6356
      %v6358 = vrot.slane %v6273, 2
      %v6359 = vsel %vm2389, %v6356, %v6358
      %v6360 = vrot.slane %v6274, 2
      %v6361 = vsel %vm2389, %v6358, %v6360
      %v6362 = vrot.slane %v6275, 2
      %v6363 = vsel %vm2389, %v6360, %v6362
      %v6364 = vrot.slane %v6276, 2
      %v6365 = vsel %vm2389, %v6362, %v6364
      %v6366 = vrot.slane %v6277, 2
      %v6367 = vsel %vm2389, %v6364, %v6366
      %v6368 = vrot.slane %v6278, 2
      %v6369 = vsel %vm2389, %v6366, %v6368
      %v6370 = vrot.slane %v6279, 2
      %v6371 = vsel %vm2389, %v6368, %v6370
      %v6372 = vrot.slane %v6280, 2
      %v6373 = vsel %vm2389, %v6370, %v6372
      %6374 = vrot.lane.b32.xlu0 %v6313, 112
      %v6375 = vpop.permute.xlu0 %6374
      %6376 = vrot.lane.b32.xlu0 %v6315, 112
      %v6377 = vpop.permute.xlu0 %6376
      %6378 = vrot.lane.b32.xlu0 %v6317, 112
      %v6379 = vpop.permute.xlu0 %6378
      %6380 = vrot.lane.b32.xlu0 %v6319, 112
      %v6381 = vpop.permute.xlu0 %6380
      %6382 = vrot.lane.b32.xlu0 %v6321, 112
      %v6383 = vpop.permute.xlu0 %6382
      %6384 = vrot.lane.b32.xlu0 %v6323, 112
      %v6385 = vpop.permute.xlu0 %6384
      %6386 = vrot.lane.b32.xlu0 %v6325, 112
      %v6387 = vpop.permute.xlu0 %6386
      %6388 = vrot.lane.b32.xlu0 %v6327, 112
      %v6389 = vpop.permute.xlu0 %6388
      %6390 = vrot.lane.b32.xlu0 %v6329, 112
      %v6391 = vpop.permute.xlu0 %6390
      %6392 = vrot.lane.b32.xlu0 %v6331, 112
      %v6393 = vpop.permute.xlu0 %6392
      %6394 = vrot.lane.b32.xlu0 %v6333, 112
      %v6395 = vpop.permute.xlu0 %6394
      %6396 = vrot.lane.b32.xlu0 %v6335, 112
      %v6397 = vpop.permute.xlu0 %6396
      %6398 = vrot.lane.b32.xlu0 %v6337, 112
      %v6399 = vpop.permute.xlu0 %6398
      %6400 = vrot.lane.b32.xlu0 %v6339, 112
      %v6401 = vpop.permute.xlu0 %6400
      %6402 = vrot.lane.b32.xlu0 %v6341, 112
      %v6403 = vpop.permute.xlu0 %6402
      %6404 = vrot.lane.b32.xlu0 %v6343, 112
      %v6405 = vpop.permute.xlu0 %6404
      %6406 = vrot.lane.b32.xlu0 %v6345, 112
      %v6407 = vpop.permute.xlu0 %6406
      %6408 = vrot.lane.b32.xlu0 %v6347, 112
      %v6409 = vpop.permute.xlu0 %6408
      %6410 = vrot.lane.b32.xlu0 %v6349, 112
      %v6411 = vpop.permute.xlu0 %6410
      %6412 = vrot.lane.b32.xlu0 %v6351, 112
      %v6413 = vpop.permute.xlu0 %6412
      %6414 = vrot.lane.b32.xlu0 %v6353, 112
      %v6415 = vpop.permute.xlu0 %6414
      %6416 = vrot.lane.b32.xlu0 %v6355, 112
      %v6417 = vpop.permute.xlu0 %6416
      %6418 = vrot.lane.b32.xlu0 %v6357, 112
      %v6419 = vpop.permute.xlu0 %6418
      %6420 = vrot.lane.b32.xlu0 %v6359, 112
      %v6421 = vpop.permute.xlu0 %6420
      %6422 = vrot.lane.b32.xlu0 %v6361, 112
      %v6423 = vpop.permute.xlu0 %6422
      %6424 = vrot.lane.b32.xlu0 %v6363, 112
      %v6425 = vpop.permute.xlu0 %6424
      %6426 = vrot.lane.b32.xlu0 %v6365, 112
      %v6427 = vpop.permute.xlu0 %6426
      %6428 = vrot.lane.b32.xlu0 %v6367, 112
      %v6429 = vpop.permute.xlu0 %6428
      %6430 = vrot.lane.b32.xlu0 %v6369, 112
      %v6431 = vpop.permute.xlu0 %6430
      %6432 = vrot.lane.b32.xlu0 %v6371, 112
      %v6433 = vpop.permute.xlu0 %6432
      %6434 = vrot.lane.b32.xlu0 %v6373, 112
      %v6435 = vpop.permute.xlu0 %6434
      %v6467 = vadd.f32 %v6219, %v6375
      %v6468 = vadd.f32 %v6220, %v6377
      %v6469 = vadd.f32 %v6221, %v6379
      %v6470 = vadd.f32 %v6222, %v6381
      %v6471 = vadd.f32 %v6223, %v6383
      %v6472 = vadd.f32 %v6224, %v6385
      %v6473 = vadd.f32 %v6225, %v6387
      %v6474 = vadd.f32 %v6226, %v6389
      %v6475 = vadd.f32 %v6227, %v6391
      %v6476 = vadd.f32 %v6228, %v6393
      %v6477 = vadd.f32 %v6229, %v6395
      %v6478 = vadd.f32 %v6230, %v6397
      %v6479 = vadd.f32 %v6231, %v6399
      %v6480 = vadd.f32 %v6232, %v6401
      %v6481 = vadd.f32 %v6233, %v6403
      %v6482 = vadd.f32 %v6234, %v6405
      %v6483 = vadd.f32 %v6235, %v6407
      %v6484 = vadd.f32 %v6236, %v6409
      %v6485 = vadd.f32 %v6237, %v6411
      %v6486 = vadd.f32 %v6238, %v6413
      %v6487 = vadd.f32 %v6239, %v6415
      %v6488 = vadd.f32 %v6240, %v6417
      %v6489 = vadd.f32 %v6241, %v6419
      %v6490 = vadd.f32 %v6242, %v6421
      %v6491 = vadd.f32 %v6243, %v6423
      %v6492 = vadd.f32 %v6244, %v6425
      %v6493 = vadd.f32 %v6245, %v6427
      %v6494 = vadd.f32 %v6246, %v6429
      %v6495 = vadd.f32 %v6247, %v6431
      %v6496 = vadd.f32 %v6248, %v6433
      %v6497 = vadd.f32 %v6249, %v6435
      %v6498 = vmul.f32 %v5820, %v2685
      %v6499 = vmul.f32 %v5823, %v2687
      %v6500 = vmul.f32 %v5828, %v2689
      %v6501 = vmul.f32 %v5831, %v2691
      %v6502 = vmul.f32 %v5836, %v2693
      %v6503 = vmul.f32 %v5839, %v2695
      %v6504 = vmul.f32 %v5844, %v2697
      %v6505 = vmul.f32 %v5847, %v2699
      %v6506 = vmul.f32 %v5852, %v2701
      %v6507 = vmul.f32 %v5855, %v2703
      %v6508 = vmul.f32 %v5860, %v2705
      %v6509 = vmul.f32 %v5863, %v2707
      %v6510 = vmul.f32 %v5868, %v2709
      %v6511 = vmul.f32 %v5871, %v2711
      %v6512 = vmul.f32 %v5876, %v2713
      %v6513 = vmul.f32 %v5879, %v2715
      %v6514 = vmul.f32 %v5884, %v2717
      %v6515 = vmul.f32 %v5887, %v2719
      %v6516 = vmul.f32 %v5892, %v2721
      %v6517 = vmul.f32 %v5895, %v2723
      %v6518 = vmul.f32 %v5900, %v2725
      %v6519 = vmul.f32 %v5903, %v2727
      %v6520 = vmul.f32 %v5908, %v2729
      %v6521 = vmul.f32 %v5911, %v2731
      %v6522 = vmul.f32 %v5916, %v2733
      %v6523 = vmul.f32 %v5919, %v2735
      %v6524 = vmul.f32 %v5924, %v2737
      %v6525 = vmul.f32 %v5927, %v2739
      %v6526 = vmul.f32 %v5932, %v2741
      %v6527 = vmul.f32 %v5935, %v2743
      %v6528 = vmul.f32 %v5940, %v2745
      %v6529 = vmul.f32 %v5943, %v2744
      %6562 = vrot.lane.b32.xlu0 %v6498, 104
      %v6563 = vpop.permute.xlu0 %6562
      %6564 = vrot.lane.b32.xlu0 %v6499, 104
      %v6565 = vpop.permute.xlu0 %6564
      %6566 = vrot.lane.b32.xlu0 %v6500, 104
      %v6567 = vpop.permute.xlu0 %6566
      %6568 = vrot.lane.b32.xlu0 %v6501, 104
      %v6569 = vpop.permute.xlu0 %6568
      %6570 = vrot.lane.b32.xlu0 %v6502, 104
      %v6571 = vpop.permute.xlu0 %6570
      %6572 = vrot.lane.b32.xlu0 %v6503, 104
      %v6573 = vpop.permute.xlu0 %6572
      %6574 = vrot.lane.b32.xlu0 %v6504, 104
      %v6575 = vpop.permute.xlu0 %6574
      %6576 = vrot.lane.b32.xlu0 %v6505, 104
      %v6577 = vpop.permute.xlu0 %6576
      %6578 = vrot.lane.b32.xlu0 %v6506, 104
      %v6579 = vpop.permute.xlu0 %6578
      %6580 = vrot.lane.b32.xlu0 %v6507, 104
      %v6581 = vpop.permute.xlu0 %6580
      %6582 = vrot.lane.b32.xlu0 %v6508, 104
      %v6583 = vpop.permute.xlu0 %6582
      %6584 = vrot.lane.b32.xlu0 %v6509, 104
      %v6585 = vpop.permute.xlu0 %6584
      %6586 = vrot.lane.b32.xlu0 %v6510, 104
      %v6587 = vpop.permute.xlu0 %6586
      %6588 = vrot.lane.b32.xlu0 %v6511, 104
      %v6589 = vpop.permute.xlu0 %6588
      %6590 = vrot.lane.b32.xlu0 %v6512, 104
      %v6591 = vpop.permute.xlu0 %6590
      %6592 = vrot.lane.b32.xlu0 %v6513, 104
      %v6593 = vpop.permute.xlu0 %6592
      %6594 = vrot.lane.b32.xlu0 %v6514, 104
      %v6595 = vpop.permute.xlu0 %6594
      %6596 = vrot.lane.b32.xlu0 %v6515, 104
      %v6597 = vpop.permute.xlu0 %6596
      %6598 = vrot.lane.b32.xlu0 %v6516, 104
      %v6599 = vpop.permute.xlu0 %6598
      %6600 = vrot.lane.b32.xlu0 %v6517, 104
      %v6601 = vpop.permute.xlu0 %6600
      %6602 = vrot.lane.b32.xlu0 %v6518, 104
      %v6603 = vpop.permute.xlu0 %6602
      %6604 = vrot.lane.b32.xlu0 %v6519, 104
      %v6605 = vpop.permute.xlu0 %6604
      %6606 = vrot.lane.b32.xlu0 %v6520, 104
      %v6607 = vpop.permute.xlu0 %6606
      %6608 = vrot.lane.b32.xlu0 %v6521, 104
      %v6609 = vpop.permute.xlu0 %6608
      %6610 = vrot.lane.b32.xlu0 %v6522, 104
      %v6611 = vpop.permute.xlu0 %6610
      %6612 = vrot.lane.b32.xlu0 %v6523, 104
      %v6613 = vpop.permute.xlu0 %6612
      %6614 = vrot.lane.b32.xlu0 %v6524, 104
      %v6615 = vpop.permute.xlu0 %6614
      %6616 = vrot.lane.b32.xlu0 %v6525, 104
      %v6617 = vpop.permute.xlu0 %6616
      %6618 = vrot.lane.b32.xlu0 %v6526, 104
      %v6619 = vpop.permute.xlu0 %6618
      %6620 = vrot.lane.b32.xlu0 %v6527, 104
      %v6621 = vpop.permute.xlu0 %6620
      %6622 = vrot.lane.b32.xlu0 %v6528, 104
      %v6623 = vpop.permute.xlu0 %6622
      %6624 = vrot.lane.b32.xlu0 %v6529, 104
      %v6625 = vpop.permute.xlu0 %6624
      %v6658 = vadd.f32 %v2555, %v6563
      %v6659 = vadd.f32 %v6467, %v6565
      %v6660 = vadd.f32 %v6468, %v6567
      %v6661 = vadd.f32 %v6469, %v6569
      %v6662 = vadd.f32 %v6470, %v6571
      %v6663 = vadd.f32 %v6471, %v6573
      %v6664 = vadd.f32 %v6472, %v6575
      %v6665 = vadd.f32 %v6473, %v6577
      %v6666 = vadd.f32 %v6474, %v6579
      %v6667 = vadd.f32 %v6475, %v6581
      %v6668 = vadd.f32 %v6476, %v6583
      %v6669 = vadd.f32 %v6477, %v6585
      %v6670 = vadd.f32 %v6478, %v6587
      %v6671 = vadd.f32 %v6479, %v6589
      %v6672 = vadd.f32 %v6480, %v6591
      %v6673 = vadd.f32 %v6481, %v6593
      %v6674 = vadd.f32 %v6482, %v6595
      %v6675 = vadd.f32 %v6483, %v6597
      %v6676 = vadd.f32 %v6484, %v6599
      %v6677 = vadd.f32 %v6485, %v6601
      %v6678 = vadd.f32 %v6486, %v6603
      %v6679 = vadd.f32 %v6487, %v6605
      %v6680 = vadd.f32 %v6488, %v6607
      %v6681 = vadd.f32 %v6489, %v6609
      %v6682 = vadd.f32 %v6490, %v6611
      %v6683 = vadd.f32 %v6491, %v6613
      %v6684 = vadd.f32 %v6492, %v6615
      %v6685 = vadd.f32 %v6493, %v6617
      %v6686 = vadd.f32 %v6494, %v6619
      %v6687 = vadd.f32 %v6495, %v6621
      %v6688 = vadd.f32 %v6496, %v6623
      %v6689 = vadd.f32 %v6497, %v6625
      %v6690 = vmul.f32 %v5820, %v2979
      %v6691 = vmul.f32 %v5823, %v2983
      %v6692 = vmul.f32 %v5828, %v2987
      %v6693 = vmul.f32 %v5831, %v2991
      %v6694 = vmul.f32 %v5836, %v2995
      %v6695 = vmul.f32 %v5839, %v2999
      %v6696 = vmul.f32 %v5844, %v3003
      %v6697 = vmul.f32 %v5847, %v3007
      %v6698 = vmul.f32 %v5852, %v3011
      %v6699 = vmul.f32 %v5855, %v3015
      %v6700 = vmul.f32 %v5860, %v3019
      %v6701 = vmul.f32 %v5863, %v3023
      %v6702 = vmul.f32 %v5868, %v3027
      %v6703 = vmul.f32 %v5871, %v3031
      %v6704 = vmul.f32 %v5876, %v3035
      %v6705 = vmul.f32 %v5879, %v3039
      %v6706 = vmul.f32 %v5884, %v3043
      %v6707 = vmul.f32 %v5887, %v3047
      %v6708 = vmul.f32 %v5892, %v3051
      %v6709 = vmul.f32 %v5895, %v3055
      %v6710 = vmul.f32 %v5900, %v3059
      %v6711 = vmul.f32 %v5903, %v3063
      %v6712 = vmul.f32 %v5908, %v3067
      %v6713 = vmul.f32 %v5911, %v3071
      %v6714 = vmul.f32 %v5916, %v3075
      %v6715 = vmul.f32 %v5919, %v3079
      %v6716 = vmul.f32 %v5924, %v3083
      %v6717 = vmul.f32 %v5927, %v3087
      %v6718 = vmul.f32 %v5932, %v3091
      %v6719 = vmul.f32 %v5935, %v3095
      %v6720 = vmul.f32 %v5940, %v3099
      %v6721 = vmul.f32 %v5943, %v3103
      %v6754 = vrot.slane %v6690, 1
      %v6755 = vrot.slane %v6691, 1
      %v6756 = vsel %vm1580, %v6754, %v6755
      %v6757 = vrot.slane %v6692, 1
      %v6758 = vsel %vm1580, %v6755, %v6757
      %v6759 = vrot.slane %v6693, 1
      %v6760 = vsel %vm1580, %v6757, %v6759
      %v6761 = vrot.slane %v6694, 1
      %v6762 = vsel %vm1580, %v6759, %v6761
      %v6763 = vrot.slane %v6695, 1
      %v6764 = vsel %vm1580, %v6761, %v6763
      %v6765 = vrot.slane %v6696, 1
      %v6766 = vsel %vm1580, %v6763, %v6765
      %v6767 = vrot.slane %v6697, 1
      %v6768 = vsel %vm1580, %v6765, %v6767
      %v6769 = vrot.slane %v6698, 1
      %v6770 = vsel %vm1580, %v6767, %v6769
      %v6771 = vrot.slane %v6699, 1
      %v6772 = vsel %vm1580, %v6769, %v6771
      %v6773 = vrot.slane %v6700, 1
      %v6774 = vsel %vm1580, %v6771, %v6773
      %v6775 = vrot.slane %v6701, 1
      %v6776 = vsel %vm1580, %v6773, %v6775
      %v6777 = vrot.slane %v6702, 1
      %v6778 = vsel %vm1580, %v6775, %v6777
      %v6779 = vrot.slane %v6703, 1
      %v6780 = vsel %vm1580, %v6777, %v6779
      %v6781 = vrot.slane %v6704, 1
      %v6782 = vsel %vm1580, %v6779, %v6781
      %v6783 = vrot.slane %v6705, 1
      %v6784 = vsel %vm1580, %v6781, %v6783
      %v6785 = vrot.slane %v6706, 1
      %v6786 = vsel %vm1580, %v6783, %v6785
      %v6787 = vrot.slane %v6707, 1
      %v6788 = vsel %vm1580, %v6785, %v6787
      %v6789 = vrot.slane %v6708, 1
      %v6790 = vsel %vm1580, %v6787, %v6789
      %v6791 = vrot.slane %v6709, 1
      %v6792 = vsel %vm1580, %v6789, %v6791
      %v6793 = vrot.slane %v6710, 1
      %v6794 = vsel %vm1580, %v6791, %v6793
      %v6795 = vrot.slane %v6711, 1
      %v6796 = vsel %vm1580, %v6793, %v6795
      %v6797 = vrot.slane %v6712, 1
      %v6798 = vsel %vm1580, %v6795, %v6797
      %v6799 = vrot.slane %v6713, 1
      %v6800 = vsel %vm1580, %v6797, %v6799
      %v6801 = vrot.slane %v6714, 1
      %v6802 = vsel %vm1580, %v6799, %v6801
      %v6803 = vrot.slane %v6715, 1
      %v6804 = vsel %vm1580, %v6801, %v6803
      %v6805 = vrot.slane %v6716, 1
      %v6806 = vsel %vm1580, %v6803, %v6805
      %v6807 = vrot.slane %v6717, 1
      %v6808 = vsel %vm1580, %v6805, %v6807
      %v6809 = vrot.slane %v6718, 1
      %v6810 = vsel %vm1580, %v6807, %v6809
      %v6811 = vrot.slane %v6719, 1
      %v6812 = vsel %vm1580, %v6809, %v6811
      %v6813 = vrot.slane %v6720, 1
      %v6814 = vsel %vm1580, %v6811, %v6813
      %v6815 = vrot.slane %v6721, 1
      %v6816 = vsel %vm1580, %v6813, %v6815
      %6817 = vrot.lane.b32.xlu0 %v6754, 96
      %v6818 = vpop.permute.xlu0 %6817
      %6819 = vrot.lane.b32.xlu0 %v6756, 96
      %v6820 = vpop.permute.xlu0 %6819
      %6821 = vrot.lane.b32.xlu0 %v6758, 96
      %v6822 = vpop.permute.xlu0 %6821
      %6823 = vrot.lane.b32.xlu0 %v6760, 96
      %v6824 = vpop.permute.xlu0 %6823
      %6825 = vrot.lane.b32.xlu0 %v6762, 96
      %v6826 = vpop.permute.xlu0 %6825
      %6827 = vrot.lane.b32.xlu0 %v6764, 96
      %v6828 = vpop.permute.xlu0 %6827
      %6829 = vrot.lane.b32.xlu0 %v6766, 96
      %v6830 = vpop.permute.xlu0 %6829
      %6831 = vrot.lane.b32.xlu0 %v6768, 96
      %v6832 = vpop.permute.xlu0 %6831
      %6833 = vrot.lane.b32.xlu0 %v6770, 96
      %v6834 = vpop.permute.xlu0 %6833
      %6835 = vrot.lane.b32.xlu0 %v6772, 96
      %v6836 = vpop.permute.xlu0 %6835
      %6837 = vrot.lane.b32.xlu0 %v6774, 96
      %v6838 = vpop.permute.xlu0 %6837
      %6839 = vrot.lane.b32.xlu0 %v6776, 96
      %v6840 = vpop.permute.xlu0 %6839
      %6841 = vrot.lane.b32.xlu0 %v6778, 96
      %v6842 = vpop.permute.xlu0 %6841
      %6843 = vrot.lane.b32.xlu0 %v6780, 96
      %v6844 = vpop.permute.xlu0 %6843
      %6845 = vrot.lane.b32.xlu0 %v6782, 96
      %v6846 = vpop.permute.xlu0 %6845
      %6847 = vrot.lane.b32.xlu0 %v6784, 96
      %v6848 = vpop.permute.xlu0 %6847
      %6849 = vrot.lane.b32.xlu0 %v6786, 96
      %v6850 = vpop.permute.xlu0 %6849
      %6851 = vrot.lane.b32.xlu0 %v6788, 96
      %v6852 = vpop.permute.xlu0 %6851
      %6853 = vrot.lane.b32.xlu0 %v6790, 96
      %v6854 = vpop.permute.xlu0 %6853
      %6855 = vrot.lane.b32.xlu0 %v6792, 96
      %v6856 = vpop.permute.xlu0 %6855
      %6857 = vrot.lane.b32.xlu0 %v6794, 96
      %v6858 = vpop.permute.xlu0 %6857
      %6859 = vrot.lane.b32.xlu0 %v6796, 96
      %v6860 = vpop.permute.xlu0 %6859
      %6861 = vrot.lane.b32.xlu0 %v6798, 96
      %v6862 = vpop.permute.xlu0 %6861
      %6863 = vrot.lane.b32.xlu0 %v6800, 96
      %v6864 = vpop.permute.xlu0 %6863
      %6865 = vrot.lane.b32.xlu0 %v6802, 96
      %v6866 = vpop.permute.xlu0 %6865
      %6867 = vrot.lane.b32.xlu0 %v6804, 96
      %v6868 = vpop.permute.xlu0 %6867
      %6869 = vrot.lane.b32.xlu0 %v6806, 96
      %v6870 = vpop.permute.xlu0 %6869
      %6871 = vrot.lane.b32.xlu0 %v6808, 96
      %v6872 = vpop.permute.xlu0 %6871
      %6873 = vrot.lane.b32.xlu0 %v6810, 96
      %v6874 = vpop.permute.xlu0 %6873
      %6875 = vrot.lane.b32.xlu0 %v6812, 96
      %v6876 = vpop.permute.xlu0 %6875
      %6877 = vrot.lane.b32.xlu0 %v6814, 96
      %v6878 = vpop.permute.xlu0 %6877
      %6879 = vrot.lane.b32.xlu0 %v6816, 96
      %v6880 = vpop.permute.xlu0 %6879
      %6881 = vrot.lane.b32.xlu0 %v6815, 96
      %v6882 = vpop.permute.xlu0 %6881
      %v6916 = vadd.f32 %v2944, %v6818
      %v6917 = vadd.f32 %v6658, %v6820
      %v6918 = vadd.f32 %v6659, %v6822
      %v6919 = vadd.f32 %v6660, %v6824
      %v6920 = vadd.f32 %v6661, %v6826
      %v6921 = vadd.f32 %v6662, %v6828
      %v6922 = vadd.f32 %v6663, %v6830
      %v6923 = vadd.f32 %v6664, %v6832
      %v6924 = vadd.f32 %v6665, %v6834
      %v6925 = vadd.f32 %v6666, %v6836
      %v6926 = vadd.f32 %v6667, %v6838
      %v6927 = vadd.f32 %v6668, %v6840
      %v6928 = vadd.f32 %v6669, %v6842
      %v6929 = vadd.f32 %v6670, %v6844
      %v6930 = vadd.f32 %v6671, %v6846
      %v6931 = vadd.f32 %v6672, %v6848
      %v6932 = vadd.f32 %v6673, %v6850
      %v6933 = vadd.f32 %v6674, %v6852
      %v6934 = vadd.f32 %v6675, %v6854
      %v6935 = vadd.f32 %v6676, %v6856
      %v6936 = vadd.f32 %v6677, %v6858
      %v6937 = vadd.f32 %v6678, %v6860
      %v6938 = vadd.f32 %v6679, %v6862
      %v6939 = vadd.f32 %v6680, %v6864
      %v6940 = vadd.f32 %v6681, %v6866
      %v6941 = vadd.f32 %v6682, %v6868
      %v6942 = vadd.f32 %v6683, %v6870
      %v6943 = vadd.f32 %v6684, %v6872
      %v6944 = vadd.f32 %v6685, %v6874
      %v6945 = vadd.f32 %v6686, %v6876
      %v6946 = vadd.f32 %v6687, %v6878
      %v6947 = vadd.f32 %v6688, %v6880
      %v6948 = vadd.f32 %v6689, %v6882
      %v6949 = vmul.f32 %v5820, %v3460
      %v6950 = vmul.f32 %v5823, %v3462
      %v6951 = vmul.f32 %v5828, %v3464
      %v6952 = vmul.f32 %v5831, %v3466
      %v6953 = vmul.f32 %v5836, %v3468
      %v6954 = vmul.f32 %v5839, %v3470
      %v6955 = vmul.f32 %v5844, %v3472
      %v6956 = vmul.f32 %v5847, %v3474
      %v6957 = vmul.f32 %v5852, %v3476
      %v6958 = vmul.f32 %v5855, %v3478
      %v6959 = vmul.f32 %v5860, %v3480
      %v6960 = vmul.f32 %v5863, %v3482
      %v6961 = vmul.f32 %v5868, %v3484
      %v6962 = vmul.f32 %v5871, %v3486
      %v6963 = vmul.f32 %v5876, %v3488
      %v6964 = vmul.f32 %v5879, %v3490
      %v6965 = vmul.f32 %v5884, %v3492
      %v6966 = vmul.f32 %v5887, %v3494
      %v6967 = vmul.f32 %v5892, %v3496
      %v6968 = vmul.f32 %v5895, %v3498
      %v6969 = vmul.f32 %v5900, %v3500
      %v6970 = vmul.f32 %v5903, %v3502
      %v6971 = vmul.f32 %v5908, %v3504
      %v6972 = vmul.f32 %v5911, %v3506
      %v6973 = vmul.f32 %v5916, %v3508
      %v6974 = vmul.f32 %v5919, %v3510
      %v6975 = vmul.f32 %v5924, %v3512
      %v6976 = vmul.f32 %v5927, %v3514
      %v6977 = vmul.f32 %v5932, %v3516
      %v6978 = vmul.f32 %v5935, %v3518
      %v6979 = vmul.f32 %v5940, %v3520
      %v6980 = vmul.f32 %v5943, %v3522
      %v7013 = vrot.slane %v6949, 2
      %v7014 = vrot.slane %v6950, 2
      %v7015 = vsel %vm2389, %v7013, %v7014
      %v7016 = vrot.slane %v6951, 2
      %v7017 = vsel %vm2389, %v7014, %v7016
      %v7018 = vrot.slane %v6952, 2
      %v7019 = vsel %vm2389, %v7016, %v7018
      %v7020 = vrot.slane %v6953, 2
      %v7021 = vsel %vm2389, %v7018, %v7020
      %v7022 = vrot.slane %v6954, 2
      %v7023 = vsel %vm2389, %v7020, %v7022
      %v7024 = vrot.slane %v6955, 2
      %v7025 = vsel %vm2389, %v7022, %v7024
      %v7026 = vrot.slane %v6956, 2
      %v7027 = vsel %vm2389, %v7024, %v7026
      %v7028 = vrot.slane %v6957, 2
      %v7029 = vsel %vm2389, %v7026, %v7028
      %v7030 = vrot.slane %v6958, 2
      %v7031 = vsel %vm2389, %v7028, %v7030
      %v7032 = vrot.slane %v6959, 2
      %v7033 = vsel %vm2389, %v7030, %v7032
      %v7034 = vrot.slane %v6960, 2
      %v7035 = vsel %vm2389, %v7032, %v7034
      %v7036 = vrot.slane %v6961, 2
      %v7037 = vsel %vm2389, %v7034, %v7036
      %v7038 = vrot.slane %v6962, 2
      %v7039 = vsel %vm2389, %v7036, %v7038
      %v7040 = vrot.slane %v6963, 2
      %v7041 = vsel %vm2389, %v7038, %v7040
      %v7042 = vrot.slane %v6964, 2
      %v7043 = vsel %vm2389, %v7040, %v7042
      %v7044 = vrot.slane %v6965, 2
      %v7045 = vsel %vm2389, %v7042, %v7044
      %v7046 = vrot.slane %v6966, 2
      %v7047 = vsel %vm2389, %v7044, %v7046
      %v7048 = vrot.slane %v6967, 2
      %v7049 = vsel %vm2389, %v7046, %v7048
      %v7050 = vrot.slane %v6968, 2
      %v7051 = vsel %vm2389, %v7048, %v7050
      %v7052 = vrot.slane %v6969, 2
      %v7053 = vsel %vm2389, %v7050, %v7052
      %v7054 = vrot.slane %v6970, 2
      %v7055 = vsel %vm2389, %v7052, %v7054
      %v7056 = vrot.slane %v6971, 2
      %v7057 = vsel %vm2389, %v7054, %v7056
      %v7058 = vrot.slane %v6972, 2
      %v7059 = vsel %vm2389, %v7056, %v7058
      %v7060 = vrot.slane %v6973, 2
      %v7061 = vsel %vm2389, %v7058, %v7060
      %v7062 = vrot.slane %v6974, 2
      %v7063 = vsel %vm2389, %v7060, %v7062
      %v7064 = vrot.slane %v6975, 2
      %v7065 = vsel %vm2389, %v7062, %v7064
      %v7066 = vrot.slane %v6976, 2
      %v7067 = vsel %vm2389, %v7064, %v7066
      %v7068 = vrot.slane %v6977, 2
      %v7069 = vsel %vm2389, %v7066, %v7068
      %v7070 = vrot.slane %v6978, 2
      %v7071 = vsel %vm2389, %v7068, %v7070
      %v7072 = vrot.slane %v6979, 2
      %v7073 = vsel %vm2389, %v7070, %v7072
      %v7074 = vrot.slane %v6980, 2
      %v7075 = vsel %vm2389, %v7072, %v7074
      %v7076 = vsel %vm2389, %v7074, %v3685
      %7077 = vrot.lane.b32.xlu0 %v7013, 88
      %v7078 = vpop.permute.xlu0 %7077
      %7079 = vrot.lane.b32.xlu0 %v7015, 88
      %v7080 = vpop.permute.xlu0 %7079
      %7081 = vrot.lane.b32.xlu0 %v7017, 88
      %v7082 = vpop.permute.xlu0 %7081
      %7083 = vrot.lane.b32.xlu0 %v7019, 88
      %v7084 = vpop.permute.xlu0 %7083
      %7085 = vrot.lane.b32.xlu0 %v7021, 88
      %v7086 = vpop.permute.xlu0 %7085
      %7087 = vrot.lane.b32.xlu0 %v7023, 88
      %v7088 = vpop.permute.xlu0 %7087
      %7089 = vrot.lane.b32.xlu0 %v7025, 88
      %v7090 = vpop.permute.xlu0 %7089
      %7091 = vrot.lane.b32.xlu0 %v7027, 88
      %v7092 = vpop.permute.xlu0 %7091
      %7093 = vrot.lane.b32.xlu0 %v7029, 88
      %v7094 = vpop.permute.xlu0 %7093
      %7095 = vrot.lane.b32.xlu0 %v7031, 88
      %v7096 = vpop.permute.xlu0 %7095
      %7097 = vrot.lane.b32.xlu0 %v7033, 88
      %v7098 = vpop.permute.xlu0 %7097
      %7099 = vrot.lane.b32.xlu0 %v7035, 88
      %v7100 = vpop.permute.xlu0 %7099
      %7101 = vrot.lane.b32.xlu0 %v7037, 88
      %v7102 = vpop.permute.xlu0 %7101
      %7103 = vrot.lane.b32.xlu0 %v7039, 88
      %v7104 = vpop.permute.xlu0 %7103
      %7105 = vrot.lane.b32.xlu0 %v7041, 88
      %v7106 = vpop.permute.xlu0 %7105
      %7107 = vrot.lane.b32.xlu0 %v7043, 88
      %v7108 = vpop.permute.xlu0 %7107
      %7109 = vrot.lane.b32.xlu0 %v7045, 88
      %v7110 = vpop.permute.xlu0 %7109
      %7111 = vrot.lane.b32.xlu0 %v7047, 88
      %v7112 = vpop.permute.xlu0 %7111
      %7113 = vrot.lane.b32.xlu0 %v7049, 88
      %v7114 = vpop.permute.xlu0 %7113
      %7115 = vrot.lane.b32.xlu0 %v7051, 88
      %v7116 = vpop.permute.xlu0 %7115
      %7117 = vrot.lane.b32.xlu0 %v7053, 88
      %v7118 = vpop.permute.xlu0 %7117
      %7119 = vrot.lane.b32.xlu0 %v7055, 88
      %v7120 = vpop.permute.xlu0 %7119
      %7121 = vrot.lane.b32.xlu0 %v7057, 88
      %v7122 = vpop.permute.xlu0 %7121
      %7123 = vrot.lane.b32.xlu0 %v7059, 88
      %v7124 = vpop.permute.xlu0 %7123
      %7125 = vrot.lane.b32.xlu0 %v7061, 88
      %v7126 = vpop.permute.xlu0 %7125
      %7127 = vrot.lane.b32.xlu0 %v7063, 88
      %v7128 = vpop.permute.xlu0 %7127
      %7129 = vrot.lane.b32.xlu0 %v7065, 88
      %v7130 = vpop.permute.xlu0 %7129
      %7131 = vrot.lane.b32.xlu0 %v7067, 88
      %v7132 = vpop.permute.xlu0 %7131
      %7133 = vrot.lane.b32.xlu0 %v7069, 88
      %v7134 = vpop.permute.xlu0 %7133
      %7135 = vrot.lane.b32.xlu0 %v7071, 88
      %v7136 = vpop.permute.xlu0 %7135
      %7137 = vrot.lane.b32.xlu0 %v7073, 88
      %v7138 = vpop.permute.xlu0 %7137
      %7139 = vrot.lane.b32.xlu0 %v7075, 88
      %v7140 = vpop.permute.xlu0 %7139
      %7141 = vrot.lane.b32.xlu0 %v7076, 88
      %v7142 = vpop.permute.xlu0 %7141
      %v7176 = vadd.f32 %v6916, %v7078
      %v7177 = vadd.f32 %v6917, %v7080
      %v7178 = vadd.f32 %v6918, %v7082
      %v7179 = vadd.f32 %v6919, %v7084
      %v7180 = vadd.f32 %v6920, %v7086
      %v7181 = vadd.f32 %v6921, %v7088
      %v7182 = vadd.f32 %v6922, %v7090
      %v7183 = vadd.f32 %v6923, %v7092
      %v7184 = vadd.f32 %v6924, %v7094
      %v7185 = vadd.f32 %v6925, %v7096
      %v7186 = vadd.f32 %v6926, %v7098
      %v7187 = vadd.f32 %v6927, %v7100
      %v7188 = vadd.f32 %v6928, %v7102
      %v7189 = vadd.f32 %v6929, %v7104
      %v7190 = vadd.f32 %v6930, %v7106
      %v7191 = vadd.f32 %v6931, %v7108
      %v7192 = vadd.f32 %v6932, %v7110
      %v7193 = vadd.f32 %v6933, %v7112
      %v7194 = vadd.f32 %v6934, %v7114
      %v7195 = vadd.f32 %v6935, %v7116
      %v7196 = vadd.f32 %v6936, %v7118
      %v7197 = vadd.f32 %v6937, %v7120
      %v7198 = vadd.f32 %v6938, %v7122
      %v7199 = vadd.f32 %v6939, %v7124
      %v7200 = vadd.f32 %v6940, %v7126
      %v7201 = vadd.f32 %v6941, %v7128
      %v7202 = vadd.f32 %v6942, %v7130
      %v7203 = vadd.f32 %v6943, %v7132
      %v7204 = vadd.f32 %v6944, %v7134
      %v7205 = vadd.f32 %v6945, %v7136
      %v7206 = vadd.f32 %v6946, %v7138
      %v7207 = vadd.f32 %v6947, %v7140
      %v7208 = vadd.f32 %v6948, %v7142
      %v7209 = vmul.f32 %v5823, %v3915
      %v7210 = vmul.f32 %v5828, %v3917
      %v7211 = vmul.f32 %v5831, %v3919
      %v7212 = vmul.f32 %v5836, %v3921
      %v7213 = vmul.f32 %v5839, %v3923
      %v7214 = vmul.f32 %v5844, %v3925
      %v7215 = vmul.f32 %v5847, %v3927
      %v7216 = vmul.f32 %v5852, %v3929
      %v7217 = vmul.f32 %v5855, %v3931
      %v7218 = vmul.f32 %v5860, %v3933
      %v7219 = vmul.f32 %v5863, %v3935
      %v7220 = vmul.f32 %v5868, %v3937
      %v7221 = vmul.f32 %v5871, %v3939
      %v7222 = vmul.f32 %v5876, %v3941
      %v7223 = vmul.f32 %v5879, %v3943
      %v7224 = vmul.f32 %v5884, %v3945
      %v7225 = vmul.f32 %v5887, %v3947
      %v7226 = vmul.f32 %v5892, %v3949
      %v7227 = vmul.f32 %v5895, %v3951
      %v7228 = vmul.f32 %v5900, %v3953
      %v7229 = vmul.f32 %v5903, %v3955
      %v7230 = vmul.f32 %v5908, %v3957
      %v7231 = vmul.f32 %v5911, %v3959
      %v7232 = vmul.f32 %v5916, %v3961
      %v7233 = vmul.f32 %v5919, %v3963
      %v7234 = vmul.f32 %v5924, %v3965
      %v7235 = vmul.f32 %v5927, %v3967
      %v7236 = vmul.f32 %v5932, %v3969
      %v7237 = vmul.f32 %v5935, %v3971
      %v7238 = vmul.f32 %v5940, %v3973
      %v7239 = vmul.f32 %v5943, %v3975
      %7271 = vrot.lane.b32.xlu0 %v7209, 80
      %v7272 = vpop.permute.xlu0 %7271
      %7273 = vrot.lane.b32.xlu0 %v7210, 80
      %v7274 = vpop.permute.xlu0 %7273
      %7275 = vrot.lane.b32.xlu0 %v7211, 80
      %v7276 = vpop.permute.xlu0 %7275
      %7277 = vrot.lane.b32.xlu0 %v7212, 80
      %v7278 = vpop.permute.xlu0 %7277
      %7279 = vrot.lane.b32.xlu0 %v7213, 80
      %v7280 = vpop.permute.xlu0 %7279
      %7281 = vrot.lane.b32.xlu0 %v7214, 80
      %v7282 = vpop.permute.xlu0 %7281
      %7283 = vrot.lane.b32.xlu0 %v7215, 80
      %v7284 = vpop.permute.xlu0 %7283
      %7285 = vrot.lane.b32.xlu0 %v7216, 80
      %v7286 = vpop.permute.xlu0 %7285
      %7287 = vrot.lane.b32.xlu0 %v7217, 80
      %v7288 = vpop.permute.xlu0 %7287
      %7289 = vrot.lane.b32.xlu0 %v7218, 80
      %v7290 = vpop.permute.xlu0 %7289
      %7291 = vrot.lane.b32.xlu0 %v7219, 80
      %v7292 = vpop.permute.xlu0 %7291
      %7293 = vrot.lane.b32.xlu0 %v7220, 80
      %v7294 = vpop.permute.xlu0 %7293
      %7295 = vrot.lane.b32.xlu0 %v7221, 80
      %v7296 = vpop.permute.xlu0 %7295
      %7297 = vrot.lane.b32.xlu0 %v7222, 80
      %v7298 = vpop.permute.xlu0 %7297
      %7299 = vrot.lane.b32.xlu0 %v7223, 80
      %v7300 = vpop.permute.xlu0 %7299
      %7301 = vrot.lane.b32.xlu0 %v7224, 80
      %v7302 = vpop.permute.xlu0 %7301
      %7303 = vrot.lane.b32.xlu0 %v7225, 80
      %v7304 = vpop.permute.xlu0 %7303
      %7305 = vrot.lane.b32.xlu0 %v7226, 80
      %v7306 = vpop.permute.xlu0 %7305
      %7307 = vrot.lane.b32.xlu0 %v7227, 80
      %v7308 = vpop.permute.xlu0 %7307
      %7309 = vrot.lane.b32.xlu0 %v7228, 80
      %v7310 = vpop.permute.xlu0 %7309
      %7311 = vrot.lane.b32.xlu0 %v7229, 80
      %v7312 = vpop.permute.xlu0 %7311
      %7313 = vrot.lane.b32.xlu0 %v7230, 80
      %v7314 = vpop.permute.xlu0 %7313
      %7315 = vrot.lane.b32.xlu0 %v7231, 80
      %v7316 = vpop.permute.xlu0 %7315
      %7317 = vrot.lane.b32.xlu0 %v7232, 80
      %v7318 = vpop.permute.xlu0 %7317
      %7319 = vrot.lane.b32.xlu0 %v7233, 80
      %v7320 = vpop.permute.xlu0 %7319
      %7321 = vrot.lane.b32.xlu0 %v7234, 80
      %v7322 = vpop.permute.xlu0 %7321
      %7323 = vrot.lane.b32.xlu0 %v7235, 80
      %v7324 = vpop.permute.xlu0 %7323
      %7325 = vrot.lane.b32.xlu0 %v7236, 80
      %v7326 = vpop.permute.xlu0 %7325
      %7327 = vrot.lane.b32.xlu0 %v7237, 80
      %v7328 = vpop.permute.xlu0 %7327
      %7329 = vrot.lane.b32.xlu0 %v7238, 80
      %v7330 = vpop.permute.xlu0 %7329
      %7331 = vrot.lane.b32.xlu0 %v7239, 80
      %v7332 = vpop.permute.xlu0 %7331
      %v7364 = vadd.f32 %v7176, %v7272
      %v7365 = vadd.f32 %v7177, %v7274
      %v7366 = vadd.f32 %v7178, %v7276
      %v7367 = vadd.f32 %v7179, %v7278
      %v7368 = vadd.f32 %v7180, %v7280
      %v7369 = vadd.f32 %v7181, %v7282
      %v7370 = vadd.f32 %v7182, %v7284
      %v7371 = vadd.f32 %v7183, %v7286
      %v7372 = vadd.f32 %v7184, %v7288
      %v7373 = vadd.f32 %v7185, %v7290
      %v7374 = vadd.f32 %v7186, %v7292
      %v7375 = vadd.f32 %v7187, %v7294
      %v7376 = vadd.f32 %v7188, %v7296
      %v7377 = vadd.f32 %v7189, %v7298
      %v7378 = vadd.f32 %v7190, %v7300
      %v7379 = vadd.f32 %v7191, %v7302
      %v7380 = vadd.f32 %v7192, %v7304
      %v7381 = vadd.f32 %v7193, %v7306
      %v7382 = vadd.f32 %v7194, %v7308
      %v7383 = vadd.f32 %v7195, %v7310
      %v7384 = vadd.f32 %v7196, %v7312
      %v7385 = vadd.f32 %v7197, %v7314
      %v7386 = vadd.f32 %v7198, %v7316
      %v7387 = vadd.f32 %v7199, %v7318
      %v7388 = vadd.f32 %v7200, %v7320
      %v7389 = vadd.f32 %v7201, %v7322
      %v7390 = vadd.f32 %v7202, %v7324
      %v7391 = vadd.f32 %v7203, %v7326
      %v7392 = vadd.f32 %v7204, %v7328
      %v7393 = vadd.f32 %v7205, %v7330
      %v7394 = vadd.f32 %v7206, %v7332
      %v7395 = vadd.f32 %v7207, %v4140
      %v7396 = vadd.f32 %v7208, %v4142
      %v7397 = vmul.f32 %v5828, %v4211
      %v7398 = vmul.f32 %v5831, %v4215
      %v7399 = vmul.f32 %v5836, %v4219
      %v7400 = vmul.f32 %v5839, %v4223
      %v7401 = vmul.f32 %v5844, %v4227
      %v7402 = vmul.f32 %v5847, %v4231
      %v7403 = vmul.f32 %v5852, %v4235
      %v7404 = vmul.f32 %v5855, %v4239
      %v7405 = vmul.f32 %v5860, %v4243
      %v7406 = vmul.f32 %v5863, %v4247
      %v7407 = vmul.f32 %v5868, %v4251
      %v7408 = vmul.f32 %v5871, %v4255
      %v7409 = vmul.f32 %v5876, %v4259
      %v7410 = vmul.f32 %v5879, %v4263
      %v7411 = vmul.f32 %v5884, %v4267
      %v7412 = vmul.f32 %v5887, %v4271
      %v7413 = vmul.f32 %v5892, %v4275
      %v7414 = vmul.f32 %v5895, %v4279
      %v7415 = vmul.f32 %v5900, %v4283
      %v7416 = vmul.f32 %v5903, %v4287
      %v7417 = vmul.f32 %v5908, %v4291
      %v7418 = vmul.f32 %v5911, %v4295
      %v7419 = vmul.f32 %v5916, %v4299
      %v7420 = vmul.f32 %v5919, %v4303
      %v7421 = vmul.f32 %v5924, %v4307
      %v7422 = vmul.f32 %v5927, %v4311
      %v7423 = vmul.f32 %v5932, %v4315
      %v7424 = vmul.f32 %v5935, %v4319
      %v7425 = vmul.f32 %v5940, %v4323
      %v7426 = vmul.f32 %v5943, %v4327
      %v7457 = vrot.slane %v7397, 1
      %v7458 = vrot.slane %v7398, 1
      %v7459 = vsel %vm1580, %v7457, %v7458
      %v7460 = vrot.slane %v7399, 1
      %v7461 = vsel %vm1580, %v7458, %v7460
      %v7462 = vrot.slane %v7400, 1
      %v7463 = vsel %vm1580, %v7460, %v7462
      %v7464 = vrot.slane %v7401, 1
      %v7465 = vsel %vm1580, %v7462, %v7464
      %v7466 = vrot.slane %v7402, 1
      %v7467 = vsel %vm1580, %v7464, %v7466
      %v7468 = vrot.slane %v7403, 1
      %v7469 = vsel %vm1580, %v7466, %v7468
      %v7470 = vrot.slane %v7404, 1
      %v7471 = vsel %vm1580, %v7468, %v7470
      %v7472 = vrot.slane %v7405, 1
      %v7473 = vsel %vm1580, %v7470, %v7472
      %v7474 = vrot.slane %v7406, 1
      %v7475 = vsel %vm1580, %v7472, %v7474
      %v7476 = vrot.slane %v7407, 1
      %v7477 = vsel %vm1580, %v7474, %v7476
      %v7478 = vrot.slane %v7408, 1
      %v7479 = vsel %vm1580, %v7476, %v7478
      %v7480 = vrot.slane %v7409, 1
      %v7481 = vsel %vm1580, %v7478, %v7480
      %v7482 = vrot.slane %v7410, 1
      %v7483 = vsel %vm1580, %v7480, %v7482
      %v7484 = vrot.slane %v7411, 1
      %v7485 = vsel %vm1580, %v7482, %v7484
      %v7486 = vrot.slane %v7412, 1
      %v7487 = vsel %vm1580, %v7484, %v7486
      %v7488 = vrot.slane %v7413, 1
      %v7489 = vsel %vm1580, %v7486, %v7488
      %v7490 = vrot.slane %v7414, 1
      %v7491 = vsel %vm1580, %v7488, %v7490
      %v7492 = vrot.slane %v7415, 1
      %v7493 = vsel %vm1580, %v7490, %v7492
      %v7494 = vrot.slane %v7416, 1
      %v7495 = vsel %vm1580, %v7492, %v7494
      %v7496 = vrot.slane %v7417, 1
      %v7497 = vsel %vm1580, %v7494, %v7496
      %v7498 = vrot.slane %v7418, 1
      %v7499 = vsel %vm1580, %v7496, %v7498
      %v7500 = vrot.slane %v7419, 1
      %v7501 = vsel %vm1580, %v7498, %v7500
      %v7502 = vrot.slane %v7420, 1
      %v7503 = vsel %vm1580, %v7500, %v7502
      %v7504 = vrot.slane %v7421, 1
      %v7505 = vsel %vm1580, %v7502, %v7504
      %v7506 = vrot.slane %v7422, 1
      %v7507 = vsel %vm1580, %v7504, %v7506
      %v7508 = vrot.slane %v7423, 1
      %v7509 = vsel %vm1580, %v7506, %v7508
      %v7510 = vrot.slane %v7424, 1
      %v7511 = vsel %vm1580, %v7508, %v7510
      %v7512 = vrot.slane %v7425, 1
      %v7513 = vsel %vm1580, %v7510, %v7512
      %v7514 = vrot.slane %v7426, 1
      %v7515 = vsel %vm1580, %v7512, %v7514
      %v7516 = vsel %vm1580, %v7514, %v4460
      %7517 = vrot.lane.b32.xlu0 %v7457, 72
      %v7518 = vpop.permute.xlu0 %7517
      %7519 = vrot.lane.b32.xlu0 %v7459, 72
      %v7520 = vpop.permute.xlu0 %7519
      %7521 = vrot.lane.b32.xlu0 %v7461, 72
      %v7522 = vpop.permute.xlu0 %7521
      %7523 = vrot.lane.b32.xlu0 %v7463, 72
      %v7524 = vpop.permute.xlu0 %7523
      %7525 = vrot.lane.b32.xlu0 %v7465, 72
      %v7526 = vpop.permute.xlu0 %7525
      %7527 = vrot.lane.b32.xlu0 %v7467, 72
      %v7528 = vpop.permute.xlu0 %7527
      %7529 = vrot.lane.b32.xlu0 %v7469, 72
      %v7530 = vpop.permute.xlu0 %7529
      %7531 = vrot.lane.b32.xlu0 %v7471, 72
      %v7532 = vpop.permute.xlu0 %7531
      %7533 = vrot.lane.b32.xlu0 %v7473, 72
      %v7534 = vpop.permute.xlu0 %7533
      %7535 = vrot.lane.b32.xlu0 %v7475, 72
      %v7536 = vpop.permute.xlu0 %7535
      %7537 = vrot.lane.b32.xlu0 %v7477, 72
      %v7538 = vpop.permute.xlu0 %7537
      %7539 = vrot.lane.b32.xlu0 %v7479, 72
      %v7540 = vpop.permute.xlu0 %7539
      %7541 = vrot.lane.b32.xlu0 %v7481, 72
      %v7542 = vpop.permute.xlu0 %7541
      %7543 = vrot.lane.b32.xlu0 %v7483, 72
      %v7544 = vpop.permute.xlu0 %7543
      %7545 = vrot.lane.b32.xlu0 %v7485, 72
      %v7546 = vpop.permute.xlu0 %7545
      %7547 = vrot.lane.b32.xlu0 %v7487, 72
      %v7548 = vpop.permute.xlu0 %7547
      %7549 = vrot.lane.b32.xlu0 %v7489, 72
      %v7550 = vpop.permute.xlu0 %7549
      %7551 = vrot.lane.b32.xlu0 %v7491, 72
      %v7552 = vpop.permute.xlu0 %7551
      %7553 = vrot.lane.b32.xlu0 %v7493, 72
      %v7554 = vpop.permute.xlu0 %7553
      %7555 = vrot.lane.b32.xlu0 %v7495, 72
      %v7556 = vpop.permute.xlu0 %7555
      %7557 = vrot.lane.b32.xlu0 %v7497, 72
      %v7558 = vpop.permute.xlu0 %7557
      %7559 = vrot.lane.b32.xlu0 %v7499, 72
      %v7560 = vpop.permute.xlu0 %7559
      %7561 = vrot.lane.b32.xlu0 %v7501, 72
      %v7562 = vpop.permute.xlu0 %7561
      %7563 = vrot.lane.b32.xlu0 %v7503, 72
      %v7564 = vpop.permute.xlu0 %7563
      %7565 = vrot.lane.b32.xlu0 %v7505, 72
      %v7566 = vpop.permute.xlu0 %7565
      %7567 = vrot.lane.b32.xlu0 %v7507, 72
      %v7568 = vpop.permute.xlu0 %7567
      %7569 = vrot.lane.b32.xlu0 %v7509, 72
      %v7570 = vpop.permute.xlu0 %7569
      %7571 = vrot.lane.b32.xlu0 %v7511, 72
      %v7572 = vpop.permute.xlu0 %7571
      %7573 = vrot.lane.b32.xlu0 %v7513, 72
      %v7574 = vpop.permute.xlu0 %7573
      %7575 = vrot.lane.b32.xlu0 %v7515, 72
      %v7576 = vpop.permute.xlu0 %7575
      %7577 = vrot.lane.b32.xlu0 %v7516, 72
      %v7578 = vpop.permute.xlu0 %7577
      %v7610 = vadd.f32 %v7364, %v7518
      %v7611 = vadd.f32 %v7365, %v7520
      %v7612 = vadd.f32 %v7366, %v7522
      %v7613 = vadd.f32 %v7367, %v7524
      %v7614 = vadd.f32 %v7368, %v7526
      %v7615 = vadd.f32 %v7369, %v7528
      %v7616 = vadd.f32 %v7370, %v7530
      %v7617 = vadd.f32 %v7371, %v7532
      %v7618 = vadd.f32 %v7372, %v7534
      %v7619 = vadd.f32 %v7373, %v7536
      %v7620 = vadd.f32 %v7374, %v7538
      %v7621 = vadd.f32 %v7375, %v7540
      %v7622 = vadd.f32 %v7376, %v7542
      %v7623 = vadd.f32 %v7377, %v7544
      %v7624 = vadd.f32 %v7378, %v7546
      %v7625 = vadd.f32 %v7379, %v7548
      %v7626 = vadd.f32 %v7380, %v7550
      %v7627 = vadd.f32 %v7381, %v7552
      %v7628 = vadd.f32 %v7382, %v7554
      %v7629 = vadd.f32 %v7383, %v7556
      %v7630 = vadd.f32 %v7384, %v7558
      %v7631 = vadd.f32 %v7385, %v7560
      %v7632 = vadd.f32 %v7386, %v7562
      %v7633 = vadd.f32 %v7387, %v7564
      %v7634 = vadd.f32 %v7388, %v7566
      %v7635 = vadd.f32 %v7389, %v7568
      %v7636 = vadd.f32 %v7390, %v7570
      %v7637 = vadd.f32 %v7391, %v7572
      %v7638 = vadd.f32 %v7392, %v7574
      %v7639 = vadd.f32 %v7393, %v7576
      %v7640 = vadd.f32 %v7394, %v7578
      %v7641 = vadd.f32 %v7395, %v4527
      %v7642 = vadd.f32 %v7396, %v4529
      %v7643 = vmul.f32 %v5828, %v4692
      %v7644 = vmul.f32 %v5831, %v4694
      %v7645 = vmul.f32 %v5836, %v4696
      %v7646 = vmul.f32 %v5839, %v4698
      %v7647 = vmul.f32 %v5844, %v4700
      %v7648 = vmul.f32 %v5847, %v4702
      %v7649 = vmul.f32 %v5852, %v4704
      %v7650 = vmul.f32 %v5855, %v4706
      %v7651 = vmul.f32 %v5860, %v4708
      %v7652 = vmul.f32 %v5863, %v4710
      %v7653 = vmul.f32 %v5868, %v4712
      %v7654 = vmul.f32 %v5871, %v4714
      %v7655 = vmul.f32 %v5876, %v4716
      %v7656 = vmul.f32 %v5879, %v4718
      %v7657 = vmul.f32 %v5884, %v4720
      %v7658 = vmul.f32 %v5887, %v4722
      %v7659 = vmul.f32 %v5892, %v4724
      %v7660 = vmul.f32 %v5895, %v4726
      %v7661 = vmul.f32 %v5900, %v4728
      %v7662 = vmul.f32 %v5903, %v4730
      %v7663 = vmul.f32 %v5908, %v4732
      %v7664 = vmul.f32 %v5911, %v4734
      %v7665 = vmul.f32 %v5916, %v4736
      %v7666 = vmul.f32 %v5919, %v4738
      %v7667 = vmul.f32 %v5924, %v4740
      %v7668 = vmul.f32 %v5927, %v4742
      %v7669 = vmul.f32 %v5932, %v4744
      %v7670 = vmul.f32 %v5935, %v4746
      %v7671 = vmul.f32 %v5940, %v4748
      %v7672 = vmul.f32 %v5943, %v4750
      %v7703 = vrot.slane %v7643, 2
      %v7704 = vrot.slane %v7644, 2
      %v7705 = vsel %vm2389, %v7703, %v7704
      %v7706 = vrot.slane %v7645, 2
      %v7707 = vsel %vm2389, %v7704, %v7706
      %v7708 = vrot.slane %v7646, 2
      %v7709 = vsel %vm2389, %v7706, %v7708
      %v7710 = vrot.slane %v7647, 2
      %v7711 = vsel %vm2389, %v7708, %v7710
      %v7712 = vrot.slane %v7648, 2
      %v7713 = vsel %vm2389, %v7710, %v7712
      %v7714 = vrot.slane %v7649, 2
      %v7715 = vsel %vm2389, %v7712, %v7714
      %v7716 = vrot.slane %v7650, 2
      %v7717 = vsel %vm2389, %v7714, %v7716
      %v7718 = vrot.slane %v7651, 2
      %v7719 = vsel %vm2389, %v7716, %v7718
      %v7720 = vrot.slane %v7652, 2
      %v7721 = vsel %vm2389, %v7718, %v7720
      %v7722 = vrot.slane %v7653, 2
      %v7723 = vsel %vm2389, %v7720, %v7722
      %v7724 = vrot.slane %v7654, 2
      %v7725 = vsel %vm2389, %v7722, %v7724
      %v7726 = vrot.slane %v7655, 2
      %v7727 = vsel %vm2389, %v7724, %v7726
      %v7728 = vrot.slane %v7656, 2
      %v7729 = vsel %vm2389, %v7726, %v7728
      %v7730 = vrot.slane %v7657, 2
      %v7731 = vsel %vm2389, %v7728, %v7730
      %v7732 = vrot.slane %v7658, 2
      %v7733 = vsel %vm2389, %v7730, %v7732
      %v7734 = vrot.slane %v7659, 2
      %v7735 = vsel %vm2389, %v7732, %v7734
      %v7736 = vrot.slane %v7660, 2
      %v7737 = vsel %vm2389, %v7734, %v7736
      %v7738 = vrot.slane %v7661, 2
      %v7739 = vsel %vm2389, %v7736, %v7738
      %v7740 = vrot.slane %v7662, 2
      %v7741 = vsel %vm2389, %v7738, %v7740
      %v7742 = vrot.slane %v7663, 2
      %v7743 = vsel %vm2389, %v7740, %v7742
      %v7744 = vrot.slane %v7664, 2
      %v7745 = vsel %vm2389, %v7742, %v7744
      %v7746 = vrot.slane %v7665, 2
      %v7747 = vsel %vm2389, %v7744, %v7746
      %v7748 = vrot.slane %v7666, 2
      %v7749 = vsel %vm2389, %v7746, %v7748
      %v7750 = vrot.slane %v7667, 2
      %v7751 = vsel %vm2389, %v7748, %v7750
      %v7752 = vrot.slane %v7668, 2
      %v7753 = vsel %vm2389, %v7750, %v7752
      %v7754 = vrot.slane %v7669, 2
      %v7755 = vsel %vm2389, %v7752, %v7754
      %v7756 = vrot.slane %v7670, 2
      %v7757 = vsel %vm2389, %v7754, %v7756
      %v7758 = vrot.slane %v7671, 2
      %v7759 = vsel %vm2389, %v7756, %v7758
      %v7760 = vrot.slane %v7672, 2
      %v7761 = vsel %vm2389, %v7758, %v7760
      %v7762 = vsel %vm2389, %v7760, %v4913
      %7763 = vrot.lane.b32.xlu0 %v7703, 64
      %v7764 = vpop.permute.xlu0 %7763
      %7765 = vrot.lane.b32.xlu0 %v7705, 64
      %v7766 = vpop.permute.xlu0 %7765
      %7767 = vrot.lane.b32.xlu0 %v7707, 64
      %v7768 = vpop.permute.xlu0 %7767
      %7769 = vrot.lane.b32.xlu0 %v7709, 64
      %v7770 = vpop.permute.xlu0 %7769
      %7771 = vrot.lane.b32.xlu0 %v7711, 64
      %v7772 = vpop.permute.xlu0 %7771
      %7773 = vrot.lane.b32.xlu0 %v7713, 64
      %v7774 = vpop.permute.xlu0 %7773
      %7775 = vrot.lane.b32.xlu0 %v7715, 64
      %v7776 = vpop.permute.xlu0 %7775
      %7777 = vrot.lane.b32.xlu0 %v7717, 64
      %v7778 = vpop.permute.xlu0 %7777
      %7779 = vrot.lane.b32.xlu0 %v7719, 64
      %v7780 = vpop.permute.xlu0 %7779
      %7781 = vrot.lane.b32.xlu0 %v7721, 64
      %v7782 = vpop.permute.xlu0 %7781
      %7783 = vrot.lane.b32.xlu0 %v7723, 64
      %v7784 = vpop.permute.xlu0 %7783
      %7785 = vrot.lane.b32.xlu0 %v7725, 64
      %v7786 = vpop.permute.xlu0 %7785
      %7787 = vrot.lane.b32.xlu0 %v7727, 64
      %v7788 = vpop.permute.xlu0 %7787
      %7789 = vrot.lane.b32.xlu0 %v7729, 64
      %v7790 = vpop.permute.xlu0 %7789
      %7791 = vrot.lane.b32.xlu0 %v7731, 64
      %v7792 = vpop.permute.xlu0 %7791
      %7793 = vrot.lane.b32.xlu0 %v7733, 64
      %v7794 = vpop.permute.xlu0 %7793
      %7795 = vrot.lane.b32.xlu0 %v7735, 64
      %v7796 = vpop.permute.xlu0 %7795
      %7797 = vrot.lane.b32.xlu0 %v7737, 64
      %v7798 = vpop.permute.xlu0 %7797
      %7799 = vrot.lane.b32.xlu0 %v7739, 64
      %v7800 = vpop.permute.xlu0 %7799
      %7801 = vrot.lane.b32.xlu0 %v7741, 64
      %v7802 = vpop.permute.xlu0 %7801
      %7803 = vrot.lane.b32.xlu0 %v7743, 64
      %v7804 = vpop.permute.xlu0 %7803
      %7805 = vrot.lane.b32.xlu0 %v7745, 64
      %v7806 = vpop.permute.xlu0 %7805
      %7807 = vrot.lane.b32.xlu0 %v7747, 64
      %v7808 = vpop.permute.xlu0 %7807
      %7809 = vrot.lane.b32.xlu0 %v7749, 64
      %v7810 = vpop.permute.xlu0 %7809
      %7811 = vrot.lane.b32.xlu0 %v7751, 64
      %v7812 = vpop.permute.xlu0 %7811
      %7813 = vrot.lane.b32.xlu0 %v7753, 64
      %v7814 = vpop.permute.xlu0 %7813
      %7815 = vrot.lane.b32.xlu0 %v7755, 64
      %v7816 = vpop.permute.xlu0 %7815
      %7817 = vrot.lane.b32.xlu0 %v7757, 64
      %v7818 = vpop.permute.xlu0 %7817
      %7819 = vrot.lane.b32.xlu0 %v7759, 64
      %v7820 = vpop.permute.xlu0 %7819
      %7821 = vrot.lane.b32.xlu0 %v7761, 64
      %v7822 = vpop.permute.xlu0 %7821
      %7823 = vrot.lane.b32.xlu0 %v7762, 64
      %v7824 = vpop.permute.xlu0 %7823
      %v7856 = vadd.f32 %v7610, %v7764
      %v7857 = vadd.f32 %v7611, %v7766
      %v7858 = vadd.f32 %v7612, %v7768
      %v7859 = vadd.f32 %v7613, %v7770
      %v7860 = vadd.f32 %v7614, %v7772
      %v7861 = vadd.f32 %v7615, %v7774
      %v7862 = vadd.f32 %v7616, %v7776
      %v7863 = vadd.f32 %v7617, %v7778
      %v7864 = vadd.f32 %v7618, %v7780
      %v7865 = vadd.f32 %v7619, %v7782
      %v7866 = vadd.f32 %v7620, %v7784
      %v7867 = vadd.f32 %v7621, %v7786
      %v7868 = vadd.f32 %v7622, %v7788
      %v7869 = vadd.f32 %v7623, %v7790
      %v7870 = vadd.f32 %v7624, %v7792
      %v7871 = vadd.f32 %v7625, %v7794
      %v7872 = vadd.f32 %v7626, %v7796
      %v7873 = vadd.f32 %v7627, %v7798
      %v7874 = vadd.f32 %v7628, %v7800
      %v7875 = vadd.f32 %v7629, %v7802
      %v7876 = vadd.f32 %v7630, %v7804
      %v7877 = vadd.f32 %v7631, %v7806
      %v7878 = vadd.f32 %v7632, %v7808
      %v7879 = vadd.f32 %v7633, %v7810
      %v7880 = vadd.f32 %v7634, %v7812
      %v7881 = vadd.f32 %v7635, %v7814
      %v7882 = vadd.f32 %v7636, %v7816
      %v7883 = vadd.f32 %v7637, %v7818
      %v7884 = vadd.f32 %v7638, %v7820
      %v7885 = vadd.f32 %v7639, %v7822
      %v7886 = vadd.f32 %v7640, %v7824
      %v7887 = vadd.f32 %v7641, %v4982
      %v7888 = vadd.f32 %v7642, %v4984
      %7922 = vrot.lane.b32.xlu0 %v7856, 16
      %v7923 = vpop.permute.xlu0 %7922
      %7924 = vrot.lane.b32.xlu0 %v7857, 16
      %v7925 = vpop.permute.xlu0 %7924
      %7926 = vrot.lane.b32.xlu0 %v7858, 16
      %v7927 = vpop.permute.xlu0 %7926
      %7928 = vrot.lane.b32.xlu0 %v7859, 16
      %v7929 = vpop.permute.xlu0 %7928
      %7930 = vrot.lane.b32.xlu0 %v7860, 16
      %v7931 = vpop.permute.xlu0 %7930
      %7932 = vrot.lane.b32.xlu0 %v7861, 16
      %v7933 = vpop.permute.xlu0 %7932
      %7934 = vrot.lane.b32.xlu0 %v7862, 16
      %v7935 = vpop.permute.xlu0 %7934
      %7936 = vrot.lane.b32.xlu0 %v7863, 16
      %v7937 = vpop.permute.xlu0 %7936
      %7938 = vrot.lane.b32.xlu0 %v7864, 16
      %v7939 = vpop.permute.xlu0 %7938
      %7940 = vrot.lane.b32.xlu0 %v7865, 16
      %v7941 = vpop.permute.xlu0 %7940
      %7942 = vrot.lane.b32.xlu0 %v7866, 16
      %v7943 = vpop.permute.xlu0 %7942
      %7944 = vrot.lane.b32.xlu0 %v7867, 16
      %v7945 = vpop.permute.xlu0 %7944
      %7946 = vrot.lane.b32.xlu0 %v7868, 16
      %v7947 = vpop.permute.xlu0 %7946
      %7948 = vrot.lane.b32.xlu0 %v7869, 16
      %v7949 = vpop.permute.xlu0 %7948
      %7950 = vrot.lane.b32.xlu0 %v7870, 16
      %v7951 = vpop.permute.xlu0 %7950
      %7952 = vrot.lane.b32.xlu0 %v7871, 16
      %v7953 = vpop.permute.xlu0 %7952
      %7954 = vrot.lane.b32.xlu0 %v7872, 16
      %v7955 = vpop.permute.xlu0 %7954
      %7956 = vrot.lane.b32.xlu0 %v7873, 16
      %v7957 = vpop.permute.xlu0 %7956
      %7958 = vrot.lane.b32.xlu0 %v7874, 16
      %v7959 = vpop.permute.xlu0 %7958
      %7960 = vrot.lane.b32.xlu0 %v7875, 16
      %v7961 = vpop.permute.xlu0 %7960
      %7962 = vrot.lane.b32.xlu0 %v7876, 16
      %v7963 = vpop.permute.xlu0 %7962
      %7964 = vrot.lane.b32.xlu0 %v7877, 16
      %v7965 = vpop.permute.xlu0 %7964
      %7966 = vrot.lane.b32.xlu0 %v7878, 16
      %v7967 = vpop.permute.xlu0 %7966
      %7968 = vrot.lane.b32.xlu0 %v7879, 16
      %v7969 = vpop.permute.xlu0 %7968
      %7970 = vrot.lane.b32.xlu0 %v7880, 16
      %v7971 = vpop.permute.xlu0 %7970
      %7972 = vrot.lane.b32.xlu0 %v7881, 16
      %v7973 = vpop.permute.xlu0 %7972
      %7974 = vrot.lane.b32.xlu0 %v7882, 16
      %v7975 = vpop.permute.xlu0 %7974
      %7976 = vrot.lane.b32.xlu0 %v7883, 16
      %v7977 = vpop.permute.xlu0 %7976
      %7978 = vrot.lane.b32.xlu0 %v7884, 16
      %v7979 = vpop.permute.xlu0 %7978
      %7980 = vrot.lane.b32.xlu0 %v7885, 16
      %v7981 = vpop.permute.xlu0 %7980
      %7982 = vrot.lane.b32.xlu0 %v7886, 16
      %v7983 = vpop.permute.xlu0 %7982
      %7984 = vrot.lane.b32.xlu0 %v7887, 16
      %v7985 = vpop.permute.xlu0 %7984
      %7986 = vrot.lane.b32.xlu0 %v7888, 16
      %v7987 = vpop.permute.xlu0 %7986
      %vm8021 = vcmask 195719
      %8022 = vst.msk [vmem:[#allocation2 - $0x7] sm:$0x80] %vm8021, %v7923
      %vm8023 = vcmask 195712
      %8024 = vst.msk [vmem:[#allocation2 + $0x1] sm:$0xff] %vm8023, %v7925
      %8025 = vst.msk [vmem:[#allocation2 + $0x9] sm:$0xff] %vm8023, %v7927
      %8026 = vst.msk [vmem:[#allocation2 + $0x11] sm:$0xff] %vm8023, %v7929
      %8027 = vst.msk [vmem:[#allocation2 + $0x19] sm:$0xff] %vm8023, %v7931
      %8028 = vst.msk [vmem:[#allocation2 + $0x21] sm:$0xff] %vm8023, %v7933
      %8029 = vst.msk [vmem:[#allocation2 + $0x29] sm:$0xff] %vm8023, %v7935
      %8030 = vst.msk [vmem:[#allocation2 + $0x31] sm:$0xff] %vm8023, %v7937
      %8031 = vst.msk [vmem:[#allocation2 + $0x39] sm:$0xff] %vm8023, %v7939
      %8032 = vst.msk [vmem:[#allocation2 + $0x41] sm:$0xff] %vm8023, %v7941
      %8033 = vst.msk [vmem:[#allocation2 + $0x49] sm:$0xff] %vm8023, %v7943
      %8034 = vst.msk [vmem:[#allocation2 + $0x51] sm:$0xff] %vm8023, %v7945
      %8035 = vst.msk [vmem:[#allocation2 + $0x59] sm:$0xff] %vm8023, %v7947
      %8036 = vst.msk [vmem:[#allocation2 + $0x61] sm:$0xff] %vm8023, %v7949
      %8037 = vst.msk [vmem:[#allocation2 + $0x69] sm:$0xff] %vm8023, %v7951
      %8038 = vst.msk [vmem:[#allocation2 + $0x71] sm:$0xff] %vm8023, %v7953
      %8039 = vst.msk [vmem:[#allocation2 + $0x79] sm:$0xff] %vm8023, %v7955
      %8040 = vst.msk [vmem:[#allocation2 + $0x81] sm:$0xff] %vm8023, %v7957
      %8041 = vst.msk [vmem:[#allocation2 + $0x89] sm:$0xff] %vm8023, %v7959
      %8042 = vst.msk [vmem:[#allocation2 + $0x91] sm:$0xff] %vm8023, %v7961
      %8043 = vst.msk [vmem:[#allocation2 + $0x99] sm:$0xff] %vm8023, %v7963
      %8044 = vst.msk [vmem:[#allocation2 + $0xa1] sm:$0xff] %vm8023, %v7965
      %8045 = vst.msk [vmem:[#allocation2 + $0xa9] sm:$0xff] %vm8023, %v7967
      %8046 = vst.msk [vmem:[#allocation2 + $0xb1] sm:$0xff] %vm8023, %v7969
      %8047 = vst.msk [vmem:[#allocation2 + $0xb9] sm:$0xff] %vm8023, %v7971
      %8048 = vst.msk [vmem:[#allocation2 + $0xc1] sm:$0xff] %vm8023, %v7973
      %8049 = vst.msk [vmem:[#allocation2 + $0xc9] sm:$0xff] %vm8023, %v7975
      %8050 = vst.msk [vmem:[#allocation2 + $0xd1] sm:$0xff] %vm8023, %v7977
      %8051 = vst.msk [vmem:[#allocation2 + $0xd9] sm:$0xff] %vm8023, %v7979
      %8052 = vst.msk [vmem:[#allocation2 + $0xe1] sm:$0xff] %vm8023, %v7981
      %8053 = vst.msk [vmem:[#allocation2 + $0xe9] sm:$0xff] %vm8023, %v7983
      %8054 = vst.msk [vmem:[#allocation2 + $0xf1] sm:$0xff] %vm8023, %v7985
      %vm8055 = vcmask 194688
      %8056 = vst.msk [vmem:[#allocation2 + $0xf9] sm:$0x7f] %vm8055, %v7987
      %v8057 = vld [vmem:[#allocation2] sm:$0xff]
      %v8058 = vld [vmem:[#allocation2 + $0x8] sm:$0xff]
      %v8059 = vld [vmem:[#allocation2 + $0x10] sm:$0xff]
      %v8060 = vld [vmem:[#allocation2 + $0x18] sm:$0xff]
      %v8061 = vld [vmem:[#allocation2 + $0x20] sm:$0xff]
      %v8062 = vld [vmem:[#allocation2 + $0x28] sm:$0xff]
      %v8063 = vld [vmem:[#allocation2 + $0x30] sm:$0xff]
      %v8064 = vld [vmem:[#allocation2 + $0x38] sm:$0xff]
      %v8065 = vld [vmem:[#allocation2 + $0x40] sm:$0xff]
      %v8066 = vld [vmem:[#allocation2 + $0x48] sm:$0xff]
      %v8067 = vld [vmem:[#allocation2 + $0x50] sm:$0xff]
      %v8068 = vld [vmem:[#allocation2 + $0x58] sm:$0xff]
      %v8069 = vld [vmem:[#allocation2 + $0x60] sm:$0xff]
      %v8070 = vld [vmem:[#allocation2 + $0x68] sm:$0xff]
      %v8071 = vld [vmem:[#allocation2 + $0x70] sm:$0xff]
      %v8072 = vld [vmem:[#allocation2 + $0x78] sm:$0xff]
      %v8073 = vld [vmem:[#allocation2 + $0x80] sm:$0xff]
      %v8074 = vld [vmem:[#allocation2 + $0x88] sm:$0xff]
      %v8075 = vld [vmem:[#allocation2 + $0x90] sm:$0xff]
      %v8076 = vld [vmem:[#allocation2 + $0x98] sm:$0xff]
      %v8077 = vld [vmem:[#allocation2 + $0xa0] sm:$0xff]
      %v8078 = vld [vmem:[#allocation2 + $0xa8] sm:$0xff]
      %v8079 = vld [vmem:[#allocation2 + $0xb0] sm:$0xff]
      %v8080 = vld [vmem:[#allocation2 + $0xb8] sm:$0xff]
      %v8081 = vld [vmem:[#allocation2 + $0xc0] sm:$0xff]
      %v8082 = vld [vmem:[#allocation2 + $0xc8] sm:$0xff]
      %v8083 = vld [vmem:[#allocation2 + $0xd0] sm:$0xff]
      %v8084 = vld [vmem:[#allocation2 + $0xd8] sm:$0xff]
      %v8085 = vld [vmem:[#allocation2 + $0xe0] sm:$0xff]
      %v8086 = vld [vmem:[#allocation2 + $0xe8] sm:$0xff]
      %v8087 = vld [vmem:[#allocation2 + $0xf0] sm:$0xff]
      %v8088 = vld [vmem:[#allocation2 + $0xf8] sm:$0xff]
      %v8089 = vld [vmem:[%s14] sm:$0x1]
      %v8091 = vlaneseq
      %v8092 = vshrl.u32 %v8091, 7
      %v8093 = vsub.s32 0, %v8092
      %v8094 = vrot.slane %v8089, %v8093
      %v8096 = vmul.f32 %v8057, %v8094
      %v8097 = vmul.f32 %v8058, %v8094
      %v8098 = vmul.f32 %v8059, %v8094
      %v8099 = vmul.f32 %v8060, %v8094
      %v8100 = vmul.f32 %v8061, %v8094
      %v8101 = vmul.f32 %v8062, %v8094
      %v8102 = vmul.f32 %v8063, %v8094
      %v8103 = vmul.f32 %v8064, %v8094
      %v8104 = vmul.f32 %v8065, %v8094
      %v8105 = vmul.f32 %v8066, %v8094
      %v8106 = vmul.f32 %v8067, %v8094
      %v8107 = vmul.f32 %v8068, %v8094
      %v8108 = vmul.f32 %v8069, %v8094
      %v8109 = vmul.f32 %v8070, %v8094
      %v8110 = vmul.f32 %v8071, %v8094
      %v8111 = vmul.f32 %v8072, %v8094
      %v8112 = vmul.f32 %v8073, %v8094
      %v8113 = vmul.f32 %v8074, %v8094
      %v8114 = vmul.f32 %v8075, %v8094
      %v8115 = vmul.f32 %v8076, %v8094
      %v8116 = vmul.f32 %v8077, %v8094
      %v8117 = vmul.f32 %v8078, %v8094
      %v8118 = vmul.f32 %v8079, %v8094
      %v8119 = vmul.f32 %v8080, %v8094
      %v8120 = vmul.f32 %v8081, %v8094
      %v8121 = vmul.f32 %v8082, %v8094
      %v8122 = vmul.f32 %v8083, %v8094
      %v8123 = vmul.f32 %v8084, %v8094
      %v8124 = vmul.f32 %v8085, %v8094
      %v8125 = vmul.f32 %v8086, %v8094
      %v8126 = vmul.f32 %v8087, %v8094
      %v8127 = vmul.f32 %v8088, %v8094
      %v8128 = vld [vmem:[%s15] sm:$0x1]
      %v8130 = vlaneseq
      %v8131 = vshrl.u32 %v8130, 7
      %v8132 = vsub.s32 0, %v8131
      %v8133 = vrot.slane %v8128, %v8132
      %v8135 = vadd.f32 %v8096, %v8133
      %v8136 = vadd.f32 %v8097, %v8133
      %v8137 = vadd.f32 %v8098, %v8133
      %v8138 = vadd.f32 %v8099, %v8133
      %v8139 = vadd.f32 %v8100, %v8133
      %v8140 = vadd.f32 %v8101, %v8133
      %v8141 = vadd.f32 %v8102, %v8133
      %v8142 = vadd.f32 %v8103, %v8133
      %v8143 = vadd.f32 %v8104, %v8133
      %v8144 = vadd.f32 %v8105, %v8133
      %v8145 = vadd.f32 %v8106, %v8133
      %v8146 = vadd.f32 %v8107, %v8133
      %v8147 = vadd.f32 %v8108, %v8133
      %v8148 = vadd.f32 %v8109, %v8133
      %v8149 = vadd.f32 %v8110, %v8133
      %v8150 = vadd.f32 %v8111, %v8133
      %v8151 = vadd.f32 %v8112, %v8133
      %v8152 = vadd.f32 %v8113, %v8133
      %v8153 = vadd.f32 %v8114, %v8133
      %v8154 = vadd.f32 %v8115, %v8133
      %v8155 = vadd.f32 %v8116, %v8133
      %v8156 = vadd.f32 %v8117, %v8133
      %v8157 = vadd.f32 %v8118, %v8133
      %v8158 = vadd.f32 %v8119, %v8133
      %v8159 = vadd.f32 %v8120, %v8133
      %v8160 = vadd.f32 %v8121, %v8133
      %v8161 = vadd.f32 %v8122, %v8133
      %v8162 = vadd.f32 %v8123, %v8133
      %v8163 = vadd.f32 %v8124, %v8133
      %v8164 = vadd.f32 %v8125, %v8133
      %v8165 = vadd.f32 %v8126, %v8133
      %v8166 = vadd.f32 %v8127, %v8133
      %v8167 = vmax.f32 %v8135, 0.0
      %v8168 = vmax.f32 %v8136, 0.0
      %v8169 = vmax.f32 %v8137, 0.0
      %v8170 = vmax.f32 %v8138, 0.0
      %v8171 = vmax.f32 %v8139, 0.0
      %v8172 = vmax.f32 %v8140, 0.0
      %v8173 = vmax.f32 %v8141, 0.0
      %v8174 = vmax.f32 %v8142, 0.0
      %v8175 = vmax.f32 %v8143, 0.0
      %v8176 = vmax.f32 %v8144, 0.0
      %v8177 = vmax.f32 %v8145, 0.0
      %v8178 = vmax.f32 %v8146, 0.0
      %v8179 = vmax.f32 %v8147, 0.0
      %v8180 = vmax.f32 %v8148, 0.0
      %v8181 = vmax.f32 %v8149, 0.0
      %v8182 = vmax.f32 %v8150, 0.0
      %v8183 = vmax.f32 %v8151, 0.0
      %v8184 = vmax.f32 %v8152, 0.0
      %v8185 = vmax.f32 %v8153, 0.0
      %v8186 = vmax.f32 %v8154, 0.0
      %v8187 = vmax.f32 %v8155, 0.0
      %v8188 = vmax.f32 %v8156, 0.0
      %v8189 = vmax.f32 %v8157, 0.0
      %v8190 = vmax.f32 %v8158, 0.0
      %v8191 = vmax.f32 %v8159, 0.0
      %v8192 = vmax.f32 %v8160, 0.0
      %v8193 = vmax.f32 %v8161, 0.0
      %v8194 = vmax.f32 %v8162, 0.0
      %v8195 = vmax.f32 %v8163, 0.0
      %v8196 = vmax.f32 %v8164, 0.0
      %v8197 = vmax.f32 %v8165, 0.0
      %v8198 = vmax.f32 %v8166, 0.0
      %v8199 = vpack.c.bf16 %v8168, %v8167
      %v8200 = vpack.c.bf16 %v8170, %v8169
      %v8201 = vpack.c.bf16 %v8172, %v8171
      %v8202 = vpack.c.bf16 %v8174, %v8173
      %v8203 = vpack.c.bf16 %v8176, %v8175
      %v8204 = vpack.c.bf16 %v8178, %v8177
      %v8205 = vpack.c.bf16 %v8180, %v8179
      %v8206 = vpack.c.bf16 %v8182, %v8181
      %v8207 = vpack.c.bf16 %v8184, %v8183
      %v8208 = vpack.c.bf16 %v8186, %v8185
      %v8209 = vpack.c.bf16 %v8188, %v8187
      %v8210 = vpack.c.bf16 %v8190, %v8189
      %v8211 = vpack.c.bf16 %v8192, %v8191
      %v8212 = vpack.c.bf16 %v8194, %v8193
      %v8213 = vpack.c.bf16 %v8196, %v8195
      %v8214 = vpack.c.bf16 %v8198, %v8197
      %v8215 = vld [vmem:[%s16] sm:$0xf]
      %v8216 = vld [vmem:[%s16 + $0x4] sm:$0xf]
      %v8217 = vld [vmem:[%s16 + $0x8] sm:$0xf]
      %v8221 = vunpack.c.l.b16 %v8215
      %v8222 = vunpack.c.l.b16 %v8216
      %v8223 = vunpack.c.l.b16 %v8217
      %v8224 = vpack.c.b16 %v8222, %v8221
      %v8225 = vpack.c.b16 %v8223, %v8223
      %vm8227 = vcmask 195584
      %v8229 = vsel %vm8227, %v8199, 0
      %v8232 = vsel %vm8227, %v8200, 0
      %v8235 = vsel %vm8227, %v8201, 0
      %v8238 = vsel %vm8227, %v8202, 0
      %v8241 = vsel %vm8227, %v8203, 0
      %v8244 = vsel %vm8227, %v8204, 0
      %v8247 = vsel %vm8227, %v8205, 0
      %v8250 = vsel %vm8227, %v8206, 0
      %v8253 = vsel %vm8227, %v8207, 0
      %v8256 = vsel %vm8227, %v8208, 0
      %v8259 = vsel %vm8227, %v8209, 0
      %v8262 = vsel %vm8227, %v8210, 0
      %v8265 = vsel %vm8227, %v8211, 0
      %v8268 = vsel %vm8227, %v8212, 0
      %v8271 = vsel %vm8227, %v8213, 0
      %v8274 = vsel %vm8227, %v8214, 0
      %v8277 = vsel %vm935, %v8225, 0
      %8279 = vmatprep.subr.bf16.mxu0 0
      %8280 = vmatpush1.bf16.msra.mxu0 %v8224
      %8281 = vmatprep.subr.bf16.mxu0 0
      %8282 = vmatpush1.bf16.msra.mxu0 %v8277
      %8283 = vmatprep.subr.bf16.mxu0 0
      %8284 = vmatpush1.bf16.msra.mxu0 0
      %8285 = vmatprep.subr.bf16.mxu0 0
      %8286 = vmatpush1.bf16.msra.mxu0 0
      %8287 = vmatprep.subr.bf16.mxu0 0
      %8288 = vmatpush1.bf16.msra.mxu0 0
      %8289 = vmatprep.subr.bf16.mxu0 0
      %8290 = vmatpush1.bf16.msra.mxu0 0
      %8291 = vmatprep.subr.bf16.mxu0 0
      %8292 = vmatpush1.bf16.msra.mxu0 0
      %8293 = vmatprep.subr.bf16.mxu0 0
      %8294 = vmatpush1.bf16.msra.mxu0 0
      %8295 = vmatprep.subr.bf16.mxu0 0
      %8296 = vmatpush1.bf16.msra.mxu0 0
      %8297 = vmatprep.subr.bf16.mxu0 0
      %8298 = vmatpush1.bf16.msra.mxu0 0
      %8299 = vmatprep.subr.bf16.mxu0 0
      %8300 = vmatpush1.bf16.msra.mxu0 0
      %8301 = vmatprep.subr.bf16.mxu0 0
      %8302 = vmatpush1.bf16.msra.mxu0 0
      %8303 = vmatprep.subr.bf16.mxu0 0
      %8304 = vmatpush1.bf16.msra.mxu0 0
      %8305 = vmatprep.subr.bf16.mxu0 0
      %8306 = vmatpush1.bf16.msra.mxu0 0
      %8307 = vmatprep.subr.bf16.mxu0 0
      %8308 = vmatpush1.bf16.msra.mxu0 0
      %8309 = vmatprep.subr.bf16.mxu0 0
      %8310 = vmatpush1.bf16.msra.mxu0 0
      %8311 = vmatprep.mubr.bf16.mxu0 0
      %8312 = vmatmul.mubr.bf16.gmra.mrb[0].mxu0 %v8229
      %v8313 = vpop.f32.mrb[0].mxu0
      %v8314 = vadd.f32 0.0, %v8313
      %v8315 = vpop.f32.mrb[0].mxu0
      %v8316 = vpop.f32.mrb[0].mxu0
      %v8317 = vadd.f32 0.0, %v8316
      %v8318 = vpop.f32.mrb[0].mxu0
      %8319 = vmatprep.mubr.bf16.mxu0 0
      %8320 = vmatmul.mubr.bf16.gmra.mrb[0].mxu0 %v8232
      %v8321 = vpop.f32.mrb[0].mxu0
      %v8322 = vadd.f32 0.0, %v8321
      %v8323 = vpop.f32.mrb[0].mxu0
      %v8324 = vpop.f32.mrb[0].mxu0
      %v8325 = vadd.f32 0.0, %v8324
      %v8326 = vpop.f32.mrb[0].mxu0
      %8327 = vmatprep.mubr.bf16.mxu0 0
      %8328 = vmatmul.mubr.bf16.gmra.mrb[0].mxu0 %v8235
      %v8329 = vpop.f32.mrb[0].mxu0
      %v8330 = vadd.f32 0.0, %v8329
      %v8331 = vpop.f32.mrb[0].mxu0
      %v8332 = vpop.f32.mrb[0].mxu0
      %v8333 = vadd.f32 0.0, %v8332
      %v8334 = vpop.f32.mrb[0].mxu0
      %8335 = vmatprep.mubr.bf16.mxu0 0
      %8336 = vmatmul.mubr.bf16.gmra.mrb[0].mxu0 %v8238
      %v8337 = vpop.f32.mrb[0].mxu0
      %v8338 = vadd.f32 0.0, %v8337
      %v8339 = vpop.f32.mrb[0].mxu0
      %v8340 = vpop.f32.mrb[0].mxu0
      %v8341 = vadd.f32 0.0, %v8340
      %v8342 = vpop.f32.mrb[0].mxu0
      %8343 = vmatprep.mubr.bf16.mxu0 0
      %8344 = vmatmul.mubr.bf16.gmra.mrb[0].mxu0 %v8241
      %v8345 = vpop.f32.mrb[0].mxu0
      %v8346 = vadd.f32 0.0, %v8345
      %v8347 = vpop.f32.mrb[0].mxu0
      %v8348 = vpop.f32.mrb[0].mxu0
      %v8349 = vadd.f32 0.0, %v8348
      %v8350 = vpop.f32.mrb[0].mxu0
      %8351 = vmatprep.mubr.bf16.mxu0 0
      %8352 = vmatmul.mubr.bf16.gmra.mrb[0].mxu0 %v8244
      %v8353 = vpop.f32.mrb[0].mxu0
      %v8354 = vadd.f32 0.0, %v8353
      %v8355 = vpop.f32.mrb[0].mxu0
      %v8356 = vpop.f32.mrb[0].mxu0
      %v8357 = vadd.f32 0.0, %v8356
      %v8358 = vpop.f32.mrb[0].mxu0
      %8359 = vmatprep.mubr.bf16.mxu0 0
      %8360 = vmatmul.mubr.bf16.gmra.mrb[0].mxu0 %v8247
      %v8361 = vpop.f32.mrb[0].mxu0
      %v8362 = vadd.f32 0.0, %v8361
      %v8363 = vpop.f32.mrb[0].mxu0
      %v8364 = vpop.f32.mrb[0].mxu0
      %v8365 = vadd.f32 0.0, %v8364
      %v8366 = vpop.f32.mrb[0].mxu0
      %8367 = vmatprep.mubr.bf16.mxu0 0
      %8368 = vmatmul.mubr.bf16.gmra.mrb[0].mxu0 %v8250
      %v8369 = vpop.f32.mrb[0].mxu0
      %v8370 = vadd.f32 0.0, %v8369
      %v8371 = vpop.f32.mrb[0].mxu0
      %v8372 = vpop.f32.mrb[0].mxu0
      %v8373 = vadd.f32 0.0, %v8372
      %v8374 = vpop.f32.mrb[0].mxu0
      %8375 = vmatprep.mubr.bf16.mxu0 0
      %8376 = vmatmul.mubr.bf16.gmra.mrb[0].mxu0 %v8253
      %v8377 = vpop.f32.mrb[0].mxu0
      %v8378 = vadd.f32 0.0, %v8377
      %v8379 = vpop.f32.mrb[0].mxu0
      %v8380 = vpop.f32.mrb[0].mxu0
      %v8381 = vadd.f32 0.0, %v8380
      %v8382 = vpop.f32.mrb[0].mxu0
      %8383 = vmatprep.mubr.bf16.mxu0 0
      %8384 = vmatmul.mubr.bf16.gmra.mrb[0].mxu0 %v8256
      %v8385 = vpop.f32.mrb[0].mxu0
      %v8386 = vadd.f32 0.0, %v8385
      %v8387 = vpop.f32.mrb[0].mxu0
      %v8388 = vpop.f32.mrb[0].mxu0
      %v8389 = vadd.f32 0.0, %v8388
      %v8390 = vpop.f32.mrb[0].mxu0
      %8391 = vmatprep.mubr.bf16.mxu0 0
      %8392 = vmatmul.mubr.bf16.gmra.mrb[0].mxu0 %v8259
      %v8393 = vpop.f32.mrb[0].mxu0
      %v8394 = vadd.f32 0.0, %v8393
      %v8395 = vpop.f32.mrb[0].mxu0
      %v8396 = vpop.f32.mrb[0].mxu0
      %v8397 = vadd.f32 0.0, %v8396
      %v8398 = vpop.f32.mrb[0].mxu0
      %8399 = vmatprep.mubr.bf16.mxu0 0
      %8400 = vmatmul.mubr.bf16.gmra.mrb[0].mxu0 %v8262
      %v8401 = vpop.f32.mrb[0].mxu0
      %v8402 = vadd.f32 0.0, %v8401
      %v8403 = vpop.f32.mrb[0].mxu0
      %v8404 = vpop.f32.mrb[0].mxu0
      %v8405 = vadd.f32 0.0, %v8404
      %v8406 = vpop.f32.mrb[0].mxu0
      %8407 = vmatprep.mubr.bf16.mxu0 0
      %8408 = vmatmul.mubr.bf16.gmra.mrb[0].mxu0 %v8265
      %v8409 = vpop.f32.mrb[0].mxu0
      %v8410 = vadd.f32 0.0, %v8409
      %v8411 = vpop.f32.mrb[0].mxu0
      %v8412 = vpop.f32.mrb[0].mxu0
      %v8413 = vadd.f32 0.0, %v8412
      %v8414 = vpop.f32.mrb[0].mxu0
      %8415 = vmatprep.mubr.bf16.mxu0 0
      %8416 = vmatmul.mubr.bf16.gmra.mrb[0].mxu0 %v8268
      %v8417 = vpop.f32.mrb[0].mxu0
      %v8418 = vadd.f32 0.0, %v8417
      %v8419 = vpop.f32.mrb[0].mxu0
      %v8420 = vpop.f32.mrb[0].mxu0
      %v8421 = vadd.f32 0.0, %v8420
      %v8422 = vpop.f32.mrb[0].mxu0
      %8423 = vmatprep.mubr.bf16.mxu0 0
      %8424 = vmatmul.mubr.bf16.gmra.mrb[0].mxu0 %v8271
      %v8425 = vpop.f32.mrb[0].mxu0
      %v8426 = vadd.f32 0.0, %v8425
      %v8427 = vpop.f32.mrb[0].mxu0
      %v8428 = vpop.f32.mrb[0].mxu0
      %v8429 = vadd.f32 0.0, %v8428
      %v8430 = vpop.f32.mrb[0].mxu0
      %8431 = vmatprep.mubr.bf16.mxu0 0
      %8432 = vmatmul.mubr.bf16.gmra.mrb[0].mxu0 %v8274
      %v8433 = vpop.f32.mrb[0].mxu0
      %v8434 = vadd.f32 0.0, %v8433
      %v8435 = vpop.f32.mrb[0].mxu0
      %v8436 = vpop.f32.mrb[0].mxu0
      %v8437 = vadd.f32 0.0, %v8436
      %v8438 = vpop.f32.mrb[0].mxu0
      %8439 = vdwg.mxu0
      %v8440 = vld [vmem:[%s17] sm:$0x1]
      %v8442 = vlaneseq
      %v8443 = vshrl.u32 %v8442, 7
      %v8444 = vsub.s32 0, %v8443
      %v8445 = vrot.slane %v8440, %v8444
      %v8447 = vmul.f32 %v8314, %v8445
      %v8448 = vmul.f32 %v8317, %v8445
      %v8449 = vmul.f32 %v8322, %v8445
      %v8450 = vmul.f32 %v8325, %v8445
      %v8451 = vmul.f32 %v8330, %v8445
      %v8452 = vmul.f32 %v8333, %v8445
      %v8453 = vmul.f32 %v8338, %v8445
      %v8454 = vmul.f32 %v8341, %v8445
      %v8455 = vmul.f32 %v8346, %v8445
      %v8456 = vmul.f32 %v8349, %v8445
      %v8457 = vmul.f32 %v8354, %v8445
      %v8458 = vmul.f32 %v8357, %v8445
      %v8459 = vmul.f32 %v8362, %v8445
      %v8460 = vmul.f32 %v8365, %v8445
      %v8461 = vmul.f32 %v8370, %v8445
      %v8462 = vmul.f32 %v8373, %v8445
      %v8463 = vmul.f32 %v8378, %v8445
      %v8464 = vmul.f32 %v8381, %v8445
      %v8465 = vmul.f32 %v8386, %v8445
      %v8466 = vmul.f32 %v8389, %v8445
      %v8467 = vmul.f32 %v8394, %v8445
      %v8468 = vmul.f32 %v8397, %v8445
      %v8469 = vmul.f32 %v8402, %v8445
      %v8470 = vmul.f32 %v8405, %v8445
      %v8471 = vmul.f32 %v8410, %v8445
      %v8472 = vmul.f32 %v8413, %v8445
      %v8473 = vmul.f32 %v8418, %v8445
      %v8474 = vmul.f32 %v8421, %v8445
      %v8475 = vmul.f32 %v8426, %v8445
      %v8476 = vmul.f32 %v8429, %v8445
      %v8477 = vmul.f32 %v8434, %v8445
      %v8478 = vmul.f32 %v8437, %v8445
      %v8479 = vld [vmem:[%s18] sm:$0x1]
      %v8481 = vlaneseq
      %v8482 = vshrl.u32 %v8481, 7
      %v8483 = vsub.s32 0, %v8482
      %v8484 = vrot.slane %v8479, %v8483
      %v8486 = vadd.f32 %v8447, %v8484
      %v8487 = vadd.f32 %v8448, %v8484
      %v8488 = vadd.f32 %v8449, %v8484
      %v8489 = vadd.f32 %v8450, %v8484
      %v8490 = vadd.f32 %v8451, %v8484
      %v8491 = vadd.f32 %v8452, %v8484
      %v8492 = vadd.f32 %v8453, %v8484
      %v8493 = vadd.f32 %v8454, %v8484
      %v8494 = vadd.f32 %v8455, %v8484
      %v8495 = vadd.f32 %v8456, %v8484
      %v8496 = vadd.f32 %v8457, %v8484
      %v8497 = vadd.f32 %v8458, %v8484
      %v8498 = vadd.f32 %v8459, %v8484
      %v8499 = vadd.f32 %v8460, %v8484
      %v8500 = vadd.f32 %v8461, %v8484
      %v8501 = vadd.f32 %v8462, %v8484
      %v8502 = vadd.f32 %v8463, %v8484
      %v8503 = vadd.f32 %v8464, %v8484
      %v8504 = vadd.f32 %v8465, %v8484
      %v8505 = vadd.f32 %v8466, %v8484
      %v8506 = vadd.f32 %v8467, %v8484
      %v8507 = vadd.f32 %v8468, %v8484
      %v8508 = vadd.f32 %v8469, %v8484
      %v8509 = vadd.f32 %v8470, %v8484
      %v8510 = vadd.f32 %v8471, %v8484
      %v8511 = vadd.f32 %v8472, %v8484
      %v8512 = vadd.f32 %v8473, %v8484
      %v8513 = vadd.f32 %v8474, %v8484
      %v8514 = vadd.f32 %v8475, %v8484
      %v8515 = vadd.f32 %v8476, %v8484
      %v8516 = vadd.f32 %v8477, %v8484
      %v8517 = vadd.f32 %v8478, %v8484
      %v8518 = vmax.f32 %v8486, 0.0
      %v8519 = vmax.f32 %v8487, 0.0
      %v8520 = vmax.f32 %v8488, 0.0
      %v8521 = vmax.f32 %v8489, 0.0
      %v8522 = vmax.f32 %v8490, 0.0
      %v8523 = vmax.f32 %v8491, 0.0
      %v8524 = vmax.f32 %v8492, 0.0
      %v8525 = vmax.f32 %v8493, 0.0
      %v8526 = vmax.f32 %v8494, 0.0
      %v8527 = vmax.f32 %v8495, 0.0
      %v8528 = vmax.f32 %v8496, 0.0
      %v8529 = vmax.f32 %v8497, 0.0
      %v8530 = vmax.f32 %v8498, 0.0
      %v8531 = vmax.f32 %v8499, 0.0
      %v8532 = vmax.f32 %v8500, 0.0
      %v8533 = vmax.f32 %v8501, 0.0
      %v8534 = vmax.f32 %v8502, 0.0
      %v8535 = vmax.f32 %v8503, 0.0
      %v8536 = vmax.f32 %v8504, 0.0
      %v8537 = vmax.f32 %v8505, 0.0
      %v8538 = vmax.f32 %v8506, 0.0
      %v8539 = vmax.f32 %v8507, 0.0
      %v8540 = vmax.f32 %v8508, 0.0
      %v8541 = vmax.f32 %v8509, 0.0
      %v8542 = vmax.f32 %v8510, 0.0
      %v8543 = vmax.f32 %v8511, 0.0
      %v8544 = vmax.f32 %v8512, 0.0
      %v8545 = vmax.f32 %v8513, 0.0
      %v8546 = vmax.f32 %v8514, 0.0
      %v8547 = vmax.f32 %v8515, 0.0
      %v8548 = vmax.f32 %v8516, 0.0
      %v8549 = vmax.f32 %v8517, 0.0
      %v8550 = vpack.c.bf16 %v8519, %v8518
      %v8551 = vpack.c.bf16 %v8521, %v8520
      %v8552 = vpack.c.bf16 %v8523, %v8522
      %v8553 = vpack.c.bf16 %v8525, %v8524
      %v8554 = vpack.c.bf16 %v8527, %v8526
      %v8555 = vpack.c.bf16 %v8529, %v8528
      %v8556 = vpack.c.bf16 %v8531, %v8530
      %v8557 = vpack.c.bf16 %v8533, %v8532
      %v8558 = vpack.c.bf16 %v8535, %v8534
      %v8559 = vpack.c.bf16 %v8537, %v8536
      %v8560 = vpack.c.bf16 %v8539, %v8538
      %v8561 = vpack.c.bf16 %v8541, %v8540
      %v8562 = vpack.c.bf16 %v8543, %v8542
      %v8563 = vpack.c.bf16 %v8545, %v8544
      %v8564 = vpack.c.bf16 %v8547, %v8546
      %v8565 = vpack.c.bf16 %v8549, %v8548
      %v8566 = vld [vmem:[%s19] sm:$0xf]
      %v8567 = vld [vmem:[%s19 + $0x4] sm:$0xf]
      %v8568 = vld [vmem:[%s19 + $0x8] sm:$0xf]
      %v8569 = vld [vmem:[%s19 + $0xc] sm:$0xf]
      %v8574 = vunpack.c.l.b16 %v8566
      %v8575 = vunpack.c.l.b16 %v8567
      %v8576 = vunpack.c.l.b16 %v8568
      %v8577 = vunpack.c.l.b16 %v8569
      %v8578 = vpack.c.b16 %v8575, %v8574
      %v8579 = vpack.c.b16 %v8577, %v8576
      %v8583 = vsel %vm1242, %v8550, 0
      %v8586 = vsel %vm1242, %v8551, 0
      %v8589 = vsel %vm1242, %v8552, 0
      %v8592 = vsel %vm1242, %v8553, 0
      %v8595 = vsel %vm1242, %v8554, 0
      %v8598 = vsel %vm1242, %v8555, 0
      %v8601 = vsel %vm1242, %v8556, 0
      %v8604 = vsel %vm1242, %v8557, 0
      %v8607 = vsel %vm1242, %v8558, 0
      %v8610 = vsel %vm1242, %v8559, 0
      %v8613 = vsel %vm1242, %v8560, 0
      %v8616 = vsel %vm1242, %v8561, 0
      %v8619 = vsel %vm1242, %v8562, 0
      %v8622 = vsel %vm1242, %v8563, 0
      %v8625 = vsel %vm1242, %v8564, 0
      %v8628 = vsel %vm1242, %v8565, 0
      %8630 = vmatprep.subr.bf16.mxu0 0
      %8631 = vmatpush1.bf16.msra.mxu0 %v8578
      %8632 = vmatprep.subr.bf16.mxu0 0
      %8633 = vmatpush1.bf16.msra.mxu0 %v8579
      %8634 = vmatprep.subr.bf16.mxu0 0
      %8635 = vmatpush1.bf16.msra.mxu0 0
      %8636 = vmatprep.subr.bf16.mxu0 0
      %8637 = vmatpush1.bf16.msra.mxu0 0
      %8638 = vmatprep.subr.bf16.mxu0 0
      %8639 = vmatpush1.bf16.msra.mxu0 0
      %8640 = vmatprep.subr.bf16.mxu0 0
      %8641 = vmatpush1.bf16.msra.mxu0 0
      %8642 = vmatprep.subr.bf16.mxu0 0
      %8643 = vmatpush1.bf16.msra.mxu0 0
      %8644 = vmatprep.subr.bf16.mxu0 0
      %8645 = vmatpush1.bf16.msra.mxu0 0
      %8646 = vmatprep.subr.bf16.mxu0 0
      %8647 = vmatpush1.bf16.msra.mxu0 0
      %8648 = vmatprep.subr.bf16.mxu0 0
      %8649 = vmatpush1.bf16.msra.mxu0 0
      %8650 = vmatprep.subr.bf16.mxu0 0
      %8651 = vmatpush1.bf16.msra.mxu0 0
      %8652 = vmatprep.subr.bf16.mxu0 0
      %8653 = vmatpush1.bf16.msra.mxu0 0
      %8654 = vmatprep.subr.bf16.mxu0 0
      %8655 = vmatpush1.bf16.msra.mxu0 0
      %8656 = vmatprep.subr.bf16.mxu0 0
      %8657 = vmatpush1.bf16.msra.mxu0 0
      %8658 = vmatprep.subr.bf16.mxu0 0
      %8659 = vmatpush1.bf16.msra.mxu0 0
      %8660 = vmatprep.subr.bf16.mxu0 0
      %8661 = vmatpush1.bf16.msra.mxu0 0
      %8662 = vmatprep.mubr.bf16.mxu0 0
      %8663 = vmatmul.mubr.bf16.gmra.mrb[0].mxu0 %v8583
      %v8664 = vpop.f32.mrb[0].mxu0
      %v8665 = vadd.f32 0.0, %v8664
      %v8666 = vpop.f32.mrb[0].mxu0
      %v8667 = vpop.f32.mrb[0].mxu0
      %v8668 = vadd.f32 0.0, %v8667
      %v8669 = vpop.f32.mrb[0].mxu0
      %8670 = vmatprep.mubr.bf16.mxu0 0
      %8671 = vmatmul.mubr.bf16.gmra.mrb[0].mxu0 %v8586
      %v8672 = vpop.f32.mrb[0].mxu0
      %v8673 = vadd.f32 0.0, %v8672
      %v8674 = vpop.f32.mrb[0].mxu0
      %v8675 = vpop.f32.mrb[0].mxu0
      %v8676 = vadd.f32 0.0, %v8675
      %v8677 = vpop.f32.mrb[0].mxu0
      %8678 = vmatprep.mubr.bf16.mxu0 0
      %8679 = vmatmul.mubr.bf16.gmra.mrb[0].mxu0 %v8589
      %v8680 = vpop.f32.mrb[0].mxu0
      %v8681 = vadd.f32 0.0, %v8680
      %v8682 = vpop.f32.mrb[0].mxu0
      %v8683 = vpop.f32.mrb[0].mxu0
      %v8684 = vadd.f32 0.0, %v8683
      %v8685 = vpop.f32.mrb[0].mxu0
      %8686 = vmatprep.mubr.bf16.mxu0 0
      %8687 = vmatmul.mubr.bf16.gmra.mrb[0].mxu0 %v8592
      %v8688 = vpop.f32.mrb[0].mxu0
      %v8689 = vadd.f32 0.0, %v8688
      %v8690 = vpop.f32.mrb[0].mxu0
      %v8691 = vpop.f32.mrb[0].mxu0
      %v8692 = vadd.f32 0.0, %v8691
      %v8693 = vpop.f32.mrb[0].mxu0
      %8694 = vmatprep.mubr.bf16.mxu0 0
      %8695 = vmatmul.mubr.bf16.gmra.mrb[0].mxu0 %v8595
      %v8696 = vpop.f32.mrb[0].mxu0
      %v8697 = vadd.f32 0.0, %v8696
      %v8698 = vpop.f32.mrb[0].mxu0
      %v8699 = vpop.f32.mrb[0].mxu0
      %v8700 = vadd.f32 0.0, %v8699
      %v8701 = vpop.f32.mrb[0].mxu0
      %8702 = vmatprep.mubr.bf16.mxu0 0
      %8703 = vmatmul.mubr.bf16.gmra.mrb[0].mxu0 %v8598
      %v8704 = vpop.f32.mrb[0].mxu0
      %v8705 = vadd.f32 0.0, %v8704
      %v8706 = vpop.f32.mrb[0].mxu0
      %v8707 = vpop.f32.mrb[0].mxu0
      %v8708 = vadd.f32 0.0, %v8707
      %v8709 = vpop.f32.mrb[0].mxu0
      %8710 = vmatprep.mubr.bf16.mxu0 0
      %8711 = vmatmul.mubr.bf16.gmra.mrb[0].mxu0 %v8601
      %v8712 = vpop.f32.mrb[0].mxu0
      %v8713 = vadd.f32 0.0, %v8712
      %v8714 = vpop.f32.mrb[0].mxu0
      %v8715 = vpop.f32.mrb[0].mxu0
      %v8716 = vadd.f32 0.0, %v8715
      %v8717 = vpop.f32.mrb[0].mxu0
      %8718 = vmatprep.mubr.bf16.mxu0 0
      %8719 = vmatmul.mubr.bf16.gmra.mrb[0].mxu0 %v8604
      %v8720 = vpop.f32.mrb[0].mxu0
      %v8721 = vadd.f32 0.0, %v8720
      %v8722 = vpop.f32.mrb[0].mxu0
      %v8723 = vpop.f32.mrb[0].mxu0
      %v8724 = vadd.f32 0.0, %v8723
      %v8725 = vpop.f32.mrb[0].mxu0
      %8726 = vmatprep.mubr.bf16.mxu0 0
      %8727 = vmatmul.mubr.bf16.gmra.mrb[0].mxu0 %v8607
      %v8728 = vpop.f32.mrb[0].mxu0
      %v8729 = vadd.f32 0.0, %v8728
      %v8730 = vpop.f32.mrb[0].mxu0
      %v8731 = vpop.f32.mrb[0].mxu0
      %v8732 = vadd.f32 0.0, %v8731
      %v8733 = vpop.f32.mrb[0].mxu0
      %8734 = vmatprep.mubr.bf16.mxu0 0
      %8735 = vmatmul.mubr.bf16.gmra.mrb[0].mxu0 %v8610
      %v8736 = vpop.f32.mrb[0].mxu0
      %v8737 = vadd.f32 0.0, %v8736
      %v8738 = vpop.f32.mrb[0].mxu0
      %v8739 = vpop.f32.mrb[0].mxu0
      %v8740 = vadd.f32 0.0, %v8739
      %v8741 = vpop.f32.mrb[0].mxu0
      %8742 = vmatprep.mubr.bf16.mxu0 0
      %8743 = vmatmul.mubr.bf16.gmra.mrb[0].mxu0 %v8613
      %v8744 = vpop.f32.mrb[0].mxu0
      %v8745 = vadd.f32 0.0, %v8744
      %v8746 = vpop.f32.mrb[0].mxu0
      %v8747 = vpop.f32.mrb[0].mxu0
      %v8748 = vadd.f32 0.0, %v8747
      %v8749 = vpop.f32.mrb[0].mxu0
      %8750 = vmatprep.mubr.bf16.mxu0 0
      %8751 = vmatmul.mubr.bf16.gmra.mrb[0].mxu0 %v8616
      %v8752 = vpop.f32.mrb[0].mxu0
      %v8753 = vadd.f32 0.0, %v8752
      %v8754 = vpop.f32.mrb[0].mxu0
      %v8755 = vpop.f32.mrb[0].mxu0
      %v8756 = vadd.f32 0.0, %v8755
      %v8757 = vpop.f32.mrb[0].mxu0
      %8758 = vmatprep.mubr.bf16.mxu0 0
      %8759 = vmatmul.mubr.bf16.gmra.mrb[0].mxu0 %v8619
      %v8760 = vpop.f32.mrb[0].mxu0
      %v8761 = vadd.f32 0.0, %v8760
      %v8762 = vpop.f32.mrb[0].mxu0
      %v8763 = vpop.f32.mrb[0].mxu0
      %v8764 = vadd.f32 0.0, %v8763
      %v8765 = vpop.f32.mrb[0].mxu0
      %8766 = vmatprep.mubr.bf16.mxu0 0
      %8767 = vmatmul.mubr.bf16.gmra.mrb[0].mxu0 %v8622
      %v8768 = vpop.f32.mrb[0].mxu0
      %v8769 = vadd.f32 0.0, %v8768
      %v8770 = vpop.f32.mrb[0].mxu0
      %v8771 = vpop.f32.mrb[0].mxu0
      %v8772 = vadd.f32 0.0, %v8771
      %v8773 = vpop.f32.mrb[0].mxu0
      %8774 = vmatprep.mubr.bf16.mxu0 0
      %8775 = vmatmul.mubr.bf16.gmra.mrb[0].mxu0 %v8625
      %v8776 = vpop.f32.mrb[0].mxu0
      %v8777 = vadd.f32 0.0, %v8776
      %v8778 = vpop.f32.mrb[0].mxu0
      %v8779 = vpop.f32.mrb[0].mxu0
      %v8780 = vadd.f32 0.0, %v8779
      %v8781 = vpop.f32.mrb[0].mxu0
      %8782 = vmatprep.mubr.bf16.mxu0 0
      %8783 = vmatmul.mubr.bf16.gmra.mrb[0].mxu0 %v8628
      %v8784 = vpop.f32.mrb[0].mxu0
      %v8785 = vadd.f32 0.0, %v8784
      %v8786 = vpop.f32.mrb[0].mxu0
      %v8787 = vpop.f32.mrb[0].mxu0
      %v8788 = vadd.f32 0.0, %v8787
      %v8789 = vpop.f32.mrb[0].mxu0
      %8790 = vdwg.mxu0
      %v8791 = vmul.f32 %v8665, %v1587
      %v8792 = vmul.f32 %v8668, %v1589
      %v8793 = vmul.f32 %v8673, %v1591
      %v8794 = vmul.f32 %v8676, %v1593
      %v8795 = vmul.f32 %v8681, %v1595
      %v8796 = vmul.f32 %v8684, %v1597
      %v8797 = vmul.f32 %v8689, %v1599
      %v8798 = vmul.f32 %v8692, %v1601
      %v8799 = vmul.f32 %v8697, %v1603
      %v8800 = vmul.f32 %v8700, %v1605
      %v8801 = vmul.f32 %v8705, %v1607
      %v8802 = vmul.f32 %v8708, %v1609
      %v8803 = vmul.f32 %v8713, %v1611
      %v8804 = vmul.f32 %v8716, %v1613
      %v8805 = vmul.f32 %v8721, %v1615
      %v8806 = vmul.f32 %v8724, %v1617
      %v8807 = vmul.f32 %v8729, %v1619
      %v8808 = vmul.f32 %v8732, %v1621
      %v8809 = vmul.f32 %v8737, %v1623
      %v8810 = vmul.f32 %v8740, %v1625
      %v8811 = vmul.f32 %v8745, %v1627
      %v8812 = vmul.f32 %v8748, %v1629
      %v8813 = vmul.f32 %v8753, %v1631
      %v8814 = vmul.f32 %v8756, %v1633
      %v8815 = vmul.f32 %v8761, %v1635
      %v8816 = vmul.f32 %v8764, %v1637
      %v8817 = vmul.f32 %v8769, %v1639
      %v8818 = vmul.f32 %v8772, %v1641
      %v8819 = vmul.f32 %v8777, %v1643
      %v8820 = vmul.f32 %v8780, %v1642
      %v8821 = vadd.f32 %v8791, 0.0
      %v8822 = vadd.f32 %v8792, 0.0
      %v8823 = vadd.f32 %v8793, 0.0
      %v8824 = vadd.f32 %v8794, 0.0
      %v8825 = vadd.f32 %v8795, 0.0
      %v8826 = vadd.f32 %v8796, 0.0
      %v8827 = vadd.f32 %v8797, 0.0
      %v8828 = vadd.f32 %v8798, 0.0
      %v8829 = vadd.f32 %v8799, 0.0
      %v8830 = vadd.f32 %v8800, 0.0
      %v8831 = vadd.f32 %v8801, 0.0
      %v8832 = vadd.f32 %v8802, 0.0
      %v8833 = vadd.f32 %v8803, 0.0
      %v8834 = vadd.f32 %v8804, 0.0
      %v8835 = vadd.f32 %v8805, 0.0
      %v8836 = vadd.f32 %v8806, 0.0
      %v8837 = vadd.f32 %v8807, 0.0
      %v8838 = vadd.f32 %v8808, 0.0
      %v8839 = vadd.f32 %v8809, 0.0
      %v8840 = vadd.f32 %v8810, 0.0
      %v8841 = vadd.f32 %v8811, 0.0
      %v8842 = vadd.f32 %v8812, 0.0
      %v8843 = vadd.f32 %v8813, 0.0
      %v8844 = vadd.f32 %v8814, 0.0
      %v8845 = vadd.f32 %v8815, 0.0
      %v8846 = vadd.f32 %v8816, 0.0
      %v8847 = vadd.f32 %v8817, 0.0
      %v8848 = vadd.f32 %v8818, 0.0
      %v8849 = vadd.f32 %v8819, 0.0
      %v8850 = vadd.f32 %v8820, 0.0
      %v8851 = vmul.f32 %v8665, %v1753
      %v8852 = vmul.f32 %v8668, %v1757
      %v8853 = vmul.f32 %v8673, %v1761
      %v8854 = vmul.f32 %v8676, %v1765
      %v8855 = vmul.f32 %v8681, %v1769
      %v8856 = vmul.f32 %v8684, %v1773
      %v8857 = vmul.f32 %v8689, %v1777
      %v8858 = vmul.f32 %v8692, %v1781
      %v8859 = vmul.f32 %v8697, %v1785
      %v8860 = vmul.f32 %v8700, %v1789
      %v8861 = vmul.f32 %v8705, %v1793
      %v8862 = vmul.f32 %v8708, %v1797
      %v8863 = vmul.f32 %v8713, %v1801
      %v8864 = vmul.f32 %v8716, %v1805
      %v8865 = vmul.f32 %v8721, %v1809
      %v8866 = vmul.f32 %v8724, %v1813
      %v8867 = vmul.f32 %v8729, %v1817
      %v8868 = vmul.f32 %v8732, %v1821
      %v8869 = vmul.f32 %v8737, %v1825
      %v8870 = vmul.f32 %v8740, %v1829
      %v8871 = vmul.f32 %v8745, %v1833
      %v8872 = vmul.f32 %v8748, %v1837
      %v8873 = vmul.f32 %v8753, %v1841
      %v8874 = vmul.f32 %v8756, %v1845
      %v8875 = vmul.f32 %v8761, %v1849
      %v8876 = vmul.f32 %v8764, %v1853
      %v8877 = vmul.f32 %v8769, %v1857
      %v8878 = vmul.f32 %v8772, %v1861
      %v8879 = vmul.f32 %v8777, %v1865
      %v8880 = vmul.f32 %v8780, %v1869
      %v8911 = vrot.slane %v8851, 1
      %v8912 = vsel %vm1580, %v1936, %v8911
      %v8913 = vrot.slane %v8852, 1
      %v8914 = vsel %vm1580, %v8911, %v8913
      %v8915 = vrot.slane %v8853, 1
      %v8916 = vsel %vm1580, %v8913, %v8915
      %v8917 = vrot.slane %v8854, 1
      %v8918 = vsel %vm1580, %v8915, %v8917
      %v8919 = vrot.slane %v8855, 1
      %v8920 = vsel %vm1580, %v8917, %v8919
      %v8921 = vrot.slane %v8856, 1
      %v8922 = vsel %vm1580, %v8919, %v8921
      %v8923 = vrot.slane %v8857, 1
      %v8924 = vsel %vm1580, %v8921, %v8923
      %v8925 = vrot.slane %v8858, 1
      %v8926 = vsel %vm1580, %v8923, %v8925
      %v8927 = vrot.slane %v8859, 1
      %v8928 = vsel %vm1580, %v8925, %v8927
      %v8929 = vrot.slane %v8860, 1
      %v8930 = vsel %vm1580, %v8927, %v8929
      %v8931 = vrot.slane %v8861, 1
      %v8932 = vsel %vm1580, %v8929, %v8931
      %v8933 = vrot.slane %v8862, 1
      %v8934 = vsel %vm1580, %v8931, %v8933
      %v8935 = vrot.slane %v8863, 1
      %v8936 = vsel %vm1580, %v8933, %v8935
      %v8937 = vrot.slane %v8864, 1
      %v8938 = vsel %vm1580, %v8935, %v8937
      %v8939 = vrot.slane %v8865, 1
      %v8940 = vsel %vm1580, %v8937, %v8939
      %v8941 = vrot.slane %v8866, 1
      %v8942 = vsel %vm1580, %v8939, %v8941
      %v8943 = vrot.slane %v8867, 1
      %v8944 = vsel %vm1580, %v8941, %v8943
      %v8945 = vrot.slane %v8868, 1
      %v8946 = vsel %vm1580, %v8943, %v8945
      %v8947 = vrot.slane %v8869, 1
      %v8948 = vsel %vm1580, %v8945, %v8947
      %v8949 = vrot.slane %v8870, 1
      %v8950 = vsel %vm1580, %v8947, %v8949
      %v8951 = vrot.slane %v8871, 1
      %v8952 = vsel %vm1580, %v8949, %v8951
      %v8953 = vrot.slane %v8872, 1
      %v8954 = vsel %vm1580, %v8951, %v8953
      %v8955 = vrot.slane %v8873, 1
      %v8956 = vsel %vm1580, %v8953, %v8955
      %v8957 = vrot.slane %v8874, 1
      %v8958 = vsel %vm1580, %v8955, %v8957
      %v8959 = vrot.slane %v8875, 1
      %v8960 = vsel %vm1580, %v8957, %v8959
      %v8961 = vrot.slane %v8876, 1
      %v8962 = vsel %vm1580, %v8959, %v8961
      %v8963 = vrot.slane %v8877, 1
      %v8964 = vsel %vm1580, %v8961, %v8963
      %v8965 = vrot.slane %v8878, 1
      %v8966 = vsel %vm1580, %v8963, %v8965
      %v8967 = vrot.slane %v8879, 1
      %v8968 = vsel %vm1580, %v8965, %v8967
      %v8969 = vrot.slane %v8880, 1
      %v8970 = vsel %vm1580, %v8967, %v8969
      %8971 = vrot.lane.b32.xlu0 %v8912, 120
      %v8972 = vpop.permute.xlu0 %8971
      %8973 = vrot.lane.b32.xlu0 %v8914, 120
      %v8974 = vpop.permute.xlu0 %8973
      %8975 = vrot.lane.b32.xlu0 %v8916, 120
      %v8976 = vpop.permute.xlu0 %8975
      %8977 = vrot.lane.b32.xlu0 %v8918, 120
      %v8978 = vpop.permute.xlu0 %8977
      %8979 = vrot.lane.b32.xlu0 %v8920, 120
      %v8980 = vpop.permute.xlu0 %8979
      %8981 = vrot.lane.b32.xlu0 %v8922, 120
      %v8982 = vpop.permute.xlu0 %8981
      %8983 = vrot.lane.b32.xlu0 %v8924, 120
      %v8984 = vpop.permute.xlu0 %8983
      %8985 = vrot.lane.b32.xlu0 %v8926, 120
      %v8986 = vpop.permute.xlu0 %8985
      %8987 = vrot.lane.b32.xlu0 %v8928, 120
      %v8988 = vpop.permute.xlu0 %8987
      %8989 = vrot.lane.b32.xlu0 %v8930, 120
      %v8990 = vpop.permute.xlu0 %8989
      %8991 = vrot.lane.b32.xlu0 %v8932, 120
      %v8992 = vpop.permute.xlu0 %8991
      %8993 = vrot.lane.b32.xlu0 %v8934, 120
      %v8994 = vpop.permute.xlu0 %8993
      %8995 = vrot.lane.b32.xlu0 %v8936, 120
      %v8996 = vpop.permute.xlu0 %8995
      %8997 = vrot.lane.b32.xlu0 %v8938, 120
      %v8998 = vpop.permute.xlu0 %8997
      %8999 = vrot.lane.b32.xlu0 %v8940, 120
      %v9000 = vpop.permute.xlu0 %8999
      %9001 = vrot.lane.b32.xlu0 %v8942, 120
      %v9002 = vpop.permute.xlu0 %9001
      %9003 = vrot.lane.b32.xlu0 %v8944, 120
      %v9004 = vpop.permute.xlu0 %9003
      %9005 = vrot.lane.b32.xlu0 %v8946, 120
      %v9006 = vpop.permute.xlu0 %9005
      %9007 = vrot.lane.b32.xlu0 %v8948, 120
      %v9008 = vpop.permute.xlu0 %9007
      %9009 = vrot.lane.b32.xlu0 %v8950, 120
      %v9010 = vpop.permute.xlu0 %9009
      %9011 = vrot.lane.b32.xlu0 %v8952, 120
      %v9012 = vpop.permute.xlu0 %9011
      %9013 = vrot.lane.b32.xlu0 %v8954, 120
      %v9014 = vpop.permute.xlu0 %9013
      %9015 = vrot.lane.b32.xlu0 %v8956, 120
      %v9016 = vpop.permute.xlu0 %9015
      %9017 = vrot.lane.b32.xlu0 %v8958, 120
      %v9018 = vpop.permute.xlu0 %9017
      %9019 = vrot.lane.b32.xlu0 %v8960, 120
      %v9020 = vpop.permute.xlu0 %9019
      %9021 = vrot.lane.b32.xlu0 %v8962, 120
      %v9022 = vpop.permute.xlu0 %9021
      %9023 = vrot.lane.b32.xlu0 %v8964, 120
      %v9024 = vpop.permute.xlu0 %9023
      %9025 = vrot.lane.b32.xlu0 %v8966, 120
      %v9026 = vpop.permute.xlu0 %9025
      %9027 = vrot.lane.b32.xlu0 %v8968, 120
      %v9028 = vpop.permute.xlu0 %9027
      %9029 = vrot.lane.b32.xlu0 %v8970, 120
      %v9030 = vpop.permute.xlu0 %9029
      %9031 = vrot.lane.b32.xlu0 %v8969, 120
      %v9032 = vpop.permute.xlu0 %9031
      %v9064 = vadd.f32 %v1712, %v8972
      %v9065 = vadd.f32 %v8821, %v8974
      %v9066 = vadd.f32 %v8822, %v8976
      %v9067 = vadd.f32 %v8823, %v8978
      %v9068 = vadd.f32 %v8824, %v8980
      %v9069 = vadd.f32 %v8825, %v8982
      %v9070 = vadd.f32 %v8826, %v8984
      %v9071 = vadd.f32 %v8827, %v8986
      %v9072 = vadd.f32 %v8828, %v8988
      %v9073 = vadd.f32 %v8829, %v8990
      %v9074 = vadd.f32 %v8830, %v8992
      %v9075 = vadd.f32 %v8831, %v8994
      %v9076 = vadd.f32 %v8832, %v8996
      %v9077 = vadd.f32 %v8833, %v8998
      %v9078 = vadd.f32 %v8834, %v9000
      %v9079 = vadd.f32 %v8835, %v9002
      %v9080 = vadd.f32 %v8836, %v9004
      %v9081 = vadd.f32 %v8837, %v9006
      %v9082 = vadd.f32 %v8838, %v9008
      %v9083 = vadd.f32 %v8839, %v9010
      %v9084 = vadd.f32 %v8840, %v9012
      %v9085 = vadd.f32 %v8841, %v9014
      %v9086 = vadd.f32 %v8842, %v9016
      %v9087 = vadd.f32 %v8843, %v9018
      %v9088 = vadd.f32 %v8844, %v9020
      %v9089 = vadd.f32 %v8845, %v9022
      %v9090 = vadd.f32 %v8846, %v9024
      %v9091 = vadd.f32 %v8847, %v9026
      %v9092 = vadd.f32 %v8848, %v9028
      %v9093 = vadd.f32 %v8849, %v9030
      %v9094 = vadd.f32 %v8850, %v9032
      %v9095 = vmul.f32 %v8665, %v2231
      %v9096 = vmul.f32 %v8668, %v2233
      %v9097 = vmul.f32 %v8673, %v2235
      %v9098 = vmul.f32 %v8676, %v2237
      %v9099 = vmul.f32 %v8681, %v2239
      %v9100 = vmul.f32 %v8684, %v2241
      %v9101 = vmul.f32 %v8689, %v2243
      %v9102 = vmul.f32 %v8692, %v2245
      %v9103 = vmul.f32 %v8697, %v2247
      %v9104 = vmul.f32 %v8700, %v2249
      %v9105 = vmul.f32 %v8705, %v2251
      %v9106 = vmul.f32 %v8708, %v2253
      %v9107 = vmul.f32 %v8713, %v2255
      %v9108 = vmul.f32 %v8716, %v2257
      %v9109 = vmul.f32 %v8721, %v2259
      %v9110 = vmul.f32 %v8724, %v2261
      %v9111 = vmul.f32 %v8729, %v2263
      %v9112 = vmul.f32 %v8732, %v2265
      %v9113 = vmul.f32 %v8737, %v2267
      %v9114 = vmul.f32 %v8740, %v2269
      %v9115 = vmul.f32 %v8745, %v2271
      %v9116 = vmul.f32 %v8748, %v2273
      %v9117 = vmul.f32 %v8753, %v2275
      %v9118 = vmul.f32 %v8756, %v2277
      %v9119 = vmul.f32 %v8761, %v2279
      %v9120 = vmul.f32 %v8764, %v2281
      %v9121 = vmul.f32 %v8769, %v2283
      %v9122 = vmul.f32 %v8772, %v2285
      %v9123 = vmul.f32 %v8777, %v2287
      %v9124 = vmul.f32 %v8780, %v2289
      %v9125 = vmul.f32 %v8785, %v2288
      %v9157 = vrot.slane %v9095, 2
      %v9158 = vsel %vm2389, %v2391, %v9157
      %v9159 = vrot.slane %v9096, 2
      %v9160 = vsel %vm2389, %v9157, %v9159
      %v9161 = vrot.slane %v9097, 2
      %v9162 = vsel %vm2389, %v9159, %v9161
      %v9163 = vrot.slane %v9098, 2
      %v9164 = vsel %vm2389, %v9161, %v9163
      %v9165 = vrot.slane %v9099, 2
      %v9166 = vsel %vm2389, %v9163, %v9165
      %v9167 = vrot.slane %v9100, 2
      %v9168 = vsel %vm2389, %v9165, %v9167
      %v9169 = vrot.slane %v9101, 2
      %v9170 = vsel %vm2389, %v9167, %v9169
      %v9171 = vrot.slane %v9102, 2
      %v9172 = vsel %vm2389, %v9169, %v9171
      %v9173 = vrot.slane %v9103, 2
      %v9174 = vsel %vm2389, %v9171, %v9173
      %v9175 = vrot.slane %v9104, 2
      %v9176 = vsel %vm2389, %v9173, %v9175
      %v9177 = vrot.slane %v9105, 2
      %v9178 = vsel %vm2389, %v9175, %v9177
      %v9179 = vrot.slane %v9106, 2
      %v9180 = vsel %vm2389, %v9177, %v9179
      %v9181 = vrot.slane %v9107, 2
      %v9182 = vsel %vm2389, %v9179, %v9181
      %v9183 = vrot.slane %v9108, 2
      %v9184 = vsel %vm2389, %v9181, %v9183
      %v9185 = vrot.slane %v9109, 2
      %v9186 = vsel %vm2389, %v9183, %v9185
      %v9187 = vrot.slane %v9110, 2
      %v9188 = vsel %vm2389, %v9185, %v9187
      %v9189 = vrot.slane %v9111, 2
      %v9190 = vsel %vm2389, %v9187, %v9189
      %v9191 = vrot.slane %v9112, 2
      %v9192 = vsel %vm2389, %v9189, %v9191
      %v9193 = vrot.slane %v9113, 2
      %v9194 = vsel %vm2389, %v9191, %v9193
      %v9195 = vrot.slane %v9114, 2
      %v9196 = vsel %vm2389, %v9193, %v9195
      %v9197 = vrot.slane %v9115, 2
      %v9198 = vsel %vm2389, %v9195, %v9197
      %v9199 = vrot.slane %v9116, 2
      %v9200 = vsel %vm2389, %v9197, %v9199
      %v9201 = vrot.slane %v9117, 2
      %v9202 = vsel %vm2389, %v9199, %v9201
      %v9203 = vrot.slane %v9118, 2
      %v9204 = vsel %vm2389, %v9201, %v9203
      %v9205 = vrot.slane %v9119, 2
      %v9206 = vsel %vm2389, %v9203, %v9205
      %v9207 = vrot.slane %v9120, 2
      %v9208 = vsel %vm2389, %v9205, %v9207
      %v9209 = vrot.slane %v9121, 2
      %v9210 = vsel %vm2389, %v9207, %v9209
      %v9211 = vrot.slane %v9122, 2
      %v9212 = vsel %vm2389, %v9209, %v9211
      %v9213 = vrot.slane %v9123, 2
      %v9214 = vsel %vm2389, %v9211, %v9213
      %v9215 = vrot.slane %v9124, 2
      %v9216 = vsel %vm2389, %v9213, %v9215
      %v9217 = vrot.slane %v9125, 2
      %v9218 = vsel %vm2389, %v9215, %v9217
      %9219 = vrot.lane.b32.xlu0 %v9158, 112
      %v9220 = vpop.permute.xlu0 %9219
      %9221 = vrot.lane.b32.xlu0 %v9160, 112
      %v9222 = vpop.permute.xlu0 %9221
      %9223 = vrot.lane.b32.xlu0 %v9162, 112
      %v9224 = vpop.permute.xlu0 %9223
      %9225 = vrot.lane.b32.xlu0 %v9164, 112
      %v9226 = vpop.permute.xlu0 %9225
      %9227 = vrot.lane.b32.xlu0 %v9166, 112
      %v9228 = vpop.permute.xlu0 %9227
      %9229 = vrot.lane.b32.xlu0 %v9168, 112
      %v9230 = vpop.permute.xlu0 %9229
      %9231 = vrot.lane.b32.xlu0 %v9170, 112
      %v9232 = vpop.permute.xlu0 %9231
      %9233 = vrot.lane.b32.xlu0 %v9172, 112
      %v9234 = vpop.permute.xlu0 %9233
      %9235 = vrot.lane.b32.xlu0 %v9174, 112
      %v9236 = vpop.permute.xlu0 %9235
      %9237 = vrot.lane.b32.xlu0 %v9176, 112
      %v9238 = vpop.permute.xlu0 %9237
      %9239 = vrot.lane.b32.xlu0 %v9178, 112
      %v9240 = vpop.permute.xlu0 %9239
      %9241 = vrot.lane.b32.xlu0 %v9180, 112
      %v9242 = vpop.permute.xlu0 %9241
      %9243 = vrot.lane.b32.xlu0 %v9182, 112
      %v9244 = vpop.permute.xlu0 %9243
      %9245 = vrot.lane.b32.xlu0 %v9184, 112
      %v9246 = vpop.permute.xlu0 %9245
      %9247 = vrot.lane.b32.xlu0 %v9186, 112
      %v9248 = vpop.permute.xlu0 %9247
      %9249 = vrot.lane.b32.xlu0 %v9188, 112
      %v9250 = vpop.permute.xlu0 %9249
      %9251 = vrot.lane.b32.xlu0 %v9190, 112
      %v9252 = vpop.permute.xlu0 %9251
      %9253 = vrot.lane.b32.xlu0 %v9192, 112
      %v9254 = vpop.permute.xlu0 %9253
      %9255 = vrot.lane.b32.xlu0 %v9194, 112
      %v9256 = vpop.permute.xlu0 %9255
      %9257 = vrot.lane.b32.xlu0 %v9196, 112
      %v9258 = vpop.permute.xlu0 %9257
      %9259 = vrot.lane.b32.xlu0 %v9198, 112
      %v9260 = vpop.permute.xlu0 %9259
      %9261 = vrot.lane.b32.xlu0 %v9200, 112
      %v9262 = vpop.permute.xlu0 %9261
      %9263 = vrot.lane.b32.xlu0 %v9202, 112
      %v9264 = vpop.permute.xlu0 %9263
      %9265 = vrot.lane.b32.xlu0 %v9204, 112
      %v9266 = vpop.permute.xlu0 %9265
      %9267 = vrot.lane.b32.xlu0 %v9206, 112
      %v9268 = vpop.permute.xlu0 %9267
      %9269 = vrot.lane.b32.xlu0 %v9208, 112
      %v9270 = vpop.permute.xlu0 %9269
      %9271 = vrot.lane.b32.xlu0 %v9210, 112
      %v9272 = vpop.permute.xlu0 %9271
      %9273 = vrot.lane.b32.xlu0 %v9212, 112
      %v9274 = vpop.permute.xlu0 %9273
      %9275 = vrot.lane.b32.xlu0 %v9214, 112
      %v9276 = vpop.permute.xlu0 %9275
      %9277 = vrot.lane.b32.xlu0 %v9216, 112
      %v9278 = vpop.permute.xlu0 %9277
      %9279 = vrot.lane.b32.xlu0 %v9218, 112
      %v9280 = vpop.permute.xlu0 %9279
      %v9312 = vadd.f32 %v9064, %v9220
      %v9313 = vadd.f32 %v9065, %v9222
      %v9314 = vadd.f32 %v9066, %v9224
      %v9315 = vadd.f32 %v9067, %v9226
      %v9316 = vadd.f32 %v9068, %v9228
      %v9317 = vadd.f32 %v9069, %v9230
      %v9318 = vadd.f32 %v9070, %v9232
      %v9319 = vadd.f32 %v9071, %v9234
      %v9320 = vadd.f32 %v9072, %v9236
      %v9321 = vadd.f32 %v9073, %v9238
      %v9322 = vadd.f32 %v9074, %v9240
      %v9323 = vadd.f32 %v9075, %v9242
      %v9324 = vadd.f32 %v9076, %v9244
      %v9325 = vadd.f32 %v9077, %v9246
      %v9326 = vadd.f32 %v9078, %v9248
      %v9327 = vadd.f32 %v9079, %v9250
      %v9328 = vadd.f32 %v9080, %v9252
      %v9329 = vadd.f32 %v9081, %v9254
      %v9330 = vadd.f32 %v9082, %v9256
      %v9331 = vadd.f32 %v9083, %v9258
      %v9332 = vadd.f32 %v9084, %v9260
      %v9333 = vadd.f32 %v9085, %v9262
      %v9334 = vadd.f32 %v9086, %v9264
      %v9335 = vadd.f32 %v9087, %v9266
      %v9336 = vadd.f32 %v9088, %v9268
      %v9337 = vadd.f32 %v9089, %v9270
      %v9338 = vadd.f32 %v9090, %v9272
      %v9339 = vadd.f32 %v9091, %v9274
      %v9340 = vadd.f32 %v9092, %v9276
      %v9341 = vadd.f32 %v9093, %v9278
      %v9342 = vadd.f32 %v9094, %v9280
      %v9343 = vmul.f32 %v8665, %v2685
      %v9344 = vmul.f32 %v8668, %v2687
      %v9345 = vmul.f32 %v8673, %v2689
      %v9346 = vmul.f32 %v8676, %v2691
      %v9347 = vmul.f32 %v8681, %v2693
      %v9348 = vmul.f32 %v8684, %v2695
      %v9349 = vmul.f32 %v8689, %v2697
      %v9350 = vmul.f32 %v8692, %v2699
      %v9351 = vmul.f32 %v8697, %v2701
      %v9352 = vmul.f32 %v8700, %v2703
      %v9353 = vmul.f32 %v8705, %v2705
      %v9354 = vmul.f32 %v8708, %v2707
      %v9355 = vmul.f32 %v8713, %v2709
      %v9356 = vmul.f32 %v8716, %v2711
      %v9357 = vmul.f32 %v8721, %v2713
      %v9358 = vmul.f32 %v8724, %v2715
      %v9359 = vmul.f32 %v8729, %v2717
      %v9360 = vmul.f32 %v8732, %v2719
      %v9361 = vmul.f32 %v8737, %v2721
      %v9362 = vmul.f32 %v8740, %v2723
      %v9363 = vmul.f32 %v8745, %v2725
      %v9364 = vmul.f32 %v8748, %v2727
      %v9365 = vmul.f32 %v8753, %v2729
      %v9366 = vmul.f32 %v8756, %v2731
      %v9367 = vmul.f32 %v8761, %v2733
      %v9368 = vmul.f32 %v8764, %v2735
      %v9369 = vmul.f32 %v8769, %v2737
      %v9370 = vmul.f32 %v8772, %v2739
      %v9371 = vmul.f32 %v8777, %v2741
      %v9372 = vmul.f32 %v8780, %v2743
      %v9373 = vmul.f32 %v8785, %v2745
      %v9374 = vmul.f32 %v8788, %v2744
      %9407 = vrot.lane.b32.xlu0 %v9343, 104
      %v9408 = vpop.permute.xlu0 %9407
      %9409 = vrot.lane.b32.xlu0 %v9344, 104
      %v9410 = vpop.permute.xlu0 %9409
      %9411 = vrot.lane.b32.xlu0 %v9345, 104
      %v9412 = vpop.permute.xlu0 %9411
      %9413 = vrot.lane.b32.xlu0 %v9346, 104
      %v9414 = vpop.permute.xlu0 %9413
      %9415 = vrot.lane.b32.xlu0 %v9347, 104
      %v9416 = vpop.permute.xlu0 %9415
      %9417 = vrot.lane.b32.xlu0 %v9348, 104
      %v9418 = vpop.permute.xlu0 %9417
      %9419 = vrot.lane.b32.xlu0 %v9349, 104
      %v9420 = vpop.permute.xlu0 %9419
      %9421 = vrot.lane.b32.xlu0 %v9350, 104
      %v9422 = vpop.permute.xlu0 %9421
      %9423 = vrot.lane.b32.xlu0 %v9351, 104
      %v9424 = vpop.permute.xlu0 %9423
      %9425 = vrot.lane.b32.xlu0 %v9352, 104
      %v9426 = vpop.permute.xlu0 %9425
      %9427 = vrot.lane.b32.xlu0 %v9353, 104
      %v9428 = vpop.permute.xlu0 %9427
      %9429 = vrot.lane.b32.xlu0 %v9354, 104
      %v9430 = vpop.permute.xlu0 %9429
      %9431 = vrot.lane.b32.xlu0 %v9355, 104
      %v9432 = vpop.permute.xlu0 %9431
      %9433 = vrot.lane.b32.xlu0 %v9356, 104
      %v9434 = vpop.permute.xlu0 %9433
      %9435 = vrot.lane.b32.xlu0 %v9357, 104
      %v9436 = vpop.permute.xlu0 %9435
      %9437 = vrot.lane.b32.xlu0 %v9358, 104
      %v9438 = vpop.permute.xlu0 %9437
      %9439 = vrot.lane.b32.xlu0 %v9359, 104
      %v9440 = vpop.permute.xlu0 %9439
      %9441 = vrot.lane.b32.xlu0 %v9360, 104
      %v9442 = vpop.permute.xlu0 %9441
      %9443 = vrot.lane.b32.xlu0 %v9361, 104
      %v9444 = vpop.permute.xlu0 %9443
      %9445 = vrot.lane.b32.xlu0 %v9362, 104
      %v9446 = vpop.permute.xlu0 %9445
      %9447 = vrot.lane.b32.xlu0 %v9363, 104
      %v9448 = vpop.permute.xlu0 %9447
      %9449 = vrot.lane.b32.xlu0 %v9364, 104
      %v9450 = vpop.permute.xlu0 %9449
      %9451 = vrot.lane.b32.xlu0 %v9365, 104
      %v9452 = vpop.permute.xlu0 %9451
      %9453 = vrot.lane.b32.xlu0 %v9366, 104
      %v9454 = vpop.permute.xlu0 %9453
      %9455 = vrot.lane.b32.xlu0 %v9367, 104
      %v9456 = vpop.permute.xlu0 %9455
      %9457 = vrot.lane.b32.xlu0 %v9368, 104
      %v9458 = vpop.permute.xlu0 %9457
      %9459 = vrot.lane.b32.xlu0 %v9369, 104
      %v9460 = vpop.permute.xlu0 %9459
      %9461 = vrot.lane.b32.xlu0 %v9370, 104
      %v9462 = vpop.permute.xlu0 %9461
      %9463 = vrot.lane.b32.xlu0 %v9371, 104
      %v9464 = vpop.permute.xlu0 %9463
      %9465 = vrot.lane.b32.xlu0 %v9372, 104
      %v9466 = vpop.permute.xlu0 %9465
      %9467 = vrot.lane.b32.xlu0 %v9373, 104
      %v9468 = vpop.permute.xlu0 %9467
      %9469 = vrot.lane.b32.xlu0 %v9374, 104
      %v9470 = vpop.permute.xlu0 %9469
      %v9503 = vadd.f32 %v2555, %v9408
      %v9504 = vadd.f32 %v9312, %v9410
      %v9505 = vadd.f32 %v9313, %v9412
      %v9506 = vadd.f32 %v9314, %v9414
      %v9507 = vadd.f32 %v9315, %v9416
      %v9508 = vadd.f32 %v9316, %v9418
      %v9509 = vadd.f32 %v9317, %v9420
      %v9510 = vadd.f32 %v9318, %v9422
      %v9511 = vadd.f32 %v9319, %v9424
      %v9512 = vadd.f32 %v9320, %v9426
      %v9513 = vadd.f32 %v9321, %v9428
      %v9514 = vadd.f32 %v9322, %v9430
      %v9515 = vadd.f32 %v9323, %v9432
      %v9516 = vadd.f32 %v9324, %v9434
      %v9517 = vadd.f32 %v9325, %v9436
      %v9518 = vadd.f32 %v9326, %v9438
      %v9519 = vadd.f32 %v9327, %v9440
      %v9520 = vadd.f32 %v9328, %v9442
      %v9521 = vadd.f32 %v9329, %v9444
      %v9522 = vadd.f32 %v9330, %v9446
      %v9523 = vadd.f32 %v9331, %v9448
      %v9524 = vadd.f32 %v9332, %v9450
      %v9525 = vadd.f32 %v9333, %v9452
      %v9526 = vadd.f32 %v9334, %v9454
      %v9527 = vadd.f32 %v9335, %v9456
      %v9528 = vadd.f32 %v9336, %v9458
      %v9529 = vadd.f32 %v9337, %v9460
      %v9530 = vadd.f32 %v9338, %v9462
      %v9531 = vadd.f32 %v9339, %v9464
      %v9532 = vadd.f32 %v9340, %v9466
      %v9533 = vadd.f32 %v9341, %v9468
      %v9534 = vadd.f32 %v9342, %v9470
      %v9535 = vmul.f32 %v8665, %v2979
      %v9536 = vmul.f32 %v8668, %v2983
      %v9537 = vmul.f32 %v8673, %v2987
      %v9538 = vmul.f32 %v8676, %v2991
      %v9539 = vmul.f32 %v8681, %v2995
      %v9540 = vmul.f32 %v8684, %v2999
      %v9541 = vmul.f32 %v8689, %v3003
      %v9542 = vmul.f32 %v8692, %v3007
      %v9543 = vmul.f32 %v8697, %v3011
      %v9544 = vmul.f32 %v8700, %v3015
      %v9545 = vmul.f32 %v8705, %v3019
      %v9546 = vmul.f32 %v8708, %v3023
      %v9547 = vmul.f32 %v8713, %v3027
      %v9548 = vmul.f32 %v8716, %v3031
      %v9549 = vmul.f32 %v8721, %v3035
      %v9550 = vmul.f32 %v8724, %v3039
      %v9551 = vmul.f32 %v8729, %v3043
      %v9552 = vmul.f32 %v8732, %v3047
      %v9553 = vmul.f32 %v8737, %v3051
      %v9554 = vmul.f32 %v8740, %v3055
      %v9555 = vmul.f32 %v8745, %v3059
      %v9556 = vmul.f32 %v8748, %v3063
      %v9557 = vmul.f32 %v8753, %v3067
      %v9558 = vmul.f32 %v8756, %v3071
      %v9559 = vmul.f32 %v8761, %v3075
      %v9560 = vmul.f32 %v8764, %v3079
      %v9561 = vmul.f32 %v8769, %v3083
      %v9562 = vmul.f32 %v8772, %v3087
      %v9563 = vmul.f32 %v8777, %v3091
      %v9564 = vmul.f32 %v8780, %v3095
      %v9565 = vmul.f32 %v8785, %v3099
      %v9566 = vmul.f32 %v8788, %v3103
      %v9599 = vrot.slane %v9535, 1
      %v9600 = vrot.slane %v9536, 1
      %v9601 = vsel %vm1580, %v9599, %v9600
      %v9602 = vrot.slane %v9537, 1
      %v9603 = vsel %vm1580, %v9600, %v9602
      %v9604 = vrot.slane %v9538, 1
      %v9605 = vsel %vm1580, %v9602, %v9604
      %v9606 = vrot.slane %v9539, 1
      %v9607 = vsel %vm1580, %v9604, %v9606
      %v9608 = vrot.slane %v9540, 1
      %v9609 = vsel %vm1580, %v9606, %v9608
      %v9610 = vrot.slane %v9541, 1
      %v9611 = vsel %vm1580, %v9608, %v9610
      %v9612 = vrot.slane %v9542, 1
      %v9613 = vsel %vm1580, %v9610, %v9612
      %v9614 = vrot.slane %v9543, 1
      %v9615 = vsel %vm1580, %v9612, %v9614
      %v9616 = vrot.slane %v9544, 1
      %v9617 = vsel %vm1580, %v9614, %v9616
      %v9618 = vrot.slane %v9545, 1
      %v9619 = vsel %vm1580, %v9616, %v9618
      %v9620 = vrot.slane %v9546, 1
      %v9621 = vsel %vm1580, %v9618, %v9620
      %v9622 = vrot.slane %v9547, 1
      %v9623 = vsel %vm1580, %v9620, %v9622
      %v9624 = vrot.slane %v9548, 1
      %v9625 = vsel %vm1580, %v9622, %v9624
      %v9626 = vrot.slane %v9549, 1
      %v9627 = vsel %vm1580, %v9624, %v9626
      %v9628 = vrot.slane %v9550, 1
      %v9629 = vsel %vm1580, %v9626, %v9628
      %v9630 = vrot.slane %v9551, 1
      %v9631 = vsel %vm1580, %v9628, %v9630
      %v9632 = vrot.slane %v9552, 1
      %v9633 = vsel %vm1580, %v9630, %v9632
      %v9634 = vrot.slane %v9553, 1
      %v9635 = vsel %vm1580, %v9632, %v9634
      %v9636 = vrot.slane %v9554, 1
      %v9637 = vsel %vm1580, %v9634, %v9636
      %v9638 = vrot.slane %v9555, 1
      %v9639 = vsel %vm1580, %v9636, %v9638
      %v9640 = vrot.slane %v9556, 1
      %v9641 = vsel %vm1580, %v9638, %v9640
      %v9642 = vrot.slane %v9557, 1
      %v9643 = vsel %vm1580, %v9640, %v9642
      %v9644 = vrot.slane %v9558, 1
      %v9645 = vsel %vm1580, %v9642, %v9644
      %v9646 = vrot.slane %v9559, 1
      %v9647 = vsel %vm1580, %v9644, %v9646
      %v9648 = vrot.slane %v9560, 1
      %v9649 = vsel %vm1580, %v9646, %v9648
      %v9650 = vrot.slane %v9561, 1
      %v9651 = vsel %vm1580, %v9648, %v9650
      %v9652 = vrot.slane %v9562, 1
      %v9653 = vsel %vm1580, %v9650, %v9652
      %v9654 = vrot.slane %v9563, 1
      %v9655 = vsel %vm1580, %v9652, %v9654
      %v9656 = vrot.slane %v9564, 1
      %v9657 = vsel %vm1580, %v9654, %v9656
      %v9658 = vrot.slane %v9565, 1
      %v9659 = vsel %vm1580, %v9656, %v9658
      %v9660 = vrot.slane %v9566, 1
      %v9661 = vsel %vm1580, %v9658, %v9660
      %9662 = vrot.lane.b32.xlu0 %v9599, 96
      %v9663 = vpop.permute.xlu0 %9662
      %9664 = vrot.lane.b32.xlu0 %v9601, 96
      %v9665 = vpop.permute.xlu0 %9664
      %9666 = vrot.lane.b32.xlu0 %v9603, 96
      %v9667 = vpop.permute.xlu0 %9666
      %9668 = vrot.lane.b32.xlu0 %v9605, 96
      %v9669 = vpop.permute.xlu0 %9668
      %9670 = vrot.lane.b32.xlu0 %v9607, 96
      %v9671 = vpop.permute.xlu0 %9670
      %9672 = vrot.lane.b32.xlu0 %v9609, 96
      %v9673 = vpop.permute.xlu0 %9672
      %9674 = vrot.lane.b32.xlu0 %v9611, 96
      %v9675 = vpop.permute.xlu0 %9674
      %9676 = vrot.lane.b32.xlu0 %v9613, 96
      %v9677 = vpop.permute.xlu0 %9676
      %9678 = vrot.lane.b32.xlu0 %v9615, 96
      %v9679 = vpop.permute.xlu0 %9678
      %9680 = vrot.lane.b32.xlu0 %v9617, 96
      %v9681 = vpop.permute.xlu0 %9680
      %9682 = vrot.lane.b32.xlu0 %v9619, 96
      %v9683 = vpop.permute.xlu0 %9682
      %9684 = vrot.lane.b32.xlu0 %v9621, 96
      %v9685 = vpop.permute.xlu0 %9684
      %9686 = vrot.lane.b32.xlu0 %v9623, 96
      %v9687 = vpop.permute.xlu0 %9686
      %9688 = vrot.lane.b32.xlu0 %v9625, 96
      %v9689 = vpop.permute.xlu0 %9688
      %9690 = vrot.lane.b32.xlu0 %v9627, 96
      %v9691 = vpop.permute.xlu0 %9690
      %9692 = vrot.lane.b32.xlu0 %v9629, 96
      %v9693 = vpop.permute.xlu0 %9692
      %9694 = vrot.lane.b32.xlu0 %v9631, 96
      %v9695 = vpop.permute.xlu0 %9694
      %9696 = vrot.lane.b32.xlu0 %v9633, 96
      %v9697 = vpop.permute.xlu0 %9696
      %9698 = vrot.lane.b32.xlu0 %v9635, 96
      %v9699 = vpop.permute.xlu0 %9698
      %9700 = vrot.lane.b32.xlu0 %v9637, 96
      %v9701 = vpop.permute.xlu0 %9700
      %9702 = vrot.lane.b32.xlu0 %v9639, 96
      %v9703 = vpop.permute.xlu0 %9702
      %9704 = vrot.lane.b32.xlu0 %v9641, 96
      %v9705 = vpop.permute.xlu0 %9704
      %9706 = vrot.lane.b32.xlu0 %v9643, 96
      %v9707 = vpop.permute.xlu0 %9706
      %9708 = vrot.lane.b32.xlu0 %v9645, 96
      %v9709 = vpop.permute.xlu0 %9708
      %9710 = vrot.lane.b32.xlu0 %v9647, 96
      %v9711 = vpop.permute.xlu0 %9710
      %9712 = vrot.lane.b32.xlu0 %v9649, 96
      %v9713 = vpop.permute.xlu0 %9712
      %9714 = vrot.lane.b32.xlu0 %v9651, 96
      %v9715 = vpop.permute.xlu0 %9714
      %9716 = vrot.lane.b32.xlu0 %v9653, 96
      %v9717 = vpop.permute.xlu0 %9716
      %9718 = vrot.lane.b32.xlu0 %v9655, 96
      %v9719 = vpop.permute.xlu0 %9718
      %9720 = vrot.lane.b32.xlu0 %v9657, 96
      %v9721 = vpop.permute.xlu0 %9720
      %9722 = vrot.lane.b32.xlu0 %v9659, 96
      %v9723 = vpop.permute.xlu0 %9722
      %9724 = vrot.lane.b32.xlu0 %v9661, 96
      %v9725 = vpop.permute.xlu0 %9724
      %9726 = vrot.lane.b32.xlu0 %v9660, 96
      %v9727 = vpop.permute.xlu0 %9726
      %v9761 = vadd.f32 %v2944, %v9663
      %v9762 = vadd.f32 %v9503, %v9665
      %v9763 = vadd.f32 %v9504, %v9667
      %v9764 = vadd.f32 %v9505, %v9669
      %v9765 = vadd.f32 %v9506, %v9671
      %v9766 = vadd.f32 %v9507, %v9673
      %v9767 = vadd.f32 %v9508, %v9675
      %v9768 = vadd.f32 %v9509, %v9677
      %v9769 = vadd.f32 %v9510, %v9679
      %v9770 = vadd.f32 %v9511, %v9681
      %v9771 = vadd.f32 %v9512, %v9683
      %v9772 = vadd.f32 %v9513, %v9685
      %v9773 = vadd.f32 %v9514, %v9687
      %v9774 = vadd.f32 %v9515, %v9689
      %v9775 = vadd.f32 %v9516, %v9691
      %v9776 = vadd.f32 %v9517, %v9693
      %v9777 = vadd.f32 %v9518, %v9695
      %v9778 = vadd.f32 %v9519, %v9697
      %v9779 = vadd.f32 %v9520, %v9699
      %v9780 = vadd.f32 %v9521, %v9701
      %v9781 = vadd.f32 %v9522, %v9703
      %v9782 = vadd.f32 %v9523, %v9705
      %v9783 = vadd.f32 %v9524, %v9707
      %v9784 = vadd.f32 %v9525, %v9709
      %v9785 = vadd.f32 %v9526, %v9711
      %v9786 = vadd.f32 %v9527, %v9713
      %v9787 = vadd.f32 %v9528, %v9715
      %v9788 = vadd.f32 %v9529, %v9717
      %v9789 = vadd.f32 %v9530, %v9719
      %v9790 = vadd.f32 %v9531, %v9721
      %v9791 = vadd.f32 %v9532, %v9723
      %v9792 = vadd.f32 %v9533, %v9725
      %v9793 = vadd.f32 %v9534, %v9727
      %v9794 = vmul.f32 %v8665, %v3460
      %v9795 = vmul.f32 %v8668, %v3462
      %v9796 = vmul.f32 %v8673, %v3464
      %v9797 = vmul.f32 %v8676, %v3466
      %v9798 = vmul.f32 %v8681, %v3468
      %v9799 = vmul.f32 %v8684, %v3470
      %v9800 = vmul.f32 %v8689, %v3472
      %v9801 = vmul.f32 %v8692, %v3474
      %v9802 = vmul.f32 %v8697, %v3476
      %v9803 = vmul.f32 %v8700, %v3478
      %v9804 = vmul.f32 %v8705, %v3480
      %v9805 = vmul.f32 %v8708, %v3482
      %v9806 = vmul.f32 %v8713, %v3484
      %v9807 = vmul.f32 %v8716, %v3486
      %v9808 = vmul.f32 %v8721, %v3488
      %v9809 = vmul.f32 %v8724, %v3490
      %v9810 = vmul.f32 %v8729, %v3492
      %v9811 = vmul.f32 %v8732, %v3494
      %v9812 = vmul.f32 %v8737, %v3496
      %v9813 = vmul.f32 %v8740, %v3498
      %v9814 = vmul.f32 %v8745, %v3500
      %v9815 = vmul.f32 %v8748, %v3502
      %v9816 = vmul.f32 %v8753, %v3504
      %v9817 = vmul.f32 %v8756, %v3506
      %v9818 = vmul.f32 %v8761, %v3508
      %v9819 = vmul.f32 %v8764, %v3510
      %v9820 = vmul.f32 %v8769, %v3512
      %v9821 = vmul.f32 %v8772, %v3514
      %v9822 = vmul.f32 %v8777, %v3516
      %v9823 = vmul.f32 %v8780, %v3518
      %v9824 = vmul.f32 %v8785, %v3520
      %v9825 = vmul.f32 %v8788, %v3522
      %v9858 = vrot.slane %v9794, 2
      %v9859 = vrot.slane %v9795, 2
      %v9860 = vsel %vm2389, %v9858, %v9859
      %v9861 = vrot.slane %v9796, 2
      %v9862 = vsel %vm2389, %v9859, %v9861
      %v9863 = vrot.slane %v9797, 2
      %v9864 = vsel %vm2389, %v9861, %v9863
      %v9865 = vrot.slane %v9798, 2
      %v9866 = vsel %vm2389, %v9863, %v9865
      %v9867 = vrot.slane %v9799, 2
      %v9868 = vsel %vm2389, %v9865, %v9867
      %v9869 = vrot.slane %v9800, 2
      %v9870 = vsel %vm2389, %v9867, %v9869
      %v9871 = vrot.slane %v9801, 2
      %v9872 = vsel %vm2389, %v9869, %v9871
      %v9873 = vrot.slane %v9802, 2
      %v9874 = vsel %vm2389, %v9871, %v9873
      %v9875 = vrot.slane %v9803, 2
      %v9876 = vsel %vm2389, %v9873, %v9875
      %v9877 = vrot.slane %v9804, 2
      %v9878 = vsel %vm2389, %v9875, %v9877
      %v9879 = vrot.slane %v9805, 2
      %v9880 = vsel %vm2389, %v9877, %v9879
      %v9881 = vrot.slane %v9806, 2
      %v9882 = vsel %vm2389, %v9879, %v9881
      %v9883 = vrot.slane %v9807, 2
      %v9884 = vsel %vm2389, %v9881, %v9883
      %v9885 = vrot.slane %v9808, 2
      %v9886 = vsel %vm2389, %v9883, %v9885
      %v9887 = vrot.slane %v9809, 2
      %v9888 = vsel %vm2389, %v9885, %v9887
      %v9889 = vrot.slane %v9810, 2
      %v9890 = vsel %vm2389, %v9887, %v9889
      %v9891 = vrot.slane %v9811, 2
      %v9892 = vsel %vm2389, %v9889, %v9891
      %v9893 = vrot.slane %v9812, 2
      %v9894 = vsel %vm2389, %v9891, %v9893
      %v9895 = vrot.slane %v9813, 2
      %v9896 = vsel %vm2389, %v9893, %v9895
      %v9897 = vrot.slane %v9814, 2
      %v9898 = vsel %vm2389, %v9895, %v9897
      %v9899 = vrot.slane %v9815, 2
      %v9900 = vsel %vm2389, %v9897, %v9899
      %v9901 = vrot.slane %v9816, 2
      %v9902 = vsel %vm2389, %v9899, %v9901
      %v9903 = vrot.slane %v9817, 2
      %v9904 = vsel %vm2389, %v9901, %v9903
      %v9905 = vrot.slane %v9818, 2
      %v9906 = vsel %vm2389, %v9903, %v9905
      %v9907 = vrot.slane %v9819, 2
      %v9908 = vsel %vm2389, %v9905, %v9907
      %v9909 = vrot.slane %v9820, 2
      %v9910 = vsel %vm2389, %v9907, %v9909
      %v9911 = vrot.slane %v9821, 2
      %v9912 = vsel %vm2389, %v9909, %v9911
      %v9913 = vrot.slane %v9822, 2
      %v9914 = vsel %vm2389, %v9911, %v9913
      %v9915 = vrot.slane %v9823, 2
      %v9916 = vsel %vm2389, %v9913, %v9915
      %v9917 = vrot.slane %v9824, 2
      %v9918 = vsel %vm2389, %v9915, %v9917
      %v9919 = vrot.slane %v9825, 2
      %v9920 = vsel %vm2389, %v9917, %v9919
      %v9921 = vsel %vm2389, %v9919, %v3685
      %9922 = vrot.lane.b32.xlu0 %v9858, 88
      %v9923 = vpop.permute.xlu0 %9922
      %9924 = vrot.lane.b32.xlu0 %v9860, 88
      %v9925 = vpop.permute.xlu0 %9924
      %9926 = vrot.lane.b32.xlu0 %v9862, 88
      %v9927 = vpop.permute.xlu0 %9926
      %9928 = vrot.lane.b32.xlu0 %v9864, 88
      %v9929 = vpop.permute.xlu0 %9928
      %9930 = vrot.lane.b32.xlu0 %v9866, 88
      %v9931 = vpop.permute.xlu0 %9930
      %9932 = vrot.lane.b32.xlu0 %v9868, 88
      %v9933 = vpop.permute.xlu0 %9932
      %9934 = vrot.lane.b32.xlu0 %v9870, 88
      %v9935 = vpop.permute.xlu0 %9934
      %9936 = vrot.lane.b32.xlu0 %v9872, 88
      %v9937 = vpop.permute.xlu0 %9936
      %9938 = vrot.lane.b32.xlu0 %v9874, 88
      %v9939 = vpop.permute.xlu0 %9938
      %9940 = vrot.lane.b32.xlu0 %v9876, 88
      %v9941 = vpop.permute.xlu0 %9940
      %9942 = vrot.lane.b32.xlu0 %v9878, 88
      %v9943 = vpop.permute.xlu0 %9942
      %9944 = vrot.lane.b32.xlu0 %v9880, 88
      %v9945 = vpop.permute.xlu0 %9944
      %9946 = vrot.lane.b32.xlu0 %v9882, 88
      %v9947 = vpop.permute.xlu0 %9946
      %9948 = vrot.lane.b32.xlu0 %v9884, 88
      %v9949 = vpop.permute.xlu0 %9948
      %9950 = vrot.lane.b32.xlu0 %v9886, 88
      %v9951 = vpop.permute.xlu0 %9950
      %9952 = vrot.lane.b32.xlu0 %v9888, 88
      %v9953 = vpop.permute.xlu0 %9952
      %9954 = vrot.lane.b32.xlu0 %v9890, 88
      %v9955 = vpop.permute.xlu0 %9954
      %9956 = vrot.lane.b32.xlu0 %v9892, 88
      %v9957 = vpop.permute.xlu0 %9956
      %9958 = vrot.lane.b32.xlu0 %v9894, 88
      %v9959 = vpop.permute.xlu0 %9958
      %9960 = vrot.lane.b32.xlu0 %v9896, 88
      %v9961 = vpop.permute.xlu0 %9960
      %9962 = vrot.lane.b32.xlu0 %v9898, 88
      %v9963 = vpop.permute.xlu0 %9962
      %9964 = vrot.lane.b32.xlu0 %v9900, 88
      %v9965 = vpop.permute.xlu0 %9964
      %9966 = vrot.lane.b32.xlu0 %v9902, 88
      %v9967 = vpop.permute.xlu0 %9966
      %9968 = vrot.lane.b32.xlu0 %v9904, 88
      %v9969 = vpop.permute.xlu0 %9968
      %9970 = vrot.lane.b32.xlu0 %v9906, 88
      %v9971 = vpop.permute.xlu0 %9970
      %9972 = vrot.lane.b32.xlu0 %v9908, 88
      %v9973 = vpop.permute.xlu0 %9972
      %9974 = vrot.lane.b32.xlu0 %v9910, 88
      %v9975 = vpop.permute.xlu0 %9974
      %9976 = vrot.lane.b32.xlu0 %v9912, 88
      %v9977 = vpop.permute.xlu0 %9976
      %9978 = vrot.lane.b32.xlu0 %v9914, 88
      %v9979 = vpop.permute.xlu0 %9978
      %9980 = vrot.lane.b32.xlu0 %v9916, 88
      %v9981 = vpop.permute.xlu0 %9980
      %9982 = vrot.lane.b32.xlu0 %v9918, 88
      %v9983 = vpop.permute.xlu0 %9982
      %9984 = vrot.lane.b32.xlu0 %v9920, 88
      %v9985 = vpop.permute.xlu0 %9984
      %9986 = vrot.lane.b32.xlu0 %v9921, 88
      %v9987 = vpop.permute.xlu0 %9986
      %v10021 = vadd.f32 %v9761, %v9923
      %v10022 = vadd.f32 %v9762, %v9925
      %v10023 = vadd.f32 %v9763, %v9927
      %v10024 = vadd.f32 %v9764, %v9929
      %v10025 = vadd.f32 %v9765, %v9931
      %v10026 = vadd.f32 %v9766, %v9933
      %v10027 = vadd.f32 %v9767, %v9935
      %v10028 = vadd.f32 %v9768, %v9937
      %v10029 = vadd.f32 %v9769, %v9939
      %v10030 = vadd.f32 %v9770, %v9941
      %v10031 = vadd.f32 %v9771, %v9943
      %v10032 = vadd.f32 %v9772, %v9945
      %v10033 = vadd.f32 %v9773, %v9947
      %v10034 = vadd.f32 %v9774, %v9949
      %v10035 = vadd.f32 %v9775, %v9951
      %v10036 = vadd.f32 %v9776, %v9953
      %v10037 = vadd.f32 %v9777, %v9955
      %v10038 = vadd.f32 %v9778, %v9957
      %v10039 = vadd.f32 %v9779, %v9959
      %v10040 = vadd.f32 %v9780, %v9961
      %v10041 = vadd.f32 %v9781, %v9963
      %v10042 = vadd.f32 %v9782, %v9965
      %v10043 = vadd.f32 %v9783, %v9967
      %v10044 = vadd.f32 %v9784, %v9969
      %v10045 = vadd.f32 %v9785, %v9971
      %v10046 = vadd.f32 %v9786, %v9973
      %v10047 = vadd.f32 %v9787, %v9975
      %v10048 = vadd.f32 %v9788, %v9977
      %v10049 = vadd.f32 %v9789, %v9979
      %v10050 = vadd.f32 %v9790, %v9981
      %v10051 = vadd.f32 %v9791, %v9983
      %v10052 = vadd.f32 %v9792, %v9985
      %v10053 = vadd.f32 %v9793, %v9987
      %v10054 = vmul.f32 %v8668, %v3915
      %v10055 = vmul.f32 %v8673, %v3917
      %v10056 = vmul.f32 %v8676, %v3919
      %v10057 = vmul.f32 %v8681, %v3921
      %v10058 = vmul.f32 %v8684, %v3923
      %v10059 = vmul.f32 %v8689, %v3925
      %v10060 = vmul.f32 %v8692, %v3927
      %v10061 = vmul.f32 %v8697, %v3929
      %v10062 = vmul.f32 %v8700, %v3931
      %v10063 = vmul.f32 %v8705, %v3933
      %v10064 = vmul.f32 %v8708, %v3935
      %v10065 = vmul.f32 %v8713, %v3937
      %v10066 = vmul.f32 %v8716, %v3939
      %v10067 = vmul.f32 %v8721, %v3941
      %v10068 = vmul.f32 %v8724, %v3943
      %v10069 = vmul.f32 %v8729, %v3945
      %v10070 = vmul.f32 %v8732, %v3947
      %v10071 = vmul.f32 %v8737, %v3949
      %v10072 = vmul.f32 %v8740, %v3951
      %v10073 = vmul.f32 %v8745, %v3953
      %v10074 = vmul.f32 %v8748, %v3955
      %v10075 = vmul.f32 %v8753, %v3957
      %v10076 = vmul.f32 %v8756, %v3959
      %v10077 = vmul.f32 %v8761, %v3961
      %v10078 = vmul.f32 %v8764, %v3963
      %v10079 = vmul.f32 %v8769, %v3965
      %v10080 = vmul.f32 %v8772, %v3967
      %v10081 = vmul.f32 %v8777, %v3969
      %v10082 = vmul.f32 %v8780, %v3971
      %v10083 = vmul.f32 %v8785, %v3973
      %v10084 = vmul.f32 %v8788, %v3975
      %10116 = vrot.lane.b32.xlu0 %v10054, 80
      %v10117 = vpop.permute.xlu0 %10116
      %10118 = vrot.lane.b32.xlu0 %v10055, 80
      %v10119 = vpop.permute.xlu0 %10118
      %10120 = vrot.lane.b32.xlu0 %v10056, 80
      %v10121 = vpop.permute.xlu0 %10120
      %10122 = vrot.lane.b32.xlu0 %v10057, 80
      %v10123 = vpop.permute.xlu0 %10122
      %10124 = vrot.lane.b32.xlu0 %v10058, 80
      %v10125 = vpop.permute.xlu0 %10124
      %10126 = vrot.lane.b32.xlu0 %v10059, 80
      %v10127 = vpop.permute.xlu0 %10126
      %10128 = vrot.lane.b32.xlu0 %v10060, 80
      %v10129 = vpop.permute.xlu0 %10128
      %10130 = vrot.lane.b32.xlu0 %v10061, 80
      %v10131 = vpop.permute.xlu0 %10130
      %10132 = vrot.lane.b32.xlu0 %v10062, 80
      %v10133 = vpop.permute.xlu0 %10132
      %10134 = vrot.lane.b32.xlu0 %v10063, 80
      %v10135 = vpop.permute.xlu0 %10134
      %10136 = vrot.lane.b32.xlu0 %v10064, 80
      %v10137 = vpop.permute.xlu0 %10136
      %10138 = vrot.lane.b32.xlu0 %v10065, 80
      %v10139 = vpop.permute.xlu0 %10138
      %10140 = vrot.lane.b32.xlu0 %v10066, 80
      %v10141 = vpop.permute.xlu0 %10140
      %10142 = vrot.lane.b32.xlu0 %v10067, 80
      %v10143 = vpop.permute.xlu0 %10142
      %10144 = vrot.lane.b32.xlu0 %v10068, 80
      %v10145 = vpop.permute.xlu0 %10144
      %10146 = vrot.lane.b32.xlu0 %v10069, 80
      %v10147 = vpop.permute.xlu0 %10146
      %10148 = vrot.lane.b32.xlu0 %v10070, 80
      %v10149 = vpop.permute.xlu0 %10148
      %10150 = vrot.lane.b32.xlu0 %v10071, 80
      %v10151 = vpop.permute.xlu0 %10150
      %10152 = vrot.lane.b32.xlu0 %v10072, 80
      %v10153 = vpop.permute.xlu0 %10152
      %10154 = vrot.lane.b32.xlu0 %v10073, 80
      %v10155 = vpop.permute.xlu0 %10154
      %10156 = vrot.lane.b32.xlu0 %v10074, 80
      %v10157 = vpop.permute.xlu0 %10156
      %10158 = vrot.lane.b32.xlu0 %v10075, 80
      %v10159 = vpop.permute.xlu0 %10158
      %10160 = vrot.lane.b32.xlu0 %v10076, 80
      %v10161 = vpop.permute.xlu0 %10160
      %10162 = vrot.lane.b32.xlu0 %v10077, 80
      %v10163 = vpop.permute.xlu0 %10162
      %10164 = vrot.lane.b32.xlu0 %v10078, 80
      %v10165 = vpop.permute.xlu0 %10164
      %10166 = vrot.lane.b32.xlu0 %v10079, 80
      %v10167 = vpop.permute.xlu0 %10166
      %10168 = vrot.lane.b32.xlu0 %v10080, 80
      %v10169 = vpop.permute.xlu0 %10168
      %10170 = vrot.lane.b32.xlu0 %v10081, 80
      %v10171 = vpop.permute.xlu0 %10170
      %10172 = vrot.lane.b32.xlu0 %v10082, 80
      %v10173 = vpop.permute.xlu0 %10172
      %10174 = vrot.lane.b32.xlu0 %v10083, 80
      %v10175 = vpop.permute.xlu0 %10174
      %10176 = vrot.lane.b32.xlu0 %v10084, 80
      %v10177 = vpop.permute.xlu0 %10176
      %v10209 = vadd.f32 %v10021, %v10117
      %v10210 = vadd.f32 %v10022, %v10119
      %v10211 = vadd.f32 %v10023, %v10121
      %v10212 = vadd.f32 %v10024, %v10123
      %v10213 = vadd.f32 %v10025, %v10125
      %v10214 = vadd.f32 %v10026, %v10127
      %v10215 = vadd.f32 %v10027, %v10129
      %v10216 = vadd.f32 %v10028, %v10131
      %v10217 = vadd.f32 %v10029, %v10133
      %v10218 = vadd.f32 %v10030, %v10135
      %v10219 = vadd.f32 %v10031, %v10137
      %v10220 = vadd.f32 %v10032, %v10139
      %v10221 = vadd.f32 %v10033, %v10141
      %v10222 = vadd.f32 %v10034, %v10143
      %v10223 = vadd.f32 %v10035, %v10145
      %v10224 = vadd.f32 %v10036, %v10147
      %v10225 = vadd.f32 %v10037, %v10149
      %v10226 = vadd.f32 %v10038, %v10151
      %v10227 = vadd.f32 %v10039, %v10153
      %v10228 = vadd.f32 %v10040, %v10155
      %v10229 = vadd.f32 %v10041, %v10157
      %v10230 = vadd.f32 %v10042, %v10159
      %v10231 = vadd.f32 %v10043, %v10161
      %v10232 = vadd.f32 %v10044, %v10163
      %v10233 = vadd.f32 %v10045, %v10165
      %v10234 = vadd.f32 %v10046, %v10167
      %v10235 = vadd.f32 %v10047, %v10169
      %v10236 = vadd.f32 %v10048, %v10171
      %v10237 = vadd.f32 %v10049, %v10173
      %v10238 = vadd.f32 %v10050, %v10175
      %v10239 = vadd.f32 %v10051, %v10177
      %v10240 = vadd.f32 %v10052, %v4140
      %v10241 = vadd.f32 %v10053, %v4142
      %v10242 = vmul.f32 %v8673, %v4211
      %v10243 = vmul.f32 %v8676, %v4215
      %v10244 = vmul.f32 %v8681, %v4219
      %v10245 = vmul.f32 %v8684, %v4223
      %v10246 = vmul.f32 %v8689, %v4227
      %v10247 = vmul.f32 %v8692, %v4231
      %v10248 = vmul.f32 %v8697, %v4235
      %v10249 = vmul.f32 %v8700, %v4239
      %v10250 = vmul.f32 %v8705, %v4243
      %v10251 = vmul.f32 %v8708, %v4247
      %v10252 = vmul.f32 %v8713, %v4251
      %v10253 = vmul.f32 %v8716, %v4255
      %v10254 = vmul.f32 %v8721, %v4259
      %v10255 = vmul.f32 %v8724, %v4263
      %v10256 = vmul.f32 %v8729, %v4267
      %v10257 = vmul.f32 %v8732, %v4271
      %v10258 = vmul.f32 %v8737, %v4275
      %v10259 = vmul.f32 %v8740, %v4279
      %v10260 = vmul.f32 %v8745, %v4283
      %v10261 = vmul.f32 %v8748, %v4287
      %v10262 = vmul.f32 %v8753, %v4291
      %v10263 = vmul.f32 %v8756, %v4295
      %v10264 = vmul.f32 %v8761, %v4299
      %v10265 = vmul.f32 %v8764, %v4303
      %v10266 = vmul.f32 %v8769, %v4307
      %v10267 = vmul.f32 %v8772, %v4311
      %v10268 = vmul.f32 %v8777, %v4315
      %v10269 = vmul.f32 %v8780, %v4319
      %v10270 = vmul.f32 %v8785, %v4323
      %v10271 = vmul.f32 %v8788, %v4327
      %v10302 = vrot.slane %v10242, 1
      %v10303 = vrot.slane %v10243, 1
      %v10304 = vsel %vm1580, %v10302, %v10303
      %v10305 = vrot.slane %v10244, 1
      %v10306 = vsel %vm1580, %v10303, %v10305
      %v10307 = vrot.slane %v10245, 1
      %v10308 = vsel %vm1580, %v10305, %v10307
      %v10309 = vrot.slane %v10246, 1
      %v10310 = vsel %vm1580, %v10307, %v10309
      %v10311 = vrot.slane %v10247, 1
      %v10312 = vsel %vm1580, %v10309, %v10311
      %v10313 = vrot.slane %v10248, 1
      %v10314 = vsel %vm1580, %v10311, %v10313
      %v10315 = vrot.slane %v10249, 1
      %v10316 = vsel %vm1580, %v10313, %v10315
      %v10317 = vrot.slane %v10250, 1
      %v10318 = vsel %vm1580, %v10315, %v10317
      %v10319 = vrot.slane %v10251, 1
      %v10320 = vsel %vm1580, %v10317, %v10319
      %v10321 = vrot.slane %v10252, 1
      %v10322 = vsel %vm1580, %v10319, %v10321
      %v10323 = vrot.slane %v10253, 1
      %v10324 = vsel %vm1580, %v10321, %v10323
      %v10325 = vrot.slane %v10254, 1
      %v10326 = vsel %vm1580, %v10323, %v10325
      %v10327 = vrot.slane %v10255, 1
      %v10328 = vsel %vm1580, %v10325, %v10327
      %v10329 = vrot.slane %v10256, 1
      %v10330 = vsel %vm1580, %v10327, %v10329
      %v10331 = vrot.slane %v10257, 1
      %v10332 = vsel %vm1580, %v10329, %v10331
      %v10333 = vrot.slane %v10258, 1
      %v10334 = vsel %vm1580, %v10331, %v10333
      %v10335 = vrot.slane %v10259, 1
      %v10336 = vsel %vm1580, %v10333, %v10335
      %v10337 = vrot.slane %v10260, 1
      %v10338 = vsel %vm1580, %v10335, %v10337
      %v10339 = vrot.slane %v10261, 1
      %v10340 = vsel %vm1580, %v10337, %v10339
      %v10341 = vrot.slane %v10262, 1
      %v10342 = vsel %vm1580, %v10339, %v10341
      %v10343 = vrot.slane %v10263, 1
      %v10344 = vsel %vm1580, %v10341, %v10343
      %v10345 = vrot.slane %v10264, 1
      %v10346 = vsel %vm1580, %v10343, %v10345
      %v10347 = vrot.slane %v10265, 1
      %v10348 = vsel %vm1580, %v10345, %v10347
      %v10349 = vrot.slane %v10266, 1
      %v10350 = vsel %vm1580, %v10347, %v10349
      %v10351 = vrot.slane %v10267, 1
      %v10352 = vsel %vm1580, %v10349, %v10351
      %v10353 = vrot.slane %v10268, 1
      %v10354 = vsel %vm1580, %v10351, %v10353
      %v10355 = vrot.slane %v10269, 1
      %v10356 = vsel %vm1580, %v10353, %v10355
      %v10357 = vrot.slane %v10270, 1
      %v10358 = vsel %vm1580, %v10355, %v10357
      %v10359 = vrot.slane %v10271, 1
      %v10360 = vsel %vm1580, %v10357, %v10359
      %v10361 = vsel %vm1580, %v10359, %v4460
      %10362 = vrot.lane.b32.xlu0 %v10302, 72
      %v10363 = vpop.permute.xlu0 %10362
      %10364 = vrot.lane.b32.xlu0 %v10304, 72
      %v10365 = vpop.permute.xlu0 %10364
      %10366 = vrot.lane.b32.xlu0 %v10306, 72
      %v10367 = vpop.permute.xlu0 %10366
      %10368 = vrot.lane.b32.xlu0 %v10308, 72
      %v10369 = vpop.permute.xlu0 %10368
      %10370 = vrot.lane.b32.xlu0 %v10310, 72
      %v10371 = vpop.permute.xlu0 %10370
      %10372 = vrot.lane.b32.xlu0 %v10312, 72
      %v10373 = vpop.permute.xlu0 %10372
      %10374 = vrot.lane.b32.xlu0 %v10314, 72
      %v10375 = vpop.permute.xlu0 %10374
      %10376 = vrot.lane.b32.xlu0 %v10316, 72
      %v10377 = vpop.permute.xlu0 %10376
      %10378 = vrot.lane.b32.xlu0 %v10318, 72
      %v10379 = vpop.permute.xlu0 %10378
      %10380 = vrot.lane.b32.xlu0 %v10320, 72
      %v10381 = vpop.permute.xlu0 %10380
      %10382 = vrot.lane.b32.xlu0 %v10322, 72
      %v10383 = vpop.permute.xlu0 %10382
      %10384 = vrot.lane.b32.xlu0 %v10324, 72
      %v10385 = vpop.permute.xlu0 %10384
      %10386 = vrot.lane.b32.xlu0 %v10326, 72
      %v10387 = vpop.permute.xlu0 %10386
      %10388 = vrot.lane.b32.xlu0 %v10328, 72
      %v10389 = vpop.permute.xlu0 %10388
      %10390 = vrot.lane.b32.xlu0 %v10330, 72
      %v10391 = vpop.permute.xlu0 %10390
      %10392 = vrot.lane.b32.xlu0 %v10332, 72
      %v10393 = vpop.permute.xlu0 %10392
      %10394 = vrot.lane.b32.xlu0 %v10334, 72
      %v10395 = vpop.permute.xlu0 %10394
      %10396 = vrot.lane.b32.xlu0 %v10336, 72
      %v10397 = vpop.permute.xlu0 %10396
      %10398 = vrot.lane.b32.xlu0 %v10338, 72
      %v10399 = vpop.permute.xlu0 %10398
      %10400 = vrot.lane.b32.xlu0 %v10340, 72
      %v10401 = vpop.permute.xlu0 %10400
      %10402 = vrot.lane.b32.xlu0 %v10342, 72
      %v10403 = vpop.permute.xlu0 %10402
      %10404 = vrot.lane.b32.xlu0 %v10344, 72
      %v10405 = vpop.permute.xlu0 %10404
      %10406 = vrot.lane.b32.xlu0 %v10346, 72
      %v10407 = vpop.permute.xlu0 %10406
      %10408 = vrot.lane.b32.xlu0 %v10348, 72
      %v10409 = vpop.permute.xlu0 %10408
      %10410 = vrot.lane.b32.xlu0 %v10350, 72
      %v10411 = vpop.permute.xlu0 %10410
      %10412 = vrot.lane.b32.xlu0 %v10352, 72
      %v10413 = vpop.permute.xlu0 %10412
      %10414 = vrot.lane.b32.xlu0 %v10354, 72
      %v10415 = vpop.permute.xlu0 %10414
      %10416 = vrot.lane.b32.xlu0 %v10356, 72
      %v10417 = vpop.permute.xlu0 %10416
      %10418 = vrot.lane.b32.xlu0 %v10358, 72
      %v10419 = vpop.permute.xlu0 %10418
      %10420 = vrot.lane.b32.xlu0 %v10360, 72
      %v10421 = vpop.permute.xlu0 %10420
      %10422 = vrot.lane.b32.xlu0 %v10361, 72
      %v10423 = vpop.permute.xlu0 %10422
      %v10455 = vadd.f32 %v10209, %v10363
      %v10456 = vadd.f32 %v10210, %v10365
      %v10457 = vadd.f32 %v10211, %v10367
      %v10458 = vadd.f32 %v10212, %v10369
      %v10459 = vadd.f32 %v10213, %v10371
      %v10460 = vadd.f32 %v10214, %v10373
      %v10461 = vadd.f32 %v10215, %v10375
      %v10462 = vadd.f32 %v10216, %v10377
      %v10463 = vadd.f32 %v10217, %v10379
      %v10464 = vadd.f32 %v10218, %v10381
      %v10465 = vadd.f32 %v10219, %v10383
      %v10466 = vadd.f32 %v10220, %v10385
      %v10467 = vadd.f32 %v10221, %v10387
      %v10468 = vadd.f32 %v10222, %v10389
      %v10469 = vadd.f32 %v10223, %v10391
      %v10470 = vadd.f32 %v10224, %v10393
      %v10471 = vadd.f32 %v10225, %v10395
      %v10472 = vadd.f32 %v10226, %v10397
      %v10473 = vadd.f32 %v10227, %v10399
      %v10474 = vadd.f32 %v10228, %v10401
      %v10475 = vadd.f32 %v10229, %v10403
      %v10476 = vadd.f32 %v10230, %v10405
      %v10477 = vadd.f32 %v10231, %v10407
      %v10478 = vadd.f32 %v10232, %v10409
      %v10479 = vadd.f32 %v10233, %v10411
      %v10480 = vadd.f32 %v10234, %v10413
      %v10481 = vadd.f32 %v10235, %v10415
      %v10482 = vadd.f32 %v10236, %v10417
      %v10483 = vadd.f32 %v10237, %v10419
      %v10484 = vadd.f32 %v10238, %v10421
      %v10485 = vadd.f32 %v10239, %v10423
      %v10486 = vadd.f32 %v10240, %v4527
      %v10487 = vadd.f32 %v10241, %v4529
      %v10488 = vmul.f32 %v8673, %v4692
      %v10489 = vmul.f32 %v8676, %v4694
      %v10490 = vmul.f32 %v8681, %v4696
      %v10491 = vmul.f32 %v8684, %v4698
      %v10492 = vmul.f32 %v8689, %v4700
      %v10493 = vmul.f32 %v8692, %v4702
      %v10494 = vmul.f32 %v8697, %v4704
      %v10495 = vmul.f32 %v8700, %v4706
      %v10496 = vmul.f32 %v8705, %v4708
      %v10497 = vmul.f32 %v8708, %v4710
      %v10498 = vmul.f32 %v8713, %v4712
      %v10499 = vmul.f32 %v8716, %v4714
      %v10500 = vmul.f32 %v8721, %v4716
      %v10501 = vmul.f32 %v8724, %v4718
      %v10502 = vmul.f32 %v8729, %v4720
      %v10503 = vmul.f32 %v8732, %v4722
      %v10504 = vmul.f32 %v8737, %v4724
      %v10505 = vmul.f32 %v8740, %v4726
      %v10506 = vmul.f32 %v8745, %v4728
      %v10507 = vmul.f32 %v8748, %v4730
      %v10508 = vmul.f32 %v8753, %v4732
      %v10509 = vmul.f32 %v8756, %v4734
      %v10510 = vmul.f32 %v8761, %v4736
      %v10511 = vmul.f32 %v8764, %v4738
      %v10512 = vmul.f32 %v8769, %v4740
      %v10513 = vmul.f32 %v8772, %v4742
      %v10514 = vmul.f32 %v8777, %v4744
      %v10515 = vmul.f32 %v8780, %v4746
      %v10516 = vmul.f32 %v8785, %v4748
      %v10517 = vmul.f32 %v8788, %v4750
      %v10548 = vrot.slane %v10488, 2
      %v10549 = vrot.slane %v10489, 2
      %v10550 = vsel %vm2389, %v10548, %v10549
      %v10551 = vrot.slane %v10490, 2
      %v10552 = vsel %vm2389, %v10549, %v10551
      %v10553 = vrot.slane %v10491, 2
      %v10554 = vsel %vm2389, %v10551, %v10553
      %v10555 = vrot.slane %v10492, 2
      %v10556 = vsel %vm2389, %v10553, %v10555
      %v10557 = vrot.slane %v10493, 2
      %v10558 = vsel %vm2389, %v10555, %v10557
      %v10559 = vrot.slane %v10494, 2
      %v10560 = vsel %vm2389, %v10557, %v10559
      %v10561 = vrot.slane %v10495, 2
      %v10562 = vsel %vm2389, %v10559, %v10561
      %v10563 = vrot.slane %v10496, 2
      %v10564 = vsel %vm2389, %v10561, %v10563
      %v10565 = vrot.slane %v10497, 2
      %v10566 = vsel %vm2389, %v10563, %v10565
      %v10567 = vrot.slane %v10498, 2
      %v10568 = vsel %vm2389, %v10565, %v10567
      %v10569 = vrot.slane %v10499, 2
      %v10570 = vsel %vm2389, %v10567, %v10569
      %v10571 = vrot.slane %v10500, 2
      %v10572 = vsel %vm2389, %v10569, %v10571
      %v10573 = vrot.slane %v10501, 2
      %v10574 = vsel %vm2389, %v10571, %v10573
      %v10575 = vrot.slane %v10502, 2
      %v10576 = vsel %vm2389, %v10573, %v10575
      %v10577 = vrot.slane %v10503, 2
      %v10578 = vsel %vm2389, %v10575, %v10577
      %v10579 = vrot.slane %v10504, 2
      %v10580 = vsel %vm2389, %v10577, %v10579
      %v10581 = vrot.slane %v10505, 2
      %v10582 = vsel %vm2389, %v10579, %v10581
      %v10583 = vrot.slane %v10506, 2
      %v10584 = vsel %vm2389, %v10581, %v10583
      %v10585 = vrot.slane %v10507, 2
      %v10586 = vsel %vm2389, %v10583, %v10585
      %v10587 = vrot.slane %v10508, 2
      %v10588 = vsel %vm2389, %v10585, %v10587
      %v10589 = vrot.slane %v10509, 2
      %v10590 = vsel %vm2389, %v10587, %v10589
      %v10591 = vrot.slane %v10510, 2
      %v10592 = vsel %vm2389, %v10589, %v10591
      %v10593 = vrot.slane %v10511, 2
      %v10594 = vsel %vm2389, %v10591, %v10593
      %v10595 = vrot.slane %v10512, 2
      %v10596 = vsel %vm2389, %v10593, %v10595
      %v10597 = vrot.slane %v10513, 2
      %v10598 = vsel %vm2389, %v10595, %v10597
      %v10599 = vrot.slane %v10514, 2
      %v10600 = vsel %vm2389, %v10597, %v10599
      %v10601 = vrot.slane %v10515, 2
      %v10602 = vsel %vm2389, %v10599, %v10601
      %v10603 = vrot.slane %v10516, 2
      %v10604 = vsel %vm2389, %v10601, %v10603
      %v10605 = vrot.slane %v10517, 2
      %v10606 = vsel %vm2389, %v10603, %v10605
      %v10607 = vsel %vm2389, %v10605, %v4913
      %10608 = vrot.lane.b32.xlu0 %v10548, 64
      %v10609 = vpop.permute.xlu0 %10608
      %10610 = vrot.lane.b32.xlu0 %v10550, 64
      %v10611 = vpop.permute.xlu0 %10610
      %10612 = vrot.lane.b32.xlu0 %v10552, 64
      %v10613 = vpop.permute.xlu0 %10612
      %10614 = vrot.lane.b32.xlu0 %v10554, 64
      %v10615 = vpop.permute.xlu0 %10614
      %10616 = vrot.lane.b32.xlu0 %v10556, 64
      %v10617 = vpop.permute.xlu0 %10616
      %10618 = vrot.lane.b32.xlu0 %v10558, 64
      %v10619 = vpop.permute.xlu0 %10618
      %10620 = vrot.lane.b32.xlu0 %v10560, 64
      %v10621 = vpop.permute.xlu0 %10620
      %10622 = vrot.lane.b32.xlu0 %v10562, 64
      %v10623 = vpop.permute.xlu0 %10622
      %10624 = vrot.lane.b32.xlu0 %v10564, 64
      %v10625 = vpop.permute.xlu0 %10624
      %10626 = vrot.lane.b32.xlu0 %v10566, 64
      %v10627 = vpop.permute.xlu0 %10626
      %10628 = vrot.lane.b32.xlu0 %v10568, 64
      %v10629 = vpop.permute.xlu0 %10628
      %10630 = vrot.lane.b32.xlu0 %v10570, 64
      %v10631 = vpop.permute.xlu0 %10630
      %10632 = vrot.lane.b32.xlu0 %v10572, 64
      %v10633 = vpop.permute.xlu0 %10632
      %10634 = vrot.lane.b32.xlu0 %v10574, 64
      %v10635 = vpop.permute.xlu0 %10634
      %10636 = vrot.lane.b32.xlu0 %v10576, 64
      %v10637 = vpop.permute.xlu0 %10636
      %10638 = vrot.lane.b32.xlu0 %v10578, 64
      %v10639 = vpop.permute.xlu0 %10638
      %10640 = vrot.lane.b32.xlu0 %v10580, 64
      %v10641 = vpop.permute.xlu0 %10640
      %10642 = vrot.lane.b32.xlu0 %v10582, 64
      %v10643 = vpop.permute.xlu0 %10642
      %10644 = vrot.lane.b32.xlu0 %v10584, 64
      %v10645 = vpop.permute.xlu0 %10644
      %10646 = vrot.lane.b32.xlu0 %v10586, 64
      %v10647 = vpop.permute.xlu0 %10646
      %10648 = vrot.lane.b32.xlu0 %v10588, 64
      %v10649 = vpop.permute.xlu0 %10648
      %10650 = vrot.lane.b32.xlu0 %v10590, 64
      %v10651 = vpop.permute.xlu0 %10650
      %10652 = vrot.lane.b32.xlu0 %v10592, 64
      %v10653 = vpop.permute.xlu0 %10652
      %10654 = vrot.lane.b32.xlu0 %v10594, 64
      %v10655 = vpop.permute.xlu0 %10654
      %10656 = vrot.lane.b32.xlu0 %v10596, 64
      %v10657 = vpop.permute.xlu0 %10656
      %10658 = vrot.lane.b32.xlu0 %v10598, 64
      %v10659 = vpop.permute.xlu0 %10658
      %10660 = vrot.lane.b32.xlu0 %v10600, 64
      %v10661 = vpop.permute.xlu0 %10660
      %10662 = vrot.lane.b32.xlu0 %v10602, 64
      %v10663 = vpop.permute.xlu0 %10662
      %10664 = vrot.lane.b32.xlu0 %v10604, 64
      %v10665 = vpop.permute.xlu0 %10664
      %10666 = vrot.lane.b32.xlu0 %v10606, 64
      %v10667 = vpop.permute.xlu0 %10666
      %10668 = vrot.lane.b32.xlu0 %v10607, 64
      %v10669 = vpop.permute.xlu0 %10668
      %v10701 = vadd.f32 %v10455, %v10609
      %v10702 = vadd.f32 %v10456, %v10611
      %v10703 = vadd.f32 %v10457, %v10613
      %v10704 = vadd.f32 %v10458, %v10615
      %v10705 = vadd.f32 %v10459, %v10617
      %v10706 = vadd.f32 %v10460, %v10619
      %v10707 = vadd.f32 %v10461, %v10621
      %v10708 = vadd.f32 %v10462, %v10623
      %v10709 = vadd.f32 %v10463, %v10625
      %v10710 = vadd.f32 %v10464, %v10627
      %v10711 = vadd.f32 %v10465, %v10629
      %v10712 = vadd.f32 %v10466, %v10631
      %v10713 = vadd.f32 %v10467, %v10633
      %v10714 = vadd.f32 %v10468, %v10635
      %v10715 = vadd.f32 %v10469, %v10637
      %v10716 = vadd.f32 %v10470, %v10639
      %v10717 = vadd.f32 %v10471, %v10641
      %v10718 = vadd.f32 %v10472, %v10643
      %v10719 = vadd.f32 %v10473, %v10645
      %v10720 = vadd.f32 %v10474, %v10647
      %v10721 = vadd.f32 %v10475, %v10649
      %v10722 = vadd.f32 %v10476, %v10651
      %v10723 = vadd.f32 %v10477, %v10653
      %v10724 = vadd.f32 %v10478, %v10655
      %v10725 = vadd.f32 %v10479, %v10657
      %v10726 = vadd.f32 %v10480, %v10659
      %v10727 = vadd.f32 %v10481, %v10661
      %v10728 = vadd.f32 %v10482, %v10663
      %v10729 = vadd.f32 %v10483, %v10665
      %v10730 = vadd.f32 %v10484, %v10667
      %v10731 = vadd.f32 %v10485, %v10669
      %v10732 = vadd.f32 %v10486, %v4982
      %v10733 = vadd.f32 %v10487, %v4984
      %10767 = vrot.lane.b32.xlu0 %v10701, 24
      %v10768 = vpop.permute.xlu0 %10767
      %10769 = vrot.lane.b32.xlu0 %v10702, 24
      %v10770 = vpop.permute.xlu0 %10769
      %10771 = vrot.lane.b32.xlu0 %v10703, 24
      %v10772 = vpop.permute.xlu0 %10771
      %10773 = vrot.lane.b32.xlu0 %v10704, 24
      %v10774 = vpop.permute.xlu0 %10773
      %10775 = vrot.lane.b32.xlu0 %v10705, 24
      %v10776 = vpop.permute.xlu0 %10775
      %10777 = vrot.lane.b32.xlu0 %v10706, 24
      %v10778 = vpop.permute.xlu0 %10777
      %10779 = vrot.lane.b32.xlu0 %v10707, 24
      %v10780 = vpop.permute.xlu0 %10779
      %10781 = vrot.lane.b32.xlu0 %v10708, 24
      %v10782 = vpop.permute.xlu0 %10781
      %10783 = vrot.lane.b32.xlu0 %v10709, 24
      %v10784 = vpop.permute.xlu0 %10783
      %10785 = vrot.lane.b32.xlu0 %v10710, 24
      %v10786 = vpop.permute.xlu0 %10785
      %10787 = vrot.lane.b32.xlu0 %v10711, 24
      %v10788 = vpop.permute.xlu0 %10787
      %10789 = vrot.lane.b32.xlu0 %v10712, 24
      %v10790 = vpop.permute.xlu0 %10789
      %10791 = vrot.lane.b32.xlu0 %v10713, 24
      %v10792 = vpop.permute.xlu0 %10791
      %10793 = vrot.lane.b32.xlu0 %v10714, 24
      %v10794 = vpop.permute.xlu0 %10793
      %10795 = vrot.lane.b32.xlu0 %v10715, 24
      %v10796 = vpop.permute.xlu0 %10795
      %10797 = vrot.lane.b32.xlu0 %v10716, 24
      %v10798 = vpop.permute.xlu0 %10797
      %10799 = vrot.lane.b32.xlu0 %v10717, 24
      %v10800 = vpop.permute.xlu0 %10799
      %10801 = vrot.lane.b32.xlu0 %v10718, 24
      %v10802 = vpop.permute.xlu0 %10801
      %10803 = vrot.lane.b32.xlu0 %v10719, 24
      %v10804 = vpop.permute.xlu0 %10803
      %10805 = vrot.lane.b32.xlu0 %v10720, 24
      %v10806 = vpop.permute.xlu0 %10805
      %10807 = vrot.lane.b32.xlu0 %v10721, 24
      %v10808 = vpop.permute.xlu0 %10807
      %10809 = vrot.lane.b32.xlu0 %v10722, 24
      %v10810 = vpop.permute.xlu0 %10809
      %10811 = vrot.lane.b32.xlu0 %v10723, 24
      %v10812 = vpop.permute.xlu0 %10811
      %10813 = vrot.lane.b32.xlu0 %v10724, 24
      %v10814 = vpop.permute.xlu0 %10813
      %10815 = vrot.lane.b32.xlu0 %v10725, 24
      %v10816 = vpop.permute.xlu0 %10815
      %10817 = vrot.lane.b32.xlu0 %v10726, 24
      %v10818 = vpop.permute.xlu0 %10817
      %10819 = vrot.lane.b32.xlu0 %v10727, 24
      %v10820 = vpop.permute.xlu0 %10819
      %10821 = vrot.lane.b32.xlu0 %v10728, 24
      %v10822 = vpop.permute.xlu0 %10821
      %10823 = vrot.lane.b32.xlu0 %v10729, 24
      %v10824 = vpop.permute.xlu0 %10823
      %10825 = vrot.lane.b32.xlu0 %v10730, 24
      %v10826 = vpop.permute.xlu0 %10825
      %10827 = vrot.lane.b32.xlu0 %v10731, 24
      %v10828 = vpop.permute.xlu0 %10827
      %10829 = vrot.lane.b32.xlu0 %v10732, 24
      %v10830 = vpop.permute.xlu0 %10829
      %10831 = vrot.lane.b32.xlu0 %v10733, 24
      %v10832 = vpop.permute.xlu0 %10831
      %vm10866 = vcmask 261319
      %10867 = vst.msk [vmem:[#allocation2 - $0x7] sm:$0x80] %vm10866, %v10768
      %vm10868 = vcmask 261312
      %10869 = vst.msk [vmem:[#allocation2 + $0x1] sm:$0xff] %vm10868, %v10770
      %10870 = vst.msk [vmem:[#allocation2 + $0x9] sm:$0xff] %vm10868, %v10772
      %10871 = vst.msk [vmem:[#allocation2 + $0x11] sm:$0xff] %vm10868, %v10774
      %10872 = vst.msk [vmem:[#allocation2 + $0x19] sm:$0xff] %vm10868, %v10776
      %10873 = vst.msk [vmem:[#allocation2 + $0x21] sm:$0xff] %vm10868, %v10778
      %10874 = vst.msk [vmem:[#allocation2 + $0x29] sm:$0xff] %vm10868, %v10780
      %10875 = vst.msk [vmem:[#allocation2 + $0x31] sm:$0xff] %vm10868, %v10782
      %10876 = vst.msk [vmem:[#allocation2 + $0x39] sm:$0xff] %vm10868, %v10784
      %10877 = vst.msk [vmem:[#allocation2 + $0x41] sm:$0xff] %vm10868, %v10786
      %10878 = vst.msk [vmem:[#allocation2 + $0x49] sm:$0xff] %vm10868, %v10788
      %10879 = vst.msk [vmem:[#allocation2 + $0x51] sm:$0xff] %vm10868, %v10790
      %10880 = vst.msk [vmem:[#allocation2 + $0x59] sm:$0xff] %vm10868, %v10792
      %10881 = vst.msk [vmem:[#allocation2 + $0x61] sm:$0xff] %vm10868, %v10794
      %10882 = vst.msk [vmem:[#allocation2 + $0x69] sm:$0xff] %vm10868, %v10796
      %10883 = vst.msk [vmem:[#allocation2 + $0x71] sm:$0xff] %vm10868, %v10798
      %10884 = vst.msk [vmem:[#allocation2 + $0x79] sm:$0xff] %vm10868, %v10800
      %10885 = vst.msk [vmem:[#allocation2 + $0x81] sm:$0xff] %vm10868, %v10802
      %10886 = vst.msk [vmem:[#allocation2 + $0x89] sm:$0xff] %vm10868, %v10804
      %10887 = vst.msk [vmem:[#allocation2 + $0x91] sm:$0xff] %vm10868, %v10806
      %10888 = vst.msk [vmem:[#allocation2 + $0x99] sm:$0xff] %vm10868, %v10808
      %10889 = vst.msk [vmem:[#allocation2 + $0xa1] sm:$0xff] %vm10868, %v10810
      %10890 = vst.msk [vmem:[#allocation2 + $0xa9] sm:$0xff] %vm10868, %v10812
      %10891 = vst.msk [vmem:[#allocation2 + $0xb1] sm:$0xff] %vm10868, %v10814
      %10892 = vst.msk [vmem:[#allocation2 + $0xb9] sm:$0xff] %vm10868, %v10816
      %10893 = vst.msk [vmem:[#allocation2 + $0xc1] sm:$0xff] %vm10868, %v10818
      %10894 = vst.msk [vmem:[#allocation2 + $0xc9] sm:$0xff] %vm10868, %v10820
      %10895 = vst.msk [vmem:[#allocation2 + $0xd1] sm:$0xff] %vm10868, %v10822
      %10896 = vst.msk [vmem:[#allocation2 + $0xd9] sm:$0xff] %vm10868, %v10824
      %10897 = vst.msk [vmem:[#allocation2 + $0xe1] sm:$0xff] %vm10868, %v10826
      %10898 = vst.msk [vmem:[#allocation2 + $0xe9] sm:$0xff] %vm10868, %v10828
      %10899 = vst.msk [vmem:[#allocation2 + $0xf1] sm:$0xff] %vm10868, %v10830
      %vm10900 = vcmask 260288
      %10901 = vst.msk [vmem:[#allocation2 + $0xf9] sm:$0x7f] %vm10900, %v10832
      %v10902 = vld [vmem:[#allocation2] sm:$0xff]
      %v10903 = vld [vmem:[#allocation2 + $0x8] sm:$0xff]
      %v10904 = vld [vmem:[#allocation2 + $0x10] sm:$0xff]
      %v10905 = vld [vmem:[#allocation2 + $0x18] sm:$0xff]
      %v10906 = vld [vmem:[#allocation2 + $0x20] sm:$0xff]
      %v10907 = vld [vmem:[#allocation2 + $0x28] sm:$0xff]
      %v10908 = vld [vmem:[#allocation2 + $0x30] sm:$0xff]
      %v10909 = vld [vmem:[#allocation2 + $0x38] sm:$0xff]
      %v10910 = vld [vmem:[#allocation2 + $0x40] sm:$0xff]
      %v10911 = vld [vmem:[#allocation2 + $0x48] sm:$0xff]
      %v10912 = vld [vmem:[#allocation2 + $0x50] sm:$0xff]
      %v10913 = vld [vmem:[#allocation2 + $0x58] sm:$0xff]
      %v10914 = vld [vmem:[#allocation2 + $0x60] sm:$0xff]
      %v10915 = vld [vmem:[#allocation2 + $0x68] sm:$0xff]
      %v10916 = vld [vmem:[#allocation2 + $0x70] sm:$0xff]
      %v10917 = vld [vmem:[#allocation2 + $0x78] sm:$0xff]
      %v10918 = vld [vmem:[#allocation2 + $0x80] sm:$0xff]
      %v10919 = vld [vmem:[#allocation2 + $0x88] sm:$0xff]
      %v10920 = vld [vmem:[#allocation2 + $0x90] sm:$0xff]
      %v10921 = vld [vmem:[#allocation2 + $0x98] sm:$0xff]
      %v10922 = vld [vmem:[#allocation2 + $0xa0] sm:$0xff]
      %v10923 = vld [vmem:[#allocation2 + $0xa8] sm:$0xff]
      %v10924 = vld [vmem:[#allocation2 + $0xb0] sm:$0xff]
      %v10925 = vld [vmem:[#allocation2 + $0xb8] sm:$0xff]
      %v10926 = vld [vmem:[#allocation2 + $0xc0] sm:$0xff]
      %v10927 = vld [vmem:[#allocation2 + $0xc8] sm:$0xff]
      %v10928 = vld [vmem:[#allocation2 + $0xd0] sm:$0xff]
      %v10929 = vld [vmem:[#allocation2 + $0xd8] sm:$0xff]
      %v10930 = vld [vmem:[#allocation2 + $0xe0] sm:$0xff]
      %v10931 = vld [vmem:[#allocation2 + $0xe8] sm:$0xff]
      %v10932 = vld [vmem:[#allocation2 + $0xf0] sm:$0xff]
      %v10933 = vld [vmem:[#allocation2 + $0xf8] sm:$0xff]
      %10934 = vst.msk [vmem:[%s629] sm:$0xff] %vm1242, %v10902
      %10935 = vst.msk [vmem:[%s629 + $0x8] sm:$0xff] %vm1242, %v10903
      %10936 = vst.msk [vmem:[%s629 + $0x10] sm:$0xff] %vm1242, %v10904
      %10937 = vst.msk [vmem:[%s629 + $0x18] sm:$0xff] %vm1242, %v10905
      %10938 = vst.msk [vmem:[%s629 + $0x20] sm:$0xff] %vm1242, %v10906
      %10939 = vst.msk [vmem:[%s629 + $0x28] sm:$0xff] %vm1242, %v10907
      %10940 = vst.msk [vmem:[%s629 + $0x30] sm:$0xff] %vm1242, %v10908
      %10941 = vst.msk [vmem:[%s629 + $0x38] sm:$0xff] %vm1242, %v10909
      %10942 = vst.msk [vmem:[%s629 + $0x40] sm:$0xff] %vm1242, %v10910
      %10943 = vst.msk [vmem:[%s629 + $0x48] sm:$0xff] %vm1242, %v10911
      %10944 = vst.msk [vmem:[%s629 + $0x50] sm:$0xff] %vm1242, %v10912
      %10945 = vst.msk [vmem:[%s629 + $0x58] sm:$0xff] %vm1242, %v10913
      %10946 = vst.msk [vmem:[%s629 + $0x60] sm:$0xff] %vm1242, %v10914
      %10947 = vst.msk [vmem:[%s629 + $0x68] sm:$0xff] %vm1242, %v10915
      %10948 = vst.msk [vmem:[%s629 + $0x70] sm:$0xff] %vm1242, %v10916
      %10949 = vst.msk [vmem:[%s629 + $0x78] sm:$0xff] %vm1242, %v10917
      %10950 = vst.msk [vmem:[%s629 + $0x80] sm:$0xff] %vm1242, %v10918
      %10951 = vst.msk [vmem:[%s629 + $0x88] sm:$0xff] %vm1242, %v10919
      %10952 = vst.msk [vmem:[%s629 + $0x90] sm:$0xff] %vm1242, %v10920
      %10953 = vst.msk [vmem:[%s629 + $0x98] sm:$0xff] %vm1242, %v10921
      %10954 = vst.msk [vmem:[%s629 + $0xa0] sm:$0xff] %vm1242, %v10922
      %10955 = vst.msk [vmem:[%s629 + $0xa8] sm:$0xff] %vm1242, %v10923
      %10956 = vst.msk [vmem:[%s629 + $0xb0] sm:$0xff] %vm1242, %v10924
      %10957 = vst.msk [vmem:[%s629 + $0xb8] sm:$0xff] %vm1242, %v10925
      %10958 = vst.msk [vmem:[%s629 + $0xc0] sm:$0xff] %vm1242, %v10926
      %10959 = vst.msk [vmem:[%s629 + $0xc8] sm:$0xff] %vm1242, %v10927
      %10960 = vst.msk [vmem:[%s629 + $0xd0] sm:$0xff] %vm1242, %v10928
      %10961 = vst.msk [vmem:[%s629 + $0xd8] sm:$0xff] %vm1242, %v10929
      %10962 = vst.msk [vmem:[%s629 + $0xe0] sm:$0xff] %vm1242, %v10930
      %10963 = vst.msk [vmem:[%s629 + $0xe8] sm:$0xff] %vm1242, %v10931
      %10964 = vst.msk [vmem:[%s629 + $0xf0] sm:$0xff] %vm1242, %v10932
      %10965 = vst.msk [vmem:[%s629 + $0xf8] sm:$0xff] %vm1242, %v10933
      %p10966 = scmp.lt.s32.totalorder %s31, 1
      %s10967 = scalar_select %p10966, %s31, 1
      %s10968 = smul.addr %s10967, 32
      %s10969 = smul.addr %s10968, 8
      %s10970 = scalar_lea.vmem %s20, %s10969
      // Predicated region
      $region101: #{tpu_custom_call.1} parent=99 // pred_check
        %p10971 = pneg %p474
      $region102: #{tpu_custom_call.1} parent=99 // pred_check_branch
        %10973 = sbr.rel (%p10971) target = $region104
      $region103: #{tpu_custom_call.1} parent=99 // pred_region
        _
      $region104: #{tpu_custom_call.1} parent=99 // pred_fallthru
        _
    $region100: #{tpu_custom_call.1} parent=5 // pred_fallthru
      _
    %p10974 = scmp.le.s32.totalorder 2, %s26
    // Predicated region
    $region105: #{tpu_custom_call.1} parent=5 // pred_check
      %p10975 = pneg %p10974
    $region106: #{tpu_custom_call.1} parent=5 // pred_check_branch
      %10977 = sbr.rel (%p10975) target = $region108
    $region107: #{tpu_custom_call.1} parent=5 // pred_region
      %s10978 = ssub.s32 %s26, 2
      // Predicated region
      $region109: #{tpu_custom_call.1} parent=107 // pred_check
        %p10979 = pneg %p480
      $region110: #{tpu_custom_call.1} parent=107 // pred_check_branch
        %10981 = sbr.rel (%p10979) target = $region112
      $region111: #{tpu_custom_call.1} parent=107 // pred_region
        %p10982 = scmp.lt.s32.totalorder %s32, 1
        %s10983 = scalar_select %p10982, %s32, 1
        %s10984 = smul.addr %s10983, 32
        %s10985 = smul.addr %s10984, 8
        %s10986 = scalar_lea.vmem %s20, %s10985
      $region112: #{tpu_custom_call.1} parent=107 // pred_fallthru
        _
    $region108: #{tpu_custom_call.1} parent=5 // pred_fallthru
      _
  $region6: #{tpu_custom_call.1} parent=0 // loop_footer
    %s30 = sadd.s32 1, %s26
  $region7: #{tpu_custom_call.1} parent=0 // loop_footer_branch
    %25 = sbr.rel target = $region3
  $region8: #{tpu_custom_call.1} parent=0 // loop_exit
    _

</llo_original>
